<compile_context>
chip_gen: v5e
topology: v5e:2x2
jax: 0.10.0
libtpu: 0.0.40
codegen_flags: <defaults>
</compile_context>

<pallas_src>
import jax
import jax.numpy as jnp
from jax.experimental import pallas as pl
from jax.experimental.pallas import tpu as pltpu

FEAT_DIMS = 256
HIDDEN = 1024
OUT = 1024 * 3
BN_EPS = 1e-5


def _select_tiling():
    """Pick (num_core_splits, w3-column tile width) per TPU generation."""
    kind = ""
    try:
        kind = jax.devices()[0].device_kind.lower()
    except Exception:
        pass
    if "v7" in kind or "7x" in kind:
        # 2 TensorCores/chip: shard w3 columns across cores, 2 tiles of 768 per core.
        return 2, 768
    if "v6" in kind:
        # Single TC, 128 MiB VMEM: 2 big tiles minimizes grid-step overhead.
        return 1, 1536
    # v5e and anything unrecognized: single TC, 4 tiles of 768.
    return 1, 768


def _mlp_decoder_kernel(x_ref, w1_ref, w2_ref, w3_ref,
                        g1_ref, b1_ref, g2_ref, b2_ref,
                        o_ref, h2_ref):
    # h2_ref: per-core VMEM scratch holding relu(bn2(l2(relu(bn1(l1(x)))))) in bf16.
    # Gate MUST stay on program_id(1) (the inner, "arbitrary" axis): each core's sub-grid
    # starts at inner index 0, so the scratch is initialized before its first column tile.
    @pl.when(pl.program_id(1) == 0)
    def _compute_trunk():
        x = x_ref[...]  # already bf16 from the wrapper

        # ---- layer 1: linear (no bias) + BatchNorm1d (batch stats, folded) + ReLU ----
        h1 = jnp.dot(x, w1_ref[...], preferred_element_type=jnp.float32)
        m1 = jnp.mean(h1, axis=0, keepdims=True)
        d1 = h1 - m1
        v1 = jnp.mean(d1 * d1, axis=0, keepdims=True)            # biased variance
        s1 = g1_ref[...] * jax.lax.rsqrt(v1 + BN_EPS)            # folded BN scale
        h1 = jnp.maximum(d1 * s1 + b1_ref[...], 0.0).astype(jnp.bfloat16)

        # ---- layer 2: linear (no bias) + BatchNorm1d (batch stats, folded) + ReLU ----
        h2 = jnp.dot(h1, w2_ref[...], preferred_element_type=jnp.float32)
        m2 = jnp.mean(h2, axis=0, keepdims=True)
        d2 = h2 - m2
        v2 = jnp.mean(d2 * d2, axis=0, keepdims=True)
        s2 = g2_ref[...] * jax.lax.rsqrt(v2 + BN_EPS)
        h2_ref[...] = jnp.maximum(d2 * s2 + b2_ref[...], 0.0).astype(jnp.bfloat16)

    # ---- layer 3: one lane-dense TN-wide column tile of w3 per grid step ----
    o_ref[...] = jnp.dot(h2_ref[...], w3_ref[...], preferred_element_type=jnp.float32)


def mlp_decoder_forward(x, w1, w2, w3, g1, b1, g2, b2):
    """x: (B, FEAT_DIMS) f32; weights bf16, pre-transposed to (in, out). Returns (B, 1024, 3) f32."""
    B = x.shape[0]
    num_core_splits, tn = _select_tiling()
    n_tiles = OUT // tn
    assert OUT % tn == 0 and n_tiles % num_core_splits == 0
    inner = n_tiles // num_core_splits

    col_map = lambda c, j: (0, c * inner + j)   # column tile of w3 / output
    fixed = lambda c, j: (0, 0)                 # resident inputs (fetched once per core)

    x_bf16 = x.astype(jnp.bfloat16)             # drop the in-kernel cast

    flops = 2 * B * (FEAT_DIMS * HIDDEN + HIDDEN * HIDDEN + HIDDEN * OUT)
    bytes_accessed = int(sum(a.size * a.dtype.itemsize
                             for a in (x_bf16, w1, w2, w3, g1, b1, g2, b2)) + B * OUT * 4)

    out = pl.pallas_call(
        _mlp_decoder_kernel,
        out_shape=jax.ShapeDtypeStruct((B, OUT), jnp.float32),
        grid_spec=pltpu.PrefetchScalarGridSpec(
            num_scalar_prefetch=0,
            grid=(num_core_splits, inner),
            in_specs=[
                pl.BlockSpec((B, FEAT_DIMS), fixed),       # x (bf16)
                pl.BlockSpec((FEAT_DIMS, HIDDEN), fixed),  # w1 (256, 1024) bf16
                pl.BlockSpec((HIDDEN, HIDDEN), fixed),     # w2 (1024, 1024) bf16
                pl.BlockSpec((HIDDEN, tn), col_map),       # w3 streamed by column tiles
                pl.BlockSpec((1, HIDDEN), fixed),          # gamma1
                pl.BlockSpec((1, HIDDEN), fixed),          # beta1
                pl.BlockSpec((1, HIDDEN), fixed),          # gamma2
                pl.BlockSpec((1, HIDDEN), fixed),          # beta2
            ],
            out_specs=pl.BlockSpec((B, tn), col_map),
            scratch_shapes=[pltpu.VMEM((B, HIDDEN), jnp.bfloat16)],  # h2 trunk, per core
        ),
        compiler_params=pltpu.CompilerParams(
            # Outer axis shards across both TensorCores on v7x; on single-TC chips it has
            # extent 1 and adds nothing. Inner axis carries the h2 scratch.
            dimension_semantics=("parallel", "arbitrary"),
            # Worst-case footprint (v6e TN=1536) incl. double buffers is ~12 MiB.
            vmem_limit_bytes=32 << 20,
        ),
        cost_estimate=pl.CostEstimate(
            flops=flops, transcendentals=0, bytes_accessed=bytes_accessed),
    )(x_bf16, w1, w2, w3, g1, b1, g2, b2)
    return out.reshape(B, 1024, 3)


def init_params(key, weight_dtype=jnp.bfloat16):
    k1, k2, k3 = jax.random.split(key, 3)
    # nn.Linear default init: U(-1/sqrt(fan_in), 1/sqrt(fan_in)); weights stored
    # pre-transposed to (in, out) and cast to bf16 for HBM-bandwidth savings.
    w1 = jax.random.uniform(k1, (FEAT_DIMS, HIDDEN), jnp.float32,
                            -1.0 / FEAT_DIMS ** 0.5, 1.0 / FEAT_DIMS ** 0.5).astype(weight_dtype)
    w2 = jax.random.uniform(k2, (HIDDEN, HIDDEN), jnp.float32,
                            -1.0 / HIDDEN ** 0.5, 1.0 / HIDDEN ** 0.5).astype(weight_dtype)
    w3 = jax.random.uniform(k3, (HIDDEN, OUT), jnp.float32,
                            -1.0 / HIDDEN ** 0.5, 1.0 / HIDDEN ** 0.5).astype(weight_dtype)
    # BatchNorm1d affine params at their __init__ values (gamma=1, beta=0), kept f32.
    g1 = jnp.ones((1, HIDDEN), jnp.float32)
    b1 = jnp.zeros((1, HIDDEN), jnp.float32)
    g2 = jnp.ones((1, HIDDEN), jnp.float32)
    b2 = jnp.zeros((1, HIDDEN), jnp.float32)
    return w1, w2, w3, g1, b1, g2, b2


def reference_forward(x, w1, w2, w3, g1, b1, g2, b2):
    """Pure-JAX reference with PyTorch training-mode BatchNorm1d semantics, mirroring the
    kernel's mixed precision (bf16 matmul operands, f32 accumulation and BN math)."""
    def bn_relu(h, g, b):
        m = h.mean(0, keepdims=True)
        d = h - m
        v = (d * d).mean(0, keepdims=True)
        return jnp.maximum(d * (g * jax.lax.rsqrt(v + BN_EPS)) + b, 0.0)

    h = jnp.dot(x.astype(w1.dtype), w1, preferred_element_type=jnp.float32)
    h = bn_relu(h, g1, b1).astype(w2.dtype)
    h = jnp.dot(h, w2, preferred_element_type=jnp.float32)
    h = bn_relu(h, g2, b2).astype(w3.dtype)
    out = jnp.dot(h, w3, preferred_element_type=jnp.float32)
    return out.reshape(x.shape[0], 1024, 3)


if __name__ == "__main__":
    key = jax.random.PRNGKey(0)
    kx, kp = jax.random.split(key)

    B = 4
    x = jax.random.normal(kx, (B, FEAT_DIMS), jnp.float32)
    params = init_params(kp)

    out = jax.block_until_ready(mlp_decoder_forward(x, *params))
    ref = reference_forward(x, *params)

    assert out.shape == (B, 1024, 3), out.shape
    # Relative + absolute tolerance (bf16 operands through K=1024 contractions).
    abs_err = jnp.max(jnp.abs(out - ref))
    tol = 1e-3 + 2e-2 * jnp.max(jnp.abs(ref))
    assert float(abs_err) < float(tol), (float(abs_err), float(tol))

    print("KERNEL_OK")
</pallas_src>

<mosaic_0001>
module attributes {stable_mosaic.version = 11 : i64} {
  func.func @_mlp_decoder_kernel(%arg0: i32, %arg1: i32, %arg2: memref<4x256xbf16, #tpu.memory_space<vmem>>, %arg3: memref<256x1024xbf16, #tpu.memory_space<vmem>>, %arg4: memref<1024x1024xbf16, #tpu.memory_space<vmem>>, %arg5: memref<1024x768xbf16, #tpu.memory_space<vmem>>, %arg6: memref<1x1024xf32, #tpu.memory_space<vmem>>, %arg7: memref<1x1024xf32, #tpu.memory_space<vmem>>, %arg8: memref<1x1024xf32, #tpu.memory_space<vmem>>, %arg9: memref<1x1024xf32, #tpu.memory_space<vmem>>, %arg10: memref<4x768xf32, #tpu.memory_space<vmem>>, %arg11: memref<4x1024xbf16, #tpu.memory_space<vmem>>) attributes {dimension_semantics = [#tpu.dimension_semantics<parallel>, #tpu.dimension_semantics<arbitrary>], iteration_bounds = array<i64: 1, 4>, scalar_prefetch = 0 : i64, scratch_operands = 1 : i64, tpu.core_type = #tpu.core_type<tc>, window_params = [{pipeline_mode = #tpu.pipeline_mode<synchronous>, transform_indices = @transform_0, window_bounds = array<i64: 4, 256>}, {pipeline_mode = #tpu.pipeline_mode<synchronous>, transform_indices = @transform_1, window_bounds = array<i64: 256, 1024>}, {pipeline_mode = #tpu.pipeline_mode<synchronous>, transform_indices = @transform_2, window_bounds = array<i64: 1024, 1024>}, {transform_indices = @transform_3, window_bounds = array<i64: 1024, 768>}, {pipeline_mode = #tpu.pipeline_mode<synchronous>, transform_indices = @transform_4, window_bounds = array<i64: 1, 1024>}, {pipeline_mode = #tpu.pipeline_mode<synchronous>, transform_indices = @transform_5, window_bounds = array<i64: 1, 1024>}, {pipeline_mode = #tpu.pipeline_mode<synchronous>, transform_indices = @transform_6, window_bounds = array<i64: 1, 1024>}, {pipeline_mode = #tpu.pipeline_mode<synchronous>, transform_indices = @transform_7, window_bounds = array<i64: 1, 1024>}, {transform_indices = @transform_8, window_bounds = array<i64: 4, 768>}]} {
    %c0_i32 = arith.constant 0 : i32
    %0 = arith.cmpi eq, %arg1, %c0_i32 : i32
    %1 = arith.extui %0 : i1 to i32
    %c0_i32_0 = arith.constant 0 : i32
    %2 = arith.cmpi ne, %1, %c0_i32_0 : i32
    scf.if %2 {
      %c0_6 = arith.constant 0 : index
      %c0_7 = arith.constant 0 : index
      %7 = vector.load %arg2[%c0_6, %c0_7] : memref<4x256xbf16, #tpu.memory_space<vmem>>, vector<4x256xbf16>
      %c0_8 = arith.constant 0 : index
      %c0_9 = arith.constant 0 : index
      %8 = vector.load %arg3[%c0_8, %c0_9] : memref<256x1024xbf16, #tpu.memory_space<vmem>>, vector<256x1024xbf16>
      %cst_10 = arith.constant dense<0.000000e+00> : vector<4x1024xf32>
      %9 = tpu.matmul %7, %8, %cst_10 {dimension_numbers = #tpu.dot_dimension_numbers<[1], [0], [0], [1], [0, 0, 1, 1], [], []>} : vector<4x256xbf16>, vector<256x1024xbf16>, vector<4x1024xf32> -> vector<4x1024xf32>
      %cst_11 = arith.constant dense<0.000000e+00> : vector<1024xf32>
      %10 = vector.multi_reduction <add>, %9, %cst_11 [0] : vector<4x1024xf32> to vector<1024xf32>
      %11 = vector.shape_cast %10 : vector<1024xf32> to vector<1x1024xf32>
      %cst_12 = arith.constant 4.000000e+00 : f32
      %12 = vector.broadcast %cst_12 : f32 to vector<1x1024xf32>
      %13 = arith.divf %11, %12 : vector<1x1024xf32>
      %14 = vector.broadcast %13 : vector<1x1024xf32> to vector<4x1024xf32>
      %15 = arith.subf %9, %14 : vector<4x1024xf32>
      %16 = arith.mulf %15, %15 : vector<4x1024xf32>
      %cst_13 = arith.constant dense<0.000000e+00> : vector<1024xf32>
      %17 = vector.multi_reduction <add>, %16, %cst_13 [0] : vector<4x1024xf32> to vector<1024xf32>
      %18 = vector.shape_cast %17 : vector<1024xf32> to vector<1x1024xf32>
      %cst_14 = arith.constant 4.000000e+00 : f32
      %19 = vector.broadcast %cst_14 : f32 to vector<1x1024xf32>
      %20 = arith.divf %18, %19 : vector<1x1024xf32>
      %c0_15 = arith.constant 0 : index
      %c0_16 = arith.constant 0 : index
      %21 = vector.load %arg6[%c0_15, %c0_16] : memref<1x1024xf32, #tpu.memory_space<vmem>>, vector<1x1024xf32>
      %cst_17 = arith.constant 9.99999974E-6 : f32
      %22 = vector.broadcast %cst_17 : f32 to vector<1x1024xf32>
      %23 = arith.addf %20, %22 : vector<1x1024xf32>
      %24 = math.rsqrt %23 : vector<1x1024xf32>
      %25 = arith.mulf %21, %24 : vector<1x1024xf32>
      %26 = vector.broadcast %25 : vector<1x1024xf32> to vector<4x1024xf32>
      %27 = arith.mulf %15, %26 : vector<4x1024xf32>
      %c0_18 = arith.constant 0 : index
      %c0_19 = arith.constant 0 : index
      %28 = vector.load %arg7[%c0_18, %c0_19] : memref<1x1024xf32, #tpu.memory_space<vmem>>, vector<1x1024xf32>
      %29 = vector.broadcast %28 : vector<1x1024xf32> to vector<4x1024xf32>
      %30 = arith.addf %27, %29 : vector<4x1024xf32>
      %cst_20 = arith.constant 0.000000e+00 : f32
      %31 = vector.broadcast %cst_20 : f32 to vector<4x1024xf32>
      %32 = arith.maximumf %30, %31 : vector<4x1024xf32>
      %33 = arith.truncf %32 : vector<4x1024xf32> to vector<4x1024xbf16>
      %c0_21 = arith.constant 0 : index
      %c0_22 = arith.constant 0 : index
      %34 = vector.load %arg4[%c0_21, %c0_22] : memref<1024x1024xbf16, #tpu.memory_space<vmem>>, vector<1024x1024xbf16>
      %cst_23 = arith.constant dense<0.000000e+00> : vector<4x1024xf32>
      %35 = tpu.matmul %33, %34, %cst_23 {dimension_numbers = #tpu.dot_dimension_numbers<[1], [0], [0], [1], [0, 0, 1, 1], [], []>} : vector<4x1024xbf16>, vector<1024x1024xbf16>, vector<4x1024xf32> -> vector<4x1024xf32>
      %cst_24 = arith.constant dense<0.000000e+00> : vector<1024xf32>
      %36 = vector.multi_reduction <add>, %35, %cst_24 [0] : vector<4x1024xf32> to vector<1024xf32>
      %37 = vector.shape_cast %36 : vector<1024xf32> to vector<1x1024xf32>
      %cst_25 = arith.constant 4.000000e+00 : f32
      %38 = vector.broadcast %cst_25 : f32 to vector<1x1024xf32>
      %39 = arith.divf %37, %38 : vector<1x1024xf32>
      %40 = vector.broadcast %39 : vector<1x1024xf32> to vector<4x1024xf32>
      %41 = arith.subf %35, %40 : vector<4x1024xf32>
      %42 = arith.mulf %41, %41 : vector<4x1024xf32>
      %cst_26 = arith.constant dense<0.000000e+00> : vector<1024xf32>
      %43 = vector.multi_reduction <add>, %42, %cst_26 [0] : vector<4x1024xf32> to vector<1024xf32>
      %44 = vector.shape_cast %43 : vector<1024xf32> to vector<1x1024xf32>
      %cst_27 = arith.constant 4.000000e+00 : f32
      %45 = vector.broadcast %cst_27 : f32 to vector<1x1024xf32>
      %46 = arith.divf %44, %45 : vector<1x1024xf32>
      %c0_28 = arith.constant 0 : index
      %c0_29 = arith.constant 0 : index
      %47 = vector.load %arg8[%c0_28, %c0_29] : memref<1x1024xf32, #tpu.memory_space<vmem>>, vector<1x1024xf32>
      %cst_30 = arith.constant 9.99999974E-6 : f32
      %48 = vector.broadcast %cst_30 : f32 to vector<1x1024xf32>
      %49 = arith.addf %46, %48 : vector<1x1024xf32>
      %50 = math.rsqrt %49 : vector<1x1024xf32>
      %51 = arith.mulf %47, %50 : vector<1x1024xf32>
      %52 = vector.broadcast %51 : vector<1x1024xf32> to vector<4x1024xf32>
      %53 = arith.mulf %41, %52 : vector<4x1024xf32>
      %c0_31 = arith.constant 0 : index
      %c0_32 = arith.constant 0 : index
      %54 = vector.load %arg9[%c0_31, %c0_32] : memref<1x1024xf32, #tpu.memory_space<vmem>>, vector<1x1024xf32>
      %55 = vector.broadcast %54 : vector<1x1024xf32> to vector<4x1024xf32>
      %56 = arith.addf %53, %55 : vector<4x1024xf32>
      %cst_33 = arith.constant 0.000000e+00 : f32
      %57 = vector.broadcast %cst_33 : f32 to vector<4x1024xf32>
      %58 = arith.maximumf %56, %57 : vector<4x1024xf32>
      %59 = arith.truncf %58 : vector<4x1024xf32> to vector<4x1024xbf16>
      %c0_34 = arith.constant 0 : index
      %c0_35 = arith.constant 0 : index
      %60 = vector.load %arg11[%c0_34, %c0_35] : memref<4x1024xbf16, #tpu.memory_space<vmem>>, vector<4x1024xbf16>
      tpu.vector_store %arg11[%c0_34, %c0_35], %59 {strides = array<i32>} : memref<4x1024xbf16, #tpu.memory_space<vmem>>, vector<4x1024xbf16>,
    } else {
    }
    %c0 = arith.constant 0 : index
    %c0_1 = arith.constant 0 : index
    %3 = vector.load %arg11[%c0, %c0_1] : memref<4x1024xbf16, #tpu.memory_space<vmem>>, vector<4x1024xbf16>
    %c0_2 = arith.constant 0 : index
    %c0_3 = arith.constant 0 : index
    %4 = vector.load %arg5[%c0_2, %c0_3] : memref<1024x768xbf16, #tpu.memory_space<vmem>>, vector<1024x768xbf16>
    %cst = arith.constant dense<0.000000e+00> : vector<4x768xf32>
    %5 = tpu.matmul %3, %4, %cst {dimension_numbers = #tpu.dot_dimension_numbers<[1], [0], [0], [1], [0, 0, 1, 1], [], []>} : vector<4x1024xbf16>, vector<1024x768xbf16>, vector<4x768xf32> -> vector<4x768xf32>
    %c0_4 = arith.constant 0 : index
    %c0_5 = arith.constant 0 : index
    %6 = vector.load %arg10[%c0_4, %c0_5] : memref<4x768xf32, #tpu.memory_space<vmem>>, vector<4x768xf32>
    tpu.vector_store %arg10[%c0_4, %c0_5], %5 {strides = array<i32>} : memref<4x768xf32, #tpu.memory_space<vmem>>, vector<4x768xf32>,
    return
  }
  func.func @transform_0(%arg0: i32, %arg1: i32) -> (i32, i32) {
    %c0_i32 = arith.constant 0 : i32
    %c0_i32_0 = arith.constant 0 : i32
    %c0_i32_1 = arith.constant 0 : i32
    return %c0_i32, %c0_i32_0 : i32, i32
  }
  func.func @transform_1(%arg0: i32, %arg1: i32) -> (i32, i32) {
    %c0_i32 = arith.constant 0 : i32
    %c0_i32_0 = arith.constant 0 : i32
    %c0_i32_1 = arith.constant 0 : i32
    return %c0_i32, %c0_i32_0 : i32, i32
  }
  func.func @transform_2(%arg0: i32, %arg1: i32) -> (i32, i32) {
    %c0_i32 = arith.constant 0 : i32
    %c0_i32_0 = arith.constant 0 : i32
    %c0_i32_1 = arith.constant 0 : i32
    return %c0_i32, %c0_i32_0 : i32, i32
  }
  func.func @transform_3(%arg0: i32, %arg1: i32) -> (i32, i32) {
    %c4_i32 = arith.constant 4 : i32
    %0 = arith.muli %arg0, %c4_i32 : i32
    %1 = arith.addi %0, %arg1 : i32
    %c0_i32 = arith.constant 0 : i32
    %c0_i32_0 = arith.constant 0 : i32
    return %c0_i32, %1 : i32, i32
  }
  func.func @transform_4(%arg0: i32, %arg1: i32) -> (i32, i32) {
    %c0_i32 = arith.constant 0 : i32
    %c0_i32_0 = arith.constant 0 : i32
    %c0_i32_1 = arith.constant 0 : i32
    return %c0_i32, %c0_i32_0 : i32, i32
  }
  func.func @transform_5(%arg0: i32, %arg1: i32) -> (i32, i32) {
    %c0_i32 = arith.constant 0 : i32
    %c0_i32_0 = arith.constant 0 : i32
    %c0_i32_1 = arith.constant 0 : i32
    return %c0_i32, %c0_i32_0 : i32, i32
  }
  func.func @transform_6(%arg0: i32, %arg1: i32) -> (i32, i32) {
    %c0_i32 = arith.constant 0 : i32
    %c0_i32_0 = arith.constant 0 : i32
    %c0_i32_1 = arith.constant 0 : i32
    return %c0_i32, %c0_i32_0 : i32, i32
  }
  func.func @transform_7(%arg0: i32, %arg1: i32) -> (i32, i32) {
    %c0_i32 = arith.constant 0 : i32
    %c0_i32_0 = arith.constant 0 : i32
    %c0_i32_1 = arith.constant 0 : i32
    return %c0_i32, %c0_i32_0 : i32, i32
  }
  func.func @transform_8(%arg0: i32, %arg1: i32) -> (i32, i32) {
    %c4_i32 = arith.constant 4 : i32
    %0 = arith.muli %arg0, %c4_i32 : i32
    %1 = arith.addi %0, %arg1 : i32
    %c0_i32 = arith.constant 0 : i32
    %c0_i32_0 = arith.constant 0 : i32
    return %c0_i32, %1 : i32, i32
  }
}

</mosaic_0001>

<llo_original>
// kernel: tpu_custom_call.1
$region0: #{tpu_custom_call.1}
  #allocation0 [shape = 'u32[]', space=smem, size = 0x4, offset = 0x4, fixed_abs, tag = 'smem constant byte address 0x4 - core index']
  #allocation1 [shape = 'u32[72,128]{1,0:T(1,128)}', space=vmem, size = 0x9000, scoped, tag = 'internal scratch']
  #allocation2 [shape = 'bf16[4,1024]{1,0:T(4,128)(2,1)}', space=vmem, size = 0x2000, scoped, tag = 'scratch operand']
  %s0 = inlined_call_operand.hbm [shape: bf16[4,256], index: 0, kind: input, shape index: {}]
  %s1 = inlined_call_operand.hbm [shape: bf16[256,1024], index: 1, kind: input, shape index: {}]
  %s2 = inlined_call_operand.hbm [shape: bf16[1024,1024], index: 2, kind: input, shape index: {}]
  %s3 = inlined_call_operand.hbm [shape: bf16[1024,3072], index: 3, kind: input, shape index: {}]
  %s4 = inlined_call_operand.hbm [shape: f32[1,1024], index: 4, kind: input, shape index: {}]
  %s5 = inlined_call_operand.hbm [shape: f32[1,1024], index: 5, kind: input, shape index: {}]
  %s6 = inlined_call_operand.hbm [shape: f32[1,1024], index: 6, kind: input, shape index: {}]
  %s7 = inlined_call_operand.hbm [shape: f32[1,1024], index: 7, kind: input, shape index: {}]
  %s8 = inlined_call_operand.hbm [shape: f32[4,3072], index: 8, kind: output, shape index: {}]
  %s9 = sld [smem:[#allocation0]]
  $region101: #{tpu_custom_call.1} parent=0
    _
  %s11 = ssub.s32 1, %s9
  %s12 = scalar_select 0, %s11, %s9
  $region1: #{tpu_custom_call.1} parent=0
    #allocation3 [shape = 'u8[2048]{0}', space=vmem, size = 0x800, scoped, tag = 'input window, operand 0, single buffered']
    #allocation4 [shape = 's32[2]{0}', space=sflag, size = 0x8, scoped, tag = 'scoped memory for tpu_custom_call.1']
    #allocation5 [shape = 's32[2]{0}', space=sflag, size = 0x8, scoped, tag = 'scoped memory for tpu_custom_call.1']
    #allocation6 [shape = 'u8[524288]{0}', space=vmem, size = 0x80000, scoped, tag = 'input window, operand 1, single buffered']
    #allocation7 [shape = 's32[1]{0}', space=sflag, size = 0x4, scoped, tag = 'scoped memory for tpu_custom_call.1']
    #allocation8 [shape = 'u8[2097152]{0}', space=vmem, size = 0x200000, scoped, tag = 'input window, operand 2, single buffered']
    #allocation9 [shape = 'u8[3145728]{0}', space=vmem, size = 0x300000, scoped, tag = 'input window, operand 3']
    #allocation10 [shape = 's32[2]{0}', space=sflag, size = 0x8, scoped, tag = 'scoped memory for tpu_custom_call.1']
    #allocation11 [shape = 'u8[4096]{0}', space=vmem, size = 0x1000, scoped, tag = 'input window, operand 4, single buffered']
    #allocation12 [shape = 'u8[4096]{0}', space=vmem, size = 0x1000, scoped, tag = 'input window, operand 5, single buffered']
    #allocation13 [shape = 's32[1]{0}', space=sflag, size = 0x4, scoped, tag = 'scoped memory for tpu_custom_call.1']
    #allocation14 [shape = 'u8[4096]{0}', space=vmem, size = 0x1000, scoped, tag = 'input window, operand 6, single buffered']
    #allocation15 [shape = 'u8[4096]{0}', space=vmem, size = 0x1000, scoped, tag = 'input window, operand 7, single buffered']
    #allocation16 [shape = 's32[1]{0}', space=sflag, size = 0x4, scoped, tag = 'scoped memory for tpu_custom_call.1']
    #allocation17 [shape = 'u8[24576]{0}', space=vmem, size = 0x6000, scoped, tag = 'output window, operand 0']
    %13 = vsyncpa [#allocation4], 0
    %14 = vsyncpa [#allocation7], 0
    %15 = vsyncpa [#allocation10], 0
    %s16 = scalar_lea.sflag [#allocation10], 1
    %17 = vsyncpa %s16, 0
    %18 = vsyncpa [#allocation13], 0
    %19 = vsyncpa [#allocation16], 0
    %20 = vsyncpa [#allocation5], 0
    %s21 = scalar_lea.sflag [#allocation5], 1
    %22 = vsyncpa %s21, 0
    loop: start=0, step=1, limit=6
    $region2: #{tpu_custom_call.1} parent=1 // loop_pre_header
      _
    $region3: #{tpu_custom_call.1} parent=1 // loop_header
      %s24 = sphi 0, %s28
      %p25 = scmp.ge.s32.totalorder %s24, 6
      %s31 = sphi 0, %s43
      %s32 = sphi 0, %s39
      %s33 = sphi 0, %s31
      %s34 = sphi 0, %s32
      %s35 = sphi 0, %s33
      %s36 = sphi 0, %s34
      %s44 = sphi 0, %s44
      %s46 = sphi 0, %s44
      %s47 = sphi 0, %s46
      %s61 = sphi 0, %s47
      %s65 = sphi 0, %s65
      %s67 = sphi 0, %s65
      %s68 = sphi 0, %s67
      %s82 = sphi 0, %s68
      %s86 = sphi 0, %s86
      %s88 = sphi 0, %s86
      %s89 = sphi 0, %s88
      %s103 = sphi 0, %s89
      %s113 = sphi 0, %s115
      %s116 = sphi 0, %s113
      %s117 = sphi 0, %s116
      %s133 = sphi 0, %s117
      %s137 = sphi 0, %s137
      %s139 = sphi 0, %s137
      %s140 = sphi 0, %s139
      %s154 = sphi 0, %s140
      %s158 = sphi 0, %s158
      %s160 = sphi 0, %s158
      %s161 = sphi 0, %s160
      %s175 = sphi 0, %s161
      %s179 = sphi 0, %s179
      %s181 = sphi 0, %s179
      %s182 = sphi 0, %s181
      %s196 = sphi 0, %s182
      %s200 = sphi 0, %s200
      %s202 = sphi 0, %s200
      %s203 = sphi 0, %s202
      %s217 = sphi 0, %s203
      %s227 = sphi 0, %s229
      %s230 = sphi 0, %s227
      %s231 = sphi 0, %s230
      %s247 = sphi 0, %s231
    $region4: #{tpu_custom_call.1} parent=1 // loop_header_branch
      %27 = sbr.rel (%p25) target = $region8
    $region5: #{tpu_custom_call.1} parent=1 // loop_body
      %s29 = ssub.s32 %s24, 1
      %s30 = ssub.s32 %s24, 2
      %s37 = sadd.s32 1, %s32
      %p38 = scmp.ge.s32.totalorder %s37, 4
      %s39 = scalar_select %p38, 0, %s37
      %s40 = sadd.s32 1, %s31
      %s41 = scalar_select %p38, %s40, %s31
      %p42 = scmp.ge.s32.totalorder %s41, 1
      %s43 = scalar_select %p42, 0, %s41
      %s45 = sadd.s32 %s44, 1
      %p48 = scmp.eq.s32.totalorder %s24, 3
      %p49 = scmp.ne.s32.totalorder %s44, %s46
      %p50 = scmp.eq.s32.totalorder %s24, 0
      %p51 = por %p49, %p50
      %p52 = scmp.ne.s32.totalorder %s44, %s46
      %p53 = scmp.eq.s32.totalorder %s29, 3
      %p54 = por %p52, %p53
      %p55 = scmp.ne.s32.totalorder %s46, %s47
      %p56 = scmp.eq.s32.totalorder %s29, 0
      %p57 = por %p55, %p56
      %p58 = scmp.ne.s32.totalorder %s46, %s47
      %p59 = scmp.eq.s32.totalorder %s30, 3
      %p60 = por %p58, %p59
      %p62 = scmp.ne.s32.totalorder %s47, %s61
      %p63 = scmp.eq.s32.totalorder %s30, 0
      %p64 = por %p62, %p63
      %s66 = sadd.s32 %s65, 1
      %p69 = scmp.eq.s32.totalorder %s24, 3
      %p70 = scmp.ne.s32.totalorder %s65, %s67
      %p71 = scmp.eq.s32.totalorder %s24, 0
      %p72 = por %p70, %p71
      %p73 = scmp.ne.s32.totalorder %s65, %s67
      %p74 = scmp.eq.s32.totalorder %s29, 3
      %p75 = por %p73, %p74
      %p76 = scmp.ne.s32.totalorder %s67, %s68
      %p77 = scmp.eq.s32.totalorder %s29, 0
      %p78 = por %p76, %p77
      %p79 = scmp.ne.s32.totalorder %s67, %s68
      %p80 = scmp.eq.s32.totalorder %s30, 3
      %p81 = por %p79, %p80
      %p83 = scmp.ne.s32.totalorder %s68, %s82
      %p84 = scmp.eq.s32.totalorder %s30, 0
      %p85 = por %p83, %p84
      %s87 = sadd.s32 %s86, 1
      %p90 = scmp.eq.s32.totalorder %s24, 3
      %p91 = scmp.ne.s32.totalorder %s86, %s88
      %p92 = scmp.eq.s32.totalorder %s24, 0
      %p93 = por %p91, %p92
      %p94 = scmp.ne.s32.totalorder %s86, %s88
      %p95 = scmp.eq.s32.totalorder %s29, 3
      %p96 = por %p94, %p95
      %p97 = scmp.ne.s32.totalorder %s88, %s89
      %p98 = scmp.eq.s32.totalorder %s29, 0
      %p99 = por %p97, %p98
      %p100 = scmp.ne.s32.totalorder %s88, %s89
      %p101 = scmp.eq.s32.totalorder %s30, 3
      %p102 = por %p100, %p101
      %p104 = scmp.ne.s32.totalorder %s89, %s103
      %p105 = scmp.eq.s32.totalorder %s30, 0
      %p106 = por %p104, %p105
      %s107 = smul.u32 %s31, 4
      %s108 = sadd.s32 %s107, %s32
      %s109 = smul.u32 %s43, 4
      %s110 = sadd.s32 %s109, %s39
      %s111 = ssub.s32 %s108, %s110
      %p112 = scmp.eq.s32.totalorder %s111, 0
      %s114 = sadd.s32 %s113, 1
      %s115 = scalar_select %p112, %s113, %s114
      %p118 = pneg %p112
      %p119 = scmp.eq.s32.totalorder %s24, 3
      %p120 = por %p118, %p119
      %p121 = scmp.ne.s32.totalorder %s113, %s116
      %p122 = scmp.eq.s32.totalorder %s24, 0
      %p123 = por %p121, %p122
      %p124 = scmp.ne.s32.totalorder %s113, %s116
      %p125 = scmp.eq.s32.totalorder %s29, 3
      %p126 = por %p124, %p125
      %p127 = scmp.ne.s32.totalorder %s116, %s117
      %p128 = scmp.eq.s32.totalorder %s29, 0
      %p129 = por %p127, %p128
      %p130 = scmp.ne.s32.totalorder %s116, %s117
      %p131 = scmp.eq.s32.totalorder %s30, 3
      %p132 = por %p130, %p131
      %p134 = scmp.ne.s32.totalorder %s117, %s133
      %p135 = scmp.eq.s32.totalorder %s30, 0
      %p136 = por %p134, %p135
      %s138 = sadd.s32 %s137, 1
      %p141 = scmp.eq.s32.totalorder %s24, 3
      %p142 = scmp.ne.s32.totalorder %s137, %s139
      %p143 = scmp.eq.s32.totalorder %s24, 0
      %p144 = por %p142, %p143
      %p145 = scmp.ne.s32.totalorder %s137, %s139
      %p146 = scmp.eq.s32.totalorder %s29, 3
      %p147 = por %p145, %p146
      %p148 = scmp.ne.s32.totalorder %s139, %s140
      %p149 = scmp.eq.s32.totalorder %s29, 0
      %p150 = por %p148, %p149
      %p151 = scmp.ne.s32.totalorder %s139, %s140
      %p152 = scmp.eq.s32.totalorder %s30, 3
      %p153 = por %p151, %p152
      %p155 = scmp.ne.s32.totalorder %s140, %s154
      %p156 = scmp.eq.s32.totalorder %s30, 0
      %p157 = por %p155, %p156
      %s159 = sadd.s32 %s158, 1
      %p162 = scmp.eq.s32.totalorder %s24, 3
      %p163 = scmp.ne.s32.totalorder %s158, %s160
      %p164 = scmp.eq.s32.totalorder %s24, 0
      %p165 = por %p163, %p164
      %p166 = scmp.ne.s32.totalorder %s158, %s160
      %p167 = scmp.eq.s32.totalorder %s29, 3
      %p168 = por %p166, %p167
      %p169 = scmp.ne.s32.totalorder %s160, %s161
      %p170 = scmp.eq.s32.totalorder %s29, 0
      %p171 = por %p169, %p170
      %p172 = scmp.ne.s32.totalorder %s160, %s161
      %p173 = scmp.eq.s32.totalorder %s30, 3
      %p174 = por %p172, %p173
      %p176 = scmp.ne.s32.totalorder %s161, %s175
      %p177 = scmp.eq.s32.totalorder %s30, 0
      %p178 = por %p176, %p177
      %s180 = sadd.s32 %s179, 1
      %p183 = scmp.eq.s32.totalorder %s24, 3
      %p184 = scmp.ne.s32.totalorder %s179, %s181
      %p185 = scmp.eq.s32.totalorder %s24, 0
      %p186 = por %p184, %p185
      %p187 = scmp.ne.s32.totalorder %s179, %s181
      %p188 = scmp.eq.s32.totalorder %s29, 3
      %p189 = por %p187, %p188
      %p190 = scmp.ne.s32.totalorder %s181, %s182
      %p191 = scmp.eq.s32.totalorder %s29, 0
      %p192 = por %p190, %p191
      %p193 = scmp.ne.s32.totalorder %s181, %s182
      %p194 = scmp.eq.s32.totalorder %s30, 3
      %p195 = por %p193, %p194
      %p197 = scmp.ne.s32.totalorder %s182, %s196
      %p198 = scmp.eq.s32.totalorder %s30, 0
      %p199 = por %p197, %p198
      %s201 = sadd.s32 %s200, 1
      %p204 = scmp.eq.s32.totalorder %s24, 3
      %p205 = scmp.ne.s32.totalorder %s200, %s202
      %p206 = scmp.eq.s32.totalorder %s24, 0
      %p207 = por %p205, %p206
      %p208 = scmp.ne.s32.totalorder %s200, %s202
      %p209 = scmp.eq.s32.totalorder %s29, 3
      %p210 = por %p208, %p209
      %p211 = scmp.ne.s32.totalorder %s202, %s203
      %p212 = scmp.eq.s32.totalorder %s29, 0
      %p213 = por %p211, %p212
      %p214 = scmp.ne.s32.totalorder %s202, %s203
      %p215 = scmp.eq.s32.totalorder %s30, 3
      %p216 = por %p214, %p215
      %p218 = scmp.ne.s32.totalorder %s203, %s217
      %p219 = scmp.eq.s32.totalorder %s30, 0
      %p220 = por %p218, %p219
      %s221 = smul.u32 %s31, 4
      %s222 = sadd.s32 %s221, %s32
      %s223 = smul.u32 %s43, 4
      %s224 = sadd.s32 %s223, %s39
      %s225 = ssub.s32 %s222, %s224
      %p226 = scmp.eq.s32.totalorder %s225, 0
      %s228 = sadd.s32 %s227, 1
      %s229 = scalar_select %p226, %s227, %s228
      %p232 = pneg %p226
      %p233 = scmp.eq.s32.totalorder %s24, 3
      %p234 = por %p232, %p233
      %p235 = scmp.ne.s32.totalorder %s227, %s230
      %p236 = scmp.eq.s32.totalorder %s24, 0
      %p237 = por %p235, %p236
      %p238 = scmp.ne.s32.totalorder %s227, %s230
      %p239 = scmp.eq.s32.totalorder %s29, 3
      %p240 = por %p238, %p239
      %p241 = scmp.ne.s32.totalorder %s230, %s231
      %p242 = scmp.eq.s32.totalorder %s29, 0
      %p243 = por %p241, %p242
      %p244 = scmp.ne.s32.totalorder %s230, %s231
      %p245 = scmp.eq.s32.totalorder %s30, 3
      %p246 = por %p244, %p245
      %p248 = scmp.ne.s32.totalorder %s231, %s247
      %p249 = scmp.eq.s32.totalorder %s30, 0
      %p250 = por %p248, %p249
      %p251 = scmp.le.s32.totalorder 1, %s24
      %p252 = scmp.lt.s32.totalorder %s24, 5
      %p253 = pnand %p251, %p252
      %p254 = pneg %p253
      // Predicated region
      $region9: #{tpu_custom_call.1} parent=5 // pred_check
        _
      $region10: #{tpu_custom_call.1} parent=5 // pred_check_branch
        %256 = sbr.rel (%p253) target = $region12
      $region11: #{tpu_custom_call.1} parent=5 // pred_region
        %s257 = ssub.s32 %s24, 1
        // Predicated region
        $region13: #{tpu_custom_call.1} parent=11 // pred_check
          %p258 = pneg %p57
        $region14: #{tpu_custom_call.1} parent=11 // pred_check_branch
          %260 = sbr.rel (%p258) target = $region16
        $region15: #{tpu_custom_call.1} parent=11 // pred_region
          %262 = vsyncadd [#allocation4], 0
          %s264 = sshll.u32 %s0, 4
          %s265 = int_to_ptr.hbm [resolvable:$true] %s264
          %s266 = sshll.u32 [#allocation3], 4
          %s267 = int_to_ptr.vmem [resolvable:$true] %s266
          %269 = dma.hbm_to_vmem [thread:$0]  %s265, 64, %s267, [#allocation4]
        $region16: #{tpu_custom_call.1} parent=11 // pred_fallthru
          _
        // Predicated region
        $region17: #{tpu_custom_call.1} parent=11 // pred_check
          %p270 = pneg %p78
        $region18: #{tpu_custom_call.1} parent=11 // pred_check_branch
          %272 = sbr.rel (%p270) target = $region20
        $region19: #{tpu_custom_call.1} parent=11 // pred_region
          %274 = vsyncadd [#allocation7], 0
          %s275 = sshll.u32 %s1, 4
          %s276 = int_to_ptr.hbm [resolvable:$true] %s275
          %s277 = sshll.u32 [#allocation6], 4
          %s278 = int_to_ptr.vmem [resolvable:$true] %s277
          %283 = dma.hbm_to_vmem [thread:$0]  %s276, 16384, %s278, [#allocation7], 512, 512, 32
        $region20: #{tpu_custom_call.1} parent=11 // pred_fallthru
          _
        // Predicated region
        $region21: #{tpu_custom_call.1} parent=11 // pred_check
          %p284 = pneg %p99
        $region22: #{tpu_custom_call.1} parent=11 // pred_check_branch
          %286 = sbr.rel (%p284) target = $region24
        $region23: #{tpu_custom_call.1} parent=11 // pred_region
          %288 = vsyncadd [#allocation7], 0
          %s289 = sshll.u32 %s2, 4
          %s290 = int_to_ptr.hbm [resolvable:$true] %s289
          %s291 = sshll.u32 [#allocation8], 4
          %s292 = int_to_ptr.vmem [resolvable:$true] %s291
          %297 = dma.hbm_to_vmem [thread:$0]  %s290, 65536, %s292, [#allocation7], 512, 512, 32
        $region24: #{tpu_custom_call.1} parent=11 // pred_fallthru
          _
        // Predicated region
        $region25: #{tpu_custom_call.1} parent=11 // pred_check
          %p298 = pneg %p150
        $region26: #{tpu_custom_call.1} parent=11 // pred_check_branch
          %300 = sbr.rel (%p298) target = $region28
        $region27: #{tpu_custom_call.1} parent=11 // pred_region
          %302 = vsyncadd [#allocation10], 0
          %s304 = sshll.u32 %s4, 4
          %s305 = int_to_ptr.hbm [resolvable:$true] %s304
          %s306 = sshll.u32 [#allocation11], 4
          %s307 = int_to_ptr.vmem [resolvable:$true] %s306
          %309 = dma.hbm_to_vmem [thread:$0]  %s305, 128, %s307, [#allocation10]
        $region28: #{tpu_custom_call.1} parent=11 // pred_fallthru
          _
        // Predicated region
        $region29: #{tpu_custom_call.1} parent=11 // pred_check
          %p310 = pneg %p171
        $region30: #{tpu_custom_call.1} parent=11 // pred_check_branch
          %312 = sbr.rel (%p310) target = $region32
        $region31: #{tpu_custom_call.1} parent=11 // pred_region
          %314 = vsyncadd [#allocation13], 0
          %s316 = sshll.u32 %s5, 4
          %s317 = int_to_ptr.hbm [resolvable:$true] %s316
          %s318 = sshll.u32 [#allocation12], 4
          %s319 = int_to_ptr.vmem [resolvable:$true] %s318
          %321 = dma.hbm_to_vmem [thread:$0]  %s317, 128, %s319, [#allocation13]
        $region32: #{tpu_custom_call.1} parent=11 // pred_fallthru
          _
        // Predicated region
        $region33: #{tpu_custom_call.1} parent=11 // pred_check
          %p322 = pneg %p192
        $region34: #{tpu_custom_call.1} parent=11 // pred_check_branch
          %324 = sbr.rel (%p322) target = $region36
        $region35: #{tpu_custom_call.1} parent=11 // pred_region
          %326 = vsyncadd [#allocation13], 0
          %s328 = sshll.u32 %s6, 4
          %s329 = int_to_ptr.hbm [resolvable:$true] %s328
          %s330 = sshll.u32 [#allocation14], 4
          %s331 = int_to_ptr.vmem [resolvable:$true] %s330
          %333 = dma.hbm_to_vmem [thread:$0]  %s329, 128, %s331, [#allocation13]
        $region36: #{tpu_custom_call.1} parent=11 // pred_fallthru
          _
        // Predicated region
        $region37: #{tpu_custom_call.1} parent=11 // pred_check
          %p334 = pneg %p213
        $region38: #{tpu_custom_call.1} parent=11 // pred_check_branch
          %336 = sbr.rel (%p334) target = $region40
        $region39: #{tpu_custom_call.1} parent=11 // pred_region
          %338 = vsyncadd [#allocation16], 0
          %s340 = sshll.u32 %s7, 4
          %s341 = int_to_ptr.hbm [resolvable:$true] %s340
          %s342 = sshll.u32 [#allocation15], 4
          %s343 = int_to_ptr.vmem [resolvable:$true] %s342
          %345 = dma.hbm_to_vmem [thread:$0]  %s341, 128, %s343, [#allocation16]
        $region40: #{tpu_custom_call.1} parent=11 // pred_fallthru
          _
      $region12: #{tpu_custom_call.1} parent=5 // pred_fallthru
        _
      %p346 = scmp.lt.s32.totalorder %s24, 4
      // Predicated region
      $region41: #{tpu_custom_call.1} parent=5 // pred_check
        %p347 = pneg %p346
      $region42: #{tpu_custom_call.1} parent=5 // pred_check_branch
        %349 = sbr.rel (%p347) target = $region44
      $region43: #{tpu_custom_call.1} parent=5 // pred_region
        // Predicated region
        $region45: #{tpu_custom_call.1} parent=43 // pred_check
          %p350 = pneg %p123
        $region46: #{tpu_custom_call.1} parent=43 // pred_check_branch
          %352 = sbr.rel (%p350) target = $region48
        $region47: #{tpu_custom_call.1} parent=43 // pred_region
          %s353 = sand.u32 %s24, 1
          %s354 = scalar_lea.sflag [#allocation10], %s353
          %s355 = sand.u32 %s113, 1
          %s356 = smul.addr %s355, 3072
          %s357 = scalar_lea.vmem [#allocation9], %s356
          %s358 = smul.u32 %s31, 4
          %s359 = sadd.s32 %s358, %s32
          %s360 = smul.u32 6, %s359
          %362 = vsyncadd %s354, 0
          %s363 = smul.addr %s360, 4
          %s364 = scalar_lea.hbm %s3, %s363
          %s365 = sshll.u32 %s364, 4
          %s366 = int_to_ptr.hbm [resolvable:$true] %s365
          %s367 = sshll.u32 %s357, 4
          %s368 = int_to_ptr.vmem [resolvable:$true] %s367
          %373 = dma.hbm_to_vmem [thread:$0]  %s366, 49152, %s368, %s354, 1536, 384, 24
        $region48: #{tpu_custom_call.1} parent=43 // pred_fallthru
          _
      $region44: #{tpu_custom_call.1} parent=5 // pred_fallthru
        _
      %p374 = scmp.le.s32.totalorder 1, %s24
      %p375 = scmp.lt.s32.totalorder %s24, 5
      %p376 = pnand %p374, %p375
      %p377 = pneg %p376
      // Predicated region
      $region49: #{tpu_custom_call.1} parent=5 // pred_check
        _
      $region50: #{tpu_custom_call.1} parent=5 // pred_check_branch
        %379 = sbr.rel (%p376) target = $region52
      $region51: #{tpu_custom_call.1} parent=5 // pred_region
        %s380 = ssub.s32 %s24, 1
        // Predicated region
        $region53: #{tpu_custom_call.1} parent=51 // pred_check
          %p381 = pneg %p57
        $region54: #{tpu_custom_call.1} parent=51 // pred_check_branch
          %383 = sbr.rel (%p381) target = $region56
        $region55: #{tpu_custom_call.1} parent=51 // pred_region
          %385 = dma.done [#allocation4], 64
        $region56: #{tpu_custom_call.1} parent=51 // pred_fallthru
          _
        // Predicated region
        $region57: #{tpu_custom_call.1} parent=51 // pred_check
          %p386 = pneg %p78
        $region58: #{tpu_custom_call.1} parent=51 // pred_check_branch
          %388 = sbr.rel (%p386) target = $region60
        $region59: #{tpu_custom_call.1} parent=51 // pred_region
          %390 = dma.done [#allocation7], 16384
        $region60: #{tpu_custom_call.1} parent=51 // pred_fallthru
          _
        // Predicated region
        $region61: #{tpu_custom_call.1} parent=51 // pred_check
          %p391 = pneg %p99
        $region62: #{tpu_custom_call.1} parent=51 // pred_check_branch
          %393 = sbr.rel (%p391) target = $region64
        $region63: #{tpu_custom_call.1} parent=51 // pred_region
          %395 = dma.done [#allocation7], 65536
        $region64: #{tpu_custom_call.1} parent=51 // pred_fallthru
          _
        %s396 = sand.u32 %s29, 1
        %s397 = scalar_lea.sflag [#allocation10], %s396
        %s398 = sand.u32 %s116, 1
        %s399 = smul.addr %s398, 3072
        %s400 = scalar_lea.vmem [#allocation9], %s399
        // Predicated region
        $region65: #{tpu_custom_call.1} parent=51 // pred_check
          %p401 = pneg %p129
        $region66: #{tpu_custom_call.1} parent=51 // pred_check_branch
          %403 = sbr.rel (%p401) target = $region68
        $region67: #{tpu_custom_call.1} parent=51 // pred_region
          %405 = dma.done %s397, 49152
        $region68: #{tpu_custom_call.1} parent=51 // pred_fallthru
          _
        // Predicated region
        $region69: #{tpu_custom_call.1} parent=51 // pred_check
          %p406 = pneg %p150
        $region70: #{tpu_custom_call.1} parent=51 // pred_check_branch
          %408 = sbr.rel (%p406) target = $region72
        $region71: #{tpu_custom_call.1} parent=51 // pred_region
          %410 = dma.done [#allocation10], 128
        $region72: #{tpu_custom_call.1} parent=51 // pred_fallthru
          _
        // Predicated region
        $region73: #{tpu_custom_call.1} parent=51 // pred_check
          %p411 = pneg %p171
        $region74: #{tpu_custom_call.1} parent=51 // pred_check_branch
          %413 = sbr.rel (%p411) target = $region76
        $region75: #{tpu_custom_call.1} parent=51 // pred_region
          %415 = dma.done [#allocation13], 128
        $region76: #{tpu_custom_call.1} parent=51 // pred_fallthru
          _
        // Predicated region
        $region77: #{tpu_custom_call.1} parent=51 // pred_check
          %p416 = pneg %p192
        $region78: #{tpu_custom_call.1} parent=51 // pred_check_branch
          %418 = sbr.rel (%p416) target = $region80
        $region79: #{tpu_custom_call.1} parent=51 // pred_region
          %420 = dma.done [#allocation13], 128
        $region80: #{tpu_custom_call.1} parent=51 // pred_fallthru
          _
        // Predicated region
        $region81: #{tpu_custom_call.1} parent=51 // pred_check
          %p421 = pneg %p213
        $region82: #{tpu_custom_call.1} parent=51 // pred_check_branch
          %423 = sbr.rel (%p421) target = $region84
        $region83: #{tpu_custom_call.1} parent=51 // pred_region
          %425 = dma.done [#allocation16], 128
        $region84: #{tpu_custom_call.1} parent=51 // pred_fallthru
          _
        %p426 = pneg %p57
        %p427 = pneg %p54
        %p428 = pneg %p78
        %p429 = pneg %p75
        %p430 = pneg %p99
        %p431 = pneg %p96
        %s432 = sand.u32 %s29, 1
        %s433 = scalar_lea.sflag [#allocation10], %s432
        %s434 = sand.u32 %s116, 1
        %s435 = smul.addr %s434, 3072
        %s436 = scalar_lea.vmem [#allocation9], %s435
        %p437 = pneg %p129
        %p438 = pneg %p126
        %p439 = pneg %p150
        %p440 = pneg %p147
        %p441 = pneg %p171
        %p442 = pneg %p168
        %p443 = pneg %p192
        %p444 = pneg %p189
        %p445 = pneg %p213
        %p446 = pneg %p210
        %p447 = pneg %p243
        %p448 = pneg %p240
        %s449 = sand.u32 %s230, 1
        %s450 = scalar_lea.sflag [#allocation5], %s449
        %s451 = sand.u32 %s230, 1
        %s452 = smul.addr %s451, 24
        %s453 = scalar_lea.vmem [#allocation17], %s452
        %s454 = smul.u32 %s33, 4
        %s455 = sadd.s32 %s454, %s34
        %s456 = smul.u32 6, %s455
        %s457 = smul.u32 %s33, 4
        %s458 = sadd.s32 %s457, %s34
        %s459 = smul.u32 6, %s458
        %p460 = scmp.eq.s32.totalorder %s34, 0
        // Predicated region
        $region85: #{tpu_custom_call.1} parent=51 // pred_check
          %p461 = pneg %p460
        $region86: #{tpu_custom_call.1} parent=51 // pred_check_branch
          %463 = sbr.rel (%p461) target = $region88
        $region87: #{tpu_custom_call.1} parent=51 // pred_region
          %v464 = vld [vmem:[#allocation3] sm:$0xf]
          %v465 = vld [vmem:[#allocation6] sm:$0xff]
          %v466 = vld [vmem:[#allocation6 + $0x8] sm:$0xff]
          %v467 = vld [vmem:[#allocation6 + $0x10] sm:$0xff]
          %v468 = vld [vmem:[#allocation6 + $0x18] sm:$0xff]
          %v469 = vld [vmem:[#allocation6 + $0x20] sm:$0xff]
          %v470 = vld [vmem:[#allocation6 + $0x28] sm:$0xff]
          %v471 = vld [vmem:[#allocation6 + $0x30] sm:$0xff]
          %v472 = vld [vmem:[#allocation6 + $0x38] sm:$0xff]
          %v473 = vld [vmem:[#allocation6 + $0x40] sm:$0xff]
          %v474 = vld [vmem:[#allocation6 + $0x48] sm:$0xff]
          %v475 = vld [vmem:[#allocation6 + $0x50] sm:$0xff]
          %v476 = vld [vmem:[#allocation6 + $0x58] sm:$0xff]
          %v477 = vld [vmem:[#allocation6 + $0x60] sm:$0xff]
          %v478 = vld [vmem:[#allocation6 + $0x68] sm:$0xff]
          %v479 = vld [vmem:[#allocation6 + $0x70] sm:$0xff]
          %v480 = vld [vmem:[#allocation6 + $0x78] sm:$0xff]
          %v481 = vld [vmem:[#allocation6 + $0x80] sm:$0xff]
          %v482 = vld [vmem:[#allocation6 + $0x88] sm:$0xff]
          %v483 = vld [vmem:[#allocation6 + $0x90] sm:$0xff]
          %v484 = vld [vmem:[#allocation6 + $0x98] sm:$0xff]
          %v485 = vld [vmem:[#allocation6 + $0xa0] sm:$0xff]
          %v486 = vld [vmem:[#allocation6 + $0xa8] sm:$0xff]
          %v487 = vld [vmem:[#allocation6 + $0xb0] sm:$0xff]
          %v488 = vld [vmem:[#allocation6 + $0xb8] sm:$0xff]
          %v489 = vld [vmem:[#allocation6 + $0xc0] sm:$0xff]
          %v490 = vld [vmem:[#allocation6 + $0xc8] sm:$0xff]
          %v491 = vld [vmem:[#allocation6 + $0xd0] sm:$0xff]
          %v492 = vld [vmem:[#allocation6 + $0xd8] sm:$0xff]
          %v493 = vld [vmem:[#allocation6 + $0xe0] sm:$0xff]
          %v494 = vld [vmem:[#allocation6 + $0xe8] sm:$0xff]
          %v495 = vld [vmem:[#allocation6 + $0xf0] sm:$0xff]
          %v496 = vld [vmem:[#allocation6 + $0xf8] sm:$0xff]
          %v497 = vld [vmem:[#allocation6 + $0x100] sm:$0xff]
          %v498 = vld [vmem:[#allocation6 + $0x108] sm:$0xff]
          %v499 = vld [vmem:[#allocation6 + $0x110] sm:$0xff]
          %v500 = vld [vmem:[#allocation6 + $0x118] sm:$0xff]
          %v501 = vld [vmem:[#allocation6 + $0x120] sm:$0xff]
          %v502 = vld [vmem:[#allocation6 + $0x128] sm:$0xff]
          %v503 = vld [vmem:[#allocation6 + $0x130] sm:$0xff]
          %v504 = vld [vmem:[#allocation6 + $0x138] sm:$0xff]
          %v505 = vld [vmem:[#allocation6 + $0x140] sm:$0xff]
          %v506 = vld [vmem:[#allocation6 + $0x148] sm:$0xff]
          %v507 = vld [vmem:[#allocation6 + $0x150] sm:$0xff]
          %v508 = vld [vmem:[#allocation6 + $0x158] sm:$0xff]
          %v509 = vld [vmem:[#allocation6 + $0x160] sm:$0xff]
          %v510 = vld [vmem:[#allocation6 + $0x168] sm:$0xff]
          %v511 = vld [vmem:[#allocation6 + $0x170] sm:$0xff]
          %v512 = vld [vmem:[#allocation6 + $0x178] sm:$0xff]
          %v513 = vld [vmem:[#allocation6 + $0x180] sm:$0xff]
          %v514 = vld [vmem:[#allocation6 + $0x188] sm:$0xff]
          %v515 = vld [vmem:[#allocation6 + $0x190] sm:$0xff]
          %v516 = vld [vmem:[#allocation6 + $0x198] sm:$0xff]
          %v517 = vld [vmem:[#allocation6 + $0x1a0] sm:$0xff]
          %v518 = vld [vmem:[#allocation6 + $0x1a8] sm:$0xff]
          %v519 = vld [vmem:[#allocation6 + $0x1b0] sm:$0xff]
          %v520 = vld [vmem:[#allocation6 + $0x1b8] sm:$0xff]
          %v521 = vld [vmem:[#allocation6 + $0x1c0] sm:$0xff]
          %v522 = vld [vmem:[#allocation6 + $0x1c8] sm:$0xff]
          %v523 = vld [vmem:[#allocation6 + $0x1d0] sm:$0xff]
          %v524 = vld [vmem:[#allocation6 + $0x1d8] sm:$0xff]
          %v525 = vld [vmem:[#allocation6 + $0x1e0] sm:$0xff]
          %v526 = vld [vmem:[#allocation6 + $0x1e8] sm:$0xff]
          %v527 = vld [vmem:[#allocation6 + $0x1f0] sm:$0xff]
          %v528 = vld [vmem:[#allocation6 + $0x1f8] sm:$0xff]
          %v529 = vld [vmem:[#allocation6 + $0x200] sm:$0xff]
          %v530 = vld [vmem:[#allocation6 + $0x208] sm:$0xff]
          %v531 = vld [vmem:[#allocation6 + $0x210] sm:$0xff]
          %v532 = vld [vmem:[#allocation6 + $0x218] sm:$0xff]
          %v533 = vld [vmem:[#allocation6 + $0x220] sm:$0xff]
          %v534 = vld [vmem:[#allocation6 + $0x228] sm:$0xff]
          %v535 = vld [vmem:[#allocation6 + $0x230] sm:$0xff]
          %v536 = vld [vmem:[#allocation6 + $0x238] sm:$0xff]
          %v537 = vld [vmem:[#allocation6 + $0x240] sm:$0xff]
          %v538 = vld [vmem:[#allocation6 + $0x248] sm:$0xff]
          %v539 = vld [vmem:[#allocation6 + $0x250] sm:$0xff]
          %v540 = vld [vmem:[#allocation6 + $0x258] sm:$0xff]
          %v541 = vld [vmem:[#allocation6 + $0x260] sm:$0xff]
          %v542 = vld [vmem:[#allocation6 + $0x268] sm:$0xff]
          %v543 = vld [vmem:[#allocation6 + $0x270] sm:$0xff]
          %v544 = vld [vmem:[#allocation6 + $0x278] sm:$0xff]
          %v545 = vld [vmem:[#allocation6 + $0x280] sm:$0xff]
          %v546 = vld [vmem:[#allocation6 + $0x288] sm:$0xff]
          %v547 = vld [vmem:[#allocation6 + $0x290] sm:$0xff]
          %v548 = vld [vmem:[#allocation6 + $0x298] sm:$0xff]
          %v549 = vld [vmem:[#allocation6 + $0x2a0] sm:$0xff]
          %v550 = vld [vmem:[#allocation6 + $0x2a8] sm:$0xff]
          %v551 = vld [vmem:[#allocation6 + $0x2b0] sm:$0xff]
          %v552 = vld [vmem:[#allocation6 + $0x2b8] sm:$0xff]
          %v553 = vld [vmem:[#allocation6 + $0x2c0] sm:$0xff]
          %v554 = vld [vmem:[#allocation6 + $0x2c8] sm:$0xff]
          %v555 = vld [vmem:[#allocation6 + $0x2d0] sm:$0xff]
          %v556 = vld [vmem:[#allocation6 + $0x2d8] sm:$0xff]
          %v557 = vld [vmem:[#allocation6 + $0x2e0] sm:$0xff]
          %v558 = vld [vmem:[#allocation6 + $0x2e8] sm:$0xff]
          %v559 = vld [vmem:[#allocation6 + $0x2f0] sm:$0xff]
          %v560 = vld [vmem:[#allocation6 + $0x2f8] sm:$0xff]
          %v561 = vld [vmem:[#allocation6 + $0x300] sm:$0xff]
          %v562 = vld [vmem:[#allocation6 + $0x308] sm:$0xff]
          %v563 = vld [vmem:[#allocation6 + $0x310] sm:$0xff]
          %v564 = vld [vmem:[#allocation6 + $0x318] sm:$0xff]
          %v565 = vld [vmem:[#allocation6 + $0x320] sm:$0xff]
          %v566 = vld [vmem:[#allocation6 + $0x328] sm:$0xff]
          %v567 = vld [vmem:[#allocation6 + $0x330] sm:$0xff]
          %v568 = vld [vmem:[#allocation6 + $0x338] sm:$0xff]
          %v569 = vld [vmem:[#allocation6 + $0x340] sm:$0xff]
          %v570 = vld [vmem:[#allocation6 + $0x348] sm:$0xff]
          %v571 = vld [vmem:[#allocation6 + $0x350] sm:$0xff]
          %v572 = vld [vmem:[#allocation6 + $0x358] sm:$0xff]
          %v573 = vld [vmem:[#allocation6 + $0x360] sm:$0xff]
          %v574 = vld [vmem:[#allocation6 + $0x368] sm:$0xff]
          %v575 = vld [vmem:[#allocation6 + $0x370] sm:$0xff]
          %v576 = vld [vmem:[#allocation6 + $0x378] sm:$0xff]
          %v577 = vld [vmem:[#allocation6 + $0x380] sm:$0xff]
          %v578 = vld [vmem:[#allocation6 + $0x388] sm:$0xff]
          %v579 = vld [vmem:[#allocation6 + $0x390] sm:$0xff]
          %v580 = vld [vmem:[#allocation6 + $0x398] sm:$0xff]
          %v581 = vld [vmem:[#allocation6 + $0x3a0] sm:$0xff]
          %v582 = vld [vmem:[#allocation6 + $0x3a8] sm:$0xff]
          %v583 = vld [vmem:[#allocation6 + $0x3b0] sm:$0xff]
          %v584 = vld [vmem:[#allocation6 + $0x3b8] sm:$0xff]
          %v585 = vld [vmem:[#allocation6 + $0x3c0] sm:$0xff]
          %v586 = vld [vmem:[#allocation6 + $0x3c8] sm:$0xff]
          %v587 = vld [vmem:[#allocation6 + $0x3d0] sm:$0xff]
          %v588 = vld [vmem:[#allocation6 + $0x3d8] sm:$0xff]
          %v589 = vld [vmem:[#allocation6 + $0x3e0] sm:$0xff]
          %v590 = vld [vmem:[#allocation6 + $0x3e8] sm:$0xff]
          %v591 = vld [vmem:[#allocation6 + $0x3f0] sm:$0xff]
          %v592 = vld [vmem:[#allocation6 + $0x3f8] sm:$0xff]
          %594 = vst [vmem:[#allocation1] ss:$4 sm:$0xff] %v464
          %v595 = vld.sshfl [vmem:[#allocation1] sm:$0xff pattern:$0x73625140]
          %v596 = vld.sshfl [vmem:[#allocation1 + $0x8] sm:$0xff pattern:$0x73625140]
          %v727 = vunpack.c.l.b16 %v465
          %v728 = vunpack.c.h.b16 %v465
          %v729 = vunpack.c.l.b16 %v466
          %v730 = vunpack.c.h.b16 %v466
          %v731 = vunpack.c.l.b16 %v467
          %v732 = vunpack.c.h.b16 %v467
          %v733 = vunpack.c.l.b16 %v468
          %v734 = vunpack.c.h.b16 %v468
          %v735 = vunpack.c.l.b16 %v469
          %v736 = vunpack.c.h.b16 %v469
          %v737 = vunpack.c.l.b16 %v470
          %v738 = vunpack.c.h.b16 %v470
          %v739 = vunpack.c.l.b16 %v471
          %v740 = vunpack.c.h.b16 %v471
          %v741 = vunpack.c.l.b16 %v472
          %v742 = vunpack.c.h.b16 %v472
          %v743 = vunpack.c.l.b16 %v473
          %v744 = vunpack.c.h.b16 %v473
          %v745 = vunpack.c.l.b16 %v474
          %v746 = vunpack.c.h.b16 %v474
          %v747 = vunpack.c.l.b16 %v475
          %v748 = vunpack.c.h.b16 %v475
          %v749 = vunpack.c.l.b16 %v476
          %v750 = vunpack.c.h.b16 %v476
          %v751 = vunpack.c.l.b16 %v477
          %v752 = vunpack.c.h.b16 %v477
          %v753 = vunpack.c.l.b16 %v478
          %v754 = vunpack.c.h.b16 %v478
          %v755 = vunpack.c.l.b16 %v479
          %v756 = vunpack.c.h.b16 %v479
          %v757 = vunpack.c.l.b16 %v480
          %v758 = vunpack.c.h.b16 %v480
          %v759 = vunpack.c.l.b16 %v481
          %v760 = vunpack.c.h.b16 %v481
          %v761 = vunpack.c.l.b16 %v482
          %v762 = vunpack.c.h.b16 %v482
          %v763 = vunpack.c.l.b16 %v483
          %v764 = vunpack.c.h.b16 %v483
          %v765 = vunpack.c.l.b16 %v484
          %v766 = vunpack.c.h.b16 %v484
          %v767 = vunpack.c.l.b16 %v485
          %v768 = vunpack.c.h.b16 %v485
          %v769 = vunpack.c.l.b16 %v486
          %v770 = vunpack.c.h.b16 %v486
          %v771 = vunpack.c.l.b16 %v487
          %v772 = vunpack.c.h.b16 %v487
          %v773 = vunpack.c.l.b16 %v488
          %v774 = vunpack.c.h.b16 %v488
          %v775 = vunpack.c.l.b16 %v489
          %v776 = vunpack.c.h.b16 %v489
          %v777 = vunpack.c.l.b16 %v490
          %v778 = vunpack.c.h.b16 %v490
          %v779 = vunpack.c.l.b16 %v491
          %v780 = vunpack.c.h.b16 %v491
          %v781 = vunpack.c.l.b16 %v492
          %v782 = vunpack.c.h.b16 %v492
          %v783 = vunpack.c.l.b16 %v493
          %v784 = vunpack.c.h.b16 %v493
          %v785 = vunpack.c.l.b16 %v494
          %v786 = vunpack.c.h.b16 %v494
          %v787 = vunpack.c.l.b16 %v495
          %v788 = vunpack.c.h.b16 %v495
          %v789 = vunpack.c.l.b16 %v496
          %v790 = vunpack.c.h.b16 %v496
          %v791 = vunpack.c.l.b16 %v497
          %v792 = vunpack.c.h.b16 %v497
          %v793 = vunpack.c.l.b16 %v498
          %v794 = vunpack.c.h.b16 %v498
          %v795 = vunpack.c.l.b16 %v499
          %v796 = vunpack.c.h.b16 %v499
          %v797 = vunpack.c.l.b16 %v500
          %v798 = vunpack.c.h.b16 %v500
          %v799 = vunpack.c.l.b16 %v501
          %v800 = vunpack.c.h.b16 %v501
          %v801 = vunpack.c.l.b16 %v502
          %v802 = vunpack.c.h.b16 %v502
          %v803 = vunpack.c.l.b16 %v503
          %v804 = vunpack.c.h.b16 %v503
          %v805 = vunpack.c.l.b16 %v504
          %v806 = vunpack.c.h.b16 %v504
          %v807 = vunpack.c.l.b16 %v505
          %v808 = vunpack.c.h.b16 %v505
          %v809 = vunpack.c.l.b16 %v506
          %v810 = vunpack.c.h.b16 %v506
          %v811 = vunpack.c.l.b16 %v507
          %v812 = vunpack.c.h.b16 %v507
          %v813 = vunpack.c.l.b16 %v508
          %v814 = vunpack.c.h.b16 %v508
          %v815 = vunpack.c.l.b16 %v509
          %v816 = vunpack.c.h.b16 %v509
          %v817 = vunpack.c.l.b16 %v510
          %v818 = vunpack.c.h.b16 %v510
          %v819 = vunpack.c.l.b16 %v511
          %v820 = vunpack.c.h.b16 %v511
          %v821 = vunpack.c.l.b16 %v512
          %v822 = vunpack.c.h.b16 %v512
          %v823 = vunpack.c.l.b16 %v513
          %v824 = vunpack.c.h.b16 %v513
          %v825 = vunpack.c.l.b16 %v514
          %v826 = vunpack.c.h.b16 %v514
          %v827 = vunpack.c.l.b16 %v515
          %v828 = vunpack.c.h.b16 %v515
          %v829 = vunpack.c.l.b16 %v516
          %v830 = vunpack.c.h.b16 %v516
          %v831 = vunpack.c.l.b16 %v517
          %v832 = vunpack.c.h.b16 %v517
          %v833 = vunpack.c.l.b16 %v518
          %v834 = vunpack.c.h.b16 %v518
          %v835 = vunpack.c.l.b16 %v519
          %v836 = vunpack.c.h.b16 %v519
          %v837 = vunpack.c.l.b16 %v520
          %v838 = vunpack.c.h.b16 %v520
          %v839 = vunpack.c.l.b16 %v521
          %v840 = vunpack.c.h.b16 %v521
          %v841 = vunpack.c.l.b16 %v522
          %v842 = vunpack.c.h.b16 %v522
          %v843 = vunpack.c.l.b16 %v523
          %v844 = vunpack.c.h.b16 %v523
          %v845 = vunpack.c.l.b16 %v524
          %v846 = vunpack.c.h.b16 %v524
          %v847 = vunpack.c.l.b16 %v525
          %v848 = vunpack.c.h.b16 %v525
          %v849 = vunpack.c.l.b16 %v526
          %v850 = vunpack.c.h.b16 %v526
          %v851 = vunpack.c.l.b16 %v527
          %v852 = vunpack.c.h.b16 %v527
          %v853 = vunpack.c.l.b16 %v528
          %v854 = vunpack.c.h.b16 %v528
          %v855 = vunpack.c.l.b16 %v529
          %v856 = vunpack.c.h.b16 %v529
          %v857 = vunpack.c.l.b16 %v530
          %v858 = vunpack.c.h.b16 %v530
          %v859 = vunpack.c.l.b16 %v531
          %v860 = vunpack.c.h.b16 %v531
          %v861 = vunpack.c.l.b16 %v532
          %v862 = vunpack.c.h.b16 %v532
          %v863 = vunpack.c.l.b16 %v533
          %v864 = vunpack.c.h.b16 %v533
          %v865 = vunpack.c.l.b16 %v534
          %v866 = vunpack.c.h.b16 %v534
          %v867 = vunpack.c.l.b16 %v535
          %v868 = vunpack.c.h.b16 %v535
          %v869 = vunpack.c.l.b16 %v536
          %v870 = vunpack.c.h.b16 %v536
          %v871 = vunpack.c.l.b16 %v537
          %v872 = vunpack.c.h.b16 %v537
          %v873 = vunpack.c.l.b16 %v538
          %v874 = vunpack.c.h.b16 %v538
          %v875 = vunpack.c.l.b16 %v539
          %v876 = vunpack.c.h.b16 %v539
          %v877 = vunpack.c.l.b16 %v540
          %v878 = vunpack.c.h.b16 %v540
          %v879 = vunpack.c.l.b16 %v541
          %v880 = vunpack.c.h.b16 %v541
          %v881 = vunpack.c.l.b16 %v542
          %v882 = vunpack.c.h.b16 %v542
          %v883 = vunpack.c.l.b16 %v543
          %v884 = vunpack.c.h.b16 %v543
          %v885 = vunpack.c.l.b16 %v544
          %v886 = vunpack.c.h.b16 %v544
          %v887 = vunpack.c.l.b16 %v545
          %v888 = vunpack.c.h.b16 %v545
          %v889 = vunpack.c.l.b16 %v546
          %v890 = vunpack.c.h.b16 %v546
          %v891 = vunpack.c.l.b16 %v547
          %v892 = vunpack.c.h.b16 %v547
          %v893 = vunpack.c.l.b16 %v548
          %v894 = vunpack.c.h.b16 %v548
          %v895 = vunpack.c.l.b16 %v549
          %v896 = vunpack.c.h.b16 %v549
          %v897 = vunpack.c.l.b16 %v550
          %v898 = vunpack.c.h.b16 %v550
          %v899 = vunpack.c.l.b16 %v551
          %v900 = vunpack.c.h.b16 %v551
          %v901 = vunpack.c.l.b16 %v552
          %v902 = vunpack.c.h.b16 %v552
          %v903 = vunpack.c.l.b16 %v553
          %v904 = vunpack.c.h.b16 %v553
          %v905 = vunpack.c.l.b16 %v554
          %v906 = vunpack.c.h.b16 %v554
          %v907 = vunpack.c.l.b16 %v555
          %v908 = vunpack.c.h.b16 %v555
          %v909 = vunpack.c.l.b16 %v556
          %v910 = vunpack.c.h.b16 %v556
          %v911 = vunpack.c.l.b16 %v557
          %v912 = vunpack.c.h.b16 %v557
          %v913 = vunpack.c.l.b16 %v558
          %v914 = vunpack.c.h.b16 %v558
          %v915 = vunpack.c.l.b16 %v559
          %v916 = vunpack.c.h.b16 %v559
          %v917 = vunpack.c.l.b16 %v560
          %v918 = vunpack.c.h.b16 %v560
          %v919 = vunpack.c.l.b16 %v561
          %v920 = vunpack.c.h.b16 %v561
          %v921 = vunpack.c.l.b16 %v562
          %v922 = vunpack.c.h.b16 %v562
          %v923 = vunpack.c.l.b16 %v563
          %v924 = vunpack.c.h.b16 %v563
          %v925 = vunpack.c.l.b16 %v564
          %v926 = vunpack.c.h.b16 %v564
          %v927 = vunpack.c.l.b16 %v565
          %v928 = vunpack.c.h.b16 %v565
          %v929 = vunpack.c.l.b16 %v566
          %v930 = vunpack.c.h.b16 %v566
          %v931 = vunpack.c.l.b16 %v567
          %v932 = vunpack.c.h.b16 %v567
          %v933 = vunpack.c.l.b16 %v568
          %v934 = vunpack.c.h.b16 %v568
          %v935 = vunpack.c.l.b16 %v569
          %v936 = vunpack.c.h.b16 %v569
          %v937 = vunpack.c.l.b16 %v570
          %v938 = vunpack.c.h.b16 %v570
          %v939 = vunpack.c.l.b16 %v571
          %v940 = vunpack.c.h.b16 %v571
          %v941 = vunpack.c.l.b16 %v572
          %v942 = vunpack.c.h.b16 %v572
          %v943 = vunpack.c.l.b16 %v573
          %v944 = vunpack.c.h.b16 %v573
          %v945 = vunpack.c.l.b16 %v574
          %v946 = vunpack.c.h.b16 %v574
          %v947 = vunpack.c.l.b16 %v575
          %v948 = vunpack.c.h.b16 %v575
          %v949 = vunpack.c.l.b16 %v576
          %v950 = vunpack.c.h.b16 %v576
          %v951 = vunpack.c.l.b16 %v577
          %v952 = vunpack.c.h.b16 %v577
          %v953 = vunpack.c.l.b16 %v578
          %v954 = vunpack.c.h.b16 %v578
          %v955 = vunpack.c.l.b16 %v579
          %v956 = vunpack.c.h.b16 %v579
          %v957 = vunpack.c.l.b16 %v580
          %v958 = vunpack.c.h.b16 %v580
          %v959 = vunpack.c.l.b16 %v581
          %v960 = vunpack.c.h.b16 %v581
          %v961 = vunpack.c.l.b16 %v582
          %v962 = vunpack.c.h.b16 %v582
          %v963 = vunpack.c.l.b16 %v583
          %v964 = vunpack.c.h.b16 %v583
          %v965 = vunpack.c.l.b16 %v584
          %v966 = vunpack.c.h.b16 %v584
          %v967 = vunpack.c.l.b16 %v585
          %v968 = vunpack.c.h.b16 %v585
          %v969 = vunpack.c.l.b16 %v586
          %v970 = vunpack.c.h.b16 %v586
          %v971 = vunpack.c.l.b16 %v587
          %v972 = vunpack.c.h.b16 %v587
          %v973 = vunpack.c.l.b16 %v588
          %v974 = vunpack.c.h.b16 %v588
          %v975 = vunpack.c.l.b16 %v589
          %v976 = vunpack.c.h.b16 %v589
          %v977 = vunpack.c.l.b16 %v590
          %v978 = vunpack.c.h.b16 %v590
          %v979 = vunpack.c.l.b16 %v591
          %v980 = vunpack.c.h.b16 %v591
          %v981 = vunpack.c.l.b16 %v592
          %v982 = vunpack.c.h.b16 %v592
          %v983 = vpack.c.b16 %v735, %v727
          %v984 = vpack.c.b16 %v736, %v728
          %v985 = vpack.c.b16 %v737, %v729
          %v986 = vpack.c.b16 %v738, %v730
          %v987 = vpack.c.b16 %v739, %v731
          %v988 = vpack.c.b16 %v740, %v732
          %v989 = vpack.c.b16 %v741, %v733
          %v990 = vpack.c.b16 %v742, %v734
          %v991 = vpack.c.b16 %v751, %v743
          %v992 = vpack.c.b16 %v752, %v744
          %v993 = vpack.c.b16 %v753, %v745
          %v994 = vpack.c.b16 %v754, %v746
          %v995 = vpack.c.b16 %v755, %v747
          %v996 = vpack.c.b16 %v756, %v748
          %v997 = vpack.c.b16 %v757, %v749
          %v998 = vpack.c.b16 %v758, %v750
          %v999 = vpack.c.b16 %v767, %v759
          %v1000 = vpack.c.b16 %v768, %v760
          %v1001 = vpack.c.b16 %v769, %v761
          %v1002 = vpack.c.b16 %v770, %v762
          %v1003 = vpack.c.b16 %v771, %v763
          %v1004 = vpack.c.b16 %v772, %v764
          %v1005 = vpack.c.b16 %v773, %v765
          %v1006 = vpack.c.b16 %v774, %v766
          %v1007 = vpack.c.b16 %v783, %v775
          %v1008 = vpack.c.b16 %v784, %v776
          %v1009 = vpack.c.b16 %v785, %v777
          %v1010 = vpack.c.b16 %v786, %v778
          %v1011 = vpack.c.b16 %v787, %v779
          %v1012 = vpack.c.b16 %v788, %v780
          %v1013 = vpack.c.b16 %v789, %v781
          %v1014 = vpack.c.b16 %v790, %v782
          %v1015 = vpack.c.b16 %v799, %v791
          %v1016 = vpack.c.b16 %v800, %v792
          %v1017 = vpack.c.b16 %v801, %v793
          %v1018 = vpack.c.b16 %v802, %v794
          %v1019 = vpack.c.b16 %v803, %v795
          %v1020 = vpack.c.b16 %v804, %v796
          %v1021 = vpack.c.b16 %v805, %v797
          %v1022 = vpack.c.b16 %v806, %v798
          %v1023 = vpack.c.b16 %v815, %v807
          %v1024 = vpack.c.b16 %v816, %v808
          %v1025 = vpack.c.b16 %v817, %v809
          %v1026 = vpack.c.b16 %v818, %v810
          %v1027 = vpack.c.b16 %v819, %v811
          %v1028 = vpack.c.b16 %v820, %v812
          %v1029 = vpack.c.b16 %v821, %v813
          %v1030 = vpack.c.b16 %v822, %v814
          %v1031 = vpack.c.b16 %v831, %v823
          %v1032 = vpack.c.b16 %v832, %v824
          %v1033 = vpack.c.b16 %v833, %v825
          %v1034 = vpack.c.b16 %v834, %v826
          %v1035 = vpack.c.b16 %v835, %v827
          %v1036 = vpack.c.b16 %v836, %v828
          %v1037 = vpack.c.b16 %v837, %v829
          %v1038 = vpack.c.b16 %v838, %v830
          %v1039 = vpack.c.b16 %v847, %v839
          %v1040 = vpack.c.b16 %v848, %v840
          %v1041 = vpack.c.b16 %v849, %v841
          %v1042 = vpack.c.b16 %v850, %v842
          %v1043 = vpack.c.b16 %v851, %v843
          %v1044 = vpack.c.b16 %v852, %v844
          %v1045 = vpack.c.b16 %v853, %v845
          %v1046 = vpack.c.b16 %v854, %v846
          %v1047 = vpack.c.b16 %v863, %v855
          %v1048 = vpack.c.b16 %v864, %v856
          %v1049 = vpack.c.b16 %v865, %v857
          %v1050 = vpack.c.b16 %v866, %v858
          %v1051 = vpack.c.b16 %v867, %v859
          %v1052 = vpack.c.b16 %v868, %v860
          %v1053 = vpack.c.b16 %v869, %v861
          %v1054 = vpack.c.b16 %v870, %v862
          %v1055 = vpack.c.b16 %v879, %v871
          %v1056 = vpack.c.b16 %v880, %v872
          %v1057 = vpack.c.b16 %v881, %v873
          %v1058 = vpack.c.b16 %v882, %v874
          %v1059 = vpack.c.b16 %v883, %v875
          %v1060 = vpack.c.b16 %v884, %v876
          %v1061 = vpack.c.b16 %v885, %v877
          %v1062 = vpack.c.b16 %v886, %v878
          %v1063 = vpack.c.b16 %v895, %v887
          %v1064 = vpack.c.b16 %v896, %v888
          %v1065 = vpack.c.b16 %v897, %v889
          %v1066 = vpack.c.b16 %v898, %v890
          %v1067 = vpack.c.b16 %v899, %v891
          %v1068 = vpack.c.b16 %v900, %v892
          %v1069 = vpack.c.b16 %v901, %v893
          %v1070 = vpack.c.b16 %v902, %v894
          %v1071 = vpack.c.b16 %v911, %v903
          %v1072 = vpack.c.b16 %v912, %v904
          %v1073 = vpack.c.b16 %v913, %v905
          %v1074 = vpack.c.b16 %v914, %v906
          %v1075 = vpack.c.b16 %v915, %v907
          %v1076 = vpack.c.b16 %v916, %v908
          %v1077 = vpack.c.b16 %v917, %v909
          %v1078 = vpack.c.b16 %v918, %v910
          %v1079 = vpack.c.b16 %v927, %v919
          %v1080 = vpack.c.b16 %v928, %v920
          %v1081 = vpack.c.b16 %v929, %v921
          %v1082 = vpack.c.b16 %v930, %v922
          %v1083 = vpack.c.b16 %v931, %v923
          %v1084 = vpack.c.b16 %v932, %v924
          %v1085 = vpack.c.b16 %v933, %v925
          %v1086 = vpack.c.b16 %v934, %v926
          %v1087 = vpack.c.b16 %v943, %v935
          %v1088 = vpack.c.b16 %v944, %v936
          %v1089 = vpack.c.b16 %v945, %v937
          %v1090 = vpack.c.b16 %v946, %v938
          %v1091 = vpack.c.b16 %v947, %v939
          %v1092 = vpack.c.b16 %v948, %v940
          %v1093 = vpack.c.b16 %v949, %v941
          %v1094 = vpack.c.b16 %v950, %v942
          %v1095 = vpack.c.b16 %v959, %v951
          %v1096 = vpack.c.b16 %v960, %v952
          %v1097 = vpack.c.b16 %v961, %v953
          %v1098 = vpack.c.b16 %v962, %v954
          %v1099 = vpack.c.b16 %v963, %v955
          %v1100 = vpack.c.b16 %v964, %v956
          %v1101 = vpack.c.b16 %v965, %v957
          %v1102 = vpack.c.b16 %v966, %v958
          %v1103 = vpack.c.b16 %v975, %v967
          %v1104 = vpack.c.b16 %v976, %v968
          %v1105 = vpack.c.b16 %v977, %v969
          %v1106 = vpack.c.b16 %v978, %v970
          %v1107 = vpack.c.b16 %v979, %v971
          %v1108 = vpack.c.b16 %v980, %v972
          %v1109 = vpack.c.b16 %v981, %v973
          %v1110 = vpack.c.b16 %v982, %v974
          %1239 = vmatpush.bf16.msra.mxu0 %v1039
          %1240 = vmatpush.bf16.msra.mxu0 %v1031
          %1241 = vmatpush.bf16.msra.mxu0 %v1023
          %1242 = vmatpush.bf16.msra.mxu0 %v1015
          %1243 = vmatpush.bf16.msra.mxu0 %v1007
          %1244 = vmatpush.bf16.msra.mxu0 %v999
          %1245 = vmatpush.bf16.msra.mxu0 %v991
          %1246 = vmatpush.bf16.msra.mxu0 %v983
          %1247 = vmatmul.bf16.gmra.mxu0 %v595
          %v1248 = vpop.f32.mrf.mxu0
          %v1249 = vadd.f32 0.0, %v1248
          %v1250 = vpop.f32.mrf.mxu0
          %1251 = vdwg.mxu0
          %1252 = vmatpush.bf16.msra.mxu0 %v1103
          %1253 = vmatpush.bf16.msra.mxu0 %v1095
          %1254 = vmatpush.bf16.msra.mxu0 %v1087
          %1255 = vmatpush.bf16.msra.mxu0 %v1079
          %1256 = vmatpush.bf16.msra.mxu0 %v1071
          %1257 = vmatpush.bf16.msra.mxu0 %v1063
          %1258 = vmatpush.bf16.msra.mxu0 %v1055
          %1259 = vmatpush.bf16.msra.mxu0 %v1047
          %1260 = vmatmul.bf16.gmra.mxu0 %v596
          %v1261 = vpop.f32.mrf.mxu0
          %v1262 = vadd.f32 %v1249, %v1261
          %v1263 = vpop.f32.mrf.mxu0
          %1264 = vdwg.mxu0
          %1265 = vmatpush.bf16.msra.mxu0 %v1040
          %1266 = vmatpush.bf16.msra.mxu0 %v1032
          %1267 = vmatpush.bf16.msra.mxu0 %v1024
          %1268 = vmatpush.bf16.msra.mxu0 %v1016
          %1269 = vmatpush.bf16.msra.mxu0 %v1008
          %1270 = vmatpush.bf16.msra.mxu0 %v1000
          %1271 = vmatpush.bf16.msra.mxu0 %v992
          %1272 = vmatpush.bf16.msra.mxu0 %v984
          %1273 = vmatmul.bf16.gmra.mxu0 %v595
          %v1274 = vpop.f32.mrf.mxu0
          %v1275 = vadd.f32 0.0, %v1274
          %v1276 = vpop.f32.mrf.mxu0
          %1277 = vdwg.mxu0
          %1278 = vmatpush.bf16.msra.mxu0 %v1104
          %1279 = vmatpush.bf16.msra.mxu0 %v1096
          %1280 = vmatpush.bf16.msra.mxu0 %v1088
          %1281 = vmatpush.bf16.msra.mxu0 %v1080
          %1282 = vmatpush.bf16.msra.mxu0 %v1072
          %1283 = vmatpush.bf16.msra.mxu0 %v1064
          %1284 = vmatpush.bf16.msra.mxu0 %v1056
          %1285 = vmatpush.bf16.msra.mxu0 %v1048
          %1286 = vmatmul.bf16.gmra.mxu0 %v596
          %v1287 = vpop.f32.mrf.mxu0
          %v1288 = vadd.f32 %v1275, %v1287
          %v1289 = vpop.f32.mrf.mxu0
          %1290 = vdwg.mxu0
          %1291 = vmatpush.bf16.msra.mxu0 %v1041
          %1292 = vmatpush.bf16.msra.mxu0 %v1033
          %1293 = vmatpush.bf16.msra.mxu0 %v1025
          %1294 = vmatpush.bf16.msra.mxu0 %v1017
          %1295 = vmatpush.bf16.msra.mxu0 %v1009
          %1296 = vmatpush.bf16.msra.mxu0 %v1001
          %1297 = vmatpush.bf16.msra.mxu0 %v993
          %1298 = vmatpush.bf16.msra.mxu0 %v985
          %1299 = vmatmul.bf16.gmra.mxu0 %v595
          %v1300 = vpop.f32.mrf.mxu0
          %v1301 = vadd.f32 0.0, %v1300
          %v1302 = vpop.f32.mrf.mxu0
          %1303 = vdwg.mxu0
          %1304 = vmatpush.bf16.msra.mxu0 %v1105
          %1305 = vmatpush.bf16.msra.mxu0 %v1097
          %1306 = vmatpush.bf16.msra.mxu0 %v1089
          %1307 = vmatpush.bf16.msra.mxu0 %v1081
          %1308 = vmatpush.bf16.msra.mxu0 %v1073
          %1309 = vmatpush.bf16.msra.mxu0 %v1065
          %1310 = vmatpush.bf16.msra.mxu0 %v1057
          %1311 = vmatpush.bf16.msra.mxu0 %v1049
          %1312 = vmatmul.bf16.gmra.mxu0 %v596
          %v1313 = vpop.f32.mrf.mxu0
          %v1314 = vadd.f32 %v1301, %v1313
          %v1315 = vpop.f32.mrf.mxu0
          %1316 = vdwg.mxu0
          %1317 = vmatpush.bf16.msra.mxu0 %v1042
          %1318 = vmatpush.bf16.msra.mxu0 %v1034
          %1319 = vmatpush.bf16.msra.mxu0 %v1026
          %1320 = vmatpush.bf16.msra.mxu0 %v1018
          %1321 = vmatpush.bf16.msra.mxu0 %v1010
          %1322 = vmatpush.bf16.msra.mxu0 %v1002
          %1323 = vmatpush.bf16.msra.mxu0 %v994
          %1324 = vmatpush.bf16.msra.mxu0 %v986
          %1325 = vmatmul.bf16.gmra.mxu0 %v595
          %v1326 = vpop.f32.mrf.mxu0
          %v1327 = vadd.f32 0.0, %v1326
          %v1328 = vpop.f32.mrf.mxu0
          %1329 = vdwg.mxu0
          %1330 = vmatpush.bf16.msra.mxu0 %v1106
          %1331 = vmatpush.bf16.msra.mxu0 %v1098
          %1332 = vmatpush.bf16.msra.mxu0 %v1090
          %1333 = vmatpush.bf16.msra.mxu0 %v1082
          %1334 = vmatpush.bf16.msra.mxu0 %v1074
          %1335 = vmatpush.bf16.msra.mxu0 %v1066
          %1336 = vmatpush.bf16.msra.mxu0 %v1058
          %1337 = vmatpush.bf16.msra.mxu0 %v1050
          %1338 = vmatmul.bf16.gmra.mxu0 %v596
          %v1339 = vpop.f32.mrf.mxu0
          %v1340 = vadd.f32 %v1327, %v1339
          %v1341 = vpop.f32.mrf.mxu0
          %1342 = vdwg.mxu0
          %1343 = vmatpush.bf16.msra.mxu0 %v1043
          %1344 = vmatpush.bf16.msra.mxu0 %v1035
          %1345 = vmatpush.bf16.msra.mxu0 %v1027
          %1346 = vmatpush.bf16.msra.mxu0 %v1019
          %1347 = vmatpush.bf16.msra.mxu0 %v1011
          %1348 = vmatpush.bf16.msra.mxu0 %v1003
          %1349 = vmatpush.bf16.msra.mxu0 %v995
          %1350 = vmatpush.bf16.msra.mxu0 %v987
          %1351 = vmatmul.bf16.gmra.mxu0 %v595
          %v1352 = vpop.f32.mrf.mxu0
          %v1353 = vadd.f32 0.0, %v1352
          %v1354 = vpop.f32.mrf.mxu0
          %1355 = vdwg.mxu0
          %1356 = vmatpush.bf16.msra.mxu0 %v1107
          %1357 = vmatpush.bf16.msra.mxu0 %v1099
          %1358 = vmatpush.bf16.msra.mxu0 %v1091
          %1359 = vmatpush.bf16.msra.mxu0 %v1083
          %1360 = vmatpush.bf16.msra.mxu0 %v1075
          %1361 = vmatpush.bf16.msra.mxu0 %v1067
          %1362 = vmatpush.bf16.msra.mxu0 %v1059
          %1363 = vmatpush.bf16.msra.mxu0 %v1051
          %1364 = vmatmul.bf16.gmra.mxu0 %v596
          %v1365 = vpop.f32.mrf.mxu0
          %v1366 = vadd.f32 %v1353, %v1365
          %v1367 = vpop.f32.mrf.mxu0
          %1368 = vdwg.mxu0
          %1369 = vmatpush.bf16.msra.mxu0 %v1044
          %1370 = vmatpush.bf16.msra.mxu0 %v1036
          %1371 = vmatpush.bf16.msra.mxu0 %v1028
          %1372 = vmatpush.bf16.msra.mxu0 %v1020
          %1373 = vmatpush.bf16.msra.mxu0 %v1012
          %1374 = vmatpush.bf16.msra.mxu0 %v1004
          %1375 = vmatpush.bf16.msra.mxu0 %v996
          %1376 = vmatpush.bf16.msra.mxu0 %v988
          %1377 = vmatmul.bf16.gmra.mxu0 %v595
          %v1378 = vpop.f32.mrf.mxu0
          %v1379 = vadd.f32 0.0, %v1378
          %v1380 = vpop.f32.mrf.mxu0
          %1381 = vdwg.mxu0
          %1382 = vmatpush.bf16.msra.mxu0 %v1108
          %1383 = vmatpush.bf16.msra.mxu0 %v1100
          %1384 = vmatpush.bf16.msra.mxu0 %v1092
          %1385 = vmatpush.bf16.msra.mxu0 %v1084
          %1386 = vmatpush.bf16.msra.mxu0 %v1076
          %1387 = vmatpush.bf16.msra.mxu0 %v1068
          %1388 = vmatpush.bf16.msra.mxu0 %v1060
          %1389 = vmatpush.bf16.msra.mxu0 %v1052
          %1390 = vmatmul.bf16.gmra.mxu0 %v596
          %v1391 = vpop.f32.mrf.mxu0
          %v1392 = vadd.f32 %v1379, %v1391
          %v1393 = vpop.f32.mrf.mxu0
          %1394 = vdwg.mxu0
          %1395 = vmatpush.bf16.msra.mxu0 %v1045
          %1396 = vmatpush.bf16.msra.mxu0 %v1037
          %1397 = vmatpush.bf16.msra.mxu0 %v1029
          %1398 = vmatpush.bf16.msra.mxu0 %v1021
          %1399 = vmatpush.bf16.msra.mxu0 %v1013
          %1400 = vmatpush.bf16.msra.mxu0 %v1005
          %1401 = vmatpush.bf16.msra.mxu0 %v997
          %1402 = vmatpush.bf16.msra.mxu0 %v989
          %1403 = vmatmul.bf16.gmra.mxu0 %v595
          %v1404 = vpop.f32.mrf.mxu0
          %v1405 = vadd.f32 0.0, %v1404
          %v1406 = vpop.f32.mrf.mxu0
          %1407 = vdwg.mxu0
          %1408 = vmatpush.bf16.msra.mxu0 %v1109
          %1409 = vmatpush.bf16.msra.mxu0 %v1101
          %1410 = vmatpush.bf16.msra.mxu0 %v1093
          %1411 = vmatpush.bf16.msra.mxu0 %v1085
          %1412 = vmatpush.bf16.msra.mxu0 %v1077
          %1413 = vmatpush.bf16.msra.mxu0 %v1069
          %1414 = vmatpush.bf16.msra.mxu0 %v1061
          %1415 = vmatpush.bf16.msra.mxu0 %v1053
          %1416 = vmatmul.bf16.gmra.mxu0 %v596
          %v1417 = vpop.f32.mrf.mxu0
          %v1418 = vadd.f32 %v1405, %v1417
          %v1419 = vpop.f32.mrf.mxu0
          %1420 = vdwg.mxu0
          %1421 = vmatpush.bf16.msra.mxu0 %v1046
          %1422 = vmatpush.bf16.msra.mxu0 %v1038
          %1423 = vmatpush.bf16.msra.mxu0 %v1030
          %1424 = vmatpush.bf16.msra.mxu0 %v1022
          %1425 = vmatpush.bf16.msra.mxu0 %v1014
          %1426 = vmatpush.bf16.msra.mxu0 %v1006
          %1427 = vmatpush.bf16.msra.mxu0 %v998
          %1428 = vmatpush.bf16.msra.mxu0 %v990
          %1429 = vmatmul.bf16.gmra.mxu0 %v595
          %v1430 = vpop.f32.mrf.mxu0
          %v1431 = vadd.f32 0.0, %v1430
          %v1432 = vpop.f32.mrf.mxu0
          %1433 = vdwg.mxu0
          %1434 = vmatpush.bf16.msra.mxu0 %v1110
          %1435 = vmatpush.bf16.msra.mxu0 %v1102
          %1436 = vmatpush.bf16.msra.mxu0 %v1094
          %1437 = vmatpush.bf16.msra.mxu0 %v1086
          %1438 = vmatpush.bf16.msra.mxu0 %v1078
          %1439 = vmatpush.bf16.msra.mxu0 %v1070
          %1440 = vmatpush.bf16.msra.mxu0 %v1062
          %1441 = vmatpush.bf16.msra.mxu0 %v1054
          %1442 = vmatmul.bf16.gmra.mxu0 %v596
          %v1443 = vpop.f32.mrf.mxu0
          %v1444 = vadd.f32 %v1431, %v1443
          %v1445 = vpop.f32.mrf.mxu0
          %1446 = vdwg.mxu0
          %vm1447 = vcmask 1043456
          %v1448 = vsel %vm1447, %v1262, 0.0
          %v1449 = vrot.slane %v1448, 4
          %v1450 = vadd.f32 %v1448, %v1449
          %v1451 = vrot.slane %v1450, 2
          %v1452 = vadd.f32 %v1450, %v1451
          %v1453 = vrot.slane %v1452, 1
          %v1454 = vadd.f32 %v1452, %v1453
          %v1455 = vsel %vm1447, %v1288, 0.0
          %v1456 = vrot.slane %v1455, 4
          %v1457 = vadd.f32 %v1455, %v1456
          %v1458 = vrot.slane %v1457, 2
          %v1459 = vadd.f32 %v1457, %v1458
          %v1460 = vrot.slane %v1459, 1
          %v1461 = vadd.f32 %v1459, %v1460
          %v1462 = vsel %vm1447, %v1314, 0.0
          %v1463 = vrot.slane %v1462, 4
          %v1464 = vadd.f32 %v1462, %v1463
          %v1465 = vrot.slane %v1464, 2
          %v1466 = vadd.f32 %v1464, %v1465
          %v1467 = vrot.slane %v1466, 1
          %v1468 = vadd.f32 %v1466, %v1467
          %v1469 = vsel %vm1447, %v1340, 0.0
          %v1470 = vrot.slane %v1469, 4
          %v1471 = vadd.f32 %v1469, %v1470
          %v1472 = vrot.slane %v1471, 2
          %v1473 = vadd.f32 %v1471, %v1472
          %v1474 = vrot.slane %v1473, 1
          %v1475 = vadd.f32 %v1473, %v1474
          %v1476 = vsel %vm1447, %v1366, 0.0
          %v1477 = vrot.slane %v1476, 4
          %v1478 = vadd.f32 %v1476, %v1477
          %v1479 = vrot.slane %v1478, 2
          %v1480 = vadd.f32 %v1478, %v1479
          %v1481 = vrot.slane %v1480, 1
          %v1482 = vadd.f32 %v1480, %v1481
          %v1483 = vsel %vm1447, %v1392, 0.0
          %v1484 = vrot.slane %v1483, 4
          %v1485 = vadd.f32 %v1483, %v1484
          %v1486 = vrot.slane %v1485, 2
          %v1487 = vadd.f32 %v1485, %v1486
          %v1488 = vrot.slane %v1487, 1
          %v1489 = vadd.f32 %v1487, %v1488
          %v1490 = vsel %vm1447, %v1418, 0.0
          %v1491 = vrot.slane %v1490, 4
          %v1492 = vadd.f32 %v1490, %v1491
          %v1493 = vrot.slane %v1492, 2
          %v1494 = vadd.f32 %v1492, %v1493
          %v1495 = vrot.slane %v1494, 1
          %v1496 = vadd.f32 %v1494, %v1495
          %v1497 = vsel %vm1447, %v1444, 0.0
          %v1498 = vrot.slane %v1497, 4
          %v1499 = vadd.f32 %v1497, %v1498
          %v1500 = vrot.slane %v1499, 2
          %v1501 = vadd.f32 %v1499, %v1500
          %v1502 = vrot.slane %v1501, 1
          %v1503 = vadd.f32 %v1501, %v1502
          %v1504 = vrcp.pop 4.0
          %v1505 = vmul.f32 4.0, %v1504
          %v1506 = vsub.f32 1.0, %v1505
          %v1507 = vmul.f32 %v1504, %v1506
          %v1508 = vadd.f32 %v1504, %v1507
          %vm1509 = vweird.f32 %v1504
          %v1510 = vsel %vm1509, %v1504, %v1508
          %v1511 = vmul.f32 %v1454, %v1510
          %v1512 = vmul.f32 %v1461, %v1510
          %v1513 = vmul.f32 %v1468, %v1510
          %v1514 = vmul.f32 %v1475, %v1510
          %v1515 = vmul.f32 %v1482, %v1510
          %v1516 = vmul.f32 %v1489, %v1510
          %v1517 = vmul.f32 %v1496, %v1510
          %v1518 = vmul.f32 %v1503, %v1510
          %v1519 = vsub.f32 %v1262, %v1511
          %v1520 = vsub.f32 %v1288, %v1512
          %v1521 = vsub.f32 %v1314, %v1513
          %v1522 = vsub.f32 %v1340, %v1514
          %v1523 = vsub.f32 %v1366, %v1515
          %v1524 = vsub.f32 %v1392, %v1516
          %v1525 = vsub.f32 %v1418, %v1517
          %v1526 = vsub.f32 %v1444, %v1518
          %v1527 = vmul.f32 %v1519, %v1519
          %v1528 = vmul.f32 %v1520, %v1520
          %v1529 = vmul.f32 %v1521, %v1521
          %v1530 = vmul.f32 %v1522, %v1522
          %v1531 = vmul.f32 %v1523, %v1523
          %v1532 = vmul.f32 %v1524, %v1524
          %v1533 = vmul.f32 %v1525, %v1525
          %v1534 = vmul.f32 %v1526, %v1526
          %v1535 = vsel %vm1447, %v1527, 0.0
          %v1536 = vrot.slane %v1535, 4
          %v1537 = vadd.f32 %v1535, %v1536
          %v1538 = vrot.slane %v1537, 2
          %v1539 = vadd.f32 %v1537, %v1538
          %v1540 = vrot.slane %v1539, 1
          %v1541 = vadd.f32 %v1539, %v1540
          %v1542 = vsel %vm1447, %v1528, 0.0
          %v1543 = vrot.slane %v1542, 4
          %v1544 = vadd.f32 %v1542, %v1543
          %v1545 = vrot.slane %v1544, 2
          %v1546 = vadd.f32 %v1544, %v1545
          %v1547 = vrot.slane %v1546, 1
          %v1548 = vadd.f32 %v1546, %v1547
          %v1549 = vsel %vm1447, %v1529, 0.0
          %v1550 = vrot.slane %v1549, 4
          %v1551 = vadd.f32 %v1549, %v1550
          %v1552 = vrot.slane %v1551, 2
          %v1553 = vadd.f32 %v1551, %v1552
          %v1554 = vrot.slane %v1553, 1
          %v1555 = vadd.f32 %v1553, %v1554
          %v1556 = vsel %vm1447, %v1530, 0.0
          %v1557 = vrot.slane %v1556, 4
          %v1558 = vadd.f32 %v1556, %v1557
          %v1559 = vrot.slane %v1558, 2
          %v1560 = vadd.f32 %v1558, %v1559
          %v1561 = vrot.slane %v1560, 1
          %v1562 = vadd.f32 %v1560, %v1561
          %v1563 = vsel %vm1447, %v1531, 0.0
          %v1564 = vrot.slane %v1563, 4
          %v1565 = vadd.f32 %v1563, %v1564
          %v1566 = vrot.slane %v1565, 2
          %v1567 = vadd.f32 %v1565, %v1566
          %v1568 = vrot.slane %v1567, 1
          %v1569 = vadd.f32 %v1567, %v1568
          %v1570 = vsel %vm1447, %v1532, 0.0
          %v1571 = vrot.slane %v1570, 4
          %v1572 = vadd.f32 %v1570, %v1571
          %v1573 = vrot.slane %v1572, 2
          %v1574 = vadd.f32 %v1572, %v1573
          %v1575 = vrot.slane %v1574, 1
          %v1576 = vadd.f32 %v1574, %v1575
          %v1577 = vsel %vm1447, %v1533, 0.0
          %v1578 = vrot.slane %v1577, 4
          %v1579 = vadd.f32 %v1577, %v1578
          %v1580 = vrot.slane %v1579, 2
          %v1581 = vadd.f32 %v1579, %v1580
          %v1582 = vrot.slane %v1581, 1
          %v1583 = vadd.f32 %v1581, %v1582
          %v1584 = vsel %vm1447, %v1534, 0.0
          %v1585 = vrot.slane %v1584, 4
          %v1586 = vadd.f32 %v1584, %v1585
          %v1587 = vrot.slane %v1586, 2
          %v1588 = vadd.f32 %v1586, %v1587
          %v1589 = vrot.slane %v1588, 1
          %v1590 = vadd.f32 %v1588, %v1589
          %v1591 = vmul.f32 %v1541, %v1510
          %v1592 = vmul.f32 %v1548, %v1510
          %v1593 = vmul.f32 %v1555, %v1510
          %v1594 = vmul.f32 %v1562, %v1510
          %v1595 = vmul.f32 %v1569, %v1510
          %v1596 = vmul.f32 %v1576, %v1510
          %v1597 = vmul.f32 %v1583, %v1510
          %v1598 = vmul.f32 %v1590, %v1510
          %v1599 = vld [vmem:[#allocation11] sm:$0xff]
          %v1600 = vadd.f32 %v1591, 1e-05
          %v1601 = vadd.f32 %v1592, 1e-05
          %v1602 = vadd.f32 %v1593, 1e-05
          %v1603 = vadd.f32 %v1594, 1e-05
          %v1604 = vadd.f32 %v1595, 1e-05
          %v1605 = vadd.f32 %v1596, 1e-05
          %v1606 = vadd.f32 %v1597, 1e-05
          %v1607 = vadd.f32 %v1598, 1e-05
          %v1608 = vrsqrt.pop %v1600
          %v1609 = vmul.f32 %v1608, %v1600
          %v1610 = vmul.f32 %v1609, %v1608
          %v1611 = vmul.f32 0.5, %v1610
          %v1612 = vsub.f32 1.5, %v1611
          %v1613 = vmul.f32 %v1608, %v1612
          %vm1614 = vweird.f32 %v1600
          %vm1615 = vweird.f32 %v1608
          %vm1616 = vmor %vm1614, %vm1615
          %v1617 = vsel %vm1616, %v1608, %v1613
          %v1618 = vrsqrt.pop %v1601
          %v1619 = vmul.f32 %v1618, %v1601
          %v1620 = vmul.f32 %v1619, %v1618
          %v1621 = vmul.f32 0.5, %v1620
          %v1622 = vsub.f32 1.5, %v1621
          %v1623 = vmul.f32 %v1618, %v1622
          %vm1624 = vweird.f32 %v1601
          %vm1625 = vweird.f32 %v1618
          %vm1626 = vmor %vm1624, %vm1625
          %v1627 = vsel %vm1626, %v1618, %v1623
          %v1628 = vrsqrt.pop %v1602
          %v1629 = vmul.f32 %v1628, %v1602
          %v1630 = vmul.f32 %v1629, %v1628
          %v1631 = vmul.f32 0.5, %v1630
          %v1632 = vsub.f32 1.5, %v1631
          %v1633 = vmul.f32 %v1628, %v1632
          %vm1634 = vweird.f32 %v1602
          %vm1635 = vweird.f32 %v1628
          %vm1636 = vmor %vm1634, %vm1635
          %v1637 = vsel %vm1636, %v1628, %v1633
          %v1638 = vrsqrt.pop %v1603
          %v1639 = vmul.f32 %v1638, %v1603
          %v1640 = vmul.f32 %v1639, %v1638
          %v1641 = vmul.f32 0.5, %v1640
          %v1642 = vsub.f32 1.5, %v1641
          %v1643 = vmul.f32 %v1638, %v1642
          %vm1644 = vweird.f32 %v1603
          %vm1645 = vweird.f32 %v1638
          %vm1646 = vmor %vm1644, %vm1645
          %v1647 = vsel %vm1646, %v1638, %v1643
          %v1648 = vrsqrt.pop %v1604
          %v1649 = vmul.f32 %v1648, %v1604
          %v1650 = vmul.f32 %v1649, %v1648
          %v1651 = vmul.f32 0.5, %v1650
          %v1652 = vsub.f32 1.5, %v1651
          %v1653 = vmul.f32 %v1648, %v1652
          %vm1654 = vweird.f32 %v1604
          %vm1655 = vweird.f32 %v1648
          %vm1656 = vmor %vm1654, %vm1655
          %v1657 = vsel %vm1656, %v1648, %v1653
          %v1658 = vrsqrt.pop %v1605
          %v1659 = vmul.f32 %v1658, %v1605
          %v1660 = vmul.f32 %v1659, %v1658
          %v1661 = vmul.f32 0.5, %v1660
          %v1662 = vsub.f32 1.5, %v1661
          %v1663 = vmul.f32 %v1658, %v1662
          %vm1664 = vweird.f32 %v1605
          %vm1665 = vweird.f32 %v1658
          %vm1666 = vmor %vm1664, %vm1665
          %v1667 = vsel %vm1666, %v1658, %v1663
          %v1668 = vrsqrt.pop %v1606
          %v1669 = vmul.f32 %v1668, %v1606
          %v1670 = vmul.f32 %v1669, %v1668
          %v1671 = vmul.f32 0.5, %v1670
          %v1672 = vsub.f32 1.5, %v1671
          %v1673 = vmul.f32 %v1668, %v1672
          %vm1674 = vweird.f32 %v1606
          %vm1675 = vweird.f32 %v1668
          %vm1676 = vmor %vm1674, %vm1675
          %v1677 = vsel %vm1676, %v1668, %v1673
          %v1678 = vrsqrt.pop %v1607
          %v1679 = vmul.f32 %v1678, %v1607
          %v1680 = vmul.f32 %v1679, %v1678
          %v1681 = vmul.f32 0.5, %v1680
          %v1682 = vsub.f32 1.5, %v1681
          %v1683 = vmul.f32 %v1678, %v1682
          %vm1684 = vweird.f32 %v1607
          %vm1685 = vweird.f32 %v1678
          %vm1686 = vmor %vm1684, %vm1685
          %v1687 = vsel %vm1686, %v1678, %v1683
          %v1696 = vrot.slane %v1627, 7
          %v1697 = vrot.slane %v1637, 6
          %v1698 = vrot.slane %v1647, 5
          %v1699 = vrot.slane %v1657, 4
          %v1700 = vrot.slane %v1667, 3
          %v1701 = vrot.slane %v1677, 2
          %v1702 = vrot.slane %v1687, 1
          %vm1703 = vcmask 1040384
          %v1704 = vsel %vm1703, %v1617, %v1696
          %vm1705 = vcmask 1042434
          %v1706 = vsel %vm1705, %v1697, %v1698
          %vm1707 = vcmask 1041408
          %v1708 = vsel %vm1707, %v1704, %v1706
          %vm1709 = vcmask 1044484
          %v1710 = vsel %vm1709, %v1699, %v1700
          %vm1711 = vcmask 1046534
          %v1712 = vsel %vm1711, %v1701, %v1702
          %vm1713 = vcmask 1045508
          %v1714 = vsel %vm1713, %v1710, %v1712
          %v1715 = vsel %vm1447, %v1708, %v1714
          %v1717 = vmul.f32 %v1599, %v1715
          %v1719 = vperm.slane %v1717, 0
          %v1720 = vperm.slane %v1717, 1
          %v1721 = vperm.slane %v1717, 2
          %v1722 = vperm.slane %v1717, 3
          %v1723 = vperm.slane %v1717, 4
          %v1724 = vperm.slane %v1717, 5
          %v1725 = vperm.slane %v1717, 6
          %v1726 = vperm.slane %v1717, 7
          %v1735 = vmul.f32 %v1519, %v1719
          %v1736 = vmul.f32 %v1520, %v1720
          %v1737 = vmul.f32 %v1521, %v1721
          %v1738 = vmul.f32 %v1522, %v1722
          %v1739 = vmul.f32 %v1523, %v1723
          %v1740 = vmul.f32 %v1524, %v1724
          %v1741 = vmul.f32 %v1525, %v1725
          %v1742 = vmul.f32 %v1526, %v1726
          %v1743 = vld [vmem:[#allocation12] sm:$0xff]
          %v1745 = vperm.slane %v1743, 0
          %v1746 = vperm.slane %v1743, 1
          %v1747 = vperm.slane %v1743, 2
          %v1748 = vperm.slane %v1743, 3
          %v1749 = vperm.slane %v1743, 4
          %v1750 = vperm.slane %v1743, 5
          %v1751 = vperm.slane %v1743, 6
          %v1752 = vperm.slane %v1743, 7
          %v1761 = vadd.f32 %v1735, %v1745
          %v1762 = vadd.f32 %v1736, %v1746
          %v1763 = vadd.f32 %v1737, %v1747
          %v1764 = vadd.f32 %v1738, %v1748
          %v1765 = vadd.f32 %v1739, %v1749
          %v1766 = vadd.f32 %v1740, %v1750
          %v1767 = vadd.f32 %v1741, %v1751
          %v1768 = vadd.f32 %v1742, %v1752
          %v1769 = vmax.f32 %v1761, 0.0
          %v1770 = vmax.f32 %v1762, 0.0
          %v1771 = vmax.f32 %v1763, 0.0
          %v1772 = vmax.f32 %v1764, 0.0
          %v1773 = vmax.f32 %v1765, 0.0
          %v1774 = vmax.f32 %v1766, 0.0
          %v1775 = vmax.f32 %v1767, 0.0
          %v1776 = vmax.f32 %v1768, 0.0
          %v1777 = vpack.c.bf16 %v1769, %v1769
          %v1778 = vpack.c.bf16 %v1770, %v1770
          %v1779 = vpack.c.bf16 %v1771, %v1771
          %v1780 = vpack.c.bf16 %v1772, %v1772
          %v1781 = vpack.c.bf16 %v1773, %v1773
          %v1782 = vpack.c.bf16 %v1774, %v1774
          %v1783 = vpack.c.bf16 %v1775, %v1775
          %v1784 = vpack.c.bf16 %v1776, %v1776
          %v1785 = vld [vmem:[#allocation8] sm:$0xff]
          %v1786 = vld [vmem:[#allocation8 + $0x8] sm:$0xff]
          %v1787 = vld [vmem:[#allocation8 + $0x10] sm:$0xff]
          %v1788 = vld [vmem:[#allocation8 + $0x18] sm:$0xff]
          %v1789 = vld [vmem:[#allocation8 + $0x20] sm:$0xff]
          %v1790 = vld [vmem:[#allocation8 + $0x28] sm:$0xff]
          %v1791 = vld [vmem:[#allocation8 + $0x30] sm:$0xff]
          %v1792 = vld [vmem:[#allocation8 + $0x38] sm:$0xff]
          %v1793 = vld [vmem:[#allocation8 + $0x40] sm:$0xff]
          %v1794 = vld [vmem:[#allocation8 + $0x48] sm:$0xff]
          %v1795 = vld [vmem:[#allocation8 + $0x50] sm:$0xff]
          %v1796 = vld [vmem:[#allocation8 + $0x58] sm:$0xff]
          %v1797 = vld [vmem:[#allocation8 + $0x60] sm:$0xff]
          %v1798 = vld [vmem:[#allocation8 + $0x68] sm:$0xff]
          %v1799 = vld [vmem:[#allocation8 + $0x70] sm:$0xff]
          %v1800 = vld [vmem:[#allocation8 + $0x78] sm:$0xff]
          %v1801 = vld [vmem:[#allocation8 + $0x80] sm:$0xff]
          %v1802 = vld [vmem:[#allocation8 + $0x88] sm:$0xff]
          %v1803 = vld [vmem:[#allocation8 + $0x90] sm:$0xff]
          %v1804 = vld [vmem:[#allocation8 + $0x98] sm:$0xff]
          %v1805 = vld [vmem:[#allocation8 + $0xa0] sm:$0xff]
          %v1806 = vld [vmem:[#allocation8 + $0xa8] sm:$0xff]
          %v1807 = vld [vmem:[#allocation8 + $0xb0] sm:$0xff]
          %v1808 = vld [vmem:[#allocation8 + $0xb8] sm:$0xff]
          %v1809 = vld [vmem:[#allocation8 + $0xc0] sm:$0xff]
          %v1810 = vld [vmem:[#allocation8 + $0xc8] sm:$0xff]
          %v1811 = vld [vmem:[#allocation8 + $0xd0] sm:$0xff]
          %v1812 = vld [vmem:[#allocation8 + $0xd8] sm:$0xff]
          %v1813 = vld [vmem:[#allocation8 + $0xe0] sm:$0xff]
          %v1814 = vld [vmem:[#allocation8 + $0xe8] sm:$0xff]
          %v1815 = vld [vmem:[#allocation8 + $0xf0] sm:$0xff]
          %v1816 = vld [vmem:[#allocation8 + $0xf8] sm:$0xff]
          %v1817 = vld [vmem:[#allocation8 + $0x100] sm:$0xff]
          %v1818 = vld [vmem:[#allocation8 + $0x108] sm:$0xff]
          %v1819 = vld [vmem:[#allocation8 + $0x110] sm:$0xff]
          %v1820 = vld [vmem:[#allocation8 + $0x118] sm:$0xff]
          %v1821 = vld [vmem:[#allocation8 + $0x120] sm:$0xff]
          %v1822 = vld [vmem:[#allocation8 + $0x128] sm:$0xff]
          %v1823 = vld [vmem:[#allocation8 + $0x130] sm:$0xff]
          %v1824 = vld [vmem:[#allocation8 + $0x138] sm:$0xff]
          %v1825 = vld [vmem:[#allocation8 + $0x140] sm:$0xff]
          %v1826 = vld [vmem:[#allocation8 + $0x148] sm:$0xff]
          %v1827 = vld [vmem:[#allocation8 + $0x150] sm:$0xff]
          %v1828 = vld [vmem:[#allocation8 + $0x158] sm:$0xff]
          %v1829 = vld [vmem:[#allocation8 + $0x160] sm:$0xff]
          %v1830 = vld [vmem:[#allocation8 + $0x168] sm:$0xff]
          %v1831 = vld [vmem:[#allocation8 + $0x170] sm:$0xff]
          %v1832 = vld [vmem:[#allocation8 + $0x178] sm:$0xff]
          %v1833 = vld [vmem:[#allocation8 + $0x180] sm:$0xff]
          %v1834 = vld [vmem:[#allocation8 + $0x188] sm:$0xff]
          %v1835 = vld [vmem:[#allocation8 + $0x190] sm:$0xff]
          %v1836 = vld [vmem:[#allocation8 + $0x198] sm:$0xff]
          %v1837 = vld [vmem:[#allocation8 + $0x1a0] sm:$0xff]
          %v1838 = vld [vmem:[#allocation8 + $0x1a8] sm:$0xff]
          %v1839 = vld [vmem:[#allocation8 + $0x1b0] sm:$0xff]
          %v1840 = vld [vmem:[#allocation8 + $0x1b8] sm:$0xff]
          %v1841 = vld [vmem:[#allocation8 + $0x1c0] sm:$0xff]
          %v1842 = vld [vmem:[#allocation8 + $0x1c8] sm:$0xff]
          %v1843 = vld [vmem:[#allocation8 + $0x1d0] sm:$0xff]
          %v1844 = vld [vmem:[#allocation8 + $0x1d8] sm:$0xff]
          %v1845 = vld [vmem:[#allocation8 + $0x1e0] sm:$0xff]
          %v1846 = vld [vmem:[#allocation8 + $0x1e8] sm:$0xff]
          %v1847 = vld [vmem:[#allocation8 + $0x1f0] sm:$0xff]
          %v1848 = vld [vmem:[#allocation8 + $0x1f8] sm:$0xff]
          %v1849 = vld [vmem:[#allocation8 + $0x200] sm:$0xff]
          %v1850 = vld [vmem:[#allocation8 + $0x208] sm:$0xff]
          %v1851 = vld [vmem:[#allocation8 + $0x210] sm:$0xff]
          %v1852 = vld [vmem:[#allocation8 + $0x218] sm:$0xff]
          %v1853 = vld [vmem:[#allocation8 + $0x220] sm:$0xff]
          %v1854 = vld [vmem:[#allocation8 + $0x228] sm:$0xff]
          %v1855 = vld [vmem:[#allocation8 + $0x230] sm:$0xff]
          %v1856 = vld [vmem:[#allocation8 + $0x238] sm:$0xff]
          %v1857 = vld [vmem:[#allocation8 + $0x240] sm:$0xff]
          %v1858 = vld [vmem:[#allocation8 + $0x248] sm:$0xff]
          %v1859 = vld [vmem:[#allocation8 + $0x250] sm:$0xff]
          %v1860 = vld [vmem:[#allocation8 + $0x258] sm:$0xff]
          %v1861 = vld [vmem:[#allocation8 + $0x260] sm:$0xff]
          %v1862 = vld [vmem:[#allocation8 + $0x268] sm:$0xff]
          %v1863 = vld [vmem:[#allocation8 + $0x270] sm:$0xff]
          %v1864 = vld [vmem:[#allocation8 + $0x278] sm:$0xff]
          %v1865 = vld [vmem:[#allocation8 + $0x280] sm:$0xff]
          %v1866 = vld [vmem:[#allocation8 + $0x288] sm:$0xff]
          %v1867 = vld [vmem:[#allocation8 + $0x290] sm:$0xff]
          %v1868 = vld [vmem:[#allocation8 + $0x298] sm:$0xff]
          %v1869 = vld [vmem:[#allocation8 + $0x2a0] sm:$0xff]
          %v1870 = vld [vmem:[#allocation8 + $0x2a8] sm:$0xff]
          %v1871 = vld [vmem:[#allocation8 + $0x2b0] sm:$0xff]
          %v1872 = vld [vmem:[#allocation8 + $0x2b8] sm:$0xff]
          %v1873 = vld [vmem:[#allocation8 + $0x2c0] sm:$0xff]
          %v1874 = vld [vmem:[#allocation8 + $0x2c8] sm:$0xff]
          %v1875 = vld [vmem:[#allocation8 + $0x2d0] sm:$0xff]
          %v1876 = vld [vmem:[#allocation8 + $0x2d8] sm:$0xff]
          %v1877 = vld [vmem:[#allocation8 + $0x2e0] sm:$0xff]
          %v1878 = vld [vmem:[#allocation8 + $0x2e8] sm:$0xff]
          %v1879 = vld [vmem:[#allocation8 + $0x2f0] sm:$0xff]
          %v1880 = vld [vmem:[#allocation8 + $0x2f8] sm:$0xff]
          %v1881 = vld [vmem:[#allocation8 + $0x300] sm:$0xff]
          %v1882 = vld [vmem:[#allocation8 + $0x308] sm:$0xff]
          %v1883 = vld [vmem:[#allocation8 + $0x310] sm:$0xff]
          %v1884 = vld [vmem:[#allocation8 + $0x318] sm:$0xff]
          %v1885 = vld [vmem:[#allocation8 + $0x320] sm:$0xff]
          %v1886 = vld [vmem:[#allocation8 + $0x328] sm:$0xff]
          %v1887 = vld [vmem:[#allocation8 + $0x330] sm:$0xff]
          %v1888 = vld [vmem:[#allocation8 + $0x338] sm:$0xff]
          %v1889 = vld [vmem:[#allocation8 + $0x340] sm:$0xff]
          %v1890 = vld [vmem:[#allocation8 + $0x348] sm:$0xff]
          %v1891 = vld [vmem:[#allocation8 + $0x350] sm:$0xff]
          %v1892 = vld [vmem:[#allocation8 + $0x358] sm:$0xff]
          %v1893 = vld [vmem:[#allocation8 + $0x360] sm:$0xff]
          %v1894 = vld [vmem:[#allocation8 + $0x368] sm:$0xff]
          %v1895 = vld [vmem:[#allocation8 + $0x370] sm:$0xff]
          %v1896 = vld [vmem:[#allocation8 + $0x378] sm:$0xff]
          %v1897 = vld [vmem:[#allocation8 + $0x380] sm:$0xff]
          %v1898 = vld [vmem:[#allocation8 + $0x388] sm:$0xff]
          %v1899 = vld [vmem:[#allocation8 + $0x390] sm:$0xff]
          %v1900 = vld [vmem:[#allocation8 + $0x398] sm:$0xff]
          %v1901 = vld [vmem:[#allocation8 + $0x3a0] sm:$0xff]
          %v1902 = vld [vmem:[#allocation8 + $0x3a8] sm:$0xff]
          %v1903 = vld [vmem:[#allocation8 + $0x3b0] sm:$0xff]
          %v1904 = vld [vmem:[#allocation8 + $0x3b8] sm:$0xff]
          %v1905 = vld [vmem:[#allocation8 + $0x3c0] sm:$0xff]
          %v1906 = vld [vmem:[#allocation8 + $0x3c8] sm:$0xff]
          %v1907 = vld [vmem:[#allocation8 + $0x3d0] sm:$0xff]
          %v1908 = vld [vmem:[#allocation8 + $0x3d8] sm:$0xff]
          %v1909 = vld [vmem:[#allocation8 + $0x3e0] sm:$0xff]
          %v1910 = vld [vmem:[#allocation8 + $0x3e8] sm:$0xff]
          %v1911 = vld [vmem:[#allocation8 + $0x3f0] sm:$0xff]
          %v1912 = vld [vmem:[#allocation8 + $0x3f8] sm:$0xff]
          %v1913 = vld [vmem:[#allocation8 + $0x400] sm:$0xff]
          %v1914 = vld [vmem:[#allocation8 + $0x408] sm:$0xff]
          %v1915 = vld [vmem:[#allocation8 + $0x410] sm:$0xff]
          %v1916 = vld [vmem:[#allocation8 + $0x418] sm:$0xff]
          %v1917 = vld [vmem:[#allocation8 + $0x420] sm:$0xff]
          %v1918 = vld [vmem:[#allocation8 + $0x428] sm:$0xff]
          %v1919 = vld [vmem:[#allocation8 + $0x430] sm:$0xff]
          %v1920 = vld [vmem:[#allocation8 + $0x438] sm:$0xff]
          %v1921 = vld [vmem:[#allocation8 + $0x440] sm:$0xff]
          %v1922 = vld [vmem:[#allocation8 + $0x448] sm:$0xff]
          %v1923 = vld [vmem:[#allocation8 + $0x450] sm:$0xff]
          %v1924 = vld [vmem:[#allocation8 + $0x458] sm:$0xff]
          %v1925 = vld [vmem:[#allocation8 + $0x460] sm:$0xff]
          %v1926 = vld [vmem:[#allocation8 + $0x468] sm:$0xff]
          %v1927 = vld [vmem:[#allocation8 + $0x470] sm:$0xff]
          %v1928 = vld [vmem:[#allocation8 + $0x478] sm:$0xff]
          %v1929 = vld [vmem:[#allocation8 + $0x480] sm:$0xff]
          %v1930 = vld [vmem:[#allocation8 + $0x488] sm:$0xff]
          %v1931 = vld [vmem:[#allocation8 + $0x490] sm:$0xff]
          %v1932 = vld [vmem:[#allocation8 + $0x498] sm:$0xff]
          %v1933 = vld [vmem:[#allocation8 + $0x4a0] sm:$0xff]
          %v1934 = vld [vmem:[#allocation8 + $0x4a8] sm:$0xff]
          %v1935 = vld [vmem:[#allocation8 + $0x4b0] sm:$0xff]
          %v1936 = vld [vmem:[#allocation8 + $0x4b8] sm:$0xff]
          %v1937 = vld [vmem:[#allocation8 + $0x4c0] sm:$0xff]
          %v1938 = vld [vmem:[#allocation8 + $0x4c8] sm:$0xff]
          %v1939 = vld [vmem:[#allocation8 + $0x4d0] sm:$0xff]
          %v1940 = vld [vmem:[#allocation8 + $0x4d8] sm:$0xff]
          %v1941 = vld [vmem:[#allocation8 + $0x4e0] sm:$0xff]
          %v1942 = vld [vmem:[#allocation8 + $0x4e8] sm:$0xff]
          %v1943 = vld [vmem:[#allocation8 + $0x4f0] sm:$0xff]
          %v1944 = vld [vmem:[#allocation8 + $0x4f8] sm:$0xff]
          %v1945 = vld [vmem:[#allocation8 + $0x500] sm:$0xff]
          %v1946 = vld [vmem:[#allocation8 + $0x508] sm:$0xff]
          %v1947 = vld [vmem:[#allocation8 + $0x510] sm:$0xff]
          %v1948 = vld [vmem:[#allocation8 + $0x518] sm:$0xff]
          %v1949 = vld [vmem:[#allocation8 + $0x520] sm:$0xff]
          %v1950 = vld [vmem:[#allocation8 + $0x528] sm:$0xff]
          %v1951 = vld [vmem:[#allocation8 + $0x530] sm:$0xff]
          %v1952 = vld [vmem:[#allocation8 + $0x538] sm:$0xff]
          %v1953 = vld [vmem:[#allocation8 + $0x540] sm:$0xff]
          %v1954 = vld [vmem:[#allocation8 + $0x548] sm:$0xff]
          %v1955 = vld [vmem:[#allocation8 + $0x550] sm:$0xff]
          %v1956 = vld [vmem:[#allocation8 + $0x558] sm:$0xff]
          %v1957 = vld [vmem:[#allocation8 + $0x560] sm:$0xff]
          %v1958 = vld [vmem:[#allocation8 + $0x568] sm:$0xff]
          %v1959 = vld [vmem:[#allocation8 + $0x570] sm:$0xff]
          %v1960 = vld [vmem:[#allocation8 + $0x578] sm:$0xff]
          %v1961 = vld [vmem:[#allocation8 + $0x580] sm:$0xff]
          %v1962 = vld [vmem:[#allocation8 + $0x588] sm:$0xff]
          %v1963 = vld [vmem:[#allocation8 + $0x590] sm:$0xff]
          %v1964 = vld [vmem:[#allocation8 + $0x598] sm:$0xff]
          %v1965 = vld [vmem:[#allocation8 + $0x5a0] sm:$0xff]
          %v1966 = vld [vmem:[#allocation8 + $0x5a8] sm:$0xff]
          %v1967 = vld [vmem:[#allocation8 + $0x5b0] sm:$0xff]
          %v1968 = vld [vmem:[#allocation8 + $0x5b8] sm:$0xff]
          %v1969 = vld [vmem:[#allocation8 + $0x5c0] sm:$0xff]
          %v1970 = vld [vmem:[#allocation8 + $0x5c8] sm:$0xff]
          %v1971 = vld [vmem:[#allocation8 + $0x5d0] sm:$0xff]
          %v1972 = vld [vmem:[#allocation8 + $0x5d8] sm:$0xff]
          %v1973 = vld [vmem:[#allocation8 + $0x5e0] sm:$0xff]
          %v1974 = vld [vmem:[#allocation8 + $0x5e8] sm:$0xff]
          %v1975 = vld [vmem:[#allocation8 + $0x5f0] sm:$0xff]
          %v1976 = vld [vmem:[#allocation8 + $0x5f8] sm:$0xff]
          %v1977 = vld [vmem:[#allocation8 + $0x600] sm:$0xff]
          %v1978 = vld [vmem:[#allocation8 + $0x608] sm:$0xff]
          %v1979 = vld [vmem:[#allocation8 + $0x610] sm:$0xff]
          %v1980 = vld [vmem:[#allocation8 + $0x618] sm:$0xff]
          %v1981 = vld [vmem:[#allocation8 + $0x620] sm:$0xff]
          %v1982 = vld [vmem:[#allocation8 + $0x628] sm:$0xff]
          %v1983 = vld [vmem:[#allocation8 + $0x630] sm:$0xff]
          %v1984 = vld [vmem:[#allocation8 + $0x638] sm:$0xff]
          %v1985 = vld [vmem:[#allocation8 + $0x640] sm:$0xff]
          %v1986 = vld [vmem:[#allocation8 + $0x648] sm:$0xff]
          %v1987 = vld [vmem:[#allocation8 + $0x650] sm:$0xff]
          %v1988 = vld [vmem:[#allocation8 + $0x658] sm:$0xff]
          %v1989 = vld [vmem:[#allocation8 + $0x660] sm:$0xff]
          %v1990 = vld [vmem:[#allocation8 + $0x668] sm:$0xff]
          %v1991 = vld [vmem:[#allocation8 + $0x670] sm:$0xff]
          %v1992 = vld [vmem:[#allocation8 + $0x678] sm:$0xff]
          %v1993 = vld [vmem:[#allocation8 + $0x680] sm:$0xff]
          %v1994 = vld [vmem:[#allocation8 + $0x688] sm:$0xff]
          %v1995 = vld [vmem:[#allocation8 + $0x690] sm:$0xff]
          %v1996 = vld [vmem:[#allocation8 + $0x698] sm:$0xff]
          %v1997 = vld [vmem:[#allocation8 + $0x6a0] sm:$0xff]
          %v1998 = vld [vmem:[#allocation8 + $0x6a8] sm:$0xff]
          %v1999 = vld [vmem:[#allocation8 + $0x6b0] sm:$0xff]
          %v2000 = vld [vmem:[#allocation8 + $0x6b8] sm:$0xff]
          %v2001 = vld [vmem:[#allocation8 + $0x6c0] sm:$0xff]
          %v2002 = vld [vmem:[#allocation8 + $0x6c8] sm:$0xff]
          %v2003 = vld [vmem:[#allocation8 + $0x6d0] sm:$0xff]
          %v2004 = vld [vmem:[#allocation8 + $0x6d8] sm:$0xff]
          %v2005 = vld [vmem:[#allocation8 + $0x6e0] sm:$0xff]
          %v2006 = vld [vmem:[#allocation8 + $0x6e8] sm:$0xff]
          %v2007 = vld [vmem:[#allocation8 + $0x6f0] sm:$0xff]
          %v2008 = vld [vmem:[#allocation8 + $0x6f8] sm:$0xff]
          %v2009 = vld [vmem:[#allocation8 + $0x700] sm:$0xff]
          %v2010 = vld [vmem:[#allocation8 + $0x708] sm:$0xff]
          %v2011 = vld [vmem:[#allocation8 + $0x710] sm:$0xff]
          %v2012 = vld [vmem:[#allocation8 + $0x718] sm:$0xff]
          %v2013 = vld [vmem:[#allocation8 + $0x720] sm:$0xff]
          %v2014 = vld [vmem:[#allocation8 + $0x728] sm:$0xff]
          %v2015 = vld [vmem:[#allocation8 + $0x730] sm:$0xff]
          %v2016 = vld [vmem:[#allocation8 + $0x738] sm:$0xff]
          %v2017 = vld [vmem:[#allocation8 + $0x740] sm:$0xff]
          %v2018 = vld [vmem:[#allocation8 + $0x748] sm:$0xff]
          %v2019 = vld [vmem:[#allocation8 + $0x750] sm:$0xff]
          %v2020 = vld [vmem:[#allocation8 + $0x758] sm:$0xff]
          %v2021 = vld [vmem:[#allocation8 + $0x760] sm:$0xff]
          %v2022 = vld [vmem:[#allocation8 + $0x768] sm:$0xff]
          %v2023 = vld [vmem:[#allocation8 + $0x770] sm:$0xff]
          %v2024 = vld [vmem:[#allocation8 + $0x778] sm:$0xff]
          %v2025 = vld [vmem:[#allocation8 + $0x780] sm:$0xff]
          %v2026 = vld [vmem:[#allocation8 + $0x788] sm:$0xff]
          %v2027 = vld [vmem:[#allocation8 + $0x790] sm:$0xff]
          %v2028 = vld [vmem:[#allocation8 + $0x798] sm:$0xff]
          %v2029 = vld [vmem:[#allocation8 + $0x7a0] sm:$0xff]
          %v2030 = vld [vmem:[#allocation8 + $0x7a8] sm:$0xff]
          %v2031 = vld [vmem:[#allocation8 + $0x7b0] sm:$0xff]
          %v2032 = vld [vmem:[#allocation8 + $0x7b8] sm:$0xff]
          %v2033 = vld [vmem:[#allocation8 + $0x7c0] sm:$0xff]
          %v2034 = vld [vmem:[#allocation8 + $0x7c8] sm:$0xff]
          %v2035 = vld [vmem:[#allocation8 + $0x7d0] sm:$0xff]
          %v2036 = vld [vmem:[#allocation8 + $0x7d8] sm:$0xff]
          %v2037 = vld [vmem:[#allocation8 + $0x7e0] sm:$0xff]
          %v2038 = vld [vmem:[#allocation8 + $0x7e8] sm:$0xff]
          %v2039 = vld [vmem:[#allocation8 + $0x7f0] sm:$0xff]
          %v2040 = vld [vmem:[#allocation8 + $0x7f8] sm:$0xff]
          %v2041 = vld [vmem:[#allocation8 + $0x800] sm:$0xff]
          %v2042 = vld [vmem:[#allocation8 + $0x808] sm:$0xff]
          %v2043 = vld [vmem:[#allocation8 + $0x810] sm:$0xff]
          %v2044 = vld [vmem:[#allocation8 + $0x818] sm:$0xff]
          %v2045 = vld [vmem:[#allocation8 + $0x820] sm:$0xff]
          %v2046 = vld [vmem:[#allocation8 + $0x828] sm:$0xff]
          %v2047 = vld [vmem:[#allocation8 + $0x830] sm:$0xff]
          %v2048 = vld [vmem:[#allocation8 + $0x838] sm:$0xff]
          %v2049 = vld [vmem:[#allocation8 + $0x840] sm:$0xff]
          %v2050 = vld [vmem:[#allocation8 + $0x848] sm:$0xff]
          %v2051 = vld [vmem:[#allocation8 + $0x850] sm:$0xff]
          %v2052 = vld [vmem:[#allocation8 + $0x858] sm:$0xff]
          %v2053 = vld [vmem:[#allocation8 + $0x860] sm:$0xff]
          %v2054 = vld [vmem:[#allocation8 + $0x868] sm:$0xff]
          %v2055 = vld [vmem:[#allocation8 + $0x870] sm:$0xff]
          %v2056 = vld [vmem:[#allocation8 + $0x878] sm:$0xff]
          %v2057 = vld [vmem:[#allocation8 + $0x880] sm:$0xff]
          %v2058 = vld [vmem:[#allocation8 + $0x888] sm:$0xff]
          %v2059 = vld [vmem:[#allocation8 + $0x890] sm:$0xff]
          %v2060 = vld [vmem:[#allocation8 + $0x898] sm:$0xff]
          %v2061 = vld [vmem:[#allocation8 + $0x8a0] sm:$0xff]
          %v2062 = vld [vmem:[#allocation8 + $0x8a8] sm:$0xff]
          %v2063 = vld [vmem:[#allocation8 + $0x8b0] sm:$0xff]
          %v2064 = vld [vmem:[#allocation8 + $0x8b8] sm:$0xff]
          %v2065 = vld [vmem:[#allocation8 + $0x8c0] sm:$0xff]
          %v2066 = vld [vmem:[#allocation8 + $0x8c8] sm:$0xff]
          %v2067 = vld [vmem:[#allocation8 + $0x8d0] sm:$0xff]
          %v2068 = vld [vmem:[#allocation8 + $0x8d8] sm:$0xff]
          %v2069 = vld [vmem:[#allocation8 + $0x8e0] sm:$0xff]
          %v2070 = vld [vmem:[#allocation8 + $0x8e8] sm:$0xff]
          %v2071 = vld [vmem:[#allocation8 + $0x8f0] sm:$0xff]
          %v2072 = vld [vmem:[#allocation8 + $0x8f8] sm:$0xff]
          %v2073 = vld [vmem:[#allocation8 + $0x900] sm:$0xff]
          %v2074 = vld [vmem:[#allocation8 + $0x908] sm:$0xff]
          %v2075 = vld [vmem:[#allocation8 + $0x910] sm:$0xff]
          %v2076 = vld [vmem:[#allocation8 + $0x918] sm:$0xff]
          %v2077 = vld [vmem:[#allocation8 + $0x920] sm:$0xff]
          %v2078 = vld [vmem:[#allocation8 + $0x928] sm:$0xff]
          %v2079 = vld [vmem:[#allocation8 + $0x930] sm:$0xff]
          %v2080 = vld [vmem:[#allocation8 + $0x938] sm:$0xff]
          %v2081 = vld [vmem:[#allocation8 + $0x940] sm:$0xff]
          %v2082 = vld [vmem:[#allocation8 + $0x948] sm:$0xff]
          %v2083 = vld [vmem:[#allocation8 + $0x950] sm:$0xff]
          %v2084 = vld [vmem:[#allocation8 + $0x958] sm:$0xff]
          %v2085 = vld [vmem:[#allocation8 + $0x960] sm:$0xff]
          %v2086 = vld [vmem:[#allocation8 + $0x968] sm:$0xff]
          %v2087 = vld [vmem:[#allocation8 + $0x970] sm:$0xff]
          %v2088 = vld [vmem:[#allocation8 + $0x978] sm:$0xff]
          %v2089 = vld [vmem:[#allocation8 + $0x980] sm:$0xff]
          %v2090 = vld [vmem:[#allocation8 + $0x988] sm:$0xff]
          %v2091 = vld [vmem:[#allocation8 + $0x990] sm:$0xff]
          %v2092 = vld [vmem:[#allocation8 + $0x998] sm:$0xff]
          %v2093 = vld [vmem:[#allocation8 + $0x9a0] sm:$0xff]
          %v2094 = vld [vmem:[#allocation8 + $0x9a8] sm:$0xff]
          %v2095 = vld [vmem:[#allocation8 + $0x9b0] sm:$0xff]
          %v2096 = vld [vmem:[#allocation8 + $0x9b8] sm:$0xff]
          %v2097 = vld [vmem:[#allocation8 + $0x9c0] sm:$0xff]
          %v2098 = vld [vmem:[#allocation8 + $0x9c8] sm:$0xff]
          %v2099 = vld [vmem:[#allocation8 + $0x9d0] sm:$0xff]
          %v2100 = vld [vmem:[#allocation8 + $0x9d8] sm:$0xff]
          %v2101 = vld [vmem:[#allocation8 + $0x9e0] sm:$0xff]
          %v2102 = vld [vmem:[#allocation8 + $0x9e8] sm:$0xff]
          %v2103 = vld [vmem:[#allocation8 + $0x9f0] sm:$0xff]
          %v2104 = vld [vmem:[#allocation8 + $0x9f8] sm:$0xff]
          %v2105 = vld [vmem:[#allocation8 + $0xa00] sm:$0xff]
          %v2106 = vld [vmem:[#allocation8 + $0xa08] sm:$0xff]
          %v2107 = vld [vmem:[#allocation8 + $0xa10] sm:$0xff]
          %v2108 = vld [vmem:[#allocation8 + $0xa18] sm:$0xff]
          %v2109 = vld [vmem:[#allocation8 + $0xa20] sm:$0xff]
          %v2110 = vld [vmem:[#allocation8 + $0xa28] sm:$0xff]
          %v2111 = vld [vmem:[#allocation8 + $0xa30] sm:$0xff]
          %v2112 = vld [vmem:[#allocation8 + $0xa38] sm:$0xff]
          %v2113 = vld [vmem:[#allocation8 + $0xa40] sm:$0xff]
          %v2114 = vld [vmem:[#allocation8 + $0xa48] sm:$0xff]
          %v2115 = vld [vmem:[#allocation8 + $0xa50] sm:$0xff]
          %v2116 = vld [vmem:[#allocation8 + $0xa58] sm:$0xff]
          %v2117 = vld [vmem:[#allocation8 + $0xa60] sm:$0xff]
          %v2118 = vld [vmem:[#allocation8 + $0xa68] sm:$0xff]
          %v2119 = vld [vmem:[#allocation8 + $0xa70] sm:$0xff]
          %v2120 = vld [vmem:[#allocation8 + $0xa78] sm:$0xff]
          %v2121 = vld [vmem:[#allocation8 + $0xa80] sm:$0xff]
          %v2122 = vld [vmem:[#allocation8 + $0xa88] sm:$0xff]
          %v2123 = vld [vmem:[#allocation8 + $0xa90] sm:$0xff]
          %v2124 = vld [vmem:[#allocation8 + $0xa98] sm:$0xff]
          %v2125 = vld [vmem:[#allocation8 + $0xaa0] sm:$0xff]
          %v2126 = vld [vmem:[#allocation8 + $0xaa8] sm:$0xff]
          %v2127 = vld [vmem:[#allocation8 + $0xab0] sm:$0xff]
          %v2128 = vld [vmem:[#allocation8 + $0xab8] sm:$0xff]
          %v2129 = vld [vmem:[#allocation8 + $0xac0] sm:$0xff]
          %v2130 = vld [vmem:[#allocation8 + $0xac8] sm:$0xff]
          %v2131 = vld [vmem:[#allocation8 + $0xad0] sm:$0xff]
          %v2132 = vld [vmem:[#allocation8 + $0xad8] sm:$0xff]
          %v2133 = vld [vmem:[#allocation8 + $0xae0] sm:$0xff]
          %v2134 = vld [vmem:[#allocation8 + $0xae8] sm:$0xff]
          %v2135 = vld [vmem:[#allocation8 + $0xaf0] sm:$0xff]
          %v2136 = vld [vmem:[#allocation8 + $0xaf8] sm:$0xff]
          %v2137 = vld [vmem:[#allocation8 + $0xb00] sm:$0xff]
          %v2138 = vld [vmem:[#allocation8 + $0xb08] sm:$0xff]
          %v2139 = vld [vmem:[#allocation8 + $0xb10] sm:$0xff]
          %v2140 = vld [vmem:[#allocation8 + $0xb18] sm:$0xff]
          %v2141 = vld [vmem:[#allocation8 + $0xb20] sm:$0xff]
          %v2142 = vld [vmem:[#allocation8 + $0xb28] sm:$0xff]
          %v2143 = vld [vmem:[#allocation8 + $0xb30] sm:$0xff]
          %v2144 = vld [vmem:[#allocation8 + $0xb38] sm:$0xff]
          %v2145 = vld [vmem:[#allocation8 + $0xb40] sm:$0xff]
          %v2146 = vld [vmem:[#allocation8 + $0xb48] sm:$0xff]
          %v2147 = vld [vmem:[#allocation8 + $0xb50] sm:$0xff]
          %v2148 = vld [vmem:[#allocation8 + $0xb58] sm:$0xff]
          %v2149 = vld [vmem:[#allocation8 + $0xb60] sm:$0xff]
          %v2150 = vld [vmem:[#allocation8 + $0xb68] sm:$0xff]
          %v2151 = vld [vmem:[#allocation8 + $0xb70] sm:$0xff]
          %v2152 = vld [vmem:[#allocation8 + $0xb78] sm:$0xff]
          %v2153 = vld [vmem:[#allocation8 + $0xb80] sm:$0xff]
          %v2154 = vld [vmem:[#allocation8 + $0xb88] sm:$0xff]
          %v2155 = vld [vmem:[#allocation8 + $0xb90] sm:$0xff]
          %v2156 = vld [vmem:[#allocation8 + $0xb98] sm:$0xff]
          %v2157 = vld [vmem:[#allocation8 + $0xba0] sm:$0xff]
          %v2158 = vld [vmem:[#allocation8 + $0xba8] sm:$0xff]
          %v2159 = vld [vmem:[#allocation8 + $0xbb0] sm:$0xff]
          %v2160 = vld [vmem:[#allocation8 + $0xbb8] sm:$0xff]
          %v2161 = vld [vmem:[#allocation8 + $0xbc0] sm:$0xff]
          %v2162 = vld [vmem:[#allocation8 + $0xbc8] sm:$0xff]
          %v2163 = vld [vmem:[#allocation8 + $0xbd0] sm:$0xff]
          %v2164 = vld [vmem:[#allocation8 + $0xbd8] sm:$0xff]
          %v2165 = vld [vmem:[#allocation8 + $0xbe0] sm:$0xff]
          %v2166 = vld [vmem:[#allocation8 + $0xbe8] sm:$0xff]
          %v2167 = vld [vmem:[#allocation8 + $0xbf0] sm:$0xff]
          %v2168 = vld [vmem:[#allocation8 + $0xbf8] sm:$0xff]
          %v2169 = vld [vmem:[#allocation8 + $0xc00] sm:$0xff]
          %v2170 = vld [vmem:[#allocation8 + $0xc08] sm:$0xff]
          %v2171 = vld [vmem:[#allocation8 + $0xc10] sm:$0xff]
          %v2172 = vld [vmem:[#allocation8 + $0xc18] sm:$0xff]
          %v2173 = vld [vmem:[#allocation8 + $0xc20] sm:$0xff]
          %v2174 = vld [vmem:[#allocation8 + $0xc28] sm:$0xff]
          %v2175 = vld [vmem:[#allocation8 + $0xc30] sm:$0xff]
          %v2176 = vld [vmem:[#allocation8 + $0xc38] sm:$0xff]
          %v2177 = vld [vmem:[#allocation8 + $0xc40] sm:$0xff]
          %v2178 = vld [vmem:[#allocation8 + $0xc48] sm:$0xff]
          %v2179 = vld [vmem:[#allocation8 + $0xc50] sm:$0xff]
          %v2180 = vld [vmem:[#allocation8 + $0xc58] sm:$0xff]
          %v2181 = vld [vmem:[#allocation8 + $0xc60] sm:$0xff]
          %v2182 = vld [vmem:[#allocation8 + $0xc68] sm:$0xff]
          %v2183 = vld [vmem:[#allocation8 + $0xc70] sm:$0xff]
          %v2184 = vld [vmem:[#allocation8 + $0xc78] sm:$0xff]
          %v2185 = vld [vmem:[#allocation8 + $0xc80] sm:$0xff]
          %v2186 = vld [vmem:[#allocation8 + $0xc88] sm:$0xff]
          %v2187 = vld [vmem:[#allocation8 + $0xc90] sm:$0xff]
          %v2188 = vld [vmem:[#allocation8 + $0xc98] sm:$0xff]
          %v2189 = vld [vmem:[#allocation8 + $0xca0] sm:$0xff]
          %v2190 = vld [vmem:[#allocation8 + $0xca8] sm:$0xff]
          %v2191 = vld [vmem:[#allocation8 + $0xcb0] sm:$0xff]
          %v2192 = vld [vmem:[#allocation8 + $0xcb8] sm:$0xff]
          %v2193 = vld [vmem:[#allocation8 + $0xcc0] sm:$0xff]
          %v2194 = vld [vmem:[#allocation8 + $0xcc8] sm:$0xff]
          %v2195 = vld [vmem:[#allocation8 + $0xcd0] sm:$0xff]
          %v2196 = vld [vmem:[#allocation8 + $0xcd8] sm:$0xff]
          %v2197 = vld [vmem:[#allocation8 + $0xce0] sm:$0xff]
          %v2198 = vld [vmem:[#allocation8 + $0xce8] sm:$0xff]
          %v2199 = vld [vmem:[#allocation8 + $0xcf0] sm:$0xff]
          %v2200 = vld [vmem:[#allocation8 + $0xcf8] sm:$0xff]
          %v2201 = vld [vmem:[#allocation8 + $0xd00] sm:$0xff]
          %v2202 = vld [vmem:[#allocation8 + $0xd08] sm:$0xff]
          %v2203 = vld [vmem:[#allocation8 + $0xd10] sm:$0xff]
          %v2204 = vld [vmem:[#allocation8 + $0xd18] sm:$0xff]
          %v2205 = vld [vmem:[#allocation8 + $0xd20] sm:$0xff]
          %v2206 = vld [vmem:[#allocation8 + $0xd28] sm:$0xff]
          %v2207 = vld [vmem:[#allocation8 + $0xd30] sm:$0xff]
          %v2208 = vld [vmem:[#allocation8 + $0xd38] sm:$0xff]
          %v2209 = vld [vmem:[#allocation8 + $0xd40] sm:$0xff]
          %v2210 = vld [vmem:[#allocation8 + $0xd48] sm:$0xff]
          %v2211 = vld [vmem:[#allocation8 + $0xd50] sm:$0xff]
          %v2212 = vld [vmem:[#allocation8 + $0xd58] sm:$0xff]
          %v2213 = vld [vmem:[#allocation8 + $0xd60] sm:$0xff]
          %v2214 = vld [vmem:[#allocation8 + $0xd68] sm:$0xff]
          %v2215 = vld [vmem:[#allocation8 + $0xd70] sm:$0xff]
          %v2216 = vld [vmem:[#allocation8 + $0xd78] sm:$0xff]
          %v2217 = vld [vmem:[#allocation8 + $0xd80] sm:$0xff]
          %v2218 = vld [vmem:[#allocation8 + $0xd88] sm:$0xff]
          %v2219 = vld [vmem:[#allocation8 + $0xd90] sm:$0xff]
          %v2220 = vld [vmem:[#allocation8 + $0xd98] sm:$0xff]
          %v2221 = vld [vmem:[#allocation8 + $0xda0] sm:$0xff]
          %v2222 = vld [vmem:[#allocation8 + $0xda8] sm:$0xff]
          %v2223 = vld [vmem:[#allocation8 + $0xdb0] sm:$0xff]
          %v2224 = vld [vmem:[#allocation8 + $0xdb8] sm:$0xff]
          %v2225 = vld [vmem:[#allocation8 + $0xdc0] sm:$0xff]
          %v2226 = vld [vmem:[#allocation8 + $0xdc8] sm:$0xff]
          %v2227 = vld [vmem:[#allocation8 + $0xdd0] sm:$0xff]
          %v2228 = vld [vmem:[#allocation8 + $0xdd8] sm:$0xff]
          %v2229 = vld [vmem:[#allocation8 + $0xde0] sm:$0xff]
          %v2230 = vld [vmem:[#allocation8 + $0xde8] sm:$0xff]
          %v2231 = vld [vmem:[#allocation8 + $0xdf0] sm:$0xff]
          %v2232 = vld [vmem:[#allocation8 + $0xdf8] sm:$0xff]
          %v2233 = vld [vmem:[#allocation8 + $0xe00] sm:$0xff]
          %v2234 = vld [vmem:[#allocation8 + $0xe08] sm:$0xff]
          %v2235 = vld [vmem:[#allocation8 + $0xe10] sm:$0xff]
          %v2236 = vld [vmem:[#allocation8 + $0xe18] sm:$0xff]
          %v2237 = vld [vmem:[#allocation8 + $0xe20] sm:$0xff]
          %v2238 = vld [vmem:[#allocation8 + $0xe28] sm:$0xff]
          %v2239 = vld [vmem:[#allocation8 + $0xe30] sm:$0xff]
          %v2240 = vld [vmem:[#allocation8 + $0xe38] sm:$0xff]
          %v2241 = vld [vmem:[#allocation8 + $0xe40] sm:$0xff]
          %v2242 = vld [vmem:[#allocation8 + $0xe48] sm:$0xff]
          %v2243 = vld [vmem:[#allocation8 + $0xe50] sm:$0xff]
          %v2244 = vld [vmem:[#allocation8 + $0xe58] sm:$0xff]
          %v2245 = vld [vmem:[#allocation8 + $0xe60] sm:$0xff]
          %v2246 = vld [vmem:[#allocation8 + $0xe68] sm:$0xff]
          %v2247 = vld [vmem:[#allocation8 + $0xe70] sm:$0xff]
          %v2248 = vld [vmem:[#allocation8 + $0xe78] sm:$0xff]
          %v2249 = vld [vmem:[#allocation8 + $0xe80] sm:$0xff]
          %v2250 = vld [vmem:[#allocation8 + $0xe88] sm:$0xff]
          %v2251 = vld [vmem:[#allocation8 + $0xe90] sm:$0xff]
          %v2252 = vld [vmem:[#allocation8 + $0xe98] sm:$0xff]
          %v2253 = vld [vmem:[#allocation8 + $0xea0] sm:$0xff]
          %v2254 = vld [vmem:[#allocation8 + $0xea8] sm:$0xff]
          %v2255 = vld [vmem:[#allocation8 + $0xeb0] sm:$0xff]
          %v2256 = vld [vmem:[#allocation8 + $0xeb8] sm:$0xff]
          %v2257 = vld [vmem:[#allocation8 + $0xec0] sm:$0xff]
          %v2258 = vld [vmem:[#allocation8 + $0xec8] sm:$0xff]
          %v2259 = vld [vmem:[#allocation8 + $0xed0] sm:$0xff]
          %v2260 = vld [vmem:[#allocation8 + $0xed8] sm:$0xff]
          %v2261 = vld [vmem:[#allocation8 + $0xee0] sm:$0xff]
          %v2262 = vld [vmem:[#allocation8 + $0xee8] sm:$0xff]
          %v2263 = vld [vmem:[#allocation8 + $0xef0] sm:$0xff]
          %v2264 = vld [vmem:[#allocation8 + $0xef8] sm:$0xff]
          %v2265 = vld [vmem:[#allocation8 + $0xf00] sm:$0xff]
          %v2266 = vld [vmem:[#allocation8 + $0xf08] sm:$0xff]
          %v2267 = vld [vmem:[#allocation8 + $0xf10] sm:$0xff]
          %v2268 = vld [vmem:[#allocation8 + $0xf18] sm:$0xff]
          %v2269 = vld [vmem:[#allocation8 + $0xf20] sm:$0xff]
          %v2270 = vld [vmem:[#allocation8 + $0xf28] sm:$0xff]
          %v2271 = vld [vmem:[#allocation8 + $0xf30] sm:$0xff]
          %v2272 = vld [vmem:[#allocation8 + $0xf38] sm:$0xff]
          %v2273 = vld [vmem:[#allocation8 + $0xf40] sm:$0xff]
          %v2274 = vld [vmem:[#allocation8 + $0xf48] sm:$0xff]
          %v2275 = vld [vmem:[#allocation8 + $0xf50] sm:$0xff]
          %v2276 = vld [vmem:[#allocation8 + $0xf58] sm:$0xff]
          %v2277 = vld [vmem:[#allocation8 + $0xf60] sm:$0xff]
          %v2278 = vld [vmem:[#allocation8 + $0xf68] sm:$0xff]
          %v2279 = vld [vmem:[#allocation8 + $0xf70] sm:$0xff]
          %v2280 = vld [vmem:[#allocation8 + $0xf78] sm:$0xff]
          %v2281 = vld [vmem:[#allocation8 + $0xf80] sm:$0xff]
          %v2282 = vld [vmem:[#allocation8 + $0xf88] sm:$0xff]
          %v2283 = vld [vmem:[#allocation8 + $0xf90] sm:$0xff]
          %v2284 = vld [vmem:[#allocation8 + $0xf98] sm:$0xff]
          %v2285 = vld [vmem:[#allocation8 + $0xfa0] sm:$0xff]
          %v2286 = vld [vmem:[#allocation8 + $0xfa8] sm:$0xff]
          %v2287 = vld [vmem:[#allocation8 + $0xfb0] sm:$0xff]
          %v2288 = vld [vmem:[#allocation8 + $0xfb8] sm:$0xff]
          %v2289 = vld [vmem:[#allocation8 + $0xfc0] sm:$0xff]
          %v2290 = vld [vmem:[#allocation8 + $0xfc8] sm:$0xff]
          %v2291 = vld [vmem:[#allocation8 + $0xfd0] sm:$0xff]
          %v2292 = vld [vmem:[#allocation8 + $0xfd8] sm:$0xff]
          %v2293 = vld [vmem:[#allocation8 + $0xfe0] sm:$0xff]
          %v2294 = vld [vmem:[#allocation8 + $0xfe8] sm:$0xff]
          %v2295 = vld [vmem:[#allocation8 + $0xff0] sm:$0xff]
          %v2296 = vld [vmem:[#allocation8 + $0xff8] sm:$0xff]
          %v2809 = vunpack.c.l.b16 %v1785
          %v2810 = vunpack.c.h.b16 %v1785
          %v2811 = vunpack.c.l.b16 %v1786
          %v2812 = vunpack.c.h.b16 %v1786
          %v2813 = vunpack.c.l.b16 %v1787
          %v2814 = vunpack.c.h.b16 %v1787
          %v2815 = vunpack.c.l.b16 %v1788
          %v2816 = vunpack.c.h.b16 %v1788
          %v2817 = vunpack.c.l.b16 %v1789
          %v2818 = vunpack.c.h.b16 %v1789
          %v2819 = vunpack.c.l.b16 %v1790
          %v2820 = vunpack.c.h.b16 %v1790
          %v2821 = vunpack.c.l.b16 %v1791
          %v2822 = vunpack.c.h.b16 %v1791
          %v2823 = vunpack.c.l.b16 %v1792
          %v2824 = vunpack.c.h.b16 %v1792
          %v2825 = vunpack.c.l.b16 %v1793
          %v2826 = vunpack.c.h.b16 %v1793
          %v2827 = vunpack.c.l.b16 %v1794
          %v2828 = vunpack.c.h.b16 %v1794
          %v2829 = vunpack.c.l.b16 %v1795
          %v2830 = vunpack.c.h.b16 %v1795
          %v2831 = vunpack.c.l.b16 %v1796
          %v2832 = vunpack.c.h.b16 %v1796
          %v2833 = vunpack.c.l.b16 %v1797
          %v2834 = vunpack.c.h.b16 %v1797
          %v2835 = vunpack.c.l.b16 %v1798
          %v2836 = vunpack.c.h.b16 %v1798
          %v2837 = vunpack.c.l.b16 %v1799
          %v2838 = vunpack.c.h.b16 %v1799
          %v2839 = vunpack.c.l.b16 %v1800
          %v2840 = vunpack.c.h.b16 %v1800
          %v2841 = vunpack.c.l.b16 %v1801
          %v2842 = vunpack.c.h.b16 %v1801
          %v2843 = vunpack.c.l.b16 %v1802
          %v2844 = vunpack.c.h.b16 %v1802
          %v2845 = vunpack.c.l.b16 %v1803
          %v2846 = vunpack.c.h.b16 %v1803
          %v2847 = vunpack.c.l.b16 %v1804
          %v2848 = vunpack.c.h.b16 %v1804
          %v2849 = vunpack.c.l.b16 %v1805
          %v2850 = vunpack.c.h.b16 %v1805
          %v2851 = vunpack.c.l.b16 %v1806
          %v2852 = vunpack.c.h.b16 %v1806
          %v2853 = vunpack.c.l.b16 %v1807
          %v2854 = vunpack.c.h.b16 %v1807
          %v2855 = vunpack.c.l.b16 %v1808
          %v2856 = vunpack.c.h.b16 %v1808
          %v2857 = vunpack.c.l.b16 %v1809
          %v2858 = vunpack.c.h.b16 %v1809
          %v2859 = vunpack.c.l.b16 %v1810
          %v2860 = vunpack.c.h.b16 %v1810
          %v2861 = vunpack.c.l.b16 %v1811
          %v2862 = vunpack.c.h.b16 %v1811
          %v2863 = vunpack.c.l.b16 %v1812
          %v2864 = vunpack.c.h.b16 %v1812
          %v2865 = vunpack.c.l.b16 %v1813
          %v2866 = vunpack.c.h.b16 %v1813
          %v2867 = vunpack.c.l.b16 %v1814
          %v2868 = vunpack.c.h.b16 %v1814
          %v2869 = vunpack.c.l.b16 %v1815
          %v2870 = vunpack.c.h.b16 %v1815
          %v2871 = vunpack.c.l.b16 %v1816
          %v2872 = vunpack.c.h.b16 %v1816
          %v2873 = vunpack.c.l.b16 %v1817
          %v2874 = vunpack.c.h.b16 %v1817
          %v2875 = vunpack.c.l.b16 %v1818
          %v2876 = vunpack.c.h.b16 %v1818
          %v2877 = vunpack.c.l.b16 %v1819
          %v2878 = vunpack.c.h.b16 %v1819
          %v2879 = vunpack.c.l.b16 %v1820
          %v2880 = vunpack.c.h.b16 %v1820
          %v2881 = vunpack.c.l.b16 %v1821
          %v2882 = vunpack.c.h.b16 %v1821
          %v2883 = vunpack.c.l.b16 %v1822
          %v2884 = vunpack.c.h.b16 %v1822
          %v2885 = vunpack.c.l.b16 %v1823
          %v2886 = vunpack.c.h.b16 %v1823
          %v2887 = vunpack.c.l.b16 %v1824
          %v2888 = vunpack.c.h.b16 %v1824
          %v2889 = vunpack.c.l.b16 %v1825
          %v2890 = vunpack.c.h.b16 %v1825
          %v2891 = vunpack.c.l.b16 %v1826
          %v2892 = vunpack.c.h.b16 %v1826
          %v2893 = vunpack.c.l.b16 %v1827
          %v2894 = vunpack.c.h.b16 %v1827
          %v2895 = vunpack.c.l.b16 %v1828
          %v2896 = vunpack.c.h.b16 %v1828
          %v2897 = vunpack.c.l.b16 %v1829
          %v2898 = vunpack.c.h.b16 %v1829
          %v2899 = vunpack.c.l.b16 %v1830
          %v2900 = vunpack.c.h.b16 %v1830
          %v2901 = vunpack.c.l.b16 %v1831
          %v2902 = vunpack.c.h.b16 %v1831
          %v2903 = vunpack.c.l.b16 %v1832
          %v2904 = vunpack.c.h.b16 %v1832
          %v2905 = vunpack.c.l.b16 %v1833
          %v2906 = vunpack.c.h.b16 %v1833
          %v2907 = vunpack.c.l.b16 %v1834
          %v2908 = vunpack.c.h.b16 %v1834
          %v2909 = vunpack.c.l.b16 %v1835
          %v2910 = vunpack.c.h.b16 %v1835
          %v2911 = vunpack.c.l.b16 %v1836
          %v2912 = vunpack.c.h.b16 %v1836
          %v2913 = vunpack.c.l.b16 %v1837
          %v2914 = vunpack.c.h.b16 %v1837
          %v2915 = vunpack.c.l.b16 %v1838
          %v2916 = vunpack.c.h.b16 %v1838
          %v2917 = vunpack.c.l.b16 %v1839
          %v2918 = vunpack.c.h.b16 %v1839
          %v2919 = vunpack.c.l.b16 %v1840
          %v2920 = vunpack.c.h.b16 %v1840
          %v2921 = vunpack.c.l.b16 %v1841
          %v2922 = vunpack.c.h.b16 %v1841
          %v2923 = vunpack.c.l.b16 %v1842
          %v2924 = vunpack.c.h.b16 %v1842
          %v2925 = vunpack.c.l.b16 %v1843
          %v2926 = vunpack.c.h.b16 %v1843
          %v2927 = vunpack.c.l.b16 %v1844
          %v2928 = vunpack.c.h.b16 %v1844
          %v2929 = vunpack.c.l.b16 %v1845
          %v2930 = vunpack.c.h.b16 %v1845
          %v2931 = vunpack.c.l.b16 %v1846
          %v2932 = vunpack.c.h.b16 %v1846
          %v2933 = vunpack.c.l.b16 %v1847
          %v2934 = vunpack.c.h.b16 %v1847
          %v2935 = vunpack.c.l.b16 %v1848
          %v2936 = vunpack.c.h.b16 %v1848
          %v2937 = vunpack.c.l.b16 %v1849
          %v2938 = vunpack.c.h.b16 %v1849
          %v2939 = vunpack.c.l.b16 %v1850
          %v2940 = vunpack.c.h.b16 %v1850
          %v2941 = vunpack.c.l.b16 %v1851
          %v2942 = vunpack.c.h.b16 %v1851
          %v2943 = vunpack.c.l.b16 %v1852
          %v2944 = vunpack.c.h.b16 %v1852
          %v2945 = vunpack.c.l.b16 %v1853
          %v2946 = vunpack.c.h.b16 %v1853
          %v2947 = vunpack.c.l.b16 %v1854
          %v2948 = vunpack.c.h.b16 %v1854
          %v2949 = vunpack.c.l.b16 %v1855
          %v2950 = vunpack.c.h.b16 %v1855
          %v2951 = vunpack.c.l.b16 %v1856
          %v2952 = vunpack.c.h.b16 %v1856
          %v2953 = vunpack.c.l.b16 %v1857
          %v2954 = vunpack.c.h.b16 %v1857
          %v2955 = vunpack.c.l.b16 %v1858
          %v2956 = vunpack.c.h.b16 %v1858
          %v2957 = vunpack.c.l.b16 %v1859
          %v2958 = vunpack.c.h.b16 %v1859
          %v2959 = vunpack.c.l.b16 %v1860
          %v2960 = vunpack.c.h.b16 %v1860
          %v2961 = vunpack.c.l.b16 %v1861
          %v2962 = vunpack.c.h.b16 %v1861
          %v2963 = vunpack.c.l.b16 %v1862
          %v2964 = vunpack.c.h.b16 %v1862
          %v2965 = vunpack.c.l.b16 %v1863
          %v2966 = vunpack.c.h.b16 %v1863
          %v2967 = vunpack.c.l.b16 %v1864
          %v2968 = vunpack.c.h.b16 %v1864
          %v2969 = vunpack.c.l.b16 %v1865
          %v2970 = vunpack.c.h.b16 %v1865
          %v2971 = vunpack.c.l.b16 %v1866
          %v2972 = vunpack.c.h.b16 %v1866
          %v2973 = vunpack.c.l.b16 %v1867
          %v2974 = vunpack.c.h.b16 %v1867
          %v2975 = vunpack.c.l.b16 %v1868
          %v2976 = vunpack.c.h.b16 %v1868
          %v2977 = vunpack.c.l.b16 %v1869
          %v2978 = vunpack.c.h.b16 %v1869
          %v2979 = vunpack.c.l.b16 %v1870
          %v2980 = vunpack.c.h.b16 %v1870
          %v2981 = vunpack.c.l.b16 %v1871
          %v2982 = vunpack.c.h.b16 %v1871
          %v2983 = vunpack.c.l.b16 %v1872
          %v2984 = vunpack.c.h.b16 %v1872
          %v2985 = vunpack.c.l.b16 %v1873
          %v2986 = vunpack.c.h.b16 %v1873
          %v2987 = vunpack.c.l.b16 %v1874
          %v2988 = vunpack.c.h.b16 %v1874
          %v2989 = vunpack.c.l.b16 %v1875
          %v2990 = vunpack.c.h.b16 %v1875
          %v2991 = vunpack.c.l.b16 %v1876
          %v2992 = vunpack.c.h.b16 %v1876
          %v2993 = vunpack.c.l.b16 %v1877
          %v2994 = vunpack.c.h.b16 %v1877
          %v2995 = vunpack.c.l.b16 %v1878
          %v2996 = vunpack.c.h.b16 %v1878
          %v2997 = vunpack.c.l.b16 %v1879
          %v2998 = vunpack.c.h.b16 %v1879
          %v2999 = vunpack.c.l.b16 %v1880
          %v3000 = vunpack.c.h.b16 %v1880
          %v3001 = vunpack.c.l.b16 %v1881
          %v3002 = vunpack.c.h.b16 %v1881
          %v3003 = vunpack.c.l.b16 %v1882
          %v3004 = vunpack.c.h.b16 %v1882
          %v3005 = vunpack.c.l.b16 %v1883
          %v3006 = vunpack.c.h.b16 %v1883
          %v3007 = vunpack.c.l.b16 %v1884
          %v3008 = vunpack.c.h.b16 %v1884
          %v3009 = vunpack.c.l.b16 %v1885
          %v3010 = vunpack.c.h.b16 %v1885
          %v3011 = vunpack.c.l.b16 %v1886
          %v3012 = vunpack.c.h.b16 %v1886
          %v3013 = vunpack.c.l.b16 %v1887
          %v3014 = vunpack.c.h.b16 %v1887
          %v3015 = vunpack.c.l.b16 %v1888
          %v3016 = vunpack.c.h.b16 %v1888
          %v3017 = vunpack.c.l.b16 %v1889
          %v3018 = vunpack.c.h.b16 %v1889
          %v3019 = vunpack.c.l.b16 %v1890
          %v3020 = vunpack.c.h.b16 %v1890
          %v3021 = vunpack.c.l.b16 %v1891
          %v3022 = vunpack.c.h.b16 %v1891
          %v3023 = vunpack.c.l.b16 %v1892
          %v3024 = vunpack.c.h.b16 %v1892
          %v3025 = vunpack.c.l.b16 %v1893
          %v3026 = vunpack.c.h.b16 %v1893
          %v3027 = vunpack.c.l.b16 %v1894
          %v3028 = vunpack.c.h.b16 %v1894
          %v3029 = vunpack.c.l.b16 %v1895
          %v3030 = vunpack.c.h.b16 %v1895
          %v3031 = vunpack.c.l.b16 %v1896
          %v3032 = vunpack.c.h.b16 %v1896
          %v3033 = vunpack.c.l.b16 %v1897
          %v3034 = vunpack.c.h.b16 %v1897
          %v3035 = vunpack.c.l.b16 %v1898
          %v3036 = vunpack.c.h.b16 %v1898
          %v3037 = vunpack.c.l.b16 %v1899
          %v3038 = vunpack.c.h.b16 %v1899
          %v3039 = vunpack.c.l.b16 %v1900
          %v3040 = vunpack.c.h.b16 %v1900
          %v3041 = vunpack.c.l.b16 %v1901
          %v3042 = vunpack.c.h.b16 %v1901
          %v3043 = vunpack.c.l.b16 %v1902
          %v3044 = vunpack.c.h.b16 %v1902
          %v3045 = vunpack.c.l.b16 %v1903
          %v3046 = vunpack.c.h.b16 %v1903
          %v3047 = vunpack.c.l.b16 %v1904
          %v3048 = vunpack.c.h.b16 %v1904
          %v3049 = vunpack.c.l.b16 %v1905
          %v3050 = vunpack.c.h.b16 %v1905
          %v3051 = vunpack.c.l.b16 %v1906
          %v3052 = vunpack.c.h.b16 %v1906
          %v3053 = vunpack.c.l.b16 %v1907
          %v3054 = vunpack.c.h.b16 %v1907
          %v3055 = vunpack.c.l.b16 %v1908
          %v3056 = vunpack.c.h.b16 %v1908
          %v3057 = vunpack.c.l.b16 %v1909
          %v3058 = vunpack.c.h.b16 %v1909
          %v3059 = vunpack.c.l.b16 %v1910
          %v3060 = vunpack.c.h.b16 %v1910
          %v3061 = vunpack.c.l.b16 %v1911
          %v3062 = vunpack.c.h.b16 %v1911
          %v3063 = vunpack.c.l.b16 %v1912
          %v3064 = vunpack.c.h.b16 %v1912
          %v3065 = vunpack.c.l.b16 %v1913
          %v3066 = vunpack.c.h.b16 %v1913
          %v3067 = vunpack.c.l.b16 %v1914
          %v3068 = vunpack.c.h.b16 %v1914
          %v3069 = vunpack.c.l.b16 %v1915
          %v3070 = vunpack.c.h.b16 %v1915
          %v3071 = vunpack.c.l.b16 %v1916
          %v3072 = vunpack.c.h.b16 %v1916
          %v3073 = vunpack.c.l.b16 %v1917
          %v3074 = vunpack.c.h.b16 %v1917
          %v3075 = vunpack.c.l.b16 %v1918
          %v3076 = vunpack.c.h.b16 %v1918
          %v3077 = vunpack.c.l.b16 %v1919
          %v3078 = vunpack.c.h.b16 %v1919
          %v3079 = vunpack.c.l.b16 %v1920
          %v3080 = vunpack.c.h.b16 %v1920
          %v3081 = vunpack.c.l.b16 %v1921
          %v3082 = vunpack.c.h.b16 %v1921
          %v3083 = vunpack.c.l.b16 %v1922
          %v3084 = vunpack.c.h.b16 %v1922
          %v3085 = vunpack.c.l.b16 %v1923
          %v3086 = vunpack.c.h.b16 %v1923
          %v3087 = vunpack.c.l.b16 %v1924
          %v3088 = vunpack.c.h.b16 %v1924
          %v3089 = vunpack.c.l.b16 %v1925
          %v3090 = vunpack.c.h.b16 %v1925
          %v3091 = vunpack.c.l.b16 %v1926
          %v3092 = vunpack.c.h.b16 %v1926
          %v3093 = vunpack.c.l.b16 %v1927
          %v3094 = vunpack.c.h.b16 %v1927
          %v3095 = vunpack.c.l.b16 %v1928
          %v3096 = vunpack.c.h.b16 %v1928
          %v3097 = vunpack.c.l.b16 %v1929
          %v3098 = vunpack.c.h.b16 %v1929
          %v3099 = vunpack.c.l.b16 %v1930
          %v3100 = vunpack.c.h.b16 %v1930
          %v3101 = vunpack.c.l.b16 %v1931
          %v3102 = vunpack.c.h.b16 %v1931
          %v3103 = vunpack.c.l.b16 %v1932
          %v3104 = vunpack.c.h.b16 %v1932
          %v3105 = vunpack.c.l.b16 %v1933
          %v3106 = vunpack.c.h.b16 %v1933
          %v3107 = vunpack.c.l.b16 %v1934
          %v3108 = vunpack.c.h.b16 %v1934
          %v3109 = vunpack.c.l.b16 %v1935
          %v3110 = vunpack.c.h.b16 %v1935
          %v3111 = vunpack.c.l.b16 %v1936
          %v3112 = vunpack.c.h.b16 %v1936
          %v3113 = vunpack.c.l.b16 %v1937
          %v3114 = vunpack.c.h.b16 %v1937
          %v3115 = vunpack.c.l.b16 %v1938
          %v3116 = vunpack.c.h.b16 %v1938
          %v3117 = vunpack.c.l.b16 %v1939
          %v3118 = vunpack.c.h.b16 %v1939
          %v3119 = vunpack.c.l.b16 %v1940
          %v3120 = vunpack.c.h.b16 %v1940
          %v3121 = vunpack.c.l.b16 %v1941
          %v3122 = vunpack.c.h.b16 %v1941
          %v3123 = vunpack.c.l.b16 %v1942
          %v3124 = vunpack.c.h.b16 %v1942
          %v3125 = vunpack.c.l.b16 %v1943
          %v3126 = vunpack.c.h.b16 %v1943
          %v3127 = vunpack.c.l.b16 %v1944
          %v3128 = vunpack.c.h.b16 %v1944
          %v3129 = vunpack.c.l.b16 %v1945
          %v3130 = vunpack.c.h.b16 %v1945
          %v3131 = vunpack.c.l.b16 %v1946
          %v3132 = vunpack.c.h.b16 %v1946
          %v3133 = vunpack.c.l.b16 %v1947
          %v3134 = vunpack.c.h.b16 %v1947
          %v3135 = vunpack.c.l.b16 %v1948
          %v3136 = vunpack.c.h.b16 %v1948
          %v3137 = vunpack.c.l.b16 %v1949
          %v3138 = vunpack.c.h.b16 %v1949
          %v3139 = vunpack.c.l.b16 %v1950
          %v3140 = vunpack.c.h.b16 %v1950
          %v3141 = vunpack.c.l.b16 %v1951
          %v3142 = vunpack.c.h.b16 %v1951
          %v3143 = vunpack.c.l.b16 %v1952
          %v3144 = vunpack.c.h.b16 %v1952
          %v3145 = vunpack.c.l.b16 %v1953
          %v3146 = vunpack.c.h.b16 %v1953
          %v3147 = vunpack.c.l.b16 %v1954
          %v3148 = vunpack.c.h.b16 %v1954
          %v3149 = vunpack.c.l.b16 %v1955
          %v3150 = vunpack.c.h.b16 %v1955
          %v3151 = vunpack.c.l.b16 %v1956
          %v3152 = vunpack.c.h.b16 %v1956
          %v3153 = vunpack.c.l.b16 %v1957
          %v3154 = vunpack.c.h.b16 %v1957
          %v3155 = vunpack.c.l.b16 %v1958
          %v3156 = vunpack.c.h.b16 %v1958
          %v3157 = vunpack.c.l.b16 %v1959
          %v3158 = vunpack.c.h.b16 %v1959
          %v3159 = vunpack.c.l.b16 %v1960
          %v3160 = vunpack.c.h.b16 %v1960
          %v3161 = vunpack.c.l.b16 %v1961
          %v3162 = vunpack.c.h.b16 %v1961
          %v3163 = vunpack.c.l.b16 %v1962
          %v3164 = vunpack.c.h.b16 %v1962
          %v3165 = vunpack.c.l.b16 %v1963
          %v3166 = vunpack.c.h.b16 %v1963
          %v3167 = vunpack.c.l.b16 %v1964
          %v3168 = vunpack.c.h.b16 %v1964
          %v3169 = vunpack.c.l.b16 %v1965
          %v3170 = vunpack.c.h.b16 %v1965
          %v3171 = vunpack.c.l.b16 %v1966
          %v3172 = vunpack.c.h.b16 %v1966
          %v3173 = vunpack.c.l.b16 %v1967
          %v3174 = vunpack.c.h.b16 %v1967
          %v3175 = vunpack.c.l.b16 %v1968
          %v3176 = vunpack.c.h.b16 %v1968
          %v3177 = vunpack.c.l.b16 %v1969
          %v3178 = vunpack.c.h.b16 %v1969
          %v3179 = vunpack.c.l.b16 %v1970
          %v3180 = vunpack.c.h.b16 %v1970
          %v3181 = vunpack.c.l.b16 %v1971
          %v3182 = vunpack.c.h.b16 %v1971
          %v3183 = vunpack.c.l.b16 %v1972
          %v3184 = vunpack.c.h.b16 %v1972
          %v3185 = vunpack.c.l.b16 %v1973
          %v3186 = vunpack.c.h.b16 %v1973
          %v3187 = vunpack.c.l.b16 %v1974
          %v3188 = vunpack.c.h.b16 %v1974
          %v3189 = vunpack.c.l.b16 %v1975
          %v3190 = vunpack.c.h.b16 %v1975
          %v3191 = vunpack.c.l.b16 %v1976
          %v3192 = vunpack.c.h.b16 %v1976
          %v3193 = vunpack.c.l.b16 %v1977
          %v3194 = vunpack.c.h.b16 %v1977
          %v3195 = vunpack.c.l.b16 %v1978
          %v3196 = vunpack.c.h.b16 %v1978
          %v3197 = vunpack.c.l.b16 %v1979
          %v3198 = vunpack.c.h.b16 %v1979
          %v3199 = vunpack.c.l.b16 %v1980
          %v3200 = vunpack.c.h.b16 %v1980
          %v3201 = vunpack.c.l.b16 %v1981
          %v3202 = vunpack.c.h.b16 %v1981
          %v3203 = vunpack.c.l.b16 %v1982
          %v3204 = vunpack.c.h.b16 %v1982
          %v3205 = vunpack.c.l.b16 %v1983
          %v3206 = vunpack.c.h.b16 %v1983
          %v3207 = vunpack.c.l.b16 %v1984
          %v3208 = vunpack.c.h.b16 %v1984
          %v3209 = vunpack.c.l.b16 %v1985
          %v3210 = vunpack.c.h.b16 %v1985
          %v3211 = vunpack.c.l.b16 %v1986
          %v3212 = vunpack.c.h.b16 %v1986
          %v3213 = vunpack.c.l.b16 %v1987
          %v3214 = vunpack.c.h.b16 %v1987
          %v3215 = vunpack.c.l.b16 %v1988
          %v3216 = vunpack.c.h.b16 %v1988
          %v3217 = vunpack.c.l.b16 %v1989
          %v3218 = vunpack.c.h.b16 %v1989
          %v3219 = vunpack.c.l.b16 %v1990
          %v3220 = vunpack.c.h.b16 %v1990
          %v3221 = vunpack.c.l.b16 %v1991
          %v3222 = vunpack.c.h.b16 %v1991
          %v3223 = vunpack.c.l.b16 %v1992
          %v3224 = vunpack.c.h.b16 %v1992
          %v3225 = vunpack.c.l.b16 %v1993
          %v3226 = vunpack.c.h.b16 %v1993
          %v3227 = vunpack.c.l.b16 %v1994
          %v3228 = vunpack.c.h.b16 %v1994
          %v3229 = vunpack.c.l.b16 %v1995
          %v3230 = vunpack.c.h.b16 %v1995
          %v3231 = vunpack.c.l.b16 %v1996
          %v3232 = vunpack.c.h.b16 %v1996
          %v3233 = vunpack.c.l.b16 %v1997
          %v3234 = vunpack.c.h.b16 %v1997
          %v3235 = vunpack.c.l.b16 %v1998
          %v3236 = vunpack.c.h.b16 %v1998
          %v3237 = vunpack.c.l.b16 %v1999
          %v3238 = vunpack.c.h.b16 %v1999
          %v3239 = vunpack.c.l.b16 %v2000
          %v3240 = vunpack.c.h.b16 %v2000
          %v3241 = vunpack.c.l.b16 %v2001
          %v3242 = vunpack.c.h.b16 %v2001
          %v3243 = vunpack.c.l.b16 %v2002
          %v3244 = vunpack.c.h.b16 %v2002
          %v3245 = vunpack.c.l.b16 %v2003
          %v3246 = vunpack.c.h.b16 %v2003
          %v3247 = vunpack.c.l.b16 %v2004
          %v3248 = vunpack.c.h.b16 %v2004
          %v3249 = vunpack.c.l.b16 %v2005
          %v3250 = vunpack.c.h.b16 %v2005
          %v3251 = vunpack.c.l.b16 %v2006
          %v3252 = vunpack.c.h.b16 %v2006
          %v3253 = vunpack.c.l.b16 %v2007
          %v3254 = vunpack.c.h.b16 %v2007
          %v3255 = vunpack.c.l.b16 %v2008
          %v3256 = vunpack.c.h.b16 %v2008
          %v3257 = vunpack.c.l.b16 %v2009
          %v3258 = vunpack.c.h.b16 %v2009
          %v3259 = vunpack.c.l.b16 %v2010
          %v3260 = vunpack.c.h.b16 %v2010
          %v3261 = vunpack.c.l.b16 %v2011
          %v3262 = vunpack.c.h.b16 %v2011
          %v3263 = vunpack.c.l.b16 %v2012
          %v3264 = vunpack.c.h.b16 %v2012
          %v3265 = vunpack.c.l.b16 %v2013
          %v3266 = vunpack.c.h.b16 %v2013
          %v3267 = vunpack.c.l.b16 %v2014
          %v3268 = vunpack.c.h.b16 %v2014
          %v3269 = vunpack.c.l.b16 %v2015
          %v3270 = vunpack.c.h.b16 %v2015
          %v3271 = vunpack.c.l.b16 %v2016
          %v3272 = vunpack.c.h.b16 %v2016
          %v3273 = vunpack.c.l.b16 %v2017
          %v3274 = vunpack.c.h.b16 %v2017
          %v3275 = vunpack.c.l.b16 %v2018
          %v3276 = vunpack.c.h.b16 %v2018
          %v3277 = vunpack.c.l.b16 %v2019
          %v3278 = vunpack.c.h.b16 %v2019
          %v3279 = vunpack.c.l.b16 %v2020
          %v3280 = vunpack.c.h.b16 %v2020
          %v3281 = vunpack.c.l.b16 %v2021
          %v3282 = vunpack.c.h.b16 %v2021
          %v3283 = vunpack.c.l.b16 %v2022
          %v3284 = vunpack.c.h.b16 %v2022
          %v3285 = vunpack.c.l.b16 %v2023
          %v3286 = vunpack.c.h.b16 %v2023
          %v3287 = vunpack.c.l.b16 %v2024
          %v3288 = vunpack.c.h.b16 %v2024
          %v3289 = vunpack.c.l.b16 %v2025
          %v3290 = vunpack.c.h.b16 %v2025
          %v3291 = vunpack.c.l.b16 %v2026
          %v3292 = vunpack.c.h.b16 %v2026
          %v3293 = vunpack.c.l.b16 %v2027
          %v3294 = vunpack.c.h.b16 %v2027
          %v3295 = vunpack.c.l.b16 %v2028
          %v3296 = vunpack.c.h.b16 %v2028
          %v3297 = vunpack.c.l.b16 %v2029
          %v3298 = vunpack.c.h.b16 %v2029
          %v3299 = vunpack.c.l.b16 %v2030
          %v3300 = vunpack.c.h.b16 %v2030
          %v3301 = vunpack.c.l.b16 %v2031
          %v3302 = vunpack.c.h.b16 %v2031
          %v3303 = vunpack.c.l.b16 %v2032
          %v3304 = vunpack.c.h.b16 %v2032
          %v3305 = vunpack.c.l.b16 %v2033
          %v3306 = vunpack.c.h.b16 %v2033
          %v3307 = vunpack.c.l.b16 %v2034
          %v3308 = vunpack.c.h.b16 %v2034
          %v3309 = vunpack.c.l.b16 %v2035
          %v3310 = vunpack.c.h.b16 %v2035
          %v3311 = vunpack.c.l.b16 %v2036
          %v3312 = vunpack.c.h.b16 %v2036
          %v3313 = vunpack.c.l.b16 %v2037
          %v3314 = vunpack.c.h.b16 %v2037
          %v3315 = vunpack.c.l.b16 %v2038
          %v3316 = vunpack.c.h.b16 %v2038
          %v3317 = vunpack.c.l.b16 %v2039
          %v3318 = vunpack.c.h.b16 %v2039
          %v3319 = vunpack.c.l.b16 %v2040
          %v3320 = vunpack.c.h.b16 %v2040
          %v3321 = vunpack.c.l.b16 %v2041
          %v3322 = vunpack.c.h.b16 %v2041
          %v3323 = vunpack.c.l.b16 %v2042
          %v3324 = vunpack.c.h.b16 %v2042
          %v3325 = vunpack.c.l.b16 %v2043
          %v3326 = vunpack.c.h.b16 %v2043
          %v3327 = vunpack.c.l.b16 %v2044
          %v3328 = vunpack.c.h.b16 %v2044
          %v3329 = vunpack.c.l.b16 %v2045
          %v3330 = vunpack.c.h.b16 %v2045
          %v3331 = vunpack.c.l.b16 %v2046
          %v3332 = vunpack.c.h.b16 %v2046
          %v3333 = vunpack.c.l.b16 %v2047
          %v3334 = vunpack.c.h.b16 %v2047
          %v3335 = vunpack.c.l.b16 %v2048
          %v3336 = vunpack.c.h.b16 %v2048
          %v3337 = vunpack.c.l.b16 %v2049
          %v3338 = vunpack.c.h.b16 %v2049
          %v3339 = vunpack.c.l.b16 %v2050
          %v3340 = vunpack.c.h.b16 %v2050
          %v3341 = vunpack.c.l.b16 %v2051
          %v3342 = vunpack.c.h.b16 %v2051
          %v3343 = vunpack.c.l.b16 %v2052
          %v3344 = vunpack.c.h.b16 %v2052
          %v3345 = vunpack.c.l.b16 %v2053
          %v3346 = vunpack.c.h.b16 %v2053
          %v3347 = vunpack.c.l.b16 %v2054
          %v3348 = vunpack.c.h.b16 %v2054
          %v3349 = vunpack.c.l.b16 %v2055
          %v3350 = vunpack.c.h.b16 %v2055
          %v3351 = vunpack.c.l.b16 %v2056
          %v3352 = vunpack.c.h.b16 %v2056
          %v3353 = vunpack.c.l.b16 %v2057
          %v3354 = vunpack.c.h.b16 %v2057
          %v3355 = vunpack.c.l.b16 %v2058
          %v3356 = vunpack.c.h.b16 %v2058
          %v3357 = vunpack.c.l.b16 %v2059
          %v3358 = vunpack.c.h.b16 %v2059
          %v3359 = vunpack.c.l.b16 %v2060
          %v3360 = vunpack.c.h.b16 %v2060
          %v3361 = vunpack.c.l.b16 %v2061
          %v3362 = vunpack.c.h.b16 %v2061
          %v3363 = vunpack.c.l.b16 %v2062
          %v3364 = vunpack.c.h.b16 %v2062
          %v3365 = vunpack.c.l.b16 %v2063
          %v3366 = vunpack.c.h.b16 %v2063
          %v3367 = vunpack.c.l.b16 %v2064
          %v3368 = vunpack.c.h.b16 %v2064
          %v3369 = vunpack.c.l.b16 %v2065
          %v3370 = vunpack.c.h.b16 %v2065
          %v3371 = vunpack.c.l.b16 %v2066
          %v3372 = vunpack.c.h.b16 %v2066
          %v3373 = vunpack.c.l.b16 %v2067
          %v3374 = vunpack.c.h.b16 %v2067
          %v3375 = vunpack.c.l.b16 %v2068
          %v3376 = vunpack.c.h.b16 %v2068
          %v3377 = vunpack.c.l.b16 %v2069
          %v3378 = vunpack.c.h.b16 %v2069
          %v3379 = vunpack.c.l.b16 %v2070
          %v3380 = vunpack.c.h.b16 %v2070
          %v3381 = vunpack.c.l.b16 %v2071
          %v3382 = vunpack.c.h.b16 %v2071
          %v3383 = vunpack.c.l.b16 %v2072
          %v3384 = vunpack.c.h.b16 %v2072
          %v3385 = vunpack.c.l.b16 %v2073
          %v3386 = vunpack.c.h.b16 %v2073
          %v3387 = vunpack.c.l.b16 %v2074
          %v3388 = vunpack.c.h.b16 %v2074
          %v3389 = vunpack.c.l.b16 %v2075
          %v3390 = vunpack.c.h.b16 %v2075
          %v3391 = vunpack.c.l.b16 %v2076
          %v3392 = vunpack.c.h.b16 %v2076
          %v3393 = vunpack.c.l.b16 %v2077
          %v3394 = vunpack.c.h.b16 %v2077
          %v3395 = vunpack.c.l.b16 %v2078
          %v3396 = vunpack.c.h.b16 %v2078
          %v3397 = vunpack.c.l.b16 %v2079
          %v3398 = vunpack.c.h.b16 %v2079
          %v3399 = vunpack.c.l.b16 %v2080
          %v3400 = vunpack.c.h.b16 %v2080
          %v3401 = vunpack.c.l.b16 %v2081
          %v3402 = vunpack.c.h.b16 %v2081
          %v3403 = vunpack.c.l.b16 %v2082
          %v3404 = vunpack.c.h.b16 %v2082
          %v3405 = vunpack.c.l.b16 %v2083
          %v3406 = vunpack.c.h.b16 %v2083
          %v3407 = vunpack.c.l.b16 %v2084
          %v3408 = vunpack.c.h.b16 %v2084
          %v3409 = vunpack.c.l.b16 %v2085
          %v3410 = vunpack.c.h.b16 %v2085
          %v3411 = vunpack.c.l.b16 %v2086
          %v3412 = vunpack.c.h.b16 %v2086
          %v3413 = vunpack.c.l.b16 %v2087
          %v3414 = vunpack.c.h.b16 %v2087
          %v3415 = vunpack.c.l.b16 %v2088
          %v3416 = vunpack.c.h.b16 %v2088
          %v3417 = vunpack.c.l.b16 %v2089
          %v3418 = vunpack.c.h.b16 %v2089
          %v3419 = vunpack.c.l.b16 %v2090
          %v3420 = vunpack.c.h.b16 %v2090
          %v3421 = vunpack.c.l.b16 %v2091
          %v3422 = vunpack.c.h.b16 %v2091
          %v3423 = vunpack.c.l.b16 %v2092
          %v3424 = vunpack.c.h.b16 %v2092
          %v3425 = vunpack.c.l.b16 %v2093
          %v3426 = vunpack.c.h.b16 %v2093
          %v3427 = vunpack.c.l.b16 %v2094
          %v3428 = vunpack.c.h.b16 %v2094
          %v3429 = vunpack.c.l.b16 %v2095
          %v3430 = vunpack.c.h.b16 %v2095
          %v3431 = vunpack.c.l.b16 %v2096
          %v3432 = vunpack.c.h.b16 %v2096
          %v3433 = vunpack.c.l.b16 %v2097
          %v3434 = vunpack.c.h.b16 %v2097
          %v3435 = vunpack.c.l.b16 %v2098
          %v3436 = vunpack.c.h.b16 %v2098
          %v3437 = vunpack.c.l.b16 %v2099
          %v3438 = vunpack.c.h.b16 %v2099
          %v3439 = vunpack.c.l.b16 %v2100
          %v3440 = vunpack.c.h.b16 %v2100
          %v3441 = vunpack.c.l.b16 %v2101
          %v3442 = vunpack.c.h.b16 %v2101
          %v3443 = vunpack.c.l.b16 %v2102
          %v3444 = vunpack.c.h.b16 %v2102
          %v3445 = vunpack.c.l.b16 %v2103
          %v3446 = vunpack.c.h.b16 %v2103
          %v3447 = vunpack.c.l.b16 %v2104
          %v3448 = vunpack.c.h.b16 %v2104
          %v3449 = vunpack.c.l.b16 %v2105
          %v3450 = vunpack.c.h.b16 %v2105
          %v3451 = vunpack.c.l.b16 %v2106
          %v3452 = vunpack.c.h.b16 %v2106
          %v3453 = vunpack.c.l.b16 %v2107
          %v3454 = vunpack.c.h.b16 %v2107
          %v3455 = vunpack.c.l.b16 %v2108
          %v3456 = vunpack.c.h.b16 %v2108
          %v3457 = vunpack.c.l.b16 %v2109
          %v3458 = vunpack.c.h.b16 %v2109
          %v3459 = vunpack.c.l.b16 %v2110
          %v3460 = vunpack.c.h.b16 %v2110
          %v3461 = vunpack.c.l.b16 %v2111
          %v3462 = vunpack.c.h.b16 %v2111
          %v3463 = vunpack.c.l.b16 %v2112
          %v3464 = vunpack.c.h.b16 %v2112
          %v3465 = vunpack.c.l.b16 %v2113
          %v3466 = vunpack.c.h.b16 %v2113
          %v3467 = vunpack.c.l.b16 %v2114
          %v3468 = vunpack.c.h.b16 %v2114
          %v3469 = vunpack.c.l.b16 %v2115
          %v3470 = vunpack.c.h.b16 %v2115
          %v3471 = vunpack.c.l.b16 %v2116
          %v3472 = vunpack.c.h.b16 %v2116
          %v3473 = vunpack.c.l.b16 %v2117
          %v3474 = vunpack.c.h.b16 %v2117
          %v3475 = vunpack.c.l.b16 %v2118
          %v3476 = vunpack.c.h.b16 %v2118
          %v3477 = vunpack.c.l.b16 %v2119
          %v3478 = vunpack.c.h.b16 %v2119
          %v3479 = vunpack.c.l.b16 %v2120
          %v3480 = vunpack.c.h.b16 %v2120
          %v3481 = vunpack.c.l.b16 %v2121
          %v3482 = vunpack.c.h.b16 %v2121
          %v3483 = vunpack.c.l.b16 %v2122
          %v3484 = vunpack.c.h.b16 %v2122
          %v3485 = vunpack.c.l.b16 %v2123
          %v3486 = vunpack.c.h.b16 %v2123
          %v3487 = vunpack.c.l.b16 %v2124
          %v3488 = vunpack.c.h.b16 %v2124
          %v3489 = vunpack.c.l.b16 %v2125
          %v3490 = vunpack.c.h.b16 %v2125
          %v3491 = vunpack.c.l.b16 %v2126
          %v3492 = vunpack.c.h.b16 %v2126
          %v3493 = vunpack.c.l.b16 %v2127
          %v3494 = vunpack.c.h.b16 %v2127
          %v3495 = vunpack.c.l.b16 %v2128
          %v3496 = vunpack.c.h.b16 %v2128
          %v3497 = vunpack.c.l.b16 %v2129
          %v3498 = vunpack.c.h.b16 %v2129
          %v3499 = vunpack.c.l.b16 %v2130
          %v3500 = vunpack.c.h.b16 %v2130
          %v3501 = vunpack.c.l.b16 %v2131
          %v3502 = vunpack.c.h.b16 %v2131
          %v3503 = vunpack.c.l.b16 %v2132
          %v3504 = vunpack.c.h.b16 %v2132
          %v3505 = vunpack.c.l.b16 %v2133
          %v3506 = vunpack.c.h.b16 %v2133
          %v3507 = vunpack.c.l.b16 %v2134
          %v3508 = vunpack.c.h.b16 %v2134
          %v3509 = vunpack.c.l.b16 %v2135
          %v3510 = vunpack.c.h.b16 %v2135
          %v3511 = vunpack.c.l.b16 %v2136
          %v3512 = vunpack.c.h.b16 %v2136
          %v3513 = vunpack.c.l.b16 %v2137
          %v3514 = vunpack.c.h.b16 %v2137
          %v3515 = vunpack.c.l.b16 %v2138
          %v3516 = vunpack.c.h.b16 %v2138
          %v3517 = vunpack.c.l.b16 %v2139
          %v3518 = vunpack.c.h.b16 %v2139
          %v3519 = vunpack.c.l.b16 %v2140
          %v3520 = vunpack.c.h.b16 %v2140
          %v3521 = vunpack.c.l.b16 %v2141
          %v3522 = vunpack.c.h.b16 %v2141
          %v3523 = vunpack.c.l.b16 %v2142
          %v3524 = vunpack.c.h.b16 %v2142
          %v3525 = vunpack.c.l.b16 %v2143
          %v3526 = vunpack.c.h.b16 %v2143
          %v3527 = vunpack.c.l.b16 %v2144
          %v3528 = vunpack.c.h.b16 %v2144
          %v3529 = vunpack.c.l.b16 %v2145
          %v3530 = vunpack.c.h.b16 %v2145
          %v3531 = vunpack.c.l.b16 %v2146
          %v3532 = vunpack.c.h.b16 %v2146
          %v3533 = vunpack.c.l.b16 %v2147
          %v3534 = vunpack.c.h.b16 %v2147
          %v3535 = vunpack.c.l.b16 %v2148
          %v3536 = vunpack.c.h.b16 %v2148
          %v3537 = vunpack.c.l.b16 %v2149
          %v3538 = vunpack.c.h.b16 %v2149
          %v3539 = vunpack.c.l.b16 %v2150
          %v3540 = vunpack.c.h.b16 %v2150
          %v3541 = vunpack.c.l.b16 %v2151
          %v3542 = vunpack.c.h.b16 %v2151
          %v3543 = vunpack.c.l.b16 %v2152
          %v3544 = vunpack.c.h.b16 %v2152
          %v3545 = vunpack.c.l.b16 %v2153
          %v3546 = vunpack.c.h.b16 %v2153
          %v3547 = vunpack.c.l.b16 %v2154
          %v3548 = vunpack.c.h.b16 %v2154
          %v3549 = vunpack.c.l.b16 %v2155
          %v3550 = vunpack.c.h.b16 %v2155
          %v3551 = vunpack.c.l.b16 %v2156
          %v3552 = vunpack.c.h.b16 %v2156
          %v3553 = vunpack.c.l.b16 %v2157
          %v3554 = vunpack.c.h.b16 %v2157
          %v3555 = vunpack.c.l.b16 %v2158
          %v3556 = vunpack.c.h.b16 %v2158
          %v3557 = vunpack.c.l.b16 %v2159
          %v3558 = vunpack.c.h.b16 %v2159
          %v3559 = vunpack.c.l.b16 %v2160
          %v3560 = vunpack.c.h.b16 %v2160
          %v3561 = vunpack.c.l.b16 %v2161
          %v3562 = vunpack.c.h.b16 %v2161
          %v3563 = vunpack.c.l.b16 %v2162
          %v3564 = vunpack.c.h.b16 %v2162
          %v3565 = vunpack.c.l.b16 %v2163
          %v3566 = vunpack.c.h.b16 %v2163
          %v3567 = vunpack.c.l.b16 %v2164
          %v3568 = vunpack.c.h.b16 %v2164
          %v3569 = vunpack.c.l.b16 %v2165
          %v3570 = vunpack.c.h.b16 %v2165
          %v3571 = vunpack.c.l.b16 %v2166
          %v3572 = vunpack.c.h.b16 %v2166
          %v3573 = vunpack.c.l.b16 %v2167
          %v3574 = vunpack.c.h.b16 %v2167
          %v3575 = vunpack.c.l.b16 %v2168
          %v3576 = vunpack.c.h.b16 %v2168
          %v3577 = vunpack.c.l.b16 %v2169
          %v3578 = vunpack.c.h.b16 %v2169
          %v3579 = vunpack.c.l.b16 %v2170
          %v3580 = vunpack.c.h.b16 %v2170
          %v3581 = vunpack.c.l.b16 %v2171
          %v3582 = vunpack.c.h.b16 %v2171
          %v3583 = vunpack.c.l.b16 %v2172
          %v3584 = vunpack.c.h.b16 %v2172
          %v3585 = vunpack.c.l.b16 %v2173
          %v3586 = vunpack.c.h.b16 %v2173
          %v3587 = vunpack.c.l.b16 %v2174
          %v3588 = vunpack.c.h.b16 %v2174
          %v3589 = vunpack.c.l.b16 %v2175
          %v3590 = vunpack.c.h.b16 %v2175
          %v3591 = vunpack.c.l.b16 %v2176
          %v3592 = vunpack.c.h.b16 %v2176
          %v3593 = vunpack.c.l.b16 %v2177
          %v3594 = vunpack.c.h.b16 %v2177
          %v3595 = vunpack.c.l.b16 %v2178
          %v3596 = vunpack.c.h.b16 %v2178
          %v3597 = vunpack.c.l.b16 %v2179
          %v3598 = vunpack.c.h.b16 %v2179
          %v3599 = vunpack.c.l.b16 %v2180
          %v3600 = vunpack.c.h.b16 %v2180
          %v3601 = vunpack.c.l.b16 %v2181
          %v3602 = vunpack.c.h.b16 %v2181
          %v3603 = vunpack.c.l.b16 %v2182
          %v3604 = vunpack.c.h.b16 %v2182
          %v3605 = vunpack.c.l.b16 %v2183
          %v3606 = vunpack.c.h.b16 %v2183
          %v3607 = vunpack.c.l.b16 %v2184
          %v3608 = vunpack.c.h.b16 %v2184
          %v3609 = vunpack.c.l.b16 %v2185
          %v3610 = vunpack.c.h.b16 %v2185
          %v3611 = vunpack.c.l.b16 %v2186
          %v3612 = vunpack.c.h.b16 %v2186
          %v3613 = vunpack.c.l.b16 %v2187
          %v3614 = vunpack.c.h.b16 %v2187
          %v3615 = vunpack.c.l.b16 %v2188
          %v3616 = vunpack.c.h.b16 %v2188
          %v3617 = vunpack.c.l.b16 %v2189
          %v3618 = vunpack.c.h.b16 %v2189
          %v3619 = vunpack.c.l.b16 %v2190
          %v3620 = vunpack.c.h.b16 %v2190
          %v3621 = vunpack.c.l.b16 %v2191
          %v3622 = vunpack.c.h.b16 %v2191
          %v3623 = vunpack.c.l.b16 %v2192
          %v3624 = vunpack.c.h.b16 %v2192
          %v3625 = vunpack.c.l.b16 %v2193
          %v3626 = vunpack.c.h.b16 %v2193
          %v3627 = vunpack.c.l.b16 %v2194
          %v3628 = vunpack.c.h.b16 %v2194
          %v3629 = vunpack.c.l.b16 %v2195
          %v3630 = vunpack.c.h.b16 %v2195
          %v3631 = vunpack.c.l.b16 %v2196
          %v3632 = vunpack.c.h.b16 %v2196
          %v3633 = vunpack.c.l.b16 %v2197
          %v3634 = vunpack.c.h.b16 %v2197
          %v3635 = vunpack.c.l.b16 %v2198
          %v3636 = vunpack.c.h.b16 %v2198
          %v3637 = vunpack.c.l.b16 %v2199
          %v3638 = vunpack.c.h.b16 %v2199
          %v3639 = vunpack.c.l.b16 %v2200
          %v3640 = vunpack.c.h.b16 %v2200
          %v3641 = vunpack.c.l.b16 %v2201
          %v3642 = vunpack.c.h.b16 %v2201
          %v3643 = vunpack.c.l.b16 %v2202
          %v3644 = vunpack.c.h.b16 %v2202
          %v3645 = vunpack.c.l.b16 %v2203
          %v3646 = vunpack.c.h.b16 %v2203
          %v3647 = vunpack.c.l.b16 %v2204
          %v3648 = vunpack.c.h.b16 %v2204
          %v3649 = vunpack.c.l.b16 %v2205
          %v3650 = vunpack.c.h.b16 %v2205
          %v3651 = vunpack.c.l.b16 %v2206
          %v3652 = vunpack.c.h.b16 %v2206
          %v3653 = vunpack.c.l.b16 %v2207
          %v3654 = vunpack.c.h.b16 %v2207
          %v3655 = vunpack.c.l.b16 %v2208
          %v3656 = vunpack.c.h.b16 %v2208
          %v3657 = vunpack.c.l.b16 %v2209
          %v3658 = vunpack.c.h.b16 %v2209
          %v3659 = vunpack.c.l.b16 %v2210
          %v3660 = vunpack.c.h.b16 %v2210
          %v3661 = vunpack.c.l.b16 %v2211
          %v3662 = vunpack.c.h.b16 %v2211
          %v3663 = vunpack.c.l.b16 %v2212
          %v3664 = vunpack.c.h.b16 %v2212
          %v3665 = vunpack.c.l.b16 %v2213
          %v3666 = vunpack.c.h.b16 %v2213
          %v3667 = vunpack.c.l.b16 %v2214
          %v3668 = vunpack.c.h.b16 %v2214
          %v3669 = vunpack.c.l.b16 %v2215
          %v3670 = vunpack.c.h.b16 %v2215
          %v3671 = vunpack.c.l.b16 %v2216
          %v3672 = vunpack.c.h.b16 %v2216
          %v3673 = vunpack.c.l.b16 %v2217
          %v3674 = vunpack.c.h.b16 %v2217
          %v3675 = vunpack.c.l.b16 %v2218
          %v3676 = vunpack.c.h.b16 %v2218
          %v3677 = vunpack.c.l.b16 %v2219
          %v3678 = vunpack.c.h.b16 %v2219
          %v3679 = vunpack.c.l.b16 %v2220
          %v3680 = vunpack.c.h.b16 %v2220
          %v3681 = vunpack.c.l.b16 %v2221
          %v3682 = vunpack.c.h.b16 %v2221
          %v3683 = vunpack.c.l.b16 %v2222
          %v3684 = vunpack.c.h.b16 %v2222
          %v3685 = vunpack.c.l.b16 %v2223
          %v3686 = vunpack.c.h.b16 %v2223
          %v3687 = vunpack.c.l.b16 %v2224
          %v3688 = vunpack.c.h.b16 %v2224
          %v3689 = vunpack.c.l.b16 %v2225
          %v3690 = vunpack.c.h.b16 %v2225
          %v3691 = vunpack.c.l.b16 %v2226
          %v3692 = vunpack.c.h.b16 %v2226
          %v3693 = vunpack.c.l.b16 %v2227
          %v3694 = vunpack.c.h.b16 %v2227
          %v3695 = vunpack.c.l.b16 %v2228
          %v3696 = vunpack.c.h.b16 %v2228
          %v3697 = vunpack.c.l.b16 %v2229
          %v3698 = vunpack.c.h.b16 %v2229
          %v3699 = vunpack.c.l.b16 %v2230
          %v3700 = vunpack.c.h.b16 %v2230
          %v3701 = vunpack.c.l.b16 %v2231
          %v3702 = vunpack.c.h.b16 %v2231
          %v3703 = vunpack.c.l.b16 %v2232
          %v3704 = vunpack.c.h.b16 %v2232
          %v3705 = vunpack.c.l.b16 %v2233
          %v3706 = vunpack.c.h.b16 %v2233
          %v3707 = vunpack.c.l.b16 %v2234
          %v3708 = vunpack.c.h.b16 %v2234
          %v3709 = vunpack.c.l.b16 %v2235
          %v3710 = vunpack.c.h.b16 %v2235
          %v3711 = vunpack.c.l.b16 %v2236
          %v3712 = vunpack.c.h.b16 %v2236
          %v3713 = vunpack.c.l.b16 %v2237
          %v3714 = vunpack.c.h.b16 %v2237
          %v3715 = vunpack.c.l.b16 %v2238
          %v3716 = vunpack.c.h.b16 %v2238
          %v3717 = vunpack.c.l.b16 %v2239
          %v3718 = vunpack.c.h.b16 %v2239
          %v3719 = vunpack.c.l.b16 %v2240
          %v3720 = vunpack.c.h.b16 %v2240
          %v3721 = vunpack.c.l.b16 %v2241
          %v3722 = vunpack.c.h.b16 %v2241
          %v3723 = vunpack.c.l.b16 %v2242
          %v3724 = vunpack.c.h.b16 %v2242
          %v3725 = vunpack.c.l.b16 %v2243
          %v3726 = vunpack.c.h.b16 %v2243
          %v3727 = vunpack.c.l.b16 %v2244
          %v3728 = vunpack.c.h.b16 %v2244
          %v3729 = vunpack.c.l.b16 %v2245
          %v3730 = vunpack.c.h.b16 %v2245
          %v3731 = vunpack.c.l.b16 %v2246
          %v3732 = vunpack.c.h.b16 %v2246
          %v3733 = vunpack.c.l.b16 %v2247
          %v3734 = vunpack.c.h.b16 %v2247
          %v3735 = vunpack.c.l.b16 %v2248
          %v3736 = vunpack.c.h.b16 %v2248
          %v3737 = vunpack.c.l.b16 %v2249
          %v3738 = vunpack.c.h.b16 %v2249
          %v3739 = vunpack.c.l.b16 %v2250
          %v3740 = vunpack.c.h.b16 %v2250
          %v3741 = vunpack.c.l.b16 %v2251
          %v3742 = vunpack.c.h.b16 %v2251
          %v3743 = vunpack.c.l.b16 %v2252
          %v3744 = vunpack.c.h.b16 %v2252
          %v3745 = vunpack.c.l.b16 %v2253
          %v3746 = vunpack.c.h.b16 %v2253
          %v3747 = vunpack.c.l.b16 %v2254
          %v3748 = vunpack.c.h.b16 %v2254
          %v3749 = vunpack.c.l.b16 %v2255
          %v3750 = vunpack.c.h.b16 %v2255
          %v3751 = vunpack.c.l.b16 %v2256
          %v3752 = vunpack.c.h.b16 %v2256
          %v3753 = vunpack.c.l.b16 %v2257
          %v3754 = vunpack.c.h.b16 %v2257
          %v3755 = vunpack.c.l.b16 %v2258
          %v3756 = vunpack.c.h.b16 %v2258
          %v3757 = vunpack.c.l.b16 %v2259
          %v3758 = vunpack.c.h.b16 %v2259
          %v3759 = vunpack.c.l.b16 %v2260
          %v3760 = vunpack.c.h.b16 %v2260
          %v3761 = vunpack.c.l.b16 %v2261
          %v3762 = vunpack.c.h.b16 %v2261
          %v3763 = vunpack.c.l.b16 %v2262
          %v3764 = vunpack.c.h.b16 %v2262
          %v3765 = vunpack.c.l.b16 %v2263
          %v3766 = vunpack.c.h.b16 %v2263
          %v3767 = vunpack.c.l.b16 %v2264
          %v3768 = vunpack.c.h.b16 %v2264
          %v3769 = vunpack.c.l.b16 %v2265
          %v3770 = vunpack.c.h.b16 %v2265
          %v3771 = vunpack.c.l.b16 %v2266
          %v3772 = vunpack.c.h.b16 %v2266
          %v3773 = vunpack.c.l.b16 %v2267
          %v3774 = vunpack.c.h.b16 %v2267
          %v3775 = vunpack.c.l.b16 %v2268
          %v3776 = vunpack.c.h.b16 %v2268
          %v3777 = vunpack.c.l.b16 %v2269
          %v3778 = vunpack.c.h.b16 %v2269
          %v3779 = vunpack.c.l.b16 %v2270
          %v3780 = vunpack.c.h.b16 %v2270
          %v3781 = vunpack.c.l.b16 %v2271
          %v3782 = vunpack.c.h.b16 %v2271
          %v3783 = vunpack.c.l.b16 %v2272
          %v3784 = vunpack.c.h.b16 %v2272
          %v3785 = vunpack.c.l.b16 %v2273
          %v3786 = vunpack.c.h.b16 %v2273
          %v3787 = vunpack.c.l.b16 %v2274
          %v3788 = vunpack.c.h.b16 %v2274
          %v3789 = vunpack.c.l.b16 %v2275
          %v3790 = vunpack.c.h.b16 %v2275
          %v3791 = vunpack.c.l.b16 %v2276
          %v3792 = vunpack.c.h.b16 %v2276
          %v3793 = vunpack.c.l.b16 %v2277
          %v3794 = vunpack.c.h.b16 %v2277
          %v3795 = vunpack.c.l.b16 %v2278
          %v3796 = vunpack.c.h.b16 %v2278
          %v3797 = vunpack.c.l.b16 %v2279
          %v3798 = vunpack.c.h.b16 %v2279
          %v3799 = vunpack.c.l.b16 %v2280
          %v3800 = vunpack.c.h.b16 %v2280
          %v3801 = vunpack.c.l.b16 %v2281
          %v3802 = vunpack.c.h.b16 %v2281
          %v3803 = vunpack.c.l.b16 %v2282
          %v3804 = vunpack.c.h.b16 %v2282
          %v3805 = vunpack.c.l.b16 %v2283
          %v3806 = vunpack.c.h.b16 %v2283
          %v3807 = vunpack.c.l.b16 %v2284
          %v3808 = vunpack.c.h.b16 %v2284
          %v3809 = vunpack.c.l.b16 %v2285
          %v3810 = vunpack.c.h.b16 %v2285
          %v3811 = vunpack.c.l.b16 %v2286
          %v3812 = vunpack.c.h.b16 %v2286
          %v3813 = vunpack.c.l.b16 %v2287
          %v3814 = vunpack.c.h.b16 %v2287
          %v3815 = vunpack.c.l.b16 %v2288
          %v3816 = vunpack.c.h.b16 %v2288
          %v3817 = vunpack.c.l.b16 %v2289
          %v3818 = vunpack.c.h.b16 %v2289
          %v3819 = vunpack.c.l.b16 %v2290
          %v3820 = vunpack.c.h.b16 %v2290
          %v3821 = vunpack.c.l.b16 %v2291
          %v3822 = vunpack.c.h.b16 %v2291
          %v3823 = vunpack.c.l.b16 %v2292
          %v3824 = vunpack.c.h.b16 %v2292
          %v3825 = vunpack.c.l.b16 %v2293
          %v3826 = vunpack.c.h.b16 %v2293
          %v3827 = vunpack.c.l.b16 %v2294
          %v3828 = vunpack.c.h.b16 %v2294
          %v3829 = vunpack.c.l.b16 %v2295
          %v3830 = vunpack.c.h.b16 %v2295
          %v3831 = vunpack.c.l.b16 %v2296
          %v3832 = vunpack.c.h.b16 %v2296
          %v3833 = vpack.c.b16 %v2817, %v2809
          %v3834 = vpack.c.b16 %v2818, %v2810
          %v3835 = vpack.c.b16 %v2819, %v2811
          %v3836 = vpack.c.b16 %v2820, %v2812
          %v3837 = vpack.c.b16 %v2821, %v2813
          %v3838 = vpack.c.b16 %v2822, %v2814
          %v3839 = vpack.c.b16 %v2823, %v2815
          %v3840 = vpack.c.b16 %v2824, %v2816
          %v3841 = vpack.c.b16 %v2833, %v2825
          %v3842 = vpack.c.b16 %v2834, %v2826
          %v3843 = vpack.c.b16 %v2835, %v2827
          %v3844 = vpack.c.b16 %v2836, %v2828
          %v3845 = vpack.c.b16 %v2837, %v2829
          %v3846 = vpack.c.b16 %v2838, %v2830
          %v3847 = vpack.c.b16 %v2839, %v2831
          %v3848 = vpack.c.b16 %v2840, %v2832
          %v3849 = vpack.c.b16 %v2849, %v2841
          %v3850 = vpack.c.b16 %v2850, %v2842
          %v3851 = vpack.c.b16 %v2851, %v2843
          %v3852 = vpack.c.b16 %v2852, %v2844
          %v3853 = vpack.c.b16 %v2853, %v2845
          %v3854 = vpack.c.b16 %v2854, %v2846
          %v3855 = vpack.c.b16 %v2855, %v2847
          %v3856 = vpack.c.b16 %v2856, %v2848
          %v3857 = vpack.c.b16 %v2865, %v2857
          %v3858 = vpack.c.b16 %v2866, %v2858
          %v3859 = vpack.c.b16 %v2867, %v2859
          %v3860 = vpack.c.b16 %v2868, %v2860
          %v3861 = vpack.c.b16 %v2869, %v2861
          %v3862 = vpack.c.b16 %v2870, %v2862
          %v3863 = vpack.c.b16 %v2871, %v2863
          %v3864 = vpack.c.b16 %v2872, %v2864
          %v3865 = vpack.c.b16 %v2881, %v2873
          %v3866 = vpack.c.b16 %v2882, %v2874
          %v3867 = vpack.c.b16 %v2883, %v2875
          %v3868 = vpack.c.b16 %v2884, %v2876
          %v3869 = vpack.c.b16 %v2885, %v2877
          %v3870 = vpack.c.b16 %v2886, %v2878
          %v3871 = vpack.c.b16 %v2887, %v2879
          %v3872 = vpack.c.b16 %v2888, %v2880
          %v3873 = vpack.c.b16 %v2897, %v2889
          %v3874 = vpack.c.b16 %v2898, %v2890
          %v3875 = vpack.c.b16 %v2899, %v2891
          %v3876 = vpack.c.b16 %v2900, %v2892
          %v3877 = vpack.c.b16 %v2901, %v2893
          %v3878 = vpack.c.b16 %v2902, %v2894
          %v3879 = vpack.c.b16 %v2903, %v2895
          %v3880 = vpack.c.b16 %v2904, %v2896
          %v3881 = vpack.c.b16 %v2913, %v2905
          %v3882 = vpack.c.b16 %v2914, %v2906
          %v3883 = vpack.c.b16 %v2915, %v2907
          %v3884 = vpack.c.b16 %v2916, %v2908
          %v3885 = vpack.c.b16 %v2917, %v2909
          %v3886 = vpack.c.b16 %v2918, %v2910
          %v3887 = vpack.c.b16 %v2919, %v2911
          %v3888 = vpack.c.b16 %v2920, %v2912
          %v3889 = vpack.c.b16 %v2929, %v2921
          %v3890 = vpack.c.b16 %v2930, %v2922
          %v3891 = vpack.c.b16 %v2931, %v2923
          %v3892 = vpack.c.b16 %v2932, %v2924
          %v3893 = vpack.c.b16 %v2933, %v2925
          %v3894 = vpack.c.b16 %v2934, %v2926
          %v3895 = vpack.c.b16 %v2935, %v2927
          %v3896 = vpack.c.b16 %v2936, %v2928
          %v3897 = vpack.c.b16 %v2945, %v2937
          %v3898 = vpack.c.b16 %v2946, %v2938
          %v3899 = vpack.c.b16 %v2947, %v2939
          %v3900 = vpack.c.b16 %v2948, %v2940
          %v3901 = vpack.c.b16 %v2949, %v2941
          %v3902 = vpack.c.b16 %v2950, %v2942
          %v3903 = vpack.c.b16 %v2951, %v2943
          %v3904 = vpack.c.b16 %v2952, %v2944
          %v3905 = vpack.c.b16 %v2961, %v2953
          %v3906 = vpack.c.b16 %v2962, %v2954
          %v3907 = vpack.c.b16 %v2963, %v2955
          %v3908 = vpack.c.b16 %v2964, %v2956
          %v3909 = vpack.c.b16 %v2965, %v2957
          %v3910 = vpack.c.b16 %v2966, %v2958
          %v3911 = vpack.c.b16 %v2967, %v2959
          %v3912 = vpack.c.b16 %v2968, %v2960
          %v3913 = vpack.c.b16 %v2977, %v2969
          %v3914 = vpack.c.b16 %v2978, %v2970
          %v3915 = vpack.c.b16 %v2979, %v2971
          %v3916 = vpack.c.b16 %v2980, %v2972
          %v3917 = vpack.c.b16 %v2981, %v2973
          %v3918 = vpack.c.b16 %v2982, %v2974
          %v3919 = vpack.c.b16 %v2983, %v2975
          %v3920 = vpack.c.b16 %v2984, %v2976
          %v3921 = vpack.c.b16 %v2993, %v2985
          %v3922 = vpack.c.b16 %v2994, %v2986
          %v3923 = vpack.c.b16 %v2995, %v2987
          %v3924 = vpack.c.b16 %v2996, %v2988
          %v3925 = vpack.c.b16 %v2997, %v2989
          %v3926 = vpack.c.b16 %v2998, %v2990
          %v3927 = vpack.c.b16 %v2999, %v2991
          %v3928 = vpack.c.b16 %v3000, %v2992
          %v3929 = vpack.c.b16 %v3009, %v3001
          %v3930 = vpack.c.b16 %v3010, %v3002
          %v3931 = vpack.c.b16 %v3011, %v3003
          %v3932 = vpack.c.b16 %v3012, %v3004
          %v3933 = vpack.c.b16 %v3013, %v3005
          %v3934 = vpack.c.b16 %v3014, %v3006
          %v3935 = vpack.c.b16 %v3015, %v3007
          %v3936 = vpack.c.b16 %v3016, %v3008
          %v3937 = vpack.c.b16 %v3025, %v3017
          %v3938 = vpack.c.b16 %v3026, %v3018
          %v3939 = vpack.c.b16 %v3027, %v3019
          %v3940 = vpack.c.b16 %v3028, %v3020
          %v3941 = vpack.c.b16 %v3029, %v3021
          %v3942 = vpack.c.b16 %v3030, %v3022
          %v3943 = vpack.c.b16 %v3031, %v3023
          %v3944 = vpack.c.b16 %v3032, %v3024
          %v3945 = vpack.c.b16 %v3041, %v3033
          %v3946 = vpack.c.b16 %v3042, %v3034
          %v3947 = vpack.c.b16 %v3043, %v3035
          %v3948 = vpack.c.b16 %v3044, %v3036
          %v3949 = vpack.c.b16 %v3045, %v3037
          %v3950 = vpack.c.b16 %v3046, %v3038
          %v3951 = vpack.c.b16 %v3047, %v3039
          %v3952 = vpack.c.b16 %v3048, %v3040
          %v3953 = vpack.c.b16 %v3057, %v3049
          %v3954 = vpack.c.b16 %v3058, %v3050
          %v3955 = vpack.c.b16 %v3059, %v3051
          %v3956 = vpack.c.b16 %v3060, %v3052
          %v3957 = vpack.c.b16 %v3061, %v3053
          %v3958 = vpack.c.b16 %v3062, %v3054
          %v3959 = vpack.c.b16 %v3063, %v3055
          %v3960 = vpack.c.b16 %v3064, %v3056
          %v3961 = vpack.c.b16 %v3073, %v3065
          %v3962 = vpack.c.b16 %v3074, %v3066
          %v3963 = vpack.c.b16 %v3075, %v3067
          %v3964 = vpack.c.b16 %v3076, %v3068
          %v3965 = vpack.c.b16 %v3077, %v3069
          %v3966 = vpack.c.b16 %v3078, %v3070
          %v3967 = vpack.c.b16 %v3079, %v3071
          %v3968 = vpack.c.b16 %v3080, %v3072
          %v3969 = vpack.c.b16 %v3089, %v3081
          %v3970 = vpack.c.b16 %v3090, %v3082
          %v3971 = vpack.c.b16 %v3091, %v3083
          %v3972 = vpack.c.b16 %v3092, %v3084
          %v3973 = vpack.c.b16 %v3093, %v3085
          %v3974 = vpack.c.b16 %v3094, %v3086
          %v3975 = vpack.c.b16 %v3095, %v3087
          %v3976 = vpack.c.b16 %v3096, %v3088
          %v3977 = vpack.c.b16 %v3105, %v3097
          %v3978 = vpack.c.b16 %v3106, %v3098
          %v3979 = vpack.c.b16 %v3107, %v3099
          %v3980 = vpack.c.b16 %v3108, %v3100
          %v3981 = vpack.c.b16 %v3109, %v3101
          %v3982 = vpack.c.b16 %v3110, %v3102
          %v3983 = vpack.c.b16 %v3111, %v3103
          %v3984 = vpack.c.b16 %v3112, %v3104
          %v3985 = vpack.c.b16 %v3121, %v3113
          %v3986 = vpack.c.b16 %v3122, %v3114
          %v3987 = vpack.c.b16 %v3123, %v3115
          %v3988 = vpack.c.b16 %v3124, %v3116
          %v3989 = vpack.c.b16 %v3125, %v3117
          %v3990 = vpack.c.b16 %v3126, %v3118
          %v3991 = vpack.c.b16 %v3127, %v3119
          %v3992 = vpack.c.b16 %v3128, %v3120
          %v3993 = vpack.c.b16 %v3137, %v3129
          %v3994 = vpack.c.b16 %v3138, %v3130
          %v3995 = vpack.c.b16 %v3139, %v3131
          %v3996 = vpack.c.b16 %v3140, %v3132
          %v3997 = vpack.c.b16 %v3141, %v3133
          %v3998 = vpack.c.b16 %v3142, %v3134
          %v3999 = vpack.c.b16 %v3143, %v3135
          %v4000 = vpack.c.b16 %v3144, %v3136
          %v4001 = vpack.c.b16 %v3153, %v3145
          %v4002 = vpack.c.b16 %v3154, %v3146
          %v4003 = vpack.c.b16 %v3155, %v3147
          %v4004 = vpack.c.b16 %v3156, %v3148
          %v4005 = vpack.c.b16 %v3157, %v3149
          %v4006 = vpack.c.b16 %v3158, %v3150
          %v4007 = vpack.c.b16 %v3159, %v3151
          %v4008 = vpack.c.b16 %v3160, %v3152
          %v4009 = vpack.c.b16 %v3169, %v3161
          %v4010 = vpack.c.b16 %v3170, %v3162
          %v4011 = vpack.c.b16 %v3171, %v3163
          %v4012 = vpack.c.b16 %v3172, %v3164
          %v4013 = vpack.c.b16 %v3173, %v3165
          %v4014 = vpack.c.b16 %v3174, %v3166
          %v4015 = vpack.c.b16 %v3175, %v3167
          %v4016 = vpack.c.b16 %v3176, %v3168
          %v4017 = vpack.c.b16 %v3185, %v3177
          %v4018 = vpack.c.b16 %v3186, %v3178
          %v4019 = vpack.c.b16 %v3187, %v3179
          %v4020 = vpack.c.b16 %v3188, %v3180
          %v4021 = vpack.c.b16 %v3189, %v3181
          %v4022 = vpack.c.b16 %v3190, %v3182
          %v4023 = vpack.c.b16 %v3191, %v3183
          %v4024 = vpack.c.b16 %v3192, %v3184
          %v4025 = vpack.c.b16 %v3201, %v3193
          %v4026 = vpack.c.b16 %v3202, %v3194
          %v4027 = vpack.c.b16 %v3203, %v3195
          %v4028 = vpack.c.b16 %v3204, %v3196
          %v4029 = vpack.c.b16 %v3205, %v3197
          %v4030 = vpack.c.b16 %v3206, %v3198
          %v4031 = vpack.c.b16 %v3207, %v3199
          %v4032 = vpack.c.b16 %v3208, %v3200
          %v4033 = vpack.c.b16 %v3217, %v3209
          %v4034 = vpack.c.b16 %v3218, %v3210
          %v4035 = vpack.c.b16 %v3219, %v3211
          %v4036 = vpack.c.b16 %v3220, %v3212
          %v4037 = vpack.c.b16 %v3221, %v3213
          %v4038 = vpack.c.b16 %v3222, %v3214
          %v4039 = vpack.c.b16 %v3223, %v3215
          %v4040 = vpack.c.b16 %v3224, %v3216
          %v4041 = vpack.c.b16 %v3233, %v3225
          %v4042 = vpack.c.b16 %v3234, %v3226
          %v4043 = vpack.c.b16 %v3235, %v3227
          %v4044 = vpack.c.b16 %v3236, %v3228
          %v4045 = vpack.c.b16 %v3237, %v3229
          %v4046 = vpack.c.b16 %v3238, %v3230
          %v4047 = vpack.c.b16 %v3239, %v3231
          %v4048 = vpack.c.b16 %v3240, %v3232
          %v4049 = vpack.c.b16 %v3249, %v3241
          %v4050 = vpack.c.b16 %v3250, %v3242
          %v4051 = vpack.c.b16 %v3251, %v3243
          %v4052 = vpack.c.b16 %v3252, %v3244
          %v4053 = vpack.c.b16 %v3253, %v3245
          %v4054 = vpack.c.b16 %v3254, %v3246
          %v4055 = vpack.c.b16 %v3255, %v3247
          %v4056 = vpack.c.b16 %v3256, %v3248
          %v4057 = vpack.c.b16 %v3265, %v3257
          %v4058 = vpack.c.b16 %v3266, %v3258
          %v4059 = vpack.c.b16 %v3267, %v3259
          %v4060 = vpack.c.b16 %v3268, %v3260
          %v4061 = vpack.c.b16 %v3269, %v3261
          %v4062 = vpack.c.b16 %v3270, %v3262
          %v4063 = vpack.c.b16 %v3271, %v3263
          %v4064 = vpack.c.b16 %v3272, %v3264
          %v4065 = vpack.c.b16 %v3281, %v3273
          %v4066 = vpack.c.b16 %v3282, %v3274
          %v4067 = vpack.c.b16 %v3283, %v3275
          %v4068 = vpack.c.b16 %v3284, %v3276
          %v4069 = vpack.c.b16 %v3285, %v3277
          %v4070 = vpack.c.b16 %v3286, %v3278
          %v4071 = vpack.c.b16 %v3287, %v3279
          %v4072 = vpack.c.b16 %v3288, %v3280
          %v4073 = vpack.c.b16 %v3297, %v3289
          %v4074 = vpack.c.b16 %v3298, %v3290
          %v4075 = vpack.c.b16 %v3299, %v3291
          %v4076 = vpack.c.b16 %v3300, %v3292
          %v4077 = vpack.c.b16 %v3301, %v3293
          %v4078 = vpack.c.b16 %v3302, %v3294
          %v4079 = vpack.c.b16 %v3303, %v3295
          %v4080 = vpack.c.b16 %v3304, %v3296
          %v4081 = vpack.c.b16 %v3313, %v3305
          %v4082 = vpack.c.b16 %v3314, %v3306
          %v4083 = vpack.c.b16 %v3315, %v3307
          %v4084 = vpack.c.b16 %v3316, %v3308
          %v4085 = vpack.c.b16 %v3317, %v3309
          %v4086 = vpack.c.b16 %v3318, %v3310
          %v4087 = vpack.c.b16 %v3319, %v3311
          %v4088 = vpack.c.b16 %v3320, %v3312
          %v4089 = vpack.c.b16 %v3329, %v3321
          %v4090 = vpack.c.b16 %v3330, %v3322
          %v4091 = vpack.c.b16 %v3331, %v3323
          %v4092 = vpack.c.b16 %v3332, %v3324
          %v4093 = vpack.c.b16 %v3333, %v3325
          %v4094 = vpack.c.b16 %v3334, %v3326
          %v4095 = vpack.c.b16 %v3335, %v3327
          %v4096 = vpack.c.b16 %v3336, %v3328
          %v4097 = vpack.c.b16 %v3345, %v3337
          %v4098 = vpack.c.b16 %v3346, %v3338
          %v4099 = vpack.c.b16 %v3347, %v3339
          %v4100 = vpack.c.b16 %v3348, %v3340
          %v4101 = vpack.c.b16 %v3349, %v3341
          %v4102 = vpack.c.b16 %v3350, %v3342
          %v4103 = vpack.c.b16 %v3351, %v3343
          %v4104 = vpack.c.b16 %v3352, %v3344
          %v4105 = vpack.c.b16 %v3361, %v3353
          %v4106 = vpack.c.b16 %v3362, %v3354
          %v4107 = vpack.c.b16 %v3363, %v3355
          %v4108 = vpack.c.b16 %v3364, %v3356
          %v4109 = vpack.c.b16 %v3365, %v3357
          %v4110 = vpack.c.b16 %v3366, %v3358
          %v4111 = vpack.c.b16 %v3367, %v3359
          %v4112 = vpack.c.b16 %v3368, %v3360
          %v4113 = vpack.c.b16 %v3377, %v3369
          %v4114 = vpack.c.b16 %v3378, %v3370
          %v4115 = vpack.c.b16 %v3379, %v3371
          %v4116 = vpack.c.b16 %v3380, %v3372
          %v4117 = vpack.c.b16 %v3381, %v3373
          %v4118 = vpack.c.b16 %v3382, %v3374
          %v4119 = vpack.c.b16 %v3383, %v3375
          %v4120 = vpack.c.b16 %v3384, %v3376
          %v4121 = vpack.c.b16 %v3393, %v3385
          %v4122 = vpack.c.b16 %v3394, %v3386
          %v4123 = vpack.c.b16 %v3395, %v3387
          %v4124 = vpack.c.b16 %v3396, %v3388
          %v4125 = vpack.c.b16 %v3397, %v3389
          %v4126 = vpack.c.b16 %v3398, %v3390
          %v4127 = vpack.c.b16 %v3399, %v3391
          %v4128 = vpack.c.b16 %v3400, %v3392
          %v4129 = vpack.c.b16 %v3409, %v3401
          %v4130 = vpack.c.b16 %v3410, %v3402
          %v4131 = vpack.c.b16 %v3411, %v3403
          %v4132 = vpack.c.b16 %v3412, %v3404
          %v4133 = vpack.c.b16 %v3413, %v3405
          %v4134 = vpack.c.b16 %v3414, %v3406
          %v4135 = vpack.c.b16 %v3415, %v3407
          %v4136 = vpack.c.b16 %v3416, %v3408
          %v4137 = vpack.c.b16 %v3425, %v3417
          %v4138 = vpack.c.b16 %v3426, %v3418
          %v4139 = vpack.c.b16 %v3427, %v3419
          %v4140 = vpack.c.b16 %v3428, %v3420
          %v4141 = vpack.c.b16 %v3429, %v3421
          %v4142 = vpack.c.b16 %v3430, %v3422
          %v4143 = vpack.c.b16 %v3431, %v3423
          %v4144 = vpack.c.b16 %v3432, %v3424
          %v4145 = vpack.c.b16 %v3441, %v3433
          %v4146 = vpack.c.b16 %v3442, %v3434
          %v4147 = vpack.c.b16 %v3443, %v3435
          %v4148 = vpack.c.b16 %v3444, %v3436
          %v4149 = vpack.c.b16 %v3445, %v3437
          %v4150 = vpack.c.b16 %v3446, %v3438
          %v4151 = vpack.c.b16 %v3447, %v3439
          %v4152 = vpack.c.b16 %v3448, %v3440
          %v4153 = vpack.c.b16 %v3457, %v3449
          %v4154 = vpack.c.b16 %v3458, %v3450
          %v4155 = vpack.c.b16 %v3459, %v3451
          %v4156 = vpack.c.b16 %v3460, %v3452
          %v4157 = vpack.c.b16 %v3461, %v3453
          %v4158 = vpack.c.b16 %v3462, %v3454
          %v4159 = vpack.c.b16 %v3463, %v3455
          %v4160 = vpack.c.b16 %v3464, %v3456
          %v4161 = vpack.c.b16 %v3473, %v3465
          %v4162 = vpack.c.b16 %v3474, %v3466
          %v4163 = vpack.c.b16 %v3475, %v3467
          %v4164 = vpack.c.b16 %v3476, %v3468
          %v4165 = vpack.c.b16 %v3477, %v3469
          %v4166 = vpack.c.b16 %v3478, %v3470
          %v4167 = vpack.c.b16 %v3479, %v3471
          %v4168 = vpack.c.b16 %v3480, %v3472
          %v4169 = vpack.c.b16 %v3489, %v3481
          %v4170 = vpack.c.b16 %v3490, %v3482
          %v4171 = vpack.c.b16 %v3491, %v3483
          %v4172 = vpack.c.b16 %v3492, %v3484
          %v4173 = vpack.c.b16 %v3493, %v3485
          %v4174 = vpack.c.b16 %v3494, %v3486
          %v4175 = vpack.c.b16 %v3495, %v3487
          %v4176 = vpack.c.b16 %v3496, %v3488
          %v4177 = vpack.c.b16 %v3505, %v3497
          %v4178 = vpack.c.b16 %v3506, %v3498
          %v4179 = vpack.c.b16 %v3507, %v3499
          %v4180 = vpack.c.b16 %v3508, %v3500
          %v4181 = vpack.c.b16 %v3509, %v3501
          %v4182 = vpack.c.b16 %v3510, %v3502
          %v4183 = vpack.c.b16 %v3511, %v3503
          %v4184 = vpack.c.b16 %v3512, %v3504
          %v4185 = vpack.c.b16 %v3521, %v3513
          %v4186 = vpack.c.b16 %v3522, %v3514
          %v4187 = vpack.c.b16 %v3523, %v3515
          %v4188 = vpack.c.b16 %v3524, %v3516
          %v4189 = vpack.c.b16 %v3525, %v3517
          %v4190 = vpack.c.b16 %v3526, %v3518
          %v4191 = vpack.c.b16 %v3527, %v3519
          %v4192 = vpack.c.b16 %v3528, %v3520
          %v4193 = vpack.c.b16 %v3537, %v3529
          %v4194 = vpack.c.b16 %v3538, %v3530
          %v4195 = vpack.c.b16 %v3539, %v3531
          %v4196 = vpack.c.b16 %v3540, %v3532
          %v4197 = vpack.c.b16 %v3541, %v3533
          %v4198 = vpack.c.b16 %v3542, %v3534
          %v4199 = vpack.c.b16 %v3543, %v3535
          %v4200 = vpack.c.b16 %v3544, %v3536
          %v4201 = vpack.c.b16 %v3553, %v3545
          %v4202 = vpack.c.b16 %v3554, %v3546
          %v4203 = vpack.c.b16 %v3555, %v3547
          %v4204 = vpack.c.b16 %v3556, %v3548
          %v4205 = vpack.c.b16 %v3557, %v3549
          %v4206 = vpack.c.b16 %v3558, %v3550
          %v4207 = vpack.c.b16 %v3559, %v3551
          %v4208 = vpack.c.b16 %v3560, %v3552
          %v4209 = vpack.c.b16 %v3569, %v3561
          %v4210 = vpack.c.b16 %v3570, %v3562
          %v4211 = vpack.c.b16 %v3571, %v3563
          %v4212 = vpack.c.b16 %v3572, %v3564
          %v4213 = vpack.c.b16 %v3573, %v3565
          %v4214 = vpack.c.b16 %v3574, %v3566
          %v4215 = vpack.c.b16 %v3575, %v3567
          %v4216 = vpack.c.b16 %v3576, %v3568
          %v4217 = vpack.c.b16 %v3585, %v3577
          %v4218 = vpack.c.b16 %v3586, %v3578
          %v4219 = vpack.c.b16 %v3587, %v3579
          %v4220 = vpack.c.b16 %v3588, %v3580
          %v4221 = vpack.c.b16 %v3589, %v3581
          %v4222 = vpack.c.b16 %v3590, %v3582
          %v4223 = vpack.c.b16 %v3591, %v3583
          %v4224 = vpack.c.b16 %v3592, %v3584
          %v4225 = vpack.c.b16 %v3601, %v3593
          %v4226 = vpack.c.b16 %v3602, %v3594
          %v4227 = vpack.c.b16 %v3603, %v3595
          %v4228 = vpack.c.b16 %v3604, %v3596
          %v4229 = vpack.c.b16 %v3605, %v3597
          %v4230 = vpack.c.b16 %v3606, %v3598
          %v4231 = vpack.c.b16 %v3607, %v3599
          %v4232 = vpack.c.b16 %v3608, %v3600
          %v4233 = vpack.c.b16 %v3617, %v3609
          %v4234 = vpack.c.b16 %v3618, %v3610
          %v4235 = vpack.c.b16 %v3619, %v3611
          %v4236 = vpack.c.b16 %v3620, %v3612
          %v4237 = vpack.c.b16 %v3621, %v3613
          %v4238 = vpack.c.b16 %v3622, %v3614
          %v4239 = vpack.c.b16 %v3623, %v3615
          %v4240 = vpack.c.b16 %v3624, %v3616
          %v4241 = vpack.c.b16 %v3633, %v3625
          %v4242 = vpack.c.b16 %v3634, %v3626
          %v4243 = vpack.c.b16 %v3635, %v3627
          %v4244 = vpack.c.b16 %v3636, %v3628
          %v4245 = vpack.c.b16 %v3637, %v3629
          %v4246 = vpack.c.b16 %v3638, %v3630
          %v4247 = vpack.c.b16 %v3639, %v3631
          %v4248 = vpack.c.b16 %v3640, %v3632
          %v4249 = vpack.c.b16 %v3649, %v3641
          %v4250 = vpack.c.b16 %v3650, %v3642
          %v4251 = vpack.c.b16 %v3651, %v3643
          %v4252 = vpack.c.b16 %v3652, %v3644
          %v4253 = vpack.c.b16 %v3653, %v3645
          %v4254 = vpack.c.b16 %v3654, %v3646
          %v4255 = vpack.c.b16 %v3655, %v3647
          %v4256 = vpack.c.b16 %v3656, %v3648
          %v4257 = vpack.c.b16 %v3665, %v3657
          %v4258 = vpack.c.b16 %v3666, %v3658
          %v4259 = vpack.c.b16 %v3667, %v3659
          %v4260 = vpack.c.b16 %v3668, %v3660
          %v4261 = vpack.c.b16 %v3669, %v3661
          %v4262 = vpack.c.b16 %v3670, %v3662
          %v4263 = vpack.c.b16 %v3671, %v3663
          %v4264 = vpack.c.b16 %v3672, %v3664
          %v4265 = vpack.c.b16 %v3681, %v3673
          %v4266 = vpack.c.b16 %v3682, %v3674
          %v4267 = vpack.c.b16 %v3683, %v3675
          %v4268 = vpack.c.b16 %v3684, %v3676
          %v4269 = vpack.c.b16 %v3685, %v3677
          %v4270 = vpack.c.b16 %v3686, %v3678
          %v4271 = vpack.c.b16 %v3687, %v3679
          %v4272 = vpack.c.b16 %v3688, %v3680
          %v4273 = vpack.c.b16 %v3697, %v3689
          %v4274 = vpack.c.b16 %v3698, %v3690
          %v4275 = vpack.c.b16 %v3699, %v3691
          %v4276 = vpack.c.b16 %v3700, %v3692
          %v4277 = vpack.c.b16 %v3701, %v3693
          %v4278 = vpack.c.b16 %v3702, %v3694
          %v4279 = vpack.c.b16 %v3703, %v3695
          %v4280 = vpack.c.b16 %v3704, %v3696
          %v4281 = vpack.c.b16 %v3713, %v3705
          %v4282 = vpack.c.b16 %v3714, %v3706
          %v4283 = vpack.c.b16 %v3715, %v3707
          %v4284 = vpack.c.b16 %v3716, %v3708
          %v4285 = vpack.c.b16 %v3717, %v3709
          %v4286 = vpack.c.b16 %v3718, %v3710
          %v4287 = vpack.c.b16 %v3719, %v3711
          %v4288 = vpack.c.b16 %v3720, %v3712
          %v4289 = vpack.c.b16 %v3729, %v3721
          %v4290 = vpack.c.b16 %v3730, %v3722
          %v4291 = vpack.c.b16 %v3731, %v3723
          %v4292 = vpack.c.b16 %v3732, %v3724
          %v4293 = vpack.c.b16 %v3733, %v3725
          %v4294 = vpack.c.b16 %v3734, %v3726
          %v4295 = vpack.c.b16 %v3735, %v3727
          %v4296 = vpack.c.b16 %v3736, %v3728
          %v4297 = vpack.c.b16 %v3745, %v3737
          %v4298 = vpack.c.b16 %v3746, %v3738
          %v4299 = vpack.c.b16 %v3747, %v3739
          %v4300 = vpack.c.b16 %v3748, %v3740
          %v4301 = vpack.c.b16 %v3749, %v3741
          %v4302 = vpack.c.b16 %v3750, %v3742
          %v4303 = vpack.c.b16 %v3751, %v3743
          %v4304 = vpack.c.b16 %v3752, %v3744
          %v4305 = vpack.c.b16 %v3761, %v3753
          %v4306 = vpack.c.b16 %v3762, %v3754
          %v4307 = vpack.c.b16 %v3763, %v3755
          %v4308 = vpack.c.b16 %v3764, %v3756
          %v4309 = vpack.c.b16 %v3765, %v3757
          %v4310 = vpack.c.b16 %v3766, %v3758
          %v4311 = vpack.c.b16 %v3767, %v3759
          %v4312 = vpack.c.b16 %v3768, %v3760
          %v4313 = vpack.c.b16 %v3777, %v3769
          %v4314 = vpack.c.b16 %v3778, %v3770
          %v4315 = vpack.c.b16 %v3779, %v3771
          %v4316 = vpack.c.b16 %v3780, %v3772
          %v4317 = vpack.c.b16 %v3781, %v3773
          %v4318 = vpack.c.b16 %v3782, %v3774
          %v4319 = vpack.c.b16 %v3783, %v3775
          %v4320 = vpack.c.b16 %v3784, %v3776
          %v4321 = vpack.c.b16 %v3793, %v3785
          %v4322 = vpack.c.b16 %v3794, %v3786
          %v4323 = vpack.c.b16 %v3795, %v3787
          %v4324 = vpack.c.b16 %v3796, %v3788
          %v4325 = vpack.c.b16 %v3797, %v3789
          %v4326 = vpack.c.b16 %v3798, %v3790
          %v4327 = vpack.c.b16 %v3799, %v3791
          %v4328 = vpack.c.b16 %v3800, %v3792
          %v4329 = vpack.c.b16 %v3809, %v3801
          %v4330 = vpack.c.b16 %v3810, %v3802
          %v4331 = vpack.c.b16 %v3811, %v3803
          %v4332 = vpack.c.b16 %v3812, %v3804
          %v4333 = vpack.c.b16 %v3813, %v3805
          %v4334 = vpack.c.b16 %v3814, %v3806
          %v4335 = vpack.c.b16 %v3815, %v3807
          %v4336 = vpack.c.b16 %v3816, %v3808
          %v4337 = vpack.c.b16 %v3825, %v3817
          %v4338 = vpack.c.b16 %v3826, %v3818
          %v4339 = vpack.c.b16 %v3827, %v3819
          %v4340 = vpack.c.b16 %v3828, %v3820
          %v4341 = vpack.c.b16 %v3829, %v3821
          %v4342 = vpack.c.b16 %v3830, %v3822
          %v4343 = vpack.c.b16 %v3831, %v3823
          %v4344 = vpack.c.b16 %v3832, %v3824
          %4857 = vmatpush.bf16.msra.mxu0 %v3889
          %4858 = vmatpush.bf16.msra.mxu0 %v3881
          %4859 = vmatpush.bf16.msra.mxu0 %v3873
          %4860 = vmatpush.bf16.msra.mxu0 %v3865
          %4861 = vmatpush.bf16.msra.mxu0 %v3857
          %4862 = vmatpush.bf16.msra.mxu0 %v3849
          %4863 = vmatpush.bf16.msra.mxu0 %v3841
          %4864 = vmatpush.bf16.msra.mxu0 %v3833
          %4865 = vmatmul.bf16.gmra.mxu0 %v1777
          %v4866 = vpop.f32.mrf.mxu0
          %v4867 = vadd.f32 0.0, %v4866
          %v4868 = vpop.f32.mrf.mxu0
          %4869 = vdwg.mxu0
          %4870 = vmatpush.bf16.msra.mxu0 %v3953
          %4871 = vmatpush.bf16.msra.mxu0 %v3945
          %4872 = vmatpush.bf16.msra.mxu0 %v3937
          %4873 = vmatpush.bf16.msra.mxu0 %v3929
          %4874 = vmatpush.bf16.msra.mxu0 %v3921
          %4875 = vmatpush.bf16.msra.mxu0 %v3913
          %4876 = vmatpush.bf16.msra.mxu0 %v3905
          %4877 = vmatpush.bf16.msra.mxu0 %v3897
          %4878 = vmatmul.bf16.gmra.mxu0 %v1778
          %v4879 = vpop.f32.mrf.mxu0
          %v4880 = vadd.f32 %v4867, %v4879
          %v4881 = vpop.f32.mrf.mxu0
          %4882 = vdwg.mxu0
          %4883 = vmatpush.bf16.msra.mxu0 %v4017
          %4884 = vmatpush.bf16.msra.mxu0 %v4009
          %4885 = vmatpush.bf16.msra.mxu0 %v4001
          %4886 = vmatpush.bf16.msra.mxu0 %v3993
          %4887 = vmatpush.bf16.msra.mxu0 %v3985
          %4888 = vmatpush.bf16.msra.mxu0 %v3977
          %4889 = vmatpush.bf16.msra.mxu0 %v3969
          %4890 = vmatpush.bf16.msra.mxu0 %v3961
          %4891 = vmatmul.bf16.gmra.mxu0 %v1779
          %v4892 = vpop.f32.mrf.mxu0
          %v4893 = vadd.f32 %v4880, %v4892
          %v4894 = vpop.f32.mrf.mxu0
          %4895 = vdwg.mxu0
          %4896 = vmatpush.bf16.msra.mxu0 %v4081
          %4897 = vmatpush.bf16.msra.mxu0 %v4073
          %4898 = vmatpush.bf16.msra.mxu0 %v4065
          %4899 = vmatpush.bf16.msra.mxu0 %v4057
          %4900 = vmatpush.bf16.msra.mxu0 %v4049
          %4901 = vmatpush.bf16.msra.mxu0 %v4041
          %4902 = vmatpush.bf16.msra.mxu0 %v4033
          %4903 = vmatpush.bf16.msra.mxu0 %v4025
          %4904 = vmatmul.bf16.gmra.mxu0 %v1780
          %v4905 = vpop.f32.mrf.mxu0
          %v4906 = vadd.f32 %v4893, %v4905
          %v4907 = vpop.f32.mrf.mxu0
          %4908 = vdwg.mxu0
          %4909 = vmatpush.bf16.msra.mxu0 %v4145
          %4910 = vmatpush.bf16.msra.mxu0 %v4137
          %4911 = vmatpush.bf16.msra.mxu0 %v4129
          %4912 = vmatpush.bf16.msra.mxu0 %v4121
          %4913 = vmatpush.bf16.msra.mxu0 %v4113
          %4914 = vmatpush.bf16.msra.mxu0 %v4105
          %4915 = vmatpush.bf16.msra.mxu0 %v4097
          %4916 = vmatpush.bf16.msra.mxu0 %v4089
          %4917 = vmatmul.bf16.gmra.mxu0 %v1781
          %v4918 = vpop.f32.mrf.mxu0
          %v4919 = vadd.f32 %v4906, %v4918
          %v4920 = vpop.f32.mrf.mxu0
          %4921 = vdwg.mxu0
          %4922 = vmatpush.bf16.msra.mxu0 %v4209
          %4923 = vmatpush.bf16.msra.mxu0 %v4201
          %4924 = vmatpush.bf16.msra.mxu0 %v4193
          %4925 = vmatpush.bf16.msra.mxu0 %v4185
          %4926 = vmatpush.bf16.msra.mxu0 %v4177
          %4927 = vmatpush.bf16.msra.mxu0 %v4169
          %4928 = vmatpush.bf16.msra.mxu0 %v4161
          %4929 = vmatpush.bf16.msra.mxu0 %v4153
          %4930 = vmatmul.bf16.gmra.mxu0 %v1782
          %v4931 = vpop.f32.mrf.mxu0
          %v4932 = vadd.f32 %v4919, %v4931
          %v4933 = vpop.f32.mrf.mxu0
          %4934 = vdwg.mxu0
          %4935 = vmatpush.bf16.msra.mxu0 %v4273
          %4936 = vmatpush.bf16.msra.mxu0 %v4265
          %4937 = vmatpush.bf16.msra.mxu0 %v4257
          %4938 = vmatpush.bf16.msra.mxu0 %v4249
          %4939 = vmatpush.bf16.msra.mxu0 %v4241
          %4940 = vmatpush.bf16.msra.mxu0 %v4233
          %4941 = vmatpush.bf16.msra.mxu0 %v4225
          %4942 = vmatpush.bf16.msra.mxu0 %v4217
          %4943 = vmatmul.bf16.gmra.mxu0 %v1783
          %v4944 = vpop.f32.mrf.mxu0
          %v4945 = vadd.f32 %v4932, %v4944
          %v4946 = vpop.f32.mrf.mxu0
          %4947 = vdwg.mxu0
          %4948 = vmatpush.bf16.msra.mxu0 %v4337
          %4949 = vmatpush.bf16.msra.mxu0 %v4329
          %4950 = vmatpush.bf16.msra.mxu0 %v4321
          %4951 = vmatpush.bf16.msra.mxu0 %v4313
          %4952 = vmatpush.bf16.msra.mxu0 %v4305
          %4953 = vmatpush.bf16.msra.mxu0 %v4297
          %4954 = vmatpush.bf16.msra.mxu0 %v4289
          %4955 = vmatpush.bf16.msra.mxu0 %v4281
          %4956 = vmatmul.bf16.gmra.mxu0 %v1784
          %v4957 = vpop.f32.mrf.mxu0
          %v4958 = vadd.f32 %v4945, %v4957
          %v4959 = vpop.f32.mrf.mxu0
          %4960 = vdwg.mxu0
          %4961 = vmatpush.bf16.msra.mxu0 %v3890
          %4962 = vmatpush.bf16.msra.mxu0 %v3882
          %4963 = vmatpush.bf16.msra.mxu0 %v3874
          %4964 = vmatpush.bf16.msra.mxu0 %v3866
          %4965 = vmatpush.bf16.msra.mxu0 %v3858
          %4966 = vmatpush.bf16.msra.mxu0 %v3850
          %4967 = vmatpush.bf16.msra.mxu0 %v3842
          %4968 = vmatpush.bf16.msra.mxu0 %v3834
          %4969 = vmatmul.bf16.gmra.mxu0 %v1777
          %v4970 = vpop.f32.mrf.mxu0
          %v4971 = vadd.f32 0.0, %v4970
          %v4972 = vpop.f32.mrf.mxu0
          %4973 = vdwg.mxu0
          %4974 = vmatpush.bf16.msra.mxu0 %v3954
          %4975 = vmatpush.bf16.msra.mxu0 %v3946
          %4976 = vmatpush.bf16.msra.mxu0 %v3938
          %4977 = vmatpush.bf16.msra.mxu0 %v3930
          %4978 = vmatpush.bf16.msra.mxu0 %v3922
          %4979 = vmatpush.bf16.msra.mxu0 %v3914
          %4980 = vmatpush.bf16.msra.mxu0 %v3906
          %4981 = vmatpush.bf16.msra.mxu0 %v3898
          %4982 = vmatmul.bf16.gmra.mxu0 %v1778
          %v4983 = vpop.f32.mrf.mxu0
          %v4984 = vadd.f32 %v4971, %v4983
          %v4985 = vpop.f32.mrf.mxu0
          %4986 = vdwg.mxu0
          %4987 = vmatpush.bf16.msra.mxu0 %v4018
          %4988 = vmatpush.bf16.msra.mxu0 %v4010
          %4989 = vmatpush.bf16.msra.mxu0 %v4002
          %4990 = vmatpush.bf16.msra.mxu0 %v3994
          %4991 = vmatpush.bf16.msra.mxu0 %v3986
          %4992 = vmatpush.bf16.msra.mxu0 %v3978
          %4993 = vmatpush.bf16.msra.mxu0 %v3970
          %4994 = vmatpush.bf16.msra.mxu0 %v3962
          %4995 = vmatmul.bf16.gmra.mxu0 %v1779
          %v4996 = vpop.f32.mrf.mxu0
          %v4997 = vadd.f32 %v4984, %v4996
          %v4998 = vpop.f32.mrf.mxu0
          %4999 = vdwg.mxu0
          %5000 = vmatpush.bf16.msra.mxu0 %v4082
          %5001 = vmatpush.bf16.msra.mxu0 %v4074
          %5002 = vmatpush.bf16.msra.mxu0 %v4066
          %5003 = vmatpush.bf16.msra.mxu0 %v4058
          %5004 = vmatpush.bf16.msra.mxu0 %v4050
          %5005 = vmatpush.bf16.msra.mxu0 %v4042
          %5006 = vmatpush.bf16.msra.mxu0 %v4034
          %5007 = vmatpush.bf16.msra.mxu0 %v4026
          %5008 = vmatmul.bf16.gmra.mxu0 %v1780
          %v5009 = vpop.f32.mrf.mxu0
          %v5010 = vadd.f32 %v4997, %v5009
          %v5011 = vpop.f32.mrf.mxu0
          %5012 = vdwg.mxu0
          %5013 = vmatpush.bf16.msra.mxu0 %v4146
          %5014 = vmatpush.bf16.msra.mxu0 %v4138
          %5015 = vmatpush.bf16.msra.mxu0 %v4130
          %5016 = vmatpush.bf16.msra.mxu0 %v4122
          %5017 = vmatpush.bf16.msra.mxu0 %v4114
          %5018 = vmatpush.bf16.msra.mxu0 %v4106
          %5019 = vmatpush.bf16.msra.mxu0 %v4098
          %5020 = vmatpush.bf16.msra.mxu0 %v4090
          %5021 = vmatmul.bf16.gmra.mxu0 %v1781
          %v5022 = vpop.f32.mrf.mxu0
          %v5023 = vadd.f32 %v5010, %v5022
          %v5024 = vpop.f32.mrf.mxu0
          %5025 = vdwg.mxu0
          %5026 = vmatpush.bf16.msra.mxu0 %v4210
          %5027 = vmatpush.bf16.msra.mxu0 %v4202
          %5028 = vmatpush.bf16.msra.mxu0 %v4194
          %5029 = vmatpush.bf16.msra.mxu0 %v4186
          %5030 = vmatpush.bf16.msra.mxu0 %v4178
          %5031 = vmatpush.bf16.msra.mxu0 %v4170
          %5032 = vmatpush.bf16.msra.mxu0 %v4162
          %5033 = vmatpush.bf16.msra.mxu0 %v4154
          %5034 = vmatmul.bf16.gmra.mxu0 %v1782
          %v5035 = vpop.f32.mrf.mxu0
          %v5036 = vadd.f32 %v5023, %v5035
          %v5037 = vpop.f32.mrf.mxu0
          %5038 = vdwg.mxu0
          %5039 = vmatpush.bf16.msra.mxu0 %v4274
          %5040 = vmatpush.bf16.msra.mxu0 %v4266
          %5041 = vmatpush.bf16.msra.mxu0 %v4258
          %5042 = vmatpush.bf16.msra.mxu0 %v4250
          %5043 = vmatpush.bf16.msra.mxu0 %v4242
          %5044 = vmatpush.bf16.msra.mxu0 %v4234
          %5045 = vmatpush.bf16.msra.mxu0 %v4226
          %5046 = vmatpush.bf16.msra.mxu0 %v4218
          %5047 = vmatmul.bf16.gmra.mxu0 %v1783
          %v5048 = vpop.f32.mrf.mxu0
          %v5049 = vadd.f32 %v5036, %v5048
          %v5050 = vpop.f32.mrf.mxu0
          %5051 = vdwg.mxu0
          %5052 = vmatpush.bf16.msra.mxu0 %v4338
          %5053 = vmatpush.bf16.msra.mxu0 %v4330
          %5054 = vmatpush.bf16.msra.mxu0 %v4322
          %5055 = vmatpush.bf16.msra.mxu0 %v4314
          %5056 = vmatpush.bf16.msra.mxu0 %v4306
          %5057 = vmatpush.bf16.msra.mxu0 %v4298
          %5058 = vmatpush.bf16.msra.mxu0 %v4290
          %5059 = vmatpush.bf16.msra.mxu0 %v4282
          %5060 = vmatmul.bf16.gmra.mxu0 %v1784
          %v5061 = vpop.f32.mrf.mxu0
          %v5062 = vadd.f32 %v5049, %v5061
          %v5063 = vpop.f32.mrf.mxu0
          %5064 = vdwg.mxu0
          %5065 = vmatpush.bf16.msra.mxu0 %v3891
          %5066 = vmatpush.bf16.msra.mxu0 %v3883
          %5067 = vmatpush.bf16.msra.mxu0 %v3875
          %5068 = vmatpush.bf16.msra.mxu0 %v3867
          %5069 = vmatpush.bf16.msra.mxu0 %v3859
          %5070 = vmatpush.bf16.msra.mxu0 %v3851
          %5071 = vmatpush.bf16.msra.mxu0 %v3843
          %5072 = vmatpush.bf16.msra.mxu0 %v3835
          %5073 = vmatmul.bf16.gmra.mxu0 %v1777
          %v5074 = vpop.f32.mrf.mxu0
          %v5075 = vadd.f32 0.0, %v5074
          %v5076 = vpop.f32.mrf.mxu0
          %5077 = vdwg.mxu0
          %5078 = vmatpush.bf16.msra.mxu0 %v3955
          %5079 = vmatpush.bf16.msra.mxu0 %v3947
          %5080 = vmatpush.bf16.msra.mxu0 %v3939
          %5081 = vmatpush.bf16.msra.mxu0 %v3931
          %5082 = vmatpush.bf16.msra.mxu0 %v3923
          %5083 = vmatpush.bf16.msra.mxu0 %v3915
          %5084 = vmatpush.bf16.msra.mxu0 %v3907
          %5085 = vmatpush.bf16.msra.mxu0 %v3899
          %5086 = vmatmul.bf16.gmra.mxu0 %v1778
          %v5087 = vpop.f32.mrf.mxu0
          %v5088 = vadd.f32 %v5075, %v5087
          %v5089 = vpop.f32.mrf.mxu0
          %5090 = vdwg.mxu0
          %5091 = vmatpush.bf16.msra.mxu0 %v4019
          %5092 = vmatpush.bf16.msra.mxu0 %v4011
          %5093 = vmatpush.bf16.msra.mxu0 %v4003
          %5094 = vmatpush.bf16.msra.mxu0 %v3995
          %5095 = vmatpush.bf16.msra.mxu0 %v3987
          %5096 = vmatpush.bf16.msra.mxu0 %v3979
          %5097 = vmatpush.bf16.msra.mxu0 %v3971
          %5098 = vmatpush.bf16.msra.mxu0 %v3963
          %5099 = vmatmul.bf16.gmra.mxu0 %v1779
          %v5100 = vpop.f32.mrf.mxu0
          %v5101 = vadd.f32 %v5088, %v5100
          %v5102 = vpop.f32.mrf.mxu0
          %5103 = vdwg.mxu0
          %5104 = vmatpush.bf16.msra.mxu0 %v4083
          %5105 = vmatpush.bf16.msra.mxu0 %v4075
          %5106 = vmatpush.bf16.msra.mxu0 %v4067
          %5107 = vmatpush.bf16.msra.mxu0 %v4059
          %5108 = vmatpush.bf16.msra.mxu0 %v4051
          %5109 = vmatpush.bf16.msra.mxu0 %v4043
          %5110 = vmatpush.bf16.msra.mxu0 %v4035
          %5111 = vmatpush.bf16.msra.mxu0 %v4027
          %5112 = vmatmul.bf16.gmra.mxu0 %v1780
          %v5113 = vpop.f32.mrf.mxu0
          %v5114 = vadd.f32 %v5101, %v5113
          %v5115 = vpop.f32.mrf.mxu0
          %5116 = vdwg.mxu0
          %5117 = vmatpush.bf16.msra.mxu0 %v4147
          %5118 = vmatpush.bf16.msra.mxu0 %v4139
          %5119 = vmatpush.bf16.msra.mxu0 %v4131
          %5120 = vmatpush.bf16.msra.mxu0 %v4123
          %5121 = vmatpush.bf16.msra.mxu0 %v4115
          %5122 = vmatpush.bf16.msra.mxu0 %v4107
          %5123 = vmatpush.bf16.msra.mxu0 %v4099
          %5124 = vmatpush.bf16.msra.mxu0 %v4091
          %5125 = vmatmul.bf16.gmra.mxu0 %v1781
          %v5126 = vpop.f32.mrf.mxu0
          %v5127 = vadd.f32 %v5114, %v5126
          %v5128 = vpop.f32.mrf.mxu0
          %5129 = vdwg.mxu0
          %5130 = vmatpush.bf16.msra.mxu0 %v4211
          %5131 = vmatpush.bf16.msra.mxu0 %v4203
          %5132 = vmatpush.bf16.msra.mxu0 %v4195
          %5133 = vmatpush.bf16.msra.mxu0 %v4187
          %5134 = vmatpush.bf16.msra.mxu0 %v4179
          %5135 = vmatpush.bf16.msra.mxu0 %v4171
          %5136 = vmatpush.bf16.msra.mxu0 %v4163
          %5137 = vmatpush.bf16.msra.mxu0 %v4155
          %5138 = vmatmul.bf16.gmra.mxu0 %v1782
          %v5139 = vpop.f32.mrf.mxu0
          %v5140 = vadd.f32 %v5127, %v5139
          %v5141 = vpop.f32.mrf.mxu0
          %5142 = vdwg.mxu0
          %5143 = vmatpush.bf16.msra.mxu0 %v4275
          %5144 = vmatpush.bf16.msra.mxu0 %v4267
          %5145 = vmatpush.bf16.msra.mxu0 %v4259
          %5146 = vmatpush.bf16.msra.mxu0 %v4251
          %5147 = vmatpush.bf16.msra.mxu0 %v4243
          %5148 = vmatpush.bf16.msra.mxu0 %v4235
          %5149 = vmatpush.bf16.msra.mxu0 %v4227
          %5150 = vmatpush.bf16.msra.mxu0 %v4219
          %5151 = vmatmul.bf16.gmra.mxu0 %v1783
          %v5152 = vpop.f32.mrf.mxu0
          %v5153 = vadd.f32 %v5140, %v5152
          %v5154 = vpop.f32.mrf.mxu0
          %5155 = vdwg.mxu0
          %5156 = vmatpush.bf16.msra.mxu0 %v4339
          %5157 = vmatpush.bf16.msra.mxu0 %v4331
          %5158 = vmatpush.bf16.msra.mxu0 %v4323
          %5159 = vmatpush.bf16.msra.mxu0 %v4315
          %5160 = vmatpush.bf16.msra.mxu0 %v4307
          %5161 = vmatpush.bf16.msra.mxu0 %v4299
          %5162 = vmatpush.bf16.msra.mxu0 %v4291
          %5163 = vmatpush.bf16.msra.mxu0 %v4283
          %5164 = vmatmul.bf16.gmra.mxu0 %v1784
          %v5165 = vpop.f32.mrf.mxu0
          %v5166 = vadd.f32 %v5153, %v5165
          %v5167 = vpop.f32.mrf.mxu0
          %5168 = vdwg.mxu0
          %5169 = vmatpush.bf16.msra.mxu0 %v3892
          %5170 = vmatpush.bf16.msra.mxu0 %v3884
          %5171 = vmatpush.bf16.msra.mxu0 %v3876
          %5172 = vmatpush.bf16.msra.mxu0 %v3868
          %5173 = vmatpush.bf16.msra.mxu0 %v3860
          %5174 = vmatpush.bf16.msra.mxu0 %v3852
          %5175 = vmatpush.bf16.msra.mxu0 %v3844
          %5176 = vmatpush.bf16.msra.mxu0 %v3836
          %5177 = vmatmul.bf16.gmra.mxu0 %v1777
          %v5178 = vpop.f32.mrf.mxu0
          %v5179 = vadd.f32 0.0, %v5178
          %v5180 = vpop.f32.mrf.mxu0
          %5181 = vdwg.mxu0
          %5182 = vmatpush.bf16.msra.mxu0 %v3956
          %5183 = vmatpush.bf16.msra.mxu0 %v3948
          %5184 = vmatpush.bf16.msra.mxu0 %v3940
          %5185 = vmatpush.bf16.msra.mxu0 %v3932
          %5186 = vmatpush.bf16.msra.mxu0 %v3924
          %5187 = vmatpush.bf16.msra.mxu0 %v3916
          %5188 = vmatpush.bf16.msra.mxu0 %v3908
          %5189 = vmatpush.bf16.msra.mxu0 %v3900
          %5190 = vmatmul.bf16.gmra.mxu0 %v1778
          %v5191 = vpop.f32.mrf.mxu0
          %v5192 = vadd.f32 %v5179, %v5191
          %v5193 = vpop.f32.mrf.mxu0
          %5194 = vdwg.mxu0
          %5195 = vmatpush.bf16.msra.mxu0 %v4020
          %5196 = vmatpush.bf16.msra.mxu0 %v4012
          %5197 = vmatpush.bf16.msra.mxu0 %v4004
          %5198 = vmatpush.bf16.msra.mxu0 %v3996
          %5199 = vmatpush.bf16.msra.mxu0 %v3988
          %5200 = vmatpush.bf16.msra.mxu0 %v3980
          %5201 = vmatpush.bf16.msra.mxu0 %v3972
          %5202 = vmatpush.bf16.msra.mxu0 %v3964
          %5203 = vmatmul.bf16.gmra.mxu0 %v1779
          %v5204 = vpop.f32.mrf.mxu0
          %v5205 = vadd.f32 %v5192, %v5204
          %v5206 = vpop.f32.mrf.mxu0
          %5207 = vdwg.mxu0
          %5208 = vmatpush.bf16.msra.mxu0 %v4084
          %5209 = vmatpush.bf16.msra.mxu0 %v4076
          %5210 = vmatpush.bf16.msra.mxu0 %v4068
          %5211 = vmatpush.bf16.msra.mxu0 %v4060
          %5212 = vmatpush.bf16.msra.mxu0 %v4052
          %5213 = vmatpush.bf16.msra.mxu0 %v4044
          %5214 = vmatpush.bf16.msra.mxu0 %v4036
          %5215 = vmatpush.bf16.msra.mxu0 %v4028
          %5216 = vmatmul.bf16.gmra.mxu0 %v1780
          %v5217 = vpop.f32.mrf.mxu0
          %v5218 = vadd.f32 %v5205, %v5217
          %v5219 = vpop.f32.mrf.mxu0
          %5220 = vdwg.mxu0
          %5221 = vmatpush.bf16.msra.mxu0 %v4148
          %5222 = vmatpush.bf16.msra.mxu0 %v4140
          %5223 = vmatpush.bf16.msra.mxu0 %v4132
          %5224 = vmatpush.bf16.msra.mxu0 %v4124
          %5225 = vmatpush.bf16.msra.mxu0 %v4116
          %5226 = vmatpush.bf16.msra.mxu0 %v4108
          %5227 = vmatpush.bf16.msra.mxu0 %v4100
          %5228 = vmatpush.bf16.msra.mxu0 %v4092
          %5229 = vmatmul.bf16.gmra.mxu0 %v1781
          %v5230 = vpop.f32.mrf.mxu0
          %v5231 = vadd.f32 %v5218, %v5230
          %v5232 = vpop.f32.mrf.mxu0
          %5233 = vdwg.mxu0
          %5234 = vmatpush.bf16.msra.mxu0 %v4212
          %5235 = vmatpush.bf16.msra.mxu0 %v4204
          %5236 = vmatpush.bf16.msra.mxu0 %v4196
          %5237 = vmatpush.bf16.msra.mxu0 %v4188
          %5238 = vmatpush.bf16.msra.mxu0 %v4180
          %5239 = vmatpush.bf16.msra.mxu0 %v4172
          %5240 = vmatpush.bf16.msra.mxu0 %v4164
          %5241 = vmatpush.bf16.msra.mxu0 %v4156
          %5242 = vmatmul.bf16.gmra.mxu0 %v1782
          %v5243 = vpop.f32.mrf.mxu0
          %v5244 = vadd.f32 %v5231, %v5243
          %v5245 = vpop.f32.mrf.mxu0
          %5246 = vdwg.mxu0
          %5247 = vmatpush.bf16.msra.mxu0 %v4276
          %5248 = vmatpush.bf16.msra.mxu0 %v4268
          %5249 = vmatpush.bf16.msra.mxu0 %v4260
          %5250 = vmatpush.bf16.msra.mxu0 %v4252
          %5251 = vmatpush.bf16.msra.mxu0 %v4244
          %5252 = vmatpush.bf16.msra.mxu0 %v4236
          %5253 = vmatpush.bf16.msra.mxu0 %v4228
          %5254 = vmatpush.bf16.msra.mxu0 %v4220
          %5255 = vmatmul.bf16.gmra.mxu0 %v1783
          %v5256 = vpop.f32.mrf.mxu0
          %v5257 = vadd.f32 %v5244, %v5256
          %v5258 = vpop.f32.mrf.mxu0
          %5259 = vdwg.mxu0
          %5260 = vmatpush.bf16.msra.mxu0 %v4340
          %5261 = vmatpush.bf16.msra.mxu0 %v4332
          %5262 = vmatpush.bf16.msra.mxu0 %v4324
          %5263 = vmatpush.bf16.msra.mxu0 %v4316
          %5264 = vmatpush.bf16.msra.mxu0 %v4308
          %5265 = vmatpush.bf16.msra.mxu0 %v4300
          %5266 = vmatpush.bf16.msra.mxu0 %v4292
          %5267 = vmatpush.bf16.msra.mxu0 %v4284
          %5268 = vmatmul.bf16.gmra.mxu0 %v1784
          %v5269 = vpop.f32.mrf.mxu0
          %v5270 = vadd.f32 %v5257, %v5269
          %v5271 = vpop.f32.mrf.mxu0
          %5272 = vdwg.mxu0
          %5273 = vmatpush.bf16.msra.mxu0 %v3893
          %5274 = vmatpush.bf16.msra.mxu0 %v3885
          %5275 = vmatpush.bf16.msra.mxu0 %v3877
          %5276 = vmatpush.bf16.msra.mxu0 %v3869
          %5277 = vmatpush.bf16.msra.mxu0 %v3861
          %5278 = vmatpush.bf16.msra.mxu0 %v3853
          %5279 = vmatpush.bf16.msra.mxu0 %v3845
          %5280 = vmatpush.bf16.msra.mxu0 %v3837
          %5281 = vmatmul.bf16.gmra.mxu0 %v1777
          %v5282 = vpop.f32.mrf.mxu0
          %v5283 = vadd.f32 0.0, %v5282
          %v5284 = vpop.f32.mrf.mxu0
          %5285 = vdwg.mxu0
          %5286 = vmatpush.bf16.msra.mxu0 %v3957
          %5287 = vmatpush.bf16.msra.mxu0 %v3949
          %5288 = vmatpush.bf16.msra.mxu0 %v3941
          %5289 = vmatpush.bf16.msra.mxu0 %v3933
          %5290 = vmatpush.bf16.msra.mxu0 %v3925
          %5291 = vmatpush.bf16.msra.mxu0 %v3917
          %5292 = vmatpush.bf16.msra.mxu0 %v3909
          %5293 = vmatpush.bf16.msra.mxu0 %v3901
          %5294 = vmatmul.bf16.gmra.mxu0 %v1778
          %v5295 = vpop.f32.mrf.mxu0
          %v5296 = vadd.f32 %v5283, %v5295
          %v5297 = vpop.f32.mrf.mxu0
          %5298 = vdwg.mxu0
          %5299 = vmatpush.bf16.msra.mxu0 %v4021
          %5300 = vmatpush.bf16.msra.mxu0 %v4013
          %5301 = vmatpush.bf16.msra.mxu0 %v4005
          %5302 = vmatpush.bf16.msra.mxu0 %v3997
          %5303 = vmatpush.bf16.msra.mxu0 %v3989
          %5304 = vmatpush.bf16.msra.mxu0 %v3981
          %5305 = vmatpush.bf16.msra.mxu0 %v3973
          %5306 = vmatpush.bf16.msra.mxu0 %v3965
          %5307 = vmatmul.bf16.gmra.mxu0 %v1779
          %v5308 = vpop.f32.mrf.mxu0
          %v5309 = vadd.f32 %v5296, %v5308
          %v5310 = vpop.f32.mrf.mxu0
          %5311 = vdwg.mxu0
          %5312 = vmatpush.bf16.msra.mxu0 %v4085
          %5313 = vmatpush.bf16.msra.mxu0 %v4077
          %5314 = vmatpush.bf16.msra.mxu0 %v4069
          %5315 = vmatpush.bf16.msra.mxu0 %v4061
          %5316 = vmatpush.bf16.msra.mxu0 %v4053
          %5317 = vmatpush.bf16.msra.mxu0 %v4045
          %5318 = vmatpush.bf16.msra.mxu0 %v4037
          %5319 = vmatpush.bf16.msra.mxu0 %v4029
          %5320 = vmatmul.bf16.gmra.mxu0 %v1780
          %v5321 = vpop.f32.mrf.mxu0
          %v5322 = vadd.f32 %v5309, %v5321
          %v5323 = vpop.f32.mrf.mxu0
          %5324 = vdwg.mxu0
          %5325 = vmatpush.bf16.msra.mxu0 %v4149
          %5326 = vmatpush.bf16.msra.mxu0 %v4141
          %5327 = vmatpush.bf16.msra.mxu0 %v4133
          %5328 = vmatpush.bf16.msra.mxu0 %v4125
          %5329 = vmatpush.bf16.msra.mxu0 %v4117
          %5330 = vmatpush.bf16.msra.mxu0 %v4109
          %5331 = vmatpush.bf16.msra.mxu0 %v4101
          %5332 = vmatpush.bf16.msra.mxu0 %v4093
          %5333 = vmatmul.bf16.gmra.mxu0 %v1781
          %v5334 = vpop.f32.mrf.mxu0
          %v5335 = vadd.f32 %v5322, %v5334
          %v5336 = vpop.f32.mrf.mxu0
          %5337 = vdwg.mxu0
          %5338 = vmatpush.bf16.msra.mxu0 %v4213
          %5339 = vmatpush.bf16.msra.mxu0 %v4205
          %5340 = vmatpush.bf16.msra.mxu0 %v4197
          %5341 = vmatpush.bf16.msra.mxu0 %v4189
          %5342 = vmatpush.bf16.msra.mxu0 %v4181
          %5343 = vmatpush.bf16.msra.mxu0 %v4173
          %5344 = vmatpush.bf16.msra.mxu0 %v4165
          %5345 = vmatpush.bf16.msra.mxu0 %v4157
          %5346 = vmatmul.bf16.gmra.mxu0 %v1782
          %v5347 = vpop.f32.mrf.mxu0
          %v5348 = vadd.f32 %v5335, %v5347
          %v5349 = vpop.f32.mrf.mxu0
          %5350 = vdwg.mxu0
          %5351 = vmatpush.bf16.msra.mxu0 %v4277
          %5352 = vmatpush.bf16.msra.mxu0 %v4269
          %5353 = vmatpush.bf16.msra.mxu0 %v4261
          %5354 = vmatpush.bf16.msra.mxu0 %v4253
          %5355 = vmatpush.bf16.msra.mxu0 %v4245
          %5356 = vmatpush.bf16.msra.mxu0 %v4237
          %5357 = vmatpush.bf16.msra.mxu0 %v4229
          %5358 = vmatpush.bf16.msra.mxu0 %v4221
          %5359 = vmatmul.bf16.gmra.mxu0 %v1783
          %v5360 = vpop.f32.mrf.mxu0
          %v5361 = vadd.f32 %v5348, %v5360
          %v5362 = vpop.f32.mrf.mxu0
          %5363 = vdwg.mxu0
          %5364 = vmatpush.bf16.msra.mxu0 %v4341
          %5365 = vmatpush.bf16.msra.mxu0 %v4333
          %5366 = vmatpush.bf16.msra.mxu0 %v4325
          %5367 = vmatpush.bf16.msra.mxu0 %v4317
          %5368 = vmatpush.bf16.msra.mxu0 %v4309
          %5369 = vmatpush.bf16.msra.mxu0 %v4301
          %5370 = vmatpush.bf16.msra.mxu0 %v4293
          %5371 = vmatpush.bf16.msra.mxu0 %v4285
          %5372 = vmatmul.bf16.gmra.mxu0 %v1784
          %v5373 = vpop.f32.mrf.mxu0
          %v5374 = vadd.f32 %v5361, %v5373
          %v5375 = vpop.f32.mrf.mxu0
          %5376 = vdwg.mxu0
          %5377 = vmatpush.bf16.msra.mxu0 %v3894
          %5378 = vmatpush.bf16.msra.mxu0 %v3886
          %5379 = vmatpush.bf16.msra.mxu0 %v3878
          %5380 = vmatpush.bf16.msra.mxu0 %v3870
          %5381 = vmatpush.bf16.msra.mxu0 %v3862
          %5382 = vmatpush.bf16.msra.mxu0 %v3854
          %5383 = vmatpush.bf16.msra.mxu0 %v3846
          %5384 = vmatpush.bf16.msra.mxu0 %v3838
          %5385 = vmatmul.bf16.gmra.mxu0 %v1777
          %v5386 = vpop.f32.mrf.mxu0
          %v5387 = vadd.f32 0.0, %v5386
          %v5388 = vpop.f32.mrf.mxu0
          %5389 = vdwg.mxu0
          %5390 = vmatpush.bf16.msra.mxu0 %v3958
          %5391 = vmatpush.bf16.msra.mxu0 %v3950
          %5392 = vmatpush.bf16.msra.mxu0 %v3942
          %5393 = vmatpush.bf16.msra.mxu0 %v3934
          %5394 = vmatpush.bf16.msra.mxu0 %v3926
          %5395 = vmatpush.bf16.msra.mxu0 %v3918
          %5396 = vmatpush.bf16.msra.mxu0 %v3910
          %5397 = vmatpush.bf16.msra.mxu0 %v3902
          %5398 = vmatmul.bf16.gmra.mxu0 %v1778
          %v5399 = vpop.f32.mrf.mxu0
          %v5400 = vadd.f32 %v5387, %v5399
          %v5401 = vpop.f32.mrf.mxu0
          %5402 = vdwg.mxu0
          %5403 = vmatpush.bf16.msra.mxu0 %v4022
          %5404 = vmatpush.bf16.msra.mxu0 %v4014
          %5405 = vmatpush.bf16.msra.mxu0 %v4006
          %5406 = vmatpush.bf16.msra.mxu0 %v3998
          %5407 = vmatpush.bf16.msra.mxu0 %v3990
          %5408 = vmatpush.bf16.msra.mxu0 %v3982
          %5409 = vmatpush.bf16.msra.mxu0 %v3974
          %5410 = vmatpush.bf16.msra.mxu0 %v3966
          %5411 = vmatmul.bf16.gmra.mxu0 %v1779
          %v5412 = vpop.f32.mrf.mxu0
          %v5413 = vadd.f32 %v5400, %v5412
          %v5414 = vpop.f32.mrf.mxu0
          %5415 = vdwg.mxu0
          %5416 = vmatpush.bf16.msra.mxu0 %v4086
          %5417 = vmatpush.bf16.msra.mxu0 %v4078
          %5418 = vmatpush.bf16.msra.mxu0 %v4070
          %5419 = vmatpush.bf16.msra.mxu0 %v4062
          %5420 = vmatpush.bf16.msra.mxu0 %v4054
          %5421 = vmatpush.bf16.msra.mxu0 %v4046
          %5422 = vmatpush.bf16.msra.mxu0 %v4038
          %5423 = vmatpush.bf16.msra.mxu0 %v4030
          %5424 = vmatmul.bf16.gmra.mxu0 %v1780
          %v5425 = vpop.f32.mrf.mxu0
          %v5426 = vadd.f32 %v5413, %v5425
          %v5427 = vpop.f32.mrf.mxu0
          %5428 = vdwg.mxu0
          %5429 = vmatpush.bf16.msra.mxu0 %v4150
          %5430 = vmatpush.bf16.msra.mxu0 %v4142
          %5431 = vmatpush.bf16.msra.mxu0 %v4134
          %5432 = vmatpush.bf16.msra.mxu0 %v4126
          %5433 = vmatpush.bf16.msra.mxu0 %v4118
          %5434 = vmatpush.bf16.msra.mxu0 %v4110
          %5435 = vmatpush.bf16.msra.mxu0 %v4102
          %5436 = vmatpush.bf16.msra.mxu0 %v4094
          %5437 = vmatmul.bf16.gmra.mxu0 %v1781
          %v5438 = vpop.f32.mrf.mxu0
          %v5439 = vadd.f32 %v5426, %v5438
          %v5440 = vpop.f32.mrf.mxu0
          %5441 = vdwg.mxu0
          %5442 = vmatpush.bf16.msra.mxu0 %v4214
          %5443 = vmatpush.bf16.msra.mxu0 %v4206
          %5444 = vmatpush.bf16.msra.mxu0 %v4198
          %5445 = vmatpush.bf16.msra.mxu0 %v4190
          %5446 = vmatpush.bf16.msra.mxu0 %v4182
          %5447 = vmatpush.bf16.msra.mxu0 %v4174
          %5448 = vmatpush.bf16.msra.mxu0 %v4166
          %5449 = vmatpush.bf16.msra.mxu0 %v4158
          %5450 = vmatmul.bf16.gmra.mxu0 %v1782
          %v5451 = vpop.f32.mrf.mxu0
          %v5452 = vadd.f32 %v5439, %v5451
          %v5453 = vpop.f32.mrf.mxu0
          %5454 = vdwg.mxu0
          %5455 = vmatpush.bf16.msra.mxu0 %v4278
          %5456 = vmatpush.bf16.msra.mxu0 %v4270
          %5457 = vmatpush.bf16.msra.mxu0 %v4262
          %5458 = vmatpush.bf16.msra.mxu0 %v4254
          %5459 = vmatpush.bf16.msra.mxu0 %v4246
          %5460 = vmatpush.bf16.msra.mxu0 %v4238
          %5461 = vmatpush.bf16.msra.mxu0 %v4230
          %5462 = vmatpush.bf16.msra.mxu0 %v4222
          %5463 = vmatmul.bf16.gmra.mxu0 %v1783
          %v5464 = vpop.f32.mrf.mxu0
          %v5465 = vadd.f32 %v5452, %v5464
          %v5466 = vpop.f32.mrf.mxu0
          %5467 = vdwg.mxu0
          %5468 = vmatpush.bf16.msra.mxu0 %v4342
          %5469 = vmatpush.bf16.msra.mxu0 %v4334
          %5470 = vmatpush.bf16.msra.mxu0 %v4326
          %5471 = vmatpush.bf16.msra.mxu0 %v4318
          %5472 = vmatpush.bf16.msra.mxu0 %v4310
          %5473 = vmatpush.bf16.msra.mxu0 %v4302
          %5474 = vmatpush.bf16.msra.mxu0 %v4294
          %5475 = vmatpush.bf16.msra.mxu0 %v4286
          %5476 = vmatmul.bf16.gmra.mxu0 %v1784
          %v5477 = vpop.f32.mrf.mxu0
          %v5478 = vadd.f32 %v5465, %v5477
          %v5479 = vpop.f32.mrf.mxu0
          %5480 = vdwg.mxu0
          %5481 = vmatpush.bf16.msra.mxu0 %v3895
          %5482 = vmatpush.bf16.msra.mxu0 %v3887
          %5483 = vmatpush.bf16.msra.mxu0 %v3879
          %5484 = vmatpush.bf16.msra.mxu0 %v3871
          %5485 = vmatpush.bf16.msra.mxu0 %v3863
          %5486 = vmatpush.bf16.msra.mxu0 %v3855
          %5487 = vmatpush.bf16.msra.mxu0 %v3847
          %5488 = vmatpush.bf16.msra.mxu0 %v3839
          %5489 = vmatmul.bf16.gmra.mxu0 %v1777
          %v5490 = vpop.f32.mrf.mxu0
          %v5491 = vadd.f32 0.0, %v5490
          %v5492 = vpop.f32.mrf.mxu0
          %5493 = vdwg.mxu0
          %5494 = vmatpush.bf16.msra.mxu0 %v3959
          %5495 = vmatpush.bf16.msra.mxu0 %v3951
          %5496 = vmatpush.bf16.msra.mxu0 %v3943
          %5497 = vmatpush.bf16.msra.mxu0 %v3935
          %5498 = vmatpush.bf16.msra.mxu0 %v3927
          %5499 = vmatpush.bf16.msra.mxu0 %v3919
          %5500 = vmatpush.bf16.msra.mxu0 %v3911
          %5501 = vmatpush.bf16.msra.mxu0 %v3903
          %5502 = vmatmul.bf16.gmra.mxu0 %v1778
          %v5503 = vpop.f32.mrf.mxu0
          %v5504 = vadd.f32 %v5491, %v5503
          %v5505 = vpop.f32.mrf.mxu0
          %5506 = vdwg.mxu0
          %5507 = vmatpush.bf16.msra.mxu0 %v4023
          %5508 = vmatpush.bf16.msra.mxu0 %v4015
          %5509 = vmatpush.bf16.msra.mxu0 %v4007
          %5510 = vmatpush.bf16.msra.mxu0 %v3999
          %5511 = vmatpush.bf16.msra.mxu0 %v3991
          %5512 = vmatpush.bf16.msra.mxu0 %v3983
          %5513 = vmatpush.bf16.msra.mxu0 %v3975
          %5514 = vmatpush.bf16.msra.mxu0 %v3967
          %5515 = vmatmul.bf16.gmra.mxu0 %v1779
          %v5516 = vpop.f32.mrf.mxu0
          %v5517 = vadd.f32 %v5504, %v5516
          %v5518 = vpop.f32.mrf.mxu0
          %5519 = vdwg.mxu0
          %5520 = vmatpush.bf16.msra.mxu0 %v4087
          %5521 = vmatpush.bf16.msra.mxu0 %v4079
          %5522 = vmatpush.bf16.msra.mxu0 %v4071
          %5523 = vmatpush.bf16.msra.mxu0 %v4063
          %5524 = vmatpush.bf16.msra.mxu0 %v4055
          %5525 = vmatpush.bf16.msra.mxu0 %v4047
          %5526 = vmatpush.bf16.msra.mxu0 %v4039
          %5527 = vmatpush.bf16.msra.mxu0 %v4031
          %5528 = vmatmul.bf16.gmra.mxu0 %v1780
          %v5529 = vpop.f32.mrf.mxu0
          %v5530 = vadd.f32 %v5517, %v5529
          %v5531 = vpop.f32.mrf.mxu0
          %5532 = vdwg.mxu0
          %5533 = vmatpush.bf16.msra.mxu0 %v4151
          %5534 = vmatpush.bf16.msra.mxu0 %v4143
          %5535 = vmatpush.bf16.msra.mxu0 %v4135
          %5536 = vmatpush.bf16.msra.mxu0 %v4127
          %5537 = vmatpush.bf16.msra.mxu0 %v4119
          %5538 = vmatpush.bf16.msra.mxu0 %v4111
          %5539 = vmatpush.bf16.msra.mxu0 %v4103
          %5540 = vmatpush.bf16.msra.mxu0 %v4095
          %5541 = vmatmul.bf16.gmra.mxu0 %v1781
          %v5542 = vpop.f32.mrf.mxu0
          %v5543 = vadd.f32 %v5530, %v5542
          %v5544 = vpop.f32.mrf.mxu0
          %5545 = vdwg.mxu0
          %5546 = vmatpush.bf16.msra.mxu0 %v4215
          %5547 = vmatpush.bf16.msra.mxu0 %v4207
          %5548 = vmatpush.bf16.msra.mxu0 %v4199
          %5549 = vmatpush.bf16.msra.mxu0 %v4191
          %5550 = vmatpush.bf16.msra.mxu0 %v4183
          %5551 = vmatpush.bf16.msra.mxu0 %v4175
          %5552 = vmatpush.bf16.msra.mxu0 %v4167
          %5553 = vmatpush.bf16.msra.mxu0 %v4159
          %5554 = vmatmul.bf16.gmra.mxu0 %v1782
          %v5555 = vpop.f32.mrf.mxu0
          %v5556 = vadd.f32 %v5543, %v5555
          %v5557 = vpop.f32.mrf.mxu0
          %5558 = vdwg.mxu0
          %5559 = vmatpush.bf16.msra.mxu0 %v4279
          %5560 = vmatpush.bf16.msra.mxu0 %v4271
          %5561 = vmatpush.bf16.msra.mxu0 %v4263
          %5562 = vmatpush.bf16.msra.mxu0 %v4255
          %5563 = vmatpush.bf16.msra.mxu0 %v4247
          %5564 = vmatpush.bf16.msra.mxu0 %v4239
          %5565 = vmatpush.bf16.msra.mxu0 %v4231
          %5566 = vmatpush.bf16.msra.mxu0 %v4223
          %5567 = vmatmul.bf16.gmra.mxu0 %v1783
          %v5568 = vpop.f32.mrf.mxu0
          %v5569 = vadd.f32 %v5556, %v5568
          %v5570 = vpop.f32.mrf.mxu0
          %5571 = vdwg.mxu0
          %5572 = vmatpush.bf16.msra.mxu0 %v4343
          %5573 = vmatpush.bf16.msra.mxu0 %v4335
          %5574 = vmatpush.bf16.msra.mxu0 %v4327
          %5575 = vmatpush.bf16.msra.mxu0 %v4319
          %5576 = vmatpush.bf16.msra.mxu0 %v4311
          %5577 = vmatpush.bf16.msra.mxu0 %v4303
          %5578 = vmatpush.bf16.msra.mxu0 %v4295
          %5579 = vmatpush.bf16.msra.mxu0 %v4287
          %5580 = vmatmul.bf16.gmra.mxu0 %v1784
          %v5581 = vpop.f32.mrf.mxu0
          %v5582 = vadd.f32 %v5569, %v5581
          %v5583 = vpop.f32.mrf.mxu0
          %5584 = vdwg.mxu0
          %5585 = vmatpush.bf16.msra.mxu0 %v3896
          %5586 = vmatpush.bf16.msra.mxu0 %v3888
          %5587 = vmatpush.bf16.msra.mxu0 %v3880
          %5588 = vmatpush.bf16.msra.mxu0 %v3872
          %5589 = vmatpush.bf16.msra.mxu0 %v3864
          %5590 = vmatpush.bf16.msra.mxu0 %v3856
          %5591 = vmatpush.bf16.msra.mxu0 %v3848
          %5592 = vmatpush.bf16.msra.mxu0 %v3840
          %5593 = vmatmul.bf16.gmra.mxu0 %v1777
          %v5594 = vpop.f32.mrf.mxu0
          %v5595 = vadd.f32 0.0, %v5594
          %v5596 = vpop.f32.mrf.mxu0
          %5597 = vdwg.mxu0
          %5598 = vmatpush.bf16.msra.mxu0 %v3960
          %5599 = vmatpush.bf16.msra.mxu0 %v3952
          %5600 = vmatpush.bf16.msra.mxu0 %v3944
          %5601 = vmatpush.bf16.msra.mxu0 %v3936
          %5602 = vmatpush.bf16.msra.mxu0 %v3928
          %5603 = vmatpush.bf16.msra.mxu0 %v3920
          %5604 = vmatpush.bf16.msra.mxu0 %v3912
          %5605 = vmatpush.bf16.msra.mxu0 %v3904
          %5606 = vmatmul.bf16.gmra.mxu0 %v1778
          %v5607 = vpop.f32.mrf.mxu0
          %v5608 = vadd.f32 %v5595, %v5607
          %v5609 = vpop.f32.mrf.mxu0
          %5610 = vdwg.mxu0
          %5611 = vmatpush.bf16.msra.mxu0 %v4024
          %5612 = vmatpush.bf16.msra.mxu0 %v4016
          %5613 = vmatpush.bf16.msra.mxu0 %v4008
          %5614 = vmatpush.bf16.msra.mxu0 %v4000
          %5615 = vmatpush.bf16.msra.mxu0 %v3992
          %5616 = vmatpush.bf16.msra.mxu0 %v3984
          %5617 = vmatpush.bf16.msra.mxu0 %v3976
          %5618 = vmatpush.bf16.msra.mxu0 %v3968
          %5619 = vmatmul.bf16.gmra.mxu0 %v1779
          %v5620 = vpop.f32.mrf.mxu0
          %v5621 = vadd.f32 %v5608, %v5620
          %v5622 = vpop.f32.mrf.mxu0
          %5623 = vdwg.mxu0
          %5624 = vmatpush.bf16.msra.mxu0 %v4088
          %5625 = vmatpush.bf16.msra.mxu0 %v4080
          %5626 = vmatpush.bf16.msra.mxu0 %v4072
          %5627 = vmatpush.bf16.msra.mxu0 %v4064
          %5628 = vmatpush.bf16.msra.mxu0 %v4056
          %5629 = vmatpush.bf16.msra.mxu0 %v4048
          %5630 = vmatpush.bf16.msra.mxu0 %v4040
          %5631 = vmatpush.bf16.msra.mxu0 %v4032
          %5632 = vmatmul.bf16.gmra.mxu0 %v1780
          %v5633 = vpop.f32.mrf.mxu0
          %v5634 = vadd.f32 %v5621, %v5633
          %v5635 = vpop.f32.mrf.mxu0
          %5636 = vdwg.mxu0
          %5637 = vmatpush.bf16.msra.mxu0 %v4152
          %5638 = vmatpush.bf16.msra.mxu0 %v4144
          %5639 = vmatpush.bf16.msra.mxu0 %v4136
          %5640 = vmatpush.bf16.msra.mxu0 %v4128
          %5641 = vmatpush.bf16.msra.mxu0 %v4120
          %5642 = vmatpush.bf16.msra.mxu0 %v4112
          %5643 = vmatpush.bf16.msra.mxu0 %v4104
          %5644 = vmatpush.bf16.msra.mxu0 %v4096
          %5645 = vmatmul.bf16.gmra.mxu0 %v1781
          %v5646 = vpop.f32.mrf.mxu0
          %v5647 = vadd.f32 %v5634, %v5646
          %v5648 = vpop.f32.mrf.mxu0
          %5649 = vdwg.mxu0
          %5650 = vmatpush.bf16.msra.mxu0 %v4216
          %5651 = vmatpush.bf16.msra.mxu0 %v4208
          %5652 = vmatpush.bf16.msra.mxu0 %v4200
          %5653 = vmatpush.bf16.msra.mxu0 %v4192
          %5654 = vmatpush.bf16.msra.mxu0 %v4184
          %5655 = vmatpush.bf16.msra.mxu0 %v4176
          %5656 = vmatpush.bf16.msra.mxu0 %v4168
          %5657 = vmatpush.bf16.msra.mxu0 %v4160
          %5658 = vmatmul.bf16.gmra.mxu0 %v1782
          %v5659 = vpop.f32.mrf.mxu0
          %v5660 = vadd.f32 %v5647, %v5659
          %v5661 = vpop.f32.mrf.mxu0
          %5662 = vdwg.mxu0
          %5663 = vmatpush.bf16.msra.mxu0 %v4280
          %5664 = vmatpush.bf16.msra.mxu0 %v4272
          %5665 = vmatpush.bf16.msra.mxu0 %v4264
          %5666 = vmatpush.bf16.msra.mxu0 %v4256
          %5667 = vmatpush.bf16.msra.mxu0 %v4248
          %5668 = vmatpush.bf16.msra.mxu0 %v4240
          %5669 = vmatpush.bf16.msra.mxu0 %v4232
          %5670 = vmatpush.bf16.msra.mxu0 %v4224
          %5671 = vmatmul.bf16.gmra.mxu0 %v1783
          %v5672 = vpop.f32.mrf.mxu0
          %v5673 = vadd.f32 %v5660, %v5672
          %v5674 = vpop.f32.mrf.mxu0
          %5675 = vdwg.mxu0
          %5676 = vmatpush.bf16.msra.mxu0 %v4344
          %5677 = vmatpush.bf16.msra.mxu0 %v4336
          %5678 = vmatpush.bf16.msra.mxu0 %v4328
          %5679 = vmatpush.bf16.msra.mxu0 %v4320
          %5680 = vmatpush.bf16.msra.mxu0 %v4312
          %5681 = vmatpush.bf16.msra.mxu0 %v4304
          %5682 = vmatpush.bf16.msra.mxu0 %v4296
          %5683 = vmatpush.bf16.msra.mxu0 %v4288
          %5684 = vmatmul.bf16.gmra.mxu0 %v1784
          %v5685 = vpop.f32.mrf.mxu0
          %v5686 = vadd.f32 %v5673, %v5685
          %v5687 = vpop.f32.mrf.mxu0
          %5688 = vdwg.mxu0
          %v5689 = vsel %vm1447, %v4958, 0.0
          %v5690 = vrot.slane %v5689, 4
          %v5691 = vadd.f32 %v5689, %v5690
          %v5692 = vrot.slane %v5691, 2
          %v5693 = vadd.f32 %v5691, %v5692
          %v5694 = vrot.slane %v5693, 1
          %v5695 = vadd.f32 %v5693, %v5694
          %v5696 = vsel %vm1447, %v5062, 0.0
          %v5697 = vrot.slane %v5696, 4
          %v5698 = vadd.f32 %v5696, %v5697
          %v5699 = vrot.slane %v5698, 2
          %v5700 = vadd.f32 %v5698, %v5699
          %v5701 = vrot.slane %v5700, 1
          %v5702 = vadd.f32 %v5700, %v5701
          %v5703 = vsel %vm1447, %v5166, 0.0
          %v5704 = vrot.slane %v5703, 4
          %v5705 = vadd.f32 %v5703, %v5704
          %v5706 = vrot.slane %v5705, 2
          %v5707 = vadd.f32 %v5705, %v5706
          %v5708 = vrot.slane %v5707, 1
          %v5709 = vadd.f32 %v5707, %v5708
          %v5710 = vsel %vm1447, %v5270, 0.0
          %v5711 = vrot.slane %v5710, 4
          %v5712 = vadd.f32 %v5710, %v5711
          %v5713 = vrot.slane %v5712, 2
          %v5714 = vadd.f32 %v5712, %v5713
          %v5715 = vrot.slane %v5714, 1
          %v5716 = vadd.f32 %v5714, %v5715
          %v5717 = vsel %vm1447, %v5374, 0.0
          %v5718 = vrot.slane %v5717, 4
          %v5719 = vadd.f32 %v5717, %v5718
          %v5720 = vrot.slane %v5719, 2
          %v5721 = vadd.f32 %v5719, %v5720
          %v5722 = vrot.slane %v5721, 1
          %v5723 = vadd.f32 %v5721, %v5722
          %v5724 = vsel %vm1447, %v5478, 0.0
          %v5725 = vrot.slane %v5724, 4
          %v5726 = vadd.f32 %v5724, %v5725
          %v5727 = vrot.slane %v5726, 2
          %v5728 = vadd.f32 %v5726, %v5727
          %v5729 = vrot.slane %v5728, 1
          %v5730 = vadd.f32 %v5728, %v5729
          %v5731 = vsel %vm1447, %v5582, 0.0
          %v5732 = vrot.slane %v5731, 4
          %v5733 = vadd.f32 %v5731, %v5732
          %v5734 = vrot.slane %v5733, 2
          %v5735 = vadd.f32 %v5733, %v5734
          %v5736 = vrot.slane %v5735, 1
          %v5737 = vadd.f32 %v5735, %v5736
          %v5738 = vsel %vm1447, %v5686, 0.0
          %v5739 = vrot.slane %v5738, 4
          %v5740 = vadd.f32 %v5738, %v5739
          %v5741 = vrot.slane %v5740, 2
          %v5742 = vadd.f32 %v5740, %v5741
          %v5743 = vrot.slane %v5742, 1
          %v5744 = vadd.f32 %v5742, %v5743
          %v5745 = vmul.f32 %v5695, %v1510
          %v5746 = vmul.f32 %v5702, %v1510
          %v5747 = vmul.f32 %v5709, %v1510
          %v5748 = vmul.f32 %v5716, %v1510
          %v5749 = vmul.f32 %v5723, %v1510
          %v5750 = vmul.f32 %v5730, %v1510
          %v5751 = vmul.f32 %v5737, %v1510
          %v5752 = vmul.f32 %v5744, %v1510
          %v5753 = vsub.f32 %v4958, %v5745
          %v5754 = vsub.f32 %v5062, %v5746
          %v5755 = vsub.f32 %v5166, %v5747
          %v5756 = vsub.f32 %v5270, %v5748
          %v5757 = vsub.f32 %v5374, %v5749
          %v5758 = vsub.f32 %v5478, %v5750
          %v5759 = vsub.f32 %v5582, %v5751
          %v5760 = vsub.f32 %v5686, %v5752
          %v5761 = vmul.f32 %v5753, %v5753
          %v5762 = vmul.f32 %v5754, %v5754
          %v5763 = vmul.f32 %v5755, %v5755
          %v5764 = vmul.f32 %v5756, %v5756
          %v5765 = vmul.f32 %v5757, %v5757
          %v5766 = vmul.f32 %v5758, %v5758
          %v5767 = vmul.f32 %v5759, %v5759
          %v5768 = vmul.f32 %v5760, %v5760
          %v5769 = vsel %vm1447, %v5761, 0.0
          %v5770 = vrot.slane %v5769, 4
          %v5771 = vadd.f32 %v5769, %v5770
          %v5772 = vrot.slane %v5771, 2
          %v5773 = vadd.f32 %v5771, %v5772
          %v5774 = vrot.slane %v5773, 1
          %v5775 = vadd.f32 %v5773, %v5774
          %v5776 = vsel %vm1447, %v5762, 0.0
          %v5777 = vrot.slane %v5776, 4
          %v5778 = vadd.f32 %v5776, %v5777
          %v5779 = vrot.slane %v5778, 2
          %v5780 = vadd.f32 %v5778, %v5779
          %v5781 = vrot.slane %v5780, 1
          %v5782 = vadd.f32 %v5780, %v5781
          %v5783 = vsel %vm1447, %v5763, 0.0
          %v5784 = vrot.slane %v5783, 4
          %v5785 = vadd.f32 %v5783, %v5784
          %v5786 = vrot.slane %v5785, 2
          %v5787 = vadd.f32 %v5785, %v5786
          %v5788 = vrot.slane %v5787, 1
          %v5789 = vadd.f32 %v5787, %v5788
          %v5790 = vsel %vm1447, %v5764, 0.0
          %v5791 = vrot.slane %v5790, 4
          %v5792 = vadd.f32 %v5790, %v5791
          %v5793 = vrot.slane %v5792, 2
          %v5794 = vadd.f32 %v5792, %v5793
          %v5795 = vrot.slane %v5794, 1
          %v5796 = vadd.f32 %v5794, %v5795
          %v5797 = vsel %vm1447, %v5765, 0.0
          %v5798 = vrot.slane %v5797, 4
          %v5799 = vadd.f32 %v5797, %v5798
          %v5800 = vrot.slane %v5799, 2
          %v5801 = vadd.f32 %v5799, %v5800
          %v5802 = vrot.slane %v5801, 1
          %v5803 = vadd.f32 %v5801, %v5802
          %v5804 = vsel %vm1447, %v5766, 0.0
          %v5805 = vrot.slane %v5804, 4
          %v5806 = vadd.f32 %v5804, %v5805
          %v5807 = vrot.slane %v5806, 2
          %v5808 = vadd.f32 %v5806, %v5807
          %v5809 = vrot.slane %v5808, 1
          %v5810 = vadd.f32 %v5808, %v5809
          %v5811 = vsel %vm1447, %v5767, 0.0
          %v5812 = vrot.slane %v5811, 4
          %v5813 = vadd.f32 %v5811, %v5812
          %v5814 = vrot.slane %v5813, 2
          %v5815 = vadd.f32 %v5813, %v5814
          %v5816 = vrot.slane %v5815, 1
          %v5817 = vadd.f32 %v5815, %v5816
          %v5818 = vsel %vm1447, %v5768, 0.0
          %v5819 = vrot.slane %v5818, 4
          %v5820 = vadd.f32 %v5818, %v5819
          %v5821 = vrot.slane %v5820, 2
          %v5822 = vadd.f32 %v5820, %v5821
          %v5823 = vrot.slane %v5822, 1
          %v5824 = vadd.f32 %v5822, %v5823
          %v5825 = vmul.f32 %v5775, %v1510
          %v5826 = vmul.f32 %v5782, %v1510
          %v5827 = vmul.f32 %v5789, %v1510
          %v5828 = vmul.f32 %v5796, %v1510
          %v5829 = vmul.f32 %v5803, %v1510
          %v5830 = vmul.f32 %v5810, %v1510
          %v5831 = vmul.f32 %v5817, %v1510
          %v5832 = vmul.f32 %v5824, %v1510
          %v5833 = vld [vmem:[#allocation14] sm:$0xff]
          %v5834 = vadd.f32 %v5825, 1e-05
          %v5835 = vadd.f32 %v5826, 1e-05
          %v5836 = vadd.f32 %v5827, 1e-05
          %v5837 = vadd.f32 %v5828, 1e-05
          %v5838 = vadd.f32 %v5829, 1e-05
          %v5839 = vadd.f32 %v5830, 1e-05
          %v5840 = vadd.f32 %v5831, 1e-05
          %v5841 = vadd.f32 %v5832, 1e-05
          %v5842 = vrsqrt.pop %v5834
          %v5843 = vmul.f32 %v5842, %v5834
          %v5844 = vmul.f32 %v5843, %v5842
          %v5845 = vmul.f32 0.5, %v5844
          %v5846 = vsub.f32 1.5, %v5845
          %v5847 = vmul.f32 %v5842, %v5846
          %vm5848 = vweird.f32 %v5834
          %vm5849 = vweird.f32 %v5842
          %vm5850 = vmor %vm5848, %vm5849
          %v5851 = vsel %vm5850, %v5842, %v5847
          %v5852 = vrsqrt.pop %v5835
          %v5853 = vmul.f32 %v5852, %v5835
          %v5854 = vmul.f32 %v5853, %v5852
          %v5855 = vmul.f32 0.5, %v5854
          %v5856 = vsub.f32 1.5, %v5855
          %v5857 = vmul.f32 %v5852, %v5856
          %vm5858 = vweird.f32 %v5835
          %vm5859 = vweird.f32 %v5852
          %vm5860 = vmor %vm5858, %vm5859
          %v5861 = vsel %vm5860, %v5852, %v5857
          %v5862 = vrsqrt.pop %v5836
          %v5863 = vmul.f32 %v5862, %v5836
          %v5864 = vmul.f32 %v5863, %v5862
          %v5865 = vmul.f32 0.5, %v5864
          %v5866 = vsub.f32 1.5, %v5865
          %v5867 = vmul.f32 %v5862, %v5866
          %vm5868 = vweird.f32 %v5836
          %vm5869 = vweird.f32 %v5862
          %vm5870 = vmor %vm5868, %vm5869
          %v5871 = vsel %vm5870, %v5862, %v5867
          %v5872 = vrsqrt.pop %v5837
          %v5873 = vmul.f32 %v5872, %v5837
          %v5874 = vmul.f32 %v5873, %v5872
          %v5875 = vmul.f32 0.5, %v5874
          %v5876 = vsub.f32 1.5, %v5875
          %v5877 = vmul.f32 %v5872, %v5876
          %vm5878 = vweird.f32 %v5837
          %vm5879 = vweird.f32 %v5872
          %vm5880 = vmor %vm5878, %vm5879
          %v5881 = vsel %vm5880, %v5872, %v5877
          %v5882 = vrsqrt.pop %v5838
          %v5883 = vmul.f32 %v5882, %v5838
          %v5884 = vmul.f32 %v5883, %v5882
          %v5885 = vmul.f32 0.5, %v5884
          %v5886 = vsub.f32 1.5, %v5885
          %v5887 = vmul.f32 %v5882, %v5886
          %vm5888 = vweird.f32 %v5838
          %vm5889 = vweird.f32 %v5882
          %vm5890 = vmor %vm5888, %vm5889
          %v5891 = vsel %vm5890, %v5882, %v5887
          %v5892 = vrsqrt.pop %v5839
          %v5893 = vmul.f32 %v5892, %v5839
          %v5894 = vmul.f32 %v5893, %v5892
          %v5895 = vmul.f32 0.5, %v5894
          %v5896 = vsub.f32 1.5, %v5895
          %v5897 = vmul.f32 %v5892, %v5896
          %vm5898 = vweird.f32 %v5839
          %vm5899 = vweird.f32 %v5892
          %vm5900 = vmor %vm5898, %vm5899
          %v5901 = vsel %vm5900, %v5892, %v5897
          %v5902 = vrsqrt.pop %v5840
          %v5903 = vmul.f32 %v5902, %v5840
          %v5904 = vmul.f32 %v5903, %v5902
          %v5905 = vmul.f32 0.5, %v5904
          %v5906 = vsub.f32 1.5, %v5905
          %v5907 = vmul.f32 %v5902, %v5906
          %vm5908 = vweird.f32 %v5840
          %vm5909 = vweird.f32 %v5902
          %vm5910 = vmor %vm5908, %vm5909
          %v5911 = vsel %vm5910, %v5902, %v5907
          %v5912 = vrsqrt.pop %v5841
          %v5913 = vmul.f32 %v5912, %v5841
          %v5914 = vmul.f32 %v5913, %v5912
          %v5915 = vmul.f32 0.5, %v5914
          %v5916 = vsub.f32 1.5, %v5915
          %v5917 = vmul.f32 %v5912, %v5916
          %vm5918 = vweird.f32 %v5841
          %vm5919 = vweird.f32 %v5912
          %vm5920 = vmor %vm5918, %vm5919
          %v5921 = vsel %vm5920, %v5912, %v5917
          %v5930 = vrot.slane %v5861, 7
          %v5931 = vrot.slane %v5871, 6
          %v5932 = vrot.slane %v5881, 5
          %v5933 = vrot.slane %v5891, 4
          %v5934 = vrot.slane %v5901, 3
          %v5935 = vrot.slane %v5911, 2
          %v5936 = vrot.slane %v5921, 1
          %v5937 = vsel %vm1703, %v5851, %v5930
          %v5938 = vsel %vm1705, %v5931, %v5932
          %v5939 = vsel %vm1707, %v5937, %v5938
          %v5940 = vsel %vm1709, %v5933, %v5934
          %v5941 = vsel %vm1711, %v5935, %v5936
          %v5942 = vsel %vm1713, %v5940, %v5941
          %v5943 = vsel %vm1447, %v5939, %v5942
          %v5945 = vmul.f32 %v5833, %v5943
          %v5947 = vperm.slane %v5945, 0
          %v5948 = vperm.slane %v5945, 1
          %v5949 = vperm.slane %v5945, 2
          %v5950 = vperm.slane %v5945, 3
          %v5951 = vperm.slane %v5945, 4
          %v5952 = vperm.slane %v5945, 5
          %v5953 = vperm.slane %v5945, 6
          %v5954 = vperm.slane %v5945, 7
          %v5963 = vmul.f32 %v5753, %v5947
          %v5964 = vmul.f32 %v5754, %v5948
          %v5965 = vmul.f32 %v5755, %v5949
          %v5966 = vmul.f32 %v5756, %v5950
          %v5967 = vmul.f32 %v5757, %v5951
          %v5968 = vmul.f32 %v5758, %v5952
          %v5969 = vmul.f32 %v5759, %v5953
          %v5970 = vmul.f32 %v5760, %v5954
          %v5971 = vld [vmem:[#allocation15] sm:$0xff]
          %v5973 = vperm.slane %v5971, 0
          %v5974 = vperm.slane %v5971, 1
          %v5975 = vperm.slane %v5971, 2
          %v5976 = vperm.slane %v5971, 3
          %v5977 = vperm.slane %v5971, 4
          %v5978 = vperm.slane %v5971, 5
          %v5979 = vperm.slane %v5971, 6
          %v5980 = vperm.slane %v5971, 7
          %v5989 = vadd.f32 %v5963, %v5973
          %v5990 = vadd.f32 %v5964, %v5974
          %v5991 = vadd.f32 %v5965, %v5975
          %v5992 = vadd.f32 %v5966, %v5976
          %v5993 = vadd.f32 %v5967, %v5977
          %v5994 = vadd.f32 %v5968, %v5978
          %v5995 = vadd.f32 %v5969, %v5979
          %v5996 = vadd.f32 %v5970, %v5980
          %v5997 = vmax.f32 %v5989, 0.0
          %v5998 = vmax.f32 %v5990, 0.0
          %v5999 = vmax.f32 %v5991, 0.0
          %v6000 = vmax.f32 %v5992, 0.0
          %v6001 = vmax.f32 %v5993, 0.0
          %v6002 = vmax.f32 %v5994, 0.0
          %v6003 = vmax.f32 %v5995, 0.0
          %v6004 = vmax.f32 %v5996, 0.0
          %v6005 = vpack.c.bf16 %v5998, %v5997
          %v6006 = vpack.c.bf16 %v6000, %v5999
          %v6007 = vpack.c.bf16 %v6002, %v6001
          %v6008 = vpack.c.bf16 %v6004, %v6003
          %v6013 = vrot.slane %v6005, 2
          %v6014 = vrot.slane %v6006, 4
          %v6015 = vrot.slane %v6006, 6
          %v6016 = vrot.slane %v6007, 2
          %v6017 = vrot.slane %v6008, 4
          %v6018 = vrot.slane %v6008, 6
          %v6021 = vsel %vm1707, %v6005, %v6013
          %v6024 = vsel %vm1713, %v6014, %v6015
          %v6025 = vsel %vm1447, %v6021, %v6024
          %v6028 = vsel %vm1707, %v6007, %v6016
          %v6031 = vsel %vm1713, %v6017, %v6018
          %v6032 = vsel %vm1447, %v6028, %v6031
          %6035 = vst [vmem:[#allocation2] sm:$0xff] %v6025
          %6036 = vst [vmem:[#allocation2 + $0x8] sm:$0xff] %v6032
        $region88: #{tpu_custom_call.1} parent=51 // pred_fallthru
          _
        %v6037 = vld [vmem:[#allocation2] sm:$0xff]
        %v6038 = vld [vmem:[#allocation2 + $0x8] sm:$0xff]
        %v6039 = vld [vmem:[%s400] sm:$0xff]
        %v6040 = vld [vmem:[%s400 + $0x8] sm:$0xff]
        %v6041 = vld [vmem:[%s400 + $0x10] sm:$0xff]
        %v6042 = vld [vmem:[%s400 + $0x18] sm:$0xff]
        %v6043 = vld [vmem:[%s400 + $0x20] sm:$0xff]
        %v6044 = vld [vmem:[%s400 + $0x28] sm:$0xff]
        %v6045 = vld [vmem:[%s400 + $0x30] sm:$0xff]
        %v6046 = vld [vmem:[%s400 + $0x38] sm:$0xff]
        %v6047 = vld [vmem:[%s400 + $0x40] sm:$0xff]
        %v6048 = vld [vmem:[%s400 + $0x48] sm:$0xff]
        %v6049 = vld [vmem:[%s400 + $0x50] sm:$0xff]
        %v6050 = vld [vmem:[%s400 + $0x58] sm:$0xff]
        %v6051 = vld [vmem:[%s400 + $0x60] sm:$0xff]
        %v6052 = vld [vmem:[%s400 + $0x68] sm:$0xff]
        %v6053 = vld [vmem:[%s400 + $0x70] sm:$0xff]
        %v6054 = vld [vmem:[%s400 + $0x78] sm:$0xff]
        %v6055 = vld [vmem:[%s400 + $0x80] sm:$0xff]
        %v6056 = vld [vmem:[%s400 + $0x88] sm:$0xff]
        %v6057 = vld [vmem:[%s400 + $0x90] sm:$0xff]
        %v6058 = vld [vmem:[%s400 + $0x98] sm:$0xff]
        %v6059 = vld [vmem:[%s400 + $0xa0] sm:$0xff]
        %v6060 = vld [vmem:[%s400 + $0xa8] sm:$0xff]
        %v6061 = vld [vmem:[%s400 + $0xb0] sm:$0xff]
        %v6062 = vld [vmem:[%s400 + $0xb8] sm:$0xff]
        %v6063 = vld [vmem:[%s400 + $0xc0] sm:$0xff]
        %v6064 = vld [vmem:[%s400 + $0xc8] sm:$0xff]
        %v6065 = vld [vmem:[%s400 + $0xd0] sm:$0xff]
        %v6066 = vld [vmem:[%s400 + $0xd8] sm:$0xff]
        %v6067 = vld [vmem:[%s400 + $0xe0] sm:$0xff]
        %v6068 = vld [vmem:[%s400 + $0xe8] sm:$0xff]
        %v6069 = vld [vmem:[%s400 + $0xf0] sm:$0xff]
        %v6070 = vld [vmem:[%s400 + $0xf8] sm:$0xff]
        %v6071 = vld [vmem:[%s400 + $0x100] sm:$0xff]
        %v6072 = vld [vmem:[%s400 + $0x108] sm:$0xff]
        %v6073 = vld [vmem:[%s400 + $0x110] sm:$0xff]
        %v6074 = vld [vmem:[%s400 + $0x118] sm:$0xff]
        %v6075 = vld [vmem:[%s400 + $0x120] sm:$0xff]
        %v6076 = vld [vmem:[%s400 + $0x128] sm:$0xff]
        %v6077 = vld [vmem:[%s400 + $0x130] sm:$0xff]
        %v6078 = vld [vmem:[%s400 + $0x138] sm:$0xff]
        %v6079 = vld [vmem:[%s400 + $0x140] sm:$0xff]
        %v6080 = vld [vmem:[%s400 + $0x148] sm:$0xff]
        %v6081 = vld [vmem:[%s400 + $0x150] sm:$0xff]
        %v6082 = vld [vmem:[%s400 + $0x158] sm:$0xff]
        %v6083 = vld [vmem:[%s400 + $0x160] sm:$0xff]
        %v6084 = vld [vmem:[%s400 + $0x168] sm:$0xff]
        %v6085 = vld [vmem:[%s400 + $0x170] sm:$0xff]
        %v6086 = vld [vmem:[%s400 + $0x178] sm:$0xff]
        %v6087 = vld [vmem:[%s400 + $0x180] sm:$0xff]
        %v6088 = vld [vmem:[%s400 + $0x188] sm:$0xff]
        %v6089 = vld [vmem:[%s400 + $0x190] sm:$0xff]
        %v6090 = vld [vmem:[%s400 + $0x198] sm:$0xff]
        %v6091 = vld [vmem:[%s400 + $0x1a0] sm:$0xff]
        %v6092 = vld [vmem:[%s400 + $0x1a8] sm:$0xff]
        %v6093 = vld [vmem:[%s400 + $0x1b0] sm:$0xff]
        %v6094 = vld [vmem:[%s400 + $0x1b8] sm:$0xff]
        %v6095 = vld [vmem:[%s400 + $0x1c0] sm:$0xff]
        %v6096 = vld [vmem:[%s400 + $0x1c8] sm:$0xff]
        %v6097 = vld [vmem:[%s400 + $0x1d0] sm:$0xff]
        %v6098 = vld [vmem:[%s400 + $0x1d8] sm:$0xff]
        %v6099 = vld [vmem:[%s400 + $0x1e0] sm:$0xff]
        %v6100 = vld [vmem:[%s400 + $0x1e8] sm:$0xff]
        %v6101 = vld [vmem:[%s400 + $0x1f0] sm:$0xff]
        %v6102 = vld [vmem:[%s400 + $0x1f8] sm:$0xff]
        %v6103 = vld [vmem:[%s400 + $0x200] sm:$0xff]
        %v6104 = vld [vmem:[%s400 + $0x208] sm:$0xff]
        %v6105 = vld [vmem:[%s400 + $0x210] sm:$0xff]
        %v6106 = vld [vmem:[%s400 + $0x218] sm:$0xff]
        %v6107 = vld [vmem:[%s400 + $0x220] sm:$0xff]
        %v6108 = vld [vmem:[%s400 + $0x228] sm:$0xff]
        %v6109 = vld [vmem:[%s400 + $0x230] sm:$0xff]
        %v6110 = vld [vmem:[%s400 + $0x238] sm:$0xff]
        %v6111 = vld [vmem:[%s400 + $0x240] sm:$0xff]
        %v6112 = vld [vmem:[%s400 + $0x248] sm:$0xff]
        %v6113 = vld [vmem:[%s400 + $0x250] sm:$0xff]
        %v6114 = vld [vmem:[%s400 + $0x258] sm:$0xff]
        %v6115 = vld [vmem:[%s400 + $0x260] sm:$0xff]
        %v6116 = vld [vmem:[%s400 + $0x268] sm:$0xff]
        %v6117 = vld [vmem:[%s400 + $0x270] sm:$0xff]
        %v6118 = vld [vmem:[%s400 + $0x278] sm:$0xff]
        %v6119 = vld [vmem:[%s400 + $0x280] sm:$0xff]
        %v6120 = vld [vmem:[%s400 + $0x288] sm:$0xff]
        %v6121 = vld [vmem:[%s400 + $0x290] sm:$0xff]
        %v6122 = vld [vmem:[%s400 + $0x298] sm:$0xff]
        %v6123 = vld [vmem:[%s400 + $0x2a0] sm:$0xff]
        %v6124 = vld [vmem:[%s400 + $0x2a8] sm:$0xff]
        %v6125 = vld [vmem:[%s400 + $0x2b0] sm:$0xff]
        %v6126 = vld [vmem:[%s400 + $0x2b8] sm:$0xff]
        %v6127 = vld [vmem:[%s400 + $0x2c0] sm:$0xff]
        %v6128 = vld [vmem:[%s400 + $0x2c8] sm:$0xff]
        %v6129 = vld [vmem:[%s400 + $0x2d0] sm:$0xff]
        %v6130 = vld [vmem:[%s400 + $0x2d8] sm:$0xff]
        %v6131 = vld [vmem:[%s400 + $0x2e0] sm:$0xff]
        %v6132 = vld [vmem:[%s400 + $0x2e8] sm:$0xff]
        %v6133 = vld [vmem:[%s400 + $0x2f0] sm:$0xff]
        %v6134 = vld [vmem:[%s400 + $0x2f8] sm:$0xff]
        %v6135 = vld [vmem:[%s400 + $0x300] sm:$0xff]
        %v6136 = vld [vmem:[%s400 + $0x308] sm:$0xff]
        %v6137 = vld [vmem:[%s400 + $0x310] sm:$0xff]
        %v6138 = vld [vmem:[%s400 + $0x318] sm:$0xff]
        %v6139 = vld [vmem:[%s400 + $0x320] sm:$0xff]
        %v6140 = vld [vmem:[%s400 + $0x328] sm:$0xff]
        %v6141 = vld [vmem:[%s400 + $0x330] sm:$0xff]
        %v6142 = vld [vmem:[%s400 + $0x338] sm:$0xff]
        %v6143 = vld [vmem:[%s400 + $0x340] sm:$0xff]
        %v6144 = vld [vmem:[%s400 + $0x348] sm:$0xff]
        %v6145 = vld [vmem:[%s400 + $0x350] sm:$0xff]
        %v6146 = vld [vmem:[%s400 + $0x358] sm:$0xff]
        %v6147 = vld [vmem:[%s400 + $0x360] sm:$0xff]
        %v6148 = vld [vmem:[%s400 + $0x368] sm:$0xff]
        %v6149 = vld [vmem:[%s400 + $0x370] sm:$0xff]
        %v6150 = vld [vmem:[%s400 + $0x378] sm:$0xff]
        %v6151 = vld [vmem:[%s400 + $0x380] sm:$0xff]
        %v6152 = vld [vmem:[%s400 + $0x388] sm:$0xff]
        %v6153 = vld [vmem:[%s400 + $0x390] sm:$0xff]
        %v6154 = vld [vmem:[%s400 + $0x398] sm:$0xff]
        %v6155 = vld [vmem:[%s400 + $0x3a0] sm:$0xff]
        %v6156 = vld [vmem:[%s400 + $0x3a8] sm:$0xff]
        %v6157 = vld [vmem:[%s400 + $0x3b0] sm:$0xff]
        %v6158 = vld [vmem:[%s400 + $0x3b8] sm:$0xff]
        %v6159 = vld [vmem:[%s400 + $0x3c0] sm:$0xff]
        %v6160 = vld [vmem:[%s400 + $0x3c8] sm:$0xff]
        %v6161 = vld [vmem:[%s400 + $0x3d0] sm:$0xff]
        %v6162 = vld [vmem:[%s400 + $0x3d8] sm:$0xff]
        %v6163 = vld [vmem:[%s400 + $0x3e0] sm:$0xff]
        %v6164 = vld [vmem:[%s400 + $0x3e8] sm:$0xff]
        %v6165 = vld [vmem:[%s400 + $0x3f0] sm:$0xff]
        %v6166 = vld [vmem:[%s400 + $0x3f8] sm:$0xff]
        %v6167 = vld [vmem:[%s400 + $0x400] sm:$0xff]
        %v6168 = vld [vmem:[%s400 + $0x408] sm:$0xff]
        %v6169 = vld [vmem:[%s400 + $0x410] sm:$0xff]
        %v6170 = vld [vmem:[%s400 + $0x418] sm:$0xff]
        %v6171 = vld [vmem:[%s400 + $0x420] sm:$0xff]
        %v6172 = vld [vmem:[%s400 + $0x428] sm:$0xff]
        %v6173 = vld [vmem:[%s400 + $0x430] sm:$0xff]
        %v6174 = vld [vmem:[%s400 + $0x438] sm:$0xff]
        %v6175 = vld [vmem:[%s400 + $0x440] sm:$0xff]
        %v6176 = vld [vmem:[%s400 + $0x448] sm:$0xff]
        %v6177 = vld [vmem:[%s400 + $0x450] sm:$0xff]
        %v6178 = vld [vmem:[%s400 + $0x458] sm:$0xff]
        %v6179 = vld [vmem:[%s400 + $0x460] sm:$0xff]
        %v6180 = vld [vmem:[%s400 + $0x468] sm:$0xff]
        %v6181 = vld [vmem:[%s400 + $0x470] sm:$0xff]
        %v6182 = vld [vmem:[%s400 + $0x478] sm:$0xff]
        %v6183 = vld [vmem:[%s400 + $0x480] sm:$0xff]
        %v6184 = vld [vmem:[%s400 + $0x488] sm:$0xff]
        %v6185 = vld [vmem:[%s400 + $0x490] sm:$0xff]
        %v6186 = vld [vmem:[%s400 + $0x498] sm:$0xff]
        %v6187 = vld [vmem:[%s400 + $0x4a0] sm:$0xff]
        %v6188 = vld [vmem:[%s400 + $0x4a8] sm:$0xff]
        %v6189 = vld [vmem:[%s400 + $0x4b0] sm:$0xff]
        %v6190 = vld [vmem:[%s400 + $0x4b8] sm:$0xff]
        %v6191 = vld [vmem:[%s400 + $0x4c0] sm:$0xff]
        %v6192 = vld [vmem:[%s400 + $0x4c8] sm:$0xff]
        %v6193 = vld [vmem:[%s400 + $0x4d0] sm:$0xff]
        %v6194 = vld [vmem:[%s400 + $0x4d8] sm:$0xff]
        %v6195 = vld [vmem:[%s400 + $0x4e0] sm:$0xff]
        %v6196 = vld [vmem:[%s400 + $0x4e8] sm:$0xff]
        %v6197 = vld [vmem:[%s400 + $0x4f0] sm:$0xff]
        %v6198 = vld [vmem:[%s400 + $0x4f8] sm:$0xff]
        %v6199 = vld [vmem:[%s400 + $0x500] sm:$0xff]
        %v6200 = vld [vmem:[%s400 + $0x508] sm:$0xff]
        %v6201 = vld [vmem:[%s400 + $0x510] sm:$0xff]
        %v6202 = vld [vmem:[%s400 + $0x518] sm:$0xff]
        %v6203 = vld [vmem:[%s400 + $0x520] sm:$0xff]
        %v6204 = vld [vmem:[%s400 + $0x528] sm:$0xff]
        %v6205 = vld [vmem:[%s400 + $0x530] sm:$0xff]
        %v6206 = vld [vmem:[%s400 + $0x538] sm:$0xff]
        %v6207 = vld [vmem:[%s400 + $0x540] sm:$0xff]
        %v6208 = vld [vmem:[%s400 + $0x548] sm:$0xff]
        %v6209 = vld [vmem:[%s400 + $0x550] sm:$0xff]
        %v6210 = vld [vmem:[%s400 + $0x558] sm:$0xff]
        %v6211 = vld [vmem:[%s400 + $0x560] sm:$0xff]
        %v6212 = vld [vmem:[%s400 + $0x568] sm:$0xff]
        %v6213 = vld [vmem:[%s400 + $0x570] sm:$0xff]
        %v6214 = vld [vmem:[%s400 + $0x578] sm:$0xff]
        %v6215 = vld [vmem:[%s400 + $0x580] sm:$0xff]
        %v6216 = vld [vmem:[%s400 + $0x588] sm:$0xff]
        %v6217 = vld [vmem:[%s400 + $0x590] sm:$0xff]
        %v6218 = vld [vmem:[%s400 + $0x598] sm:$0xff]
        %v6219 = vld [vmem:[%s400 + $0x5a0] sm:$0xff]
        %v6220 = vld [vmem:[%s400 + $0x5a8] sm:$0xff]
        %v6221 = vld [vmem:[%s400 + $0x5b0] sm:$0xff]
        %v6222 = vld [vmem:[%s400 + $0x5b8] sm:$0xff]
        %v6223 = vld [vmem:[%s400 + $0x5c0] sm:$0xff]
        %v6224 = vld [vmem:[%s400 + $0x5c8] sm:$0xff]
        %v6225 = vld [vmem:[%s400 + $0x5d0] sm:$0xff]
        %v6226 = vld [vmem:[%s400 + $0x5d8] sm:$0xff]
        %v6227 = vld [vmem:[%s400 + $0x5e0] sm:$0xff]
        %v6228 = vld [vmem:[%s400 + $0x5e8] sm:$0xff]
        %v6229 = vld [vmem:[%s400 + $0x5f0] sm:$0xff]
        %v6230 = vld [vmem:[%s400 + $0x5f8] sm:$0xff]
        %v6231 = vld [vmem:[%s400 + $0x600] sm:$0xff]
        %v6232 = vld [vmem:[%s400 + $0x608] sm:$0xff]
        %v6233 = vld [vmem:[%s400 + $0x610] sm:$0xff]
        %v6234 = vld [vmem:[%s400 + $0x618] sm:$0xff]
        %v6235 = vld [vmem:[%s400 + $0x620] sm:$0xff]
        %v6236 = vld [vmem:[%s400 + $0x628] sm:$0xff]
        %v6237 = vld [vmem:[%s400 + $0x630] sm:$0xff]
        %v6238 = vld [vmem:[%s400 + $0x638] sm:$0xff]
        %v6239 = vld [vmem:[%s400 + $0x640] sm:$0xff]
        %v6240 = vld [vmem:[%s400 + $0x648] sm:$0xff]
        %v6241 = vld [vmem:[%s400 + $0x650] sm:$0xff]
        %v6242 = vld [vmem:[%s400 + $0x658] sm:$0xff]
        %v6243 = vld [vmem:[%s400 + $0x660] sm:$0xff]
        %v6244 = vld [vmem:[%s400 + $0x668] sm:$0xff]
        %v6245 = vld [vmem:[%s400 + $0x670] sm:$0xff]
        %v6246 = vld [vmem:[%s400 + $0x678] sm:$0xff]
        %v6247 = vld [vmem:[%s400 + $0x680] sm:$0xff]
        %v6248 = vld [vmem:[%s400 + $0x688] sm:$0xff]
        %v6249 = vld [vmem:[%s400 + $0x690] sm:$0xff]
        %v6250 = vld [vmem:[%s400 + $0x698] sm:$0xff]
        %v6251 = vld [vmem:[%s400 + $0x6a0] sm:$0xff]
        %v6252 = vld [vmem:[%s400 + $0x6a8] sm:$0xff]
        %v6253 = vld [vmem:[%s400 + $0x6b0] sm:$0xff]
        %v6254 = vld [vmem:[%s400 + $0x6b8] sm:$0xff]
        %v6255 = vld [vmem:[%s400 + $0x6c0] sm:$0xff]
        %v6256 = vld [vmem:[%s400 + $0x6c8] sm:$0xff]
        %v6257 = vld [vmem:[%s400 + $0x6d0] sm:$0xff]
        %v6258 = vld [vmem:[%s400 + $0x6d8] sm:$0xff]
        %v6259 = vld [vmem:[%s400 + $0x6e0] sm:$0xff]
        %v6260 = vld [vmem:[%s400 + $0x6e8] sm:$0xff]
        %v6261 = vld [vmem:[%s400 + $0x6f0] sm:$0xff]
        %v6262 = vld [vmem:[%s400 + $0x6f8] sm:$0xff]
        %v6263 = vld [vmem:[%s400 + $0x700] sm:$0xff]
        %v6264 = vld [vmem:[%s400 + $0x708] sm:$0xff]
        %v6265 = vld [vmem:[%s400 + $0x710] sm:$0xff]
        %v6266 = vld [vmem:[%s400 + $0x718] sm:$0xff]
        %v6267 = vld [vmem:[%s400 + $0x720] sm:$0xff]
        %v6268 = vld [vmem:[%s400 + $0x728] sm:$0xff]
        %v6269 = vld [vmem:[%s400 + $0x730] sm:$0xff]
        %v6270 = vld [vmem:[%s400 + $0x738] sm:$0xff]
        %v6271 = vld [vmem:[%s400 + $0x740] sm:$0xff]
        %v6272 = vld [vmem:[%s400 + $0x748] sm:$0xff]
        %v6273 = vld [vmem:[%s400 + $0x750] sm:$0xff]
        %v6274 = vld [vmem:[%s400 + $0x758] sm:$0xff]
        %v6275 = vld [vmem:[%s400 + $0x760] sm:$0xff]
        %v6276 = vld [vmem:[%s400 + $0x768] sm:$0xff]
        %v6277 = vld [vmem:[%s400 + $0x770] sm:$0xff]
        %v6278 = vld [vmem:[%s400 + $0x778] sm:$0xff]
        %v6279 = vld [vmem:[%s400 + $0x780] sm:$0xff]
        %v6280 = vld [vmem:[%s400 + $0x788] sm:$0xff]
        %v6281 = vld [vmem:[%s400 + $0x790] sm:$0xff]
        %v6282 = vld [vmem:[%s400 + $0x798] sm:$0xff]
        %v6283 = vld [vmem:[%s400 + $0x7a0] sm:$0xff]
        %v6284 = vld [vmem:[%s400 + $0x7a8] sm:$0xff]
        %v6285 = vld [vmem:[%s400 + $0x7b0] sm:$0xff]
        %v6286 = vld [vmem:[%s400 + $0x7b8] sm:$0xff]
        %v6287 = vld [vmem:[%s400 + $0x7c0] sm:$0xff]
        %v6288 = vld [vmem:[%s400 + $0x7c8] sm:$0xff]
        %v6289 = vld [vmem:[%s400 + $0x7d0] sm:$0xff]
        %v6290 = vld [vmem:[%s400 + $0x7d8] sm:$0xff]
        %v6291 = vld [vmem:[%s400 + $0x7e0] sm:$0xff]
        %v6292 = vld [vmem:[%s400 + $0x7e8] sm:$0xff]
        %v6293 = vld [vmem:[%s400 + $0x7f0] sm:$0xff]
        %v6294 = vld [vmem:[%s400 + $0x7f8] sm:$0xff]
        %v6295 = vld [vmem:[%s400 + $0x800] sm:$0xff]
        %v6296 = vld [vmem:[%s400 + $0x808] sm:$0xff]
        %v6297 = vld [vmem:[%s400 + $0x810] sm:$0xff]
        %v6298 = vld [vmem:[%s400 + $0x818] sm:$0xff]
        %v6299 = vld [vmem:[%s400 + $0x820] sm:$0xff]
        %v6300 = vld [vmem:[%s400 + $0x828] sm:$0xff]
        %v6301 = vld [vmem:[%s400 + $0x830] sm:$0xff]
        %v6302 = vld [vmem:[%s400 + $0x838] sm:$0xff]
        %v6303 = vld [vmem:[%s400 + $0x840] sm:$0xff]
        %v6304 = vld [vmem:[%s400 + $0x848] sm:$0xff]
        %v6305 = vld [vmem:[%s400 + $0x850] sm:$0xff]
        %v6306 = vld [vmem:[%s400 + $0x858] sm:$0xff]
        %v6307 = vld [vmem:[%s400 + $0x860] sm:$0xff]
        %v6308 = vld [vmem:[%s400 + $0x868] sm:$0xff]
        %v6309 = vld [vmem:[%s400 + $0x870] sm:$0xff]
        %v6310 = vld [vmem:[%s400 + $0x878] sm:$0xff]
        %v6311 = vld [vmem:[%s400 + $0x880] sm:$0xff]
        %v6312 = vld [vmem:[%s400 + $0x888] sm:$0xff]
        %v6313 = vld [vmem:[%s400 + $0x890] sm:$0xff]
        %v6314 = vld [vmem:[%s400 + $0x898] sm:$0xff]
        %v6315 = vld [vmem:[%s400 + $0x8a0] sm:$0xff]
        %v6316 = vld [vmem:[%s400 + $0x8a8] sm:$0xff]
        %v6317 = vld [vmem:[%s400 + $0x8b0] sm:$0xff]
        %v6318 = vld [vmem:[%s400 + $0x8b8] sm:$0xff]
        %v6319 = vld [vmem:[%s400 + $0x8c0] sm:$0xff]
        %v6320 = vld [vmem:[%s400 + $0x8c8] sm:$0xff]
        %v6321 = vld [vmem:[%s400 + $0x8d0] sm:$0xff]
        %v6322 = vld [vmem:[%s400 + $0x8d8] sm:$0xff]
        %v6323 = vld [vmem:[%s400 + $0x8e0] sm:$0xff]
        %v6324 = vld [vmem:[%s400 + $0x8e8] sm:$0xff]
        %v6325 = vld [vmem:[%s400 + $0x8f0] sm:$0xff]
        %v6326 = vld [vmem:[%s400 + $0x8f8] sm:$0xff]
        %v6327 = vld [vmem:[%s400 + $0x900] sm:$0xff]
        %v6328 = vld [vmem:[%s400 + $0x908] sm:$0xff]
        %v6329 = vld [vmem:[%s400 + $0x910] sm:$0xff]
        %v6330 = vld [vmem:[%s400 + $0x918] sm:$0xff]
        %v6331 = vld [vmem:[%s400 + $0x920] sm:$0xff]
        %v6332 = vld [vmem:[%s400 + $0x928] sm:$0xff]
        %v6333 = vld [vmem:[%s400 + $0x930] sm:$0xff]
        %v6334 = vld [vmem:[%s400 + $0x938] sm:$0xff]
        %v6335 = vld [vmem:[%s400 + $0x940] sm:$0xff]
        %v6336 = vld [vmem:[%s400 + $0x948] sm:$0xff]
        %v6337 = vld [vmem:[%s400 + $0x950] sm:$0xff]
        %v6338 = vld [vmem:[%s400 + $0x958] sm:$0xff]
        %v6339 = vld [vmem:[%s400 + $0x960] sm:$0xff]
        %v6340 = vld [vmem:[%s400 + $0x968] sm:$0xff]
        %v6341 = vld [vmem:[%s400 + $0x970] sm:$0xff]
        %v6342 = vld [vmem:[%s400 + $0x978] sm:$0xff]
        %v6343 = vld [vmem:[%s400 + $0x980] sm:$0xff]
        %v6344 = vld [vmem:[%s400 + $0x988] sm:$0xff]
        %v6345 = vld [vmem:[%s400 + $0x990] sm:$0xff]
        %v6346 = vld [vmem:[%s400 + $0x998] sm:$0xff]
        %v6347 = vld [vmem:[%s400 + $0x9a0] sm:$0xff]
        %v6348 = vld [vmem:[%s400 + $0x9a8] sm:$0xff]
        %v6349 = vld [vmem:[%s400 + $0x9b0] sm:$0xff]
        %v6350 = vld [vmem:[%s400 + $0x9b8] sm:$0xff]
        %v6351 = vld [vmem:[%s400 + $0x9c0] sm:$0xff]
        %v6352 = vld [vmem:[%s400 + $0x9c8] sm:$0xff]
        %v6353 = vld [vmem:[%s400 + $0x9d0] sm:$0xff]
        %v6354 = vld [vmem:[%s400 + $0x9d8] sm:$0xff]
        %v6355 = vld [vmem:[%s400 + $0x9e0] sm:$0xff]
        %v6356 = vld [vmem:[%s400 + $0x9e8] sm:$0xff]
        %v6357 = vld [vmem:[%s400 + $0x9f0] sm:$0xff]
        %v6358 = vld [vmem:[%s400 + $0x9f8] sm:$0xff]
        %v6359 = vld [vmem:[%s400 + $0xa00] sm:$0xff]
        %v6360 = vld [vmem:[%s400 + $0xa08] sm:$0xff]
        %v6361 = vld [vmem:[%s400 + $0xa10] sm:$0xff]
        %v6362 = vld [vmem:[%s400 + $0xa18] sm:$0xff]
        %v6363 = vld [vmem:[%s400 + $0xa20] sm:$0xff]
        %v6364 = vld [vmem:[%s400 + $0xa28] sm:$0xff]
        %v6365 = vld [vmem:[%s400 + $0xa30] sm:$0xff]
        %v6366 = vld [vmem:[%s400 + $0xa38] sm:$0xff]
        %v6367 = vld [vmem:[%s400 + $0xa40] sm:$0xff]
        %v6368 = vld [vmem:[%s400 + $0xa48] sm:$0xff]
        %v6369 = vld [vmem:[%s400 + $0xa50] sm:$0xff]
        %v6370 = vld [vmem:[%s400 + $0xa58] sm:$0xff]
        %v6371 = vld [vmem:[%s400 + $0xa60] sm:$0xff]
        %v6372 = vld [vmem:[%s400 + $0xa68] sm:$0xff]
        %v6373 = vld [vmem:[%s400 + $0xa70] sm:$0xff]
        %v6374 = vld [vmem:[%s400 + $0xa78] sm:$0xff]
        %v6375 = vld [vmem:[%s400 + $0xa80] sm:$0xff]
        %v6376 = vld [vmem:[%s400 + $0xa88] sm:$0xff]
        %v6377 = vld [vmem:[%s400 + $0xa90] sm:$0xff]
        %v6378 = vld [vmem:[%s400 + $0xa98] sm:$0xff]
        %v6379 = vld [vmem:[%s400 + $0xaa0] sm:$0xff]
        %v6380 = vld [vmem:[%s400 + $0xaa8] sm:$0xff]
        %v6381 = vld [vmem:[%s400 + $0xab0] sm:$0xff]
        %v6382 = vld [vmem:[%s400 + $0xab8] sm:$0xff]
        %v6383 = vld [vmem:[%s400 + $0xac0] sm:$0xff]
        %v6384 = vld [vmem:[%s400 + $0xac8] sm:$0xff]
        %v6385 = vld [vmem:[%s400 + $0xad0] sm:$0xff]
        %v6386 = vld [vmem:[%s400 + $0xad8] sm:$0xff]
        %v6387 = vld [vmem:[%s400 + $0xae0] sm:$0xff]
        %v6388 = vld [vmem:[%s400 + $0xae8] sm:$0xff]
        %v6389 = vld [vmem:[%s400 + $0xaf0] sm:$0xff]
        %v6390 = vld [vmem:[%s400 + $0xaf8] sm:$0xff]
        %v6391 = vld [vmem:[%s400 + $0xb00] sm:$0xff]
        %v6392 = vld [vmem:[%s400 + $0xb08] sm:$0xff]
        %v6393 = vld [vmem:[%s400 + $0xb10] sm:$0xff]
        %v6394 = vld [vmem:[%s400 + $0xb18] sm:$0xff]
        %v6395 = vld [vmem:[%s400 + $0xb20] sm:$0xff]
        %v6396 = vld [vmem:[%s400 + $0xb28] sm:$0xff]
        %v6397 = vld [vmem:[%s400 + $0xb30] sm:$0xff]
        %v6398 = vld [vmem:[%s400 + $0xb38] sm:$0xff]
        %v6399 = vld [vmem:[%s400 + $0xb40] sm:$0xff]
        %v6400 = vld [vmem:[%s400 + $0xb48] sm:$0xff]
        %v6401 = vld [vmem:[%s400 + $0xb50] sm:$0xff]
        %v6402 = vld [vmem:[%s400 + $0xb58] sm:$0xff]
        %v6403 = vld [vmem:[%s400 + $0xb60] sm:$0xff]
        %v6404 = vld [vmem:[%s400 + $0xb68] sm:$0xff]
        %v6405 = vld [vmem:[%s400 + $0xb70] sm:$0xff]
        %v6406 = vld [vmem:[%s400 + $0xb78] sm:$0xff]
        %v6407 = vld [vmem:[%s400 + $0xb80] sm:$0xff]
        %v6408 = vld [vmem:[%s400 + $0xb88] sm:$0xff]
        %v6409 = vld [vmem:[%s400 + $0xb90] sm:$0xff]
        %v6410 = vld [vmem:[%s400 + $0xb98] sm:$0xff]
        %v6411 = vld [vmem:[%s400 + $0xba0] sm:$0xff]
        %v6412 = vld [vmem:[%s400 + $0xba8] sm:$0xff]
        %v6413 = vld [vmem:[%s400 + $0xbb0] sm:$0xff]
        %v6414 = vld [vmem:[%s400 + $0xbb8] sm:$0xff]
        %v6415 = vld [vmem:[%s400 + $0xbc0] sm:$0xff]
        %v6416 = vld [vmem:[%s400 + $0xbc8] sm:$0xff]
        %v6417 = vld [vmem:[%s400 + $0xbd0] sm:$0xff]
        %v6418 = vld [vmem:[%s400 + $0xbd8] sm:$0xff]
        %v6419 = vld [vmem:[%s400 + $0xbe0] sm:$0xff]
        %v6420 = vld [vmem:[%s400 + $0xbe8] sm:$0xff]
        %v6421 = vld [vmem:[%s400 + $0xbf0] sm:$0xff]
        %v6422 = vld [vmem:[%s400 + $0xbf8] sm:$0xff]
        %6424 = vst [vmem:[#allocation1] ss:$4 sm:$0xff] %v6037
        %s6426 = scalar_lea.vmem [#allocation1], 32
        %6427 = vst [vmem:[%s6426] ss:$4 sm:$0xff] %v6038
        %v6428 = vld.sshfl [vmem:[#allocation1] sm:$0xff pattern:$0x73625140]
        %v6429 = vld.sshfl [vmem:[#allocation1 + $0x8] sm:$0xff pattern:$0x73625140]
        %v6430 = vld.sshfl [vmem:[#allocation1 + $0x10] sm:$0xff pattern:$0x73625140]
        %v6431 = vld.sshfl [vmem:[#allocation1 + $0x18] sm:$0xff pattern:$0x73625140]
        %v6432 = vld.sshfl [vmem:[#allocation1 + $0x20] sm:$0xff pattern:$0x73625140]
        %v6433 = vld.sshfl [vmem:[#allocation1 + $0x28] sm:$0xff pattern:$0x73625140]
        %v6434 = vld.sshfl [vmem:[#allocation1 + $0x30] sm:$0xff pattern:$0x73625140]
        %v6435 = vld.sshfl [vmem:[#allocation1 + $0x38] sm:$0xff pattern:$0x73625140]
        %v6828 = vunpack.c.l.b16 %v6039
        %v6829 = vunpack.c.h.b16 %v6039
        %v6830 = vunpack.c.l.b16 %v6040
        %v6831 = vunpack.c.h.b16 %v6040
        %v6832 = vunpack.c.l.b16 %v6041
        %v6833 = vunpack.c.h.b16 %v6041
        %v6834 = vunpack.c.l.b16 %v6042
        %v6835 = vunpack.c.h.b16 %v6042
        %v6836 = vunpack.c.l.b16 %v6043
        %v6837 = vunpack.c.h.b16 %v6043
        %v6838 = vunpack.c.l.b16 %v6044
        %v6839 = vunpack.c.h.b16 %v6044
        %v6840 = vunpack.c.l.b16 %v6045
        %v6841 = vunpack.c.h.b16 %v6045
        %v6842 = vunpack.c.l.b16 %v6046
        %v6843 = vunpack.c.h.b16 %v6046
        %v6844 = vunpack.c.l.b16 %v6047
        %v6845 = vunpack.c.h.b16 %v6047
        %v6846 = vunpack.c.l.b16 %v6048
        %v6847 = vunpack.c.h.b16 %v6048
        %v6848 = vunpack.c.l.b16 %v6049
        %v6849 = vunpack.c.h.b16 %v6049
        %v6850 = vunpack.c.l.b16 %v6050
        %v6851 = vunpack.c.h.b16 %v6050
        %v6852 = vunpack.c.l.b16 %v6051
        %v6853 = vunpack.c.h.b16 %v6051
        %v6854 = vunpack.c.l.b16 %v6052
        %v6855 = vunpack.c.h.b16 %v6052
        %v6856 = vunpack.c.l.b16 %v6053
        %v6857 = vunpack.c.h.b16 %v6053
        %v6858 = vunpack.c.l.b16 %v6054
        %v6859 = vunpack.c.h.b16 %v6054
        %v6860 = vunpack.c.l.b16 %v6055
        %v6861 = vunpack.c.h.b16 %v6055
        %v6862 = vunpack.c.l.b16 %v6056
        %v6863 = vunpack.c.h.b16 %v6056
        %v6864 = vunpack.c.l.b16 %v6057
        %v6865 = vunpack.c.h.b16 %v6057
        %v6866 = vunpack.c.l.b16 %v6058
        %v6867 = vunpack.c.h.b16 %v6058
        %v6868 = vunpack.c.l.b16 %v6059
        %v6869 = vunpack.c.h.b16 %v6059
        %v6870 = vunpack.c.l.b16 %v6060
        %v6871 = vunpack.c.h.b16 %v6060
        %v6872 = vunpack.c.l.b16 %v6061
        %v6873 = vunpack.c.h.b16 %v6061
        %v6874 = vunpack.c.l.b16 %v6062
        %v6875 = vunpack.c.h.b16 %v6062
        %v6876 = vunpack.c.l.b16 %v6063
        %v6877 = vunpack.c.h.b16 %v6063
        %v6878 = vunpack.c.l.b16 %v6064
        %v6879 = vunpack.c.h.b16 %v6064
        %v6880 = vunpack.c.l.b16 %v6065
        %v6881 = vunpack.c.h.b16 %v6065
        %v6882 = vunpack.c.l.b16 %v6066
        %v6883 = vunpack.c.h.b16 %v6066
        %v6884 = vunpack.c.l.b16 %v6067
        %v6885 = vunpack.c.h.b16 %v6067
        %v6886 = vunpack.c.l.b16 %v6068
        %v6887 = vunpack.c.h.b16 %v6068
        %v6888 = vunpack.c.l.b16 %v6069
        %v6889 = vunpack.c.h.b16 %v6069
        %v6890 = vunpack.c.l.b16 %v6070
        %v6891 = vunpack.c.h.b16 %v6070
        %v6892 = vunpack.c.l.b16 %v6071
        %v6893 = vunpack.c.h.b16 %v6071
        %v6894 = vunpack.c.l.b16 %v6072
        %v6895 = vunpack.c.h.b16 %v6072
        %v6896 = vunpack.c.l.b16 %v6073
        %v6897 = vunpack.c.h.b16 %v6073
        %v6898 = vunpack.c.l.b16 %v6074
        %v6899 = vunpack.c.h.b16 %v6074
        %v6900 = vunpack.c.l.b16 %v6075
        %v6901 = vunpack.c.h.b16 %v6075
        %v6902 = vunpack.c.l.b16 %v6076
        %v6903 = vunpack.c.h.b16 %v6076
        %v6904 = vunpack.c.l.b16 %v6077
        %v6905 = vunpack.c.h.b16 %v6077
        %v6906 = vunpack.c.l.b16 %v6078
        %v6907 = vunpack.c.h.b16 %v6078
        %v6908 = vunpack.c.l.b16 %v6079
        %v6909 = vunpack.c.h.b16 %v6079
        %v6910 = vunpack.c.l.b16 %v6080
        %v6911 = vunpack.c.h.b16 %v6080
        %v6912 = vunpack.c.l.b16 %v6081
        %v6913 = vunpack.c.h.b16 %v6081
        %v6914 = vunpack.c.l.b16 %v6082
        %v6915 = vunpack.c.h.b16 %v6082
        %v6916 = vunpack.c.l.b16 %v6083
        %v6917 = vunpack.c.h.b16 %v6083
        %v6918 = vunpack.c.l.b16 %v6084
        %v6919 = vunpack.c.h.b16 %v6084
        %v6920 = vunpack.c.l.b16 %v6085
        %v6921 = vunpack.c.h.b16 %v6085
        %v6922 = vunpack.c.l.b16 %v6086
        %v6923 = vunpack.c.h.b16 %v6086
        %v6924 = vunpack.c.l.b16 %v6087
        %v6925 = vunpack.c.h.b16 %v6087
        %v6926 = vunpack.c.l.b16 %v6088
        %v6927 = vunpack.c.h.b16 %v6088
        %v6928 = vunpack.c.l.b16 %v6089
        %v6929 = vunpack.c.h.b16 %v6089
        %v6930 = vunpack.c.l.b16 %v6090
        %v6931 = vunpack.c.h.b16 %v6090
        %v6932 = vunpack.c.l.b16 %v6091
        %v6933 = vunpack.c.h.b16 %v6091
        %v6934 = vunpack.c.l.b16 %v6092
        %v6935 = vunpack.c.h.b16 %v6092
        %v6936 = vunpack.c.l.b16 %v6093
        %v6937 = vunpack.c.h.b16 %v6093
        %v6938 = vunpack.c.l.b16 %v6094
        %v6939 = vunpack.c.h.b16 %v6094
        %v6940 = vunpack.c.l.b16 %v6095
        %v6941 = vunpack.c.h.b16 %v6095
        %v6942 = vunpack.c.l.b16 %v6096
        %v6943 = vunpack.c.h.b16 %v6096
        %v6944 = vunpack.c.l.b16 %v6097
        %v6945 = vunpack.c.h.b16 %v6097
        %v6946 = vunpack.c.l.b16 %v6098
        %v6947 = vunpack.c.h.b16 %v6098
        %v6948 = vunpack.c.l.b16 %v6099
        %v6949 = vunpack.c.h.b16 %v6099
        %v6950 = vunpack.c.l.b16 %v6100
        %v6951 = vunpack.c.h.b16 %v6100
        %v6952 = vunpack.c.l.b16 %v6101
        %v6953 = vunpack.c.h.b16 %v6101
        %v6954 = vunpack.c.l.b16 %v6102
        %v6955 = vunpack.c.h.b16 %v6102
        %v6956 = vunpack.c.l.b16 %v6103
        %v6957 = vunpack.c.h.b16 %v6103
        %v6958 = vunpack.c.l.b16 %v6104
        %v6959 = vunpack.c.h.b16 %v6104
        %v6960 = vunpack.c.l.b16 %v6105
        %v6961 = vunpack.c.h.b16 %v6105
        %v6962 = vunpack.c.l.b16 %v6106
        %v6963 = vunpack.c.h.b16 %v6106
        %v6964 = vunpack.c.l.b16 %v6107
        %v6965 = vunpack.c.h.b16 %v6107
        %v6966 = vunpack.c.l.b16 %v6108
        %v6967 = vunpack.c.h.b16 %v6108
        %v6968 = vunpack.c.l.b16 %v6109
        %v6969 = vunpack.c.h.b16 %v6109
        %v6970 = vunpack.c.l.b16 %v6110
        %v6971 = vunpack.c.h.b16 %v6110
        %v6972 = vunpack.c.l.b16 %v6111
        %v6973 = vunpack.c.h.b16 %v6111
        %v6974 = vunpack.c.l.b16 %v6112
        %v6975 = vunpack.c.h.b16 %v6112
        %v6976 = vunpack.c.l.b16 %v6113
        %v6977 = vunpack.c.h.b16 %v6113
        %v6978 = vunpack.c.l.b16 %v6114
        %v6979 = vunpack.c.h.b16 %v6114
        %v6980 = vunpack.c.l.b16 %v6115
        %v6981 = vunpack.c.h.b16 %v6115
        %v6982 = vunpack.c.l.b16 %v6116
        %v6983 = vunpack.c.h.b16 %v6116
        %v6984 = vunpack.c.l.b16 %v6117
        %v6985 = vunpack.c.h.b16 %v6117
        %v6986 = vunpack.c.l.b16 %v6118
        %v6987 = vunpack.c.h.b16 %v6118
        %v6988 = vunpack.c.l.b16 %v6119
        %v6989 = vunpack.c.h.b16 %v6119
        %v6990 = vunpack.c.l.b16 %v6120
        %v6991 = vunpack.c.h.b16 %v6120
        %v6992 = vunpack.c.l.b16 %v6121
        %v6993 = vunpack.c.h.b16 %v6121
        %v6994 = vunpack.c.l.b16 %v6122
        %v6995 = vunpack.c.h.b16 %v6122
        %v6996 = vunpack.c.l.b16 %v6123
        %v6997 = vunpack.c.h.b16 %v6123
        %v6998 = vunpack.c.l.b16 %v6124
        %v6999 = vunpack.c.h.b16 %v6124
        %v7000 = vunpack.c.l.b16 %v6125
        %v7001 = vunpack.c.h.b16 %v6125
        %v7002 = vunpack.c.l.b16 %v6126
        %v7003 = vunpack.c.h.b16 %v6126
        %v7004 = vunpack.c.l.b16 %v6127
        %v7005 = vunpack.c.h.b16 %v6127
        %v7006 = vunpack.c.l.b16 %v6128
        %v7007 = vunpack.c.h.b16 %v6128
        %v7008 = vunpack.c.l.b16 %v6129
        %v7009 = vunpack.c.h.b16 %v6129
        %v7010 = vunpack.c.l.b16 %v6130
        %v7011 = vunpack.c.h.b16 %v6130
        %v7012 = vunpack.c.l.b16 %v6131
        %v7013 = vunpack.c.h.b16 %v6131
        %v7014 = vunpack.c.l.b16 %v6132
        %v7015 = vunpack.c.h.b16 %v6132
        %v7016 = vunpack.c.l.b16 %v6133
        %v7017 = vunpack.c.h.b16 %v6133
        %v7018 = vunpack.c.l.b16 %v6134
        %v7019 = vunpack.c.h.b16 %v6134
        %v7020 = vunpack.c.l.b16 %v6135
        %v7021 = vunpack.c.h.b16 %v6135
        %v7022 = vunpack.c.l.b16 %v6136
        %v7023 = vunpack.c.h.b16 %v6136
        %v7024 = vunpack.c.l.b16 %v6137
        %v7025 = vunpack.c.h.b16 %v6137
        %v7026 = vunpack.c.l.b16 %v6138
        %v7027 = vunpack.c.h.b16 %v6138
        %v7028 = vunpack.c.l.b16 %v6139
        %v7029 = vunpack.c.h.b16 %v6139
        %v7030 = vunpack.c.l.b16 %v6140
        %v7031 = vunpack.c.h.b16 %v6140
        %v7032 = vunpack.c.l.b16 %v6141
        %v7033 = vunpack.c.h.b16 %v6141
        %v7034 = vunpack.c.l.b16 %v6142
        %v7035 = vunpack.c.h.b16 %v6142
        %v7036 = vunpack.c.l.b16 %v6143
        %v7037 = vunpack.c.h.b16 %v6143
        %v7038 = vunpack.c.l.b16 %v6144
        %v7039 = vunpack.c.h.b16 %v6144
        %v7040 = vunpack.c.l.b16 %v6145
        %v7041 = vunpack.c.h.b16 %v6145
        %v7042 = vunpack.c.l.b16 %v6146
        %v7043 = vunpack.c.h.b16 %v6146
        %v7044 = vunpack.c.l.b16 %v6147
        %v7045 = vunpack.c.h.b16 %v6147
        %v7046 = vunpack.c.l.b16 %v6148
        %v7047 = vunpack.c.h.b16 %v6148
        %v7048 = vunpack.c.l.b16 %v6149
        %v7049 = vunpack.c.h.b16 %v6149
        %v7050 = vunpack.c.l.b16 %v6150
        %v7051 = vunpack.c.h.b16 %v6150
        %v7052 = vunpack.c.l.b16 %v6151
        %v7053 = vunpack.c.h.b16 %v6151
        %v7054 = vunpack.c.l.b16 %v6152
        %v7055 = vunpack.c.h.b16 %v6152
        %v7056 = vunpack.c.l.b16 %v6153
        %v7057 = vunpack.c.h.b16 %v6153
        %v7058 = vunpack.c.l.b16 %v6154
        %v7059 = vunpack.c.h.b16 %v6154
        %v7060 = vunpack.c.l.b16 %v6155
        %v7061 = vunpack.c.h.b16 %v6155
        %v7062 = vunpack.c.l.b16 %v6156
        %v7063 = vunpack.c.h.b16 %v6156
        %v7064 = vunpack.c.l.b16 %v6157
        %v7065 = vunpack.c.h.b16 %v6157
        %v7066 = vunpack.c.l.b16 %v6158
        %v7067 = vunpack.c.h.b16 %v6158
        %v7068 = vunpack.c.l.b16 %v6159
        %v7069 = vunpack.c.h.b16 %v6159
        %v7070 = vunpack.c.l.b16 %v6160
        %v7071 = vunpack.c.h.b16 %v6160
        %v7072 = vunpack.c.l.b16 %v6161
        %v7073 = vunpack.c.h.b16 %v6161
        %v7074 = vunpack.c.l.b16 %v6162
        %v7075 = vunpack.c.h.b16 %v6162
        %v7076 = vunpack.c.l.b16 %v6163
        %v7077 = vunpack.c.h.b16 %v6163
        %v7078 = vunpack.c.l.b16 %v6164
        %v7079 = vunpack.c.h.b16 %v6164
        %v7080 = vunpack.c.l.b16 %v6165
        %v7081 = vunpack.c.h.b16 %v6165
        %v7082 = vunpack.c.l.b16 %v6166
        %v7083 = vunpack.c.h.b16 %v6166
        %v7084 = vunpack.c.l.b16 %v6167
        %v7085 = vunpack.c.h.b16 %v6167
        %v7086 = vunpack.c.l.b16 %v6168
        %v7087 = vunpack.c.h.b16 %v6168
        %v7088 = vunpack.c.l.b16 %v6169
        %v7089 = vunpack.c.h.b16 %v6169
        %v7090 = vunpack.c.l.b16 %v6170
        %v7091 = vunpack.c.h.b16 %v6170
        %v7092 = vunpack.c.l.b16 %v6171
        %v7093 = vunpack.c.h.b16 %v6171
        %v7094 = vunpack.c.l.b16 %v6172
        %v7095 = vunpack.c.h.b16 %v6172
        %v7096 = vunpack.c.l.b16 %v6173
        %v7097 = vunpack.c.h.b16 %v6173
        %v7098 = vunpack.c.l.b16 %v6174
        %v7099 = vunpack.c.h.b16 %v6174
        %v7100 = vunpack.c.l.b16 %v6175
        %v7101 = vunpack.c.h.b16 %v6175
        %v7102 = vunpack.c.l.b16 %v6176
        %v7103 = vunpack.c.h.b16 %v6176
        %v7104 = vunpack.c.l.b16 %v6177
        %v7105 = vunpack.c.h.b16 %v6177
        %v7106 = vunpack.c.l.b16 %v6178
        %v7107 = vunpack.c.h.b16 %v6178
        %v7108 = vunpack.c.l.b16 %v6179
        %v7109 = vunpack.c.h.b16 %v6179
        %v7110 = vunpack.c.l.b16 %v6180
        %v7111 = vunpack.c.h.b16 %v6180
        %v7112 = vunpack.c.l.b16 %v6181
        %v7113 = vunpack.c.h.b16 %v6181
        %v7114 = vunpack.c.l.b16 %v6182
        %v7115 = vunpack.c.h.b16 %v6182
        %v7116 = vunpack.c.l.b16 %v6183
        %v7117 = vunpack.c.h.b16 %v6183
        %v7118 = vunpack.c.l.b16 %v6184
        %v7119 = vunpack.c.h.b16 %v6184
        %v7120 = vunpack.c.l.b16 %v6185
        %v7121 = vunpack.c.h.b16 %v6185
        %v7122 = vunpack.c.l.b16 %v6186
        %v7123 = vunpack.c.h.b16 %v6186
        %v7124 = vunpack.c.l.b16 %v6187
        %v7125 = vunpack.c.h.b16 %v6187
        %v7126 = vunpack.c.l.b16 %v6188
        %v7127 = vunpack.c.h.b16 %v6188
        %v7128 = vunpack.c.l.b16 %v6189
        %v7129 = vunpack.c.h.b16 %v6189
        %v7130 = vunpack.c.l.b16 %v6190
        %v7131 = vunpack.c.h.b16 %v6190
        %v7132 = vunpack.c.l.b16 %v6191
        %v7133 = vunpack.c.h.b16 %v6191
        %v7134 = vunpack.c.l.b16 %v6192
        %v7135 = vunpack.c.h.b16 %v6192
        %v7136 = vunpack.c.l.b16 %v6193
        %v7137 = vunpack.c.h.b16 %v6193
        %v7138 = vunpack.c.l.b16 %v6194
        %v7139 = vunpack.c.h.b16 %v6194
        %v7140 = vunpack.c.l.b16 %v6195
        %v7141 = vunpack.c.h.b16 %v6195
        %v7142 = vunpack.c.l.b16 %v6196
        %v7143 = vunpack.c.h.b16 %v6196
        %v7144 = vunpack.c.l.b16 %v6197
        %v7145 = vunpack.c.h.b16 %v6197
        %v7146 = vunpack.c.l.b16 %v6198
        %v7147 = vunpack.c.h.b16 %v6198
        %v7148 = vunpack.c.l.b16 %v6199
        %v7149 = vunpack.c.h.b16 %v6199
        %v7150 = vunpack.c.l.b16 %v6200
        %v7151 = vunpack.c.h.b16 %v6200
        %v7152 = vunpack.c.l.b16 %v6201
        %v7153 = vunpack.c.h.b16 %v6201
        %v7154 = vunpack.c.l.b16 %v6202
        %v7155 = vunpack.c.h.b16 %v6202
        %v7156 = vunpack.c.l.b16 %v6203
        %v7157 = vunpack.c.h.b16 %v6203
        %v7158 = vunpack.c.l.b16 %v6204
        %v7159 = vunpack.c.h.b16 %v6204
        %v7160 = vunpack.c.l.b16 %v6205
        %v7161 = vunpack.c.h.b16 %v6205
        %v7162 = vunpack.c.l.b16 %v6206
        %v7163 = vunpack.c.h.b16 %v6206
        %v7164 = vunpack.c.l.b16 %v6207
        %v7165 = vunpack.c.h.b16 %v6207
        %v7166 = vunpack.c.l.b16 %v6208
        %v7167 = vunpack.c.h.b16 %v6208
        %v7168 = vunpack.c.l.b16 %v6209
        %v7169 = vunpack.c.h.b16 %v6209
        %v7170 = vunpack.c.l.b16 %v6210
        %v7171 = vunpack.c.h.b16 %v6210
        %v7172 = vunpack.c.l.b16 %v6211
        %v7173 = vunpack.c.h.b16 %v6211
        %v7174 = vunpack.c.l.b16 %v6212
        %v7175 = vunpack.c.h.b16 %v6212
        %v7176 = vunpack.c.l.b16 %v6213
        %v7177 = vunpack.c.h.b16 %v6213
        %v7178 = vunpack.c.l.b16 %v6214
        %v7179 = vunpack.c.h.b16 %v6214
        %v7180 = vunpack.c.l.b16 %v6215
        %v7181 = vunpack.c.h.b16 %v6215
        %v7182 = vunpack.c.l.b16 %v6216
        %v7183 = vunpack.c.h.b16 %v6216
        %v7184 = vunpack.c.l.b16 %v6217
        %v7185 = vunpack.c.h.b16 %v6217
        %v7186 = vunpack.c.l.b16 %v6218
        %v7187 = vunpack.c.h.b16 %v6218
        %v7188 = vunpack.c.l.b16 %v6219
        %v7189 = vunpack.c.h.b16 %v6219
        %v7190 = vunpack.c.l.b16 %v6220
        %v7191 = vunpack.c.h.b16 %v6220
        %v7192 = vunpack.c.l.b16 %v6221
        %v7193 = vunpack.c.h.b16 %v6221
        %v7194 = vunpack.c.l.b16 %v6222
        %v7195 = vunpack.c.h.b16 %v6222
        %v7196 = vunpack.c.l.b16 %v6223
        %v7197 = vunpack.c.h.b16 %v6223
        %v7198 = vunpack.c.l.b16 %v6224
        %v7199 = vunpack.c.h.b16 %v6224
        %v7200 = vunpack.c.l.b16 %v6225
        %v7201 = vunpack.c.h.b16 %v6225
        %v7202 = vunpack.c.l.b16 %v6226
        %v7203 = vunpack.c.h.b16 %v6226
        %v7204 = vunpack.c.l.b16 %v6227
        %v7205 = vunpack.c.h.b16 %v6227
        %v7206 = vunpack.c.l.b16 %v6228
        %v7207 = vunpack.c.h.b16 %v6228
        %v7208 = vunpack.c.l.b16 %v6229
        %v7209 = vunpack.c.h.b16 %v6229
        %v7210 = vunpack.c.l.b16 %v6230
        %v7211 = vunpack.c.h.b16 %v6230
        %v7212 = vunpack.c.l.b16 %v6231
        %v7213 = vunpack.c.h.b16 %v6231
        %v7214 = vunpack.c.l.b16 %v6232
        %v7215 = vunpack.c.h.b16 %v6232
        %v7216 = vunpack.c.l.b16 %v6233
        %v7217 = vunpack.c.h.b16 %v6233
        %v7218 = vunpack.c.l.b16 %v6234
        %v7219 = vunpack.c.h.b16 %v6234
        %v7220 = vunpack.c.l.b16 %v6235
        %v7221 = vunpack.c.h.b16 %v6235
        %v7222 = vunpack.c.l.b16 %v6236
        %v7223 = vunpack.c.h.b16 %v6236
        %v7224 = vunpack.c.l.b16 %v6237
        %v7225 = vunpack.c.h.b16 %v6237
        %v7226 = vunpack.c.l.b16 %v6238
        %v7227 = vunpack.c.h.b16 %v6238
        %v7228 = vunpack.c.l.b16 %v6239
        %v7229 = vunpack.c.h.b16 %v6239
        %v7230 = vunpack.c.l.b16 %v6240
        %v7231 = vunpack.c.h.b16 %v6240
        %v7232 = vunpack.c.l.b16 %v6241
        %v7233 = vunpack.c.h.b16 %v6241
        %v7234 = vunpack.c.l.b16 %v6242
        %v7235 = vunpack.c.h.b16 %v6242
        %v7236 = vunpack.c.l.b16 %v6243
        %v7237 = vunpack.c.h.b16 %v6243
        %v7238 = vunpack.c.l.b16 %v6244
        %v7239 = vunpack.c.h.b16 %v6244
        %v7240 = vunpack.c.l.b16 %v6245
        %v7241 = vunpack.c.h.b16 %v6245
        %v7242 = vunpack.c.l.b16 %v6246
        %v7243 = vunpack.c.h.b16 %v6246
        %v7244 = vunpack.c.l.b16 %v6247
        %v7245 = vunpack.c.h.b16 %v6247
        %v7246 = vunpack.c.l.b16 %v6248
        %v7247 = vunpack.c.h.b16 %v6248
        %v7248 = vunpack.c.l.b16 %v6249
        %v7249 = vunpack.c.h.b16 %v6249
        %v7250 = vunpack.c.l.b16 %v6250
        %v7251 = vunpack.c.h.b16 %v6250
        %v7252 = vunpack.c.l.b16 %v6251
        %v7253 = vunpack.c.h.b16 %v6251
        %v7254 = vunpack.c.l.b16 %v6252
        %v7255 = vunpack.c.h.b16 %v6252
        %v7256 = vunpack.c.l.b16 %v6253
        %v7257 = vunpack.c.h.b16 %v6253
        %v7258 = vunpack.c.l.b16 %v6254
        %v7259 = vunpack.c.h.b16 %v6254
        %v7260 = vunpack.c.l.b16 %v6255
        %v7261 = vunpack.c.h.b16 %v6255
        %v7262 = vunpack.c.l.b16 %v6256
        %v7263 = vunpack.c.h.b16 %v6256
        %v7264 = vunpack.c.l.b16 %v6257
        %v7265 = vunpack.c.h.b16 %v6257
        %v7266 = vunpack.c.l.b16 %v6258
        %v7267 = vunpack.c.h.b16 %v6258
        %v7268 = vunpack.c.l.b16 %v6259
        %v7269 = vunpack.c.h.b16 %v6259
        %v7270 = vunpack.c.l.b16 %v6260
        %v7271 = vunpack.c.h.b16 %v6260
        %v7272 = vunpack.c.l.b16 %v6261
        %v7273 = vunpack.c.h.b16 %v6261
        %v7274 = vunpack.c.l.b16 %v6262
        %v7275 = vunpack.c.h.b16 %v6262
        %v7276 = vunpack.c.l.b16 %v6263
        %v7277 = vunpack.c.h.b16 %v6263
        %v7278 = vunpack.c.l.b16 %v6264
        %v7279 = vunpack.c.h.b16 %v6264
        %v7280 = vunpack.c.l.b16 %v6265
        %v7281 = vunpack.c.h.b16 %v6265
        %v7282 = vunpack.c.l.b16 %v6266
        %v7283 = vunpack.c.h.b16 %v6266
        %v7284 = vunpack.c.l.b16 %v6267
        %v7285 = vunpack.c.h.b16 %v6267
        %v7286 = vunpack.c.l.b16 %v6268
        %v7287 = vunpack.c.h.b16 %v6268
        %v7288 = vunpack.c.l.b16 %v6269
        %v7289 = vunpack.c.h.b16 %v6269
        %v7290 = vunpack.c.l.b16 %v6270
        %v7291 = vunpack.c.h.b16 %v6270
        %v7292 = vunpack.c.l.b16 %v6271
        %v7293 = vunpack.c.h.b16 %v6271
        %v7294 = vunpack.c.l.b16 %v6272
        %v7295 = vunpack.c.h.b16 %v6272
        %v7296 = vunpack.c.l.b16 %v6273
        %v7297 = vunpack.c.h.b16 %v6273
        %v7298 = vunpack.c.l.b16 %v6274
        %v7299 = vunpack.c.h.b16 %v6274
        %v7300 = vunpack.c.l.b16 %v6275
        %v7301 = vunpack.c.h.b16 %v6275
        %v7302 = vunpack.c.l.b16 %v6276
        %v7303 = vunpack.c.h.b16 %v6276
        %v7304 = vunpack.c.l.b16 %v6277
        %v7305 = vunpack.c.h.b16 %v6277
        %v7306 = vunpack.c.l.b16 %v6278
        %v7307 = vunpack.c.h.b16 %v6278
        %v7308 = vunpack.c.l.b16 %v6279
        %v7309 = vunpack.c.h.b16 %v6279
        %v7310 = vunpack.c.l.b16 %v6280
        %v7311 = vunpack.c.h.b16 %v6280
        %v7312 = vunpack.c.l.b16 %v6281
        %v7313 = vunpack.c.h.b16 %v6281
        %v7314 = vunpack.c.l.b16 %v6282
        %v7315 = vunpack.c.h.b16 %v6282
        %v7316 = vunpack.c.l.b16 %v6283
        %v7317 = vunpack.c.h.b16 %v6283
        %v7318 = vunpack.c.l.b16 %v6284
        %v7319 = vunpack.c.h.b16 %v6284
        %v7320 = vunpack.c.l.b16 %v6285
        %v7321 = vunpack.c.h.b16 %v6285
        %v7322 = vunpack.c.l.b16 %v6286
        %v7323 = vunpack.c.h.b16 %v6286
        %v7324 = vunpack.c.l.b16 %v6287
        %v7325 = vunpack.c.h.b16 %v6287
        %v7326 = vunpack.c.l.b16 %v6288
        %v7327 = vunpack.c.h.b16 %v6288
        %v7328 = vunpack.c.l.b16 %v6289
        %v7329 = vunpack.c.h.b16 %v6289
        %v7330 = vunpack.c.l.b16 %v6290
        %v7331 = vunpack.c.h.b16 %v6290
        %v7332 = vunpack.c.l.b16 %v6291
        %v7333 = vunpack.c.h.b16 %v6291
        %v7334 = vunpack.c.l.b16 %v6292
        %v7335 = vunpack.c.h.b16 %v6292
        %v7336 = vunpack.c.l.b16 %v6293
        %v7337 = vunpack.c.h.b16 %v6293
        %v7338 = vunpack.c.l.b16 %v6294
        %v7339 = vunpack.c.h.b16 %v6294
        %v7340 = vunpack.c.l.b16 %v6295
        %v7341 = vunpack.c.h.b16 %v6295
        %v7342 = vunpack.c.l.b16 %v6296
        %v7343 = vunpack.c.h.b16 %v6296
        %v7344 = vunpack.c.l.b16 %v6297
        %v7345 = vunpack.c.h.b16 %v6297
        %v7346 = vunpack.c.l.b16 %v6298
        %v7347 = vunpack.c.h.b16 %v6298
        %v7348 = vunpack.c.l.b16 %v6299
        %v7349 = vunpack.c.h.b16 %v6299
        %v7350 = vunpack.c.l.b16 %v6300
        %v7351 = vunpack.c.h.b16 %v6300
        %v7352 = vunpack.c.l.b16 %v6301
        %v7353 = vunpack.c.h.b16 %v6301
        %v7354 = vunpack.c.l.b16 %v6302
        %v7355 = vunpack.c.h.b16 %v6302
        %v7356 = vunpack.c.l.b16 %v6303
        %v7357 = vunpack.c.h.b16 %v6303
        %v7358 = vunpack.c.l.b16 %v6304
        %v7359 = vunpack.c.h.b16 %v6304
        %v7360 = vunpack.c.l.b16 %v6305
        %v7361 = vunpack.c.h.b16 %v6305
        %v7362 = vunpack.c.l.b16 %v6306
        %v7363 = vunpack.c.h.b16 %v6306
        %v7364 = vunpack.c.l.b16 %v6307
        %v7365 = vunpack.c.h.b16 %v6307
        %v7366 = vunpack.c.l.b16 %v6308
        %v7367 = vunpack.c.h.b16 %v6308
        %v7368 = vunpack.c.l.b16 %v6309
        %v7369 = vunpack.c.h.b16 %v6309
        %v7370 = vunpack.c.l.b16 %v6310
        %v7371 = vunpack.c.h.b16 %v6310
        %v7372 = vunpack.c.l.b16 %v6311
        %v7373 = vunpack.c.h.b16 %v6311
        %v7374 = vunpack.c.l.b16 %v6312
        %v7375 = vunpack.c.h.b16 %v6312
        %v7376 = vunpack.c.l.b16 %v6313
        %v7377 = vunpack.c.h.b16 %v6313
        %v7378 = vunpack.c.l.b16 %v6314
        %v7379 = vunpack.c.h.b16 %v6314
        %v7380 = vunpack.c.l.b16 %v6315
        %v7381 = vunpack.c.h.b16 %v6315
        %v7382 = vunpack.c.l.b16 %v6316
        %v7383 = vunpack.c.h.b16 %v6316
        %v7384 = vunpack.c.l.b16 %v6317
        %v7385 = vunpack.c.h.b16 %v6317
        %v7386 = vunpack.c.l.b16 %v6318
        %v7387 = vunpack.c.h.b16 %v6318
        %v7388 = vunpack.c.l.b16 %v6319
        %v7389 = vunpack.c.h.b16 %v6319
        %v7390 = vunpack.c.l.b16 %v6320
        %v7391 = vunpack.c.h.b16 %v6320
        %v7392 = vunpack.c.l.b16 %v6321
        %v7393 = vunpack.c.h.b16 %v6321
        %v7394 = vunpack.c.l.b16 %v6322
        %v7395 = vunpack.c.h.b16 %v6322
        %v7396 = vunpack.c.l.b16 %v6323
        %v7397 = vunpack.c.h.b16 %v6323
        %v7398 = vunpack.c.l.b16 %v6324
        %v7399 = vunpack.c.h.b16 %v6324
        %v7400 = vunpack.c.l.b16 %v6325
        %v7401 = vunpack.c.h.b16 %v6325
        %v7402 = vunpack.c.l.b16 %v6326
        %v7403 = vunpack.c.h.b16 %v6326
        %v7404 = vunpack.c.l.b16 %v6327
        %v7405 = vunpack.c.h.b16 %v6327
        %v7406 = vunpack.c.l.b16 %v6328
        %v7407 = vunpack.c.h.b16 %v6328
        %v7408 = vunpack.c.l.b16 %v6329
        %v7409 = vunpack.c.h.b16 %v6329
        %v7410 = vunpack.c.l.b16 %v6330
        %v7411 = vunpack.c.h.b16 %v6330
        %v7412 = vunpack.c.l.b16 %v6331
        %v7413 = vunpack.c.h.b16 %v6331
        %v7414 = vunpack.c.l.b16 %v6332
        %v7415 = vunpack.c.h.b16 %v6332
        %v7416 = vunpack.c.l.b16 %v6333
        %v7417 = vunpack.c.h.b16 %v6333
        %v7418 = vunpack.c.l.b16 %v6334
        %v7419 = vunpack.c.h.b16 %v6334
        %v7420 = vunpack.c.l.b16 %v6335
        %v7421 = vunpack.c.h.b16 %v6335
        %v7422 = vunpack.c.l.b16 %v6336
        %v7423 = vunpack.c.h.b16 %v6336
        %v7424 = vunpack.c.l.b16 %v6337
        %v7425 = vunpack.c.h.b16 %v6337
        %v7426 = vunpack.c.l.b16 %v6338
        %v7427 = vunpack.c.h.b16 %v6338
        %v7428 = vunpack.c.l.b16 %v6339
        %v7429 = vunpack.c.h.b16 %v6339
        %v7430 = vunpack.c.l.b16 %v6340
        %v7431 = vunpack.c.h.b16 %v6340
        %v7432 = vunpack.c.l.b16 %v6341
        %v7433 = vunpack.c.h.b16 %v6341
        %v7434 = vunpack.c.l.b16 %v6342
        %v7435 = vunpack.c.h.b16 %v6342
        %v7436 = vunpack.c.l.b16 %v6343
        %v7437 = vunpack.c.h.b16 %v6343
        %v7438 = vunpack.c.l.b16 %v6344
        %v7439 = vunpack.c.h.b16 %v6344
        %v7440 = vunpack.c.l.b16 %v6345
        %v7441 = vunpack.c.h.b16 %v6345
        %v7442 = vunpack.c.l.b16 %v6346
        %v7443 = vunpack.c.h.b16 %v6346
        %v7444 = vunpack.c.l.b16 %v6347
        %v7445 = vunpack.c.h.b16 %v6347
        %v7446 = vunpack.c.l.b16 %v6348
        %v7447 = vunpack.c.h.b16 %v6348
        %v7448 = vunpack.c.l.b16 %v6349
        %v7449 = vunpack.c.h.b16 %v6349
        %v7450 = vunpack.c.l.b16 %v6350
        %v7451 = vunpack.c.h.b16 %v6350
        %v7452 = vunpack.c.l.b16 %v6351
        %v7453 = vunpack.c.h.b16 %v6351
        %v7454 = vunpack.c.l.b16 %v6352
        %v7455 = vunpack.c.h.b16 %v6352
        %v7456 = vunpack.c.l.b16 %v6353
        %v7457 = vunpack.c.h.b16 %v6353
        %v7458 = vunpack.c.l.b16 %v6354
        %v7459 = vunpack.c.h.b16 %v6354
        %v7460 = vunpack.c.l.b16 %v6355
        %v7461 = vunpack.c.h.b16 %v6355
        %v7462 = vunpack.c.l.b16 %v6356
        %v7463 = vunpack.c.h.b16 %v6356
        %v7464 = vunpack.c.l.b16 %v6357
        %v7465 = vunpack.c.h.b16 %v6357
        %v7466 = vunpack.c.l.b16 %v6358
        %v7467 = vunpack.c.h.b16 %v6358
        %v7468 = vunpack.c.l.b16 %v6359
        %v7469 = vunpack.c.h.b16 %v6359
        %v7470 = vunpack.c.l.b16 %v6360
        %v7471 = vunpack.c.h.b16 %v6360
        %v7472 = vunpack.c.l.b16 %v6361
        %v7473 = vunpack.c.h.b16 %v6361
        %v7474 = vunpack.c.l.b16 %v6362
        %v7475 = vunpack.c.h.b16 %v6362
        %v7476 = vunpack.c.l.b16 %v6363
        %v7477 = vunpack.c.h.b16 %v6363
        %v7478 = vunpack.c.l.b16 %v6364
        %v7479 = vunpack.c.h.b16 %v6364
        %v7480 = vunpack.c.l.b16 %v6365
        %v7481 = vunpack.c.h.b16 %v6365
        %v7482 = vunpack.c.l.b16 %v6366
        %v7483 = vunpack.c.h.b16 %v6366
        %v7484 = vunpack.c.l.b16 %v6367
        %v7485 = vunpack.c.h.b16 %v6367
        %v7486 = vunpack.c.l.b16 %v6368
        %v7487 = vunpack.c.h.b16 %v6368
        %v7488 = vunpack.c.l.b16 %v6369
        %v7489 = vunpack.c.h.b16 %v6369
        %v7490 = vunpack.c.l.b16 %v6370
        %v7491 = vunpack.c.h.b16 %v6370
        %v7492 = vunpack.c.l.b16 %v6371
        %v7493 = vunpack.c.h.b16 %v6371
        %v7494 = vunpack.c.l.b16 %v6372
        %v7495 = vunpack.c.h.b16 %v6372
        %v7496 = vunpack.c.l.b16 %v6373
        %v7497 = vunpack.c.h.b16 %v6373
        %v7498 = vunpack.c.l.b16 %v6374
        %v7499 = vunpack.c.h.b16 %v6374
        %v7500 = vunpack.c.l.b16 %v6375
        %v7501 = vunpack.c.h.b16 %v6375
        %v7502 = vunpack.c.l.b16 %v6376
        %v7503 = vunpack.c.h.b16 %v6376
        %v7504 = vunpack.c.l.b16 %v6377
        %v7505 = vunpack.c.h.b16 %v6377
        %v7506 = vunpack.c.l.b16 %v6378
        %v7507 = vunpack.c.h.b16 %v6378
        %v7508 = vunpack.c.l.b16 %v6379
        %v7509 = vunpack.c.h.b16 %v6379
        %v7510 = vunpack.c.l.b16 %v6380
        %v7511 = vunpack.c.h.b16 %v6380
        %v7512 = vunpack.c.l.b16 %v6381
        %v7513 = vunpack.c.h.b16 %v6381
        %v7514 = vunpack.c.l.b16 %v6382
        %v7515 = vunpack.c.h.b16 %v6382
        %v7516 = vunpack.c.l.b16 %v6383
        %v7517 = vunpack.c.h.b16 %v6383
        %v7518 = vunpack.c.l.b16 %v6384
        %v7519 = vunpack.c.h.b16 %v6384
        %v7520 = vunpack.c.l.b16 %v6385
        %v7521 = vunpack.c.h.b16 %v6385
        %v7522 = vunpack.c.l.b16 %v6386
        %v7523 = vunpack.c.h.b16 %v6386
        %v7524 = vunpack.c.l.b16 %v6387
        %v7525 = vunpack.c.h.b16 %v6387
        %v7526 = vunpack.c.l.b16 %v6388
        %v7527 = vunpack.c.h.b16 %v6388
        %v7528 = vunpack.c.l.b16 %v6389
        %v7529 = vunpack.c.h.b16 %v6389
        %v7530 = vunpack.c.l.b16 %v6390
        %v7531 = vunpack.c.h.b16 %v6390
        %v7532 = vunpack.c.l.b16 %v6391
        %v7533 = vunpack.c.h.b16 %v6391
        %v7534 = vunpack.c.l.b16 %v6392
        %v7535 = vunpack.c.h.b16 %v6392
        %v7536 = vunpack.c.l.b16 %v6393
        %v7537 = vunpack.c.h.b16 %v6393
        %v7538 = vunpack.c.l.b16 %v6394
        %v7539 = vunpack.c.h.b16 %v6394
        %v7540 = vunpack.c.l.b16 %v6395
        %v7541 = vunpack.c.h.b16 %v6395
        %v7542 = vunpack.c.l.b16 %v6396
        %v7543 = vunpack.c.h.b16 %v6396
        %v7544 = vunpack.c.l.b16 %v6397
        %v7545 = vunpack.c.h.b16 %v6397
        %v7546 = vunpack.c.l.b16 %v6398
        %v7547 = vunpack.c.h.b16 %v6398
        %v7548 = vunpack.c.l.b16 %v6399
        %v7549 = vunpack.c.h.b16 %v6399
        %v7550 = vunpack.c.l.b16 %v6400
        %v7551 = vunpack.c.h.b16 %v6400
        %v7552 = vunpack.c.l.b16 %v6401
        %v7553 = vunpack.c.h.b16 %v6401
        %v7554 = vunpack.c.l.b16 %v6402
        %v7555 = vunpack.c.h.b16 %v6402
        %v7556 = vunpack.c.l.b16 %v6403
        %v7557 = vunpack.c.h.b16 %v6403
        %v7558 = vunpack.c.l.b16 %v6404
        %v7559 = vunpack.c.h.b16 %v6404
        %v7560 = vunpack.c.l.b16 %v6405
        %v7561 = vunpack.c.h.b16 %v6405
        %v7562 = vunpack.c.l.b16 %v6406
        %v7563 = vunpack.c.h.b16 %v6406
        %v7564 = vunpack.c.l.b16 %v6407
        %v7565 = vunpack.c.h.b16 %v6407
        %v7566 = vunpack.c.l.b16 %v6408
        %v7567 = vunpack.c.h.b16 %v6408
        %v7568 = vunpack.c.l.b16 %v6409
        %v7569 = vunpack.c.h.b16 %v6409
        %v7570 = vunpack.c.l.b16 %v6410
        %v7571 = vunpack.c.h.b16 %v6410
        %v7572 = vunpack.c.l.b16 %v6411
        %v7573 = vunpack.c.h.b16 %v6411
        %v7574 = vunpack.c.l.b16 %v6412
        %v7575 = vunpack.c.h.b16 %v6412
        %v7576 = vunpack.c.l.b16 %v6413
        %v7577 = vunpack.c.h.b16 %v6413
        %v7578 = vunpack.c.l.b16 %v6414
        %v7579 = vunpack.c.h.b16 %v6414
        %v7580 = vunpack.c.l.b16 %v6415
        %v7581 = vunpack.c.h.b16 %v6415
        %v7582 = vunpack.c.l.b16 %v6416
        %v7583 = vunpack.c.h.b16 %v6416
        %v7584 = vunpack.c.l.b16 %v6417
        %v7585 = vunpack.c.h.b16 %v6417
        %v7586 = vunpack.c.l.b16 %v6418
        %v7587 = vunpack.c.h.b16 %v6418
        %v7588 = vunpack.c.l.b16 %v6419
        %v7589 = vunpack.c.h.b16 %v6419
        %v7590 = vunpack.c.l.b16 %v6420
        %v7591 = vunpack.c.h.b16 %v6420
        %v7592 = vunpack.c.l.b16 %v6421
        %v7593 = vunpack.c.h.b16 %v6421
        %v7594 = vunpack.c.l.b16 %v6422
        %v7595 = vunpack.c.h.b16 %v6422
        %v7596 = vpack.c.b16 %v6834, %v6828
        %v7597 = vpack.c.b16 %v6835, %v6829
        %v7598 = vpack.c.b16 %v6836, %v6830
        %v7599 = vpack.c.b16 %v6837, %v6831
        %v7600 = vpack.c.b16 %v6838, %v6832
        %v7601 = vpack.c.b16 %v6839, %v6833
        %v7602 = vpack.c.b16 %v6846, %v6840
        %v7603 = vpack.c.b16 %v6847, %v6841
        %v7604 = vpack.c.b16 %v6848, %v6842
        %v7605 = vpack.c.b16 %v6849, %v6843
        %v7606 = vpack.c.b16 %v6850, %v6844
        %v7607 = vpack.c.b16 %v6851, %v6845
        %v7608 = vpack.c.b16 %v6858, %v6852
        %v7609 = vpack.c.b16 %v6859, %v6853
        %v7610 = vpack.c.b16 %v6860, %v6854
        %v7611 = vpack.c.b16 %v6861, %v6855
        %v7612 = vpack.c.b16 %v6862, %v6856
        %v7613 = vpack.c.b16 %v6863, %v6857
        %v7614 = vpack.c.b16 %v6870, %v6864
        %v7615 = vpack.c.b16 %v6871, %v6865
        %v7616 = vpack.c.b16 %v6872, %v6866
        %v7617 = vpack.c.b16 %v6873, %v6867
        %v7618 = vpack.c.b16 %v6874, %v6868
        %v7619 = vpack.c.b16 %v6875, %v6869
        %v7620 = vpack.c.b16 %v6882, %v6876
        %v7621 = vpack.c.b16 %v6883, %v6877
        %v7622 = vpack.c.b16 %v6884, %v6878
        %v7623 = vpack.c.b16 %v6885, %v6879
        %v7624 = vpack.c.b16 %v6886, %v6880
        %v7625 = vpack.c.b16 %v6887, %v6881
        %v7626 = vpack.c.b16 %v6894, %v6888
        %v7627 = vpack.c.b16 %v6895, %v6889
        %v7628 = vpack.c.b16 %v6896, %v6890
        %v7629 = vpack.c.b16 %v6897, %v6891
        %v7630 = vpack.c.b16 %v6898, %v6892
        %v7631 = vpack.c.b16 %v6899, %v6893
        %v7632 = vpack.c.b16 %v6906, %v6900
        %v7633 = vpack.c.b16 %v6907, %v6901
        %v7634 = vpack.c.b16 %v6908, %v6902
        %v7635 = vpack.c.b16 %v6909, %v6903
        %v7636 = vpack.c.b16 %v6910, %v6904
        %v7637 = vpack.c.b16 %v6911, %v6905
        %v7638 = vpack.c.b16 %v6918, %v6912
        %v7639 = vpack.c.b16 %v6919, %v6913
        %v7640 = vpack.c.b16 %v6920, %v6914
        %v7641 = vpack.c.b16 %v6921, %v6915
        %v7642 = vpack.c.b16 %v6922, %v6916
        %v7643 = vpack.c.b16 %v6923, %v6917
        %v7644 = vpack.c.b16 %v6930, %v6924
        %v7645 = vpack.c.b16 %v6931, %v6925
        %v7646 = vpack.c.b16 %v6932, %v6926
        %v7647 = vpack.c.b16 %v6933, %v6927
        %v7648 = vpack.c.b16 %v6934, %v6928
        %v7649 = vpack.c.b16 %v6935, %v6929
        %v7650 = vpack.c.b16 %v6942, %v6936
        %v7651 = vpack.c.b16 %v6943, %v6937
        %v7652 = vpack.c.b16 %v6944, %v6938
        %v7653 = vpack.c.b16 %v6945, %v6939
        %v7654 = vpack.c.b16 %v6946, %v6940
        %v7655 = vpack.c.b16 %v6947, %v6941
        %v7656 = vpack.c.b16 %v6954, %v6948
        %v7657 = vpack.c.b16 %v6955, %v6949
        %v7658 = vpack.c.b16 %v6956, %v6950
        %v7659 = vpack.c.b16 %v6957, %v6951
        %v7660 = vpack.c.b16 %v6958, %v6952
        %v7661 = vpack.c.b16 %v6959, %v6953
        %v7662 = vpack.c.b16 %v6966, %v6960
        %v7663 = vpack.c.b16 %v6967, %v6961
        %v7664 = vpack.c.b16 %v6968, %v6962
        %v7665 = vpack.c.b16 %v6969, %v6963
        %v7666 = vpack.c.b16 %v6970, %v6964
        %v7667 = vpack.c.b16 %v6971, %v6965
        %v7668 = vpack.c.b16 %v6978, %v6972
        %v7669 = vpack.c.b16 %v6979, %v6973
        %v7670 = vpack.c.b16 %v6980, %v6974
        %v7671 = vpack.c.b16 %v6981, %v6975
        %v7672 = vpack.c.b16 %v6982, %v6976
        %v7673 = vpack.c.b16 %v6983, %v6977
        %v7674 = vpack.c.b16 %v6990, %v6984
        %v7675 = vpack.c.b16 %v6991, %v6985
        %v7676 = vpack.c.b16 %v6992, %v6986
        %v7677 = vpack.c.b16 %v6993, %v6987
        %v7678 = vpack.c.b16 %v6994, %v6988
        %v7679 = vpack.c.b16 %v6995, %v6989
        %v7680 = vpack.c.b16 %v7002, %v6996
        %v7681 = vpack.c.b16 %v7003, %v6997
        %v7682 = vpack.c.b16 %v7004, %v6998
        %v7683 = vpack.c.b16 %v7005, %v6999
        %v7684 = vpack.c.b16 %v7006, %v7000
        %v7685 = vpack.c.b16 %v7007, %v7001
        %v7686 = vpack.c.b16 %v7014, %v7008
        %v7687 = vpack.c.b16 %v7015, %v7009
        %v7688 = vpack.c.b16 %v7016, %v7010
        %v7689 = vpack.c.b16 %v7017, %v7011
        %v7690 = vpack.c.b16 %v7018, %v7012
        %v7691 = vpack.c.b16 %v7019, %v7013
        %v7692 = vpack.c.b16 %v7026, %v7020
        %v7693 = vpack.c.b16 %v7027, %v7021
        %v7694 = vpack.c.b16 %v7028, %v7022
        %v7695 = vpack.c.b16 %v7029, %v7023
        %v7696 = vpack.c.b16 %v7030, %v7024
        %v7697 = vpack.c.b16 %v7031, %v7025
        %v7698 = vpack.c.b16 %v7038, %v7032
        %v7699 = vpack.c.b16 %v7039, %v7033
        %v7700 = vpack.c.b16 %v7040, %v7034
        %v7701 = vpack.c.b16 %v7041, %v7035
        %v7702 = vpack.c.b16 %v7042, %v7036
        %v7703 = vpack.c.b16 %v7043, %v7037
        %v7704 = vpack.c.b16 %v7050, %v7044
        %v7705 = vpack.c.b16 %v7051, %v7045
        %v7706 = vpack.c.b16 %v7052, %v7046
        %v7707 = vpack.c.b16 %v7053, %v7047
        %v7708 = vpack.c.b16 %v7054, %v7048
        %v7709 = vpack.c.b16 %v7055, %v7049
        %v7710 = vpack.c.b16 %v7062, %v7056
        %v7711 = vpack.c.b16 %v7063, %v7057
        %v7712 = vpack.c.b16 %v7064, %v7058
        %v7713 = vpack.c.b16 %v7065, %v7059
        %v7714 = vpack.c.b16 %v7066, %v7060
        %v7715 = vpack.c.b16 %v7067, %v7061
        %v7716 = vpack.c.b16 %v7074, %v7068
        %v7717 = vpack.c.b16 %v7075, %v7069
        %v7718 = vpack.c.b16 %v7076, %v7070
        %v7719 = vpack.c.b16 %v7077, %v7071
        %v7720 = vpack.c.b16 %v7078, %v7072
        %v7721 = vpack.c.b16 %v7079, %v7073
        %v7722 = vpack.c.b16 %v7086, %v7080
        %v7723 = vpack.c.b16 %v7087, %v7081
        %v7724 = vpack.c.b16 %v7088, %v7082
        %v7725 = vpack.c.b16 %v7089, %v7083
        %v7726 = vpack.c.b16 %v7090, %v7084
        %v7727 = vpack.c.b16 %v7091, %v7085
        %v7728 = vpack.c.b16 %v7098, %v7092
        %v7729 = vpack.c.b16 %v7099, %v7093
        %v7730 = vpack.c.b16 %v7100, %v7094
        %v7731 = vpack.c.b16 %v7101, %v7095
        %v7732 = vpack.c.b16 %v7102, %v7096
        %v7733 = vpack.c.b16 %v7103, %v7097
        %v7734 = vpack.c.b16 %v7110, %v7104
        %v7735 = vpack.c.b16 %v7111, %v7105
        %v7736 = vpack.c.b16 %v7112, %v7106
        %v7737 = vpack.c.b16 %v7113, %v7107
        %v7738 = vpack.c.b16 %v7114, %v7108
        %v7739 = vpack.c.b16 %v7115, %v7109
        %v7740 = vpack.c.b16 %v7122, %v7116
        %v7741 = vpack.c.b16 %v7123, %v7117
        %v7742 = vpack.c.b16 %v7124, %v7118
        %v7743 = vpack.c.b16 %v7125, %v7119
        %v7744 = vpack.c.b16 %v7126, %v7120
        %v7745 = vpack.c.b16 %v7127, %v7121
        %v7746 = vpack.c.b16 %v7134, %v7128
        %v7747 = vpack.c.b16 %v7135, %v7129
        %v7748 = vpack.c.b16 %v7136, %v7130
        %v7749 = vpack.c.b16 %v7137, %v7131
        %v7750 = vpack.c.b16 %v7138, %v7132
        %v7751 = vpack.c.b16 %v7139, %v7133
        %v7752 = vpack.c.b16 %v7146, %v7140
        %v7753 = vpack.c.b16 %v7147, %v7141
        %v7754 = vpack.c.b16 %v7148, %v7142
        %v7755 = vpack.c.b16 %v7149, %v7143
        %v7756 = vpack.c.b16 %v7150, %v7144
        %v7757 = vpack.c.b16 %v7151, %v7145
        %v7758 = vpack.c.b16 %v7158, %v7152
        %v7759 = vpack.c.b16 %v7159, %v7153
        %v7760 = vpack.c.b16 %v7160, %v7154
        %v7761 = vpack.c.b16 %v7161, %v7155
        %v7762 = vpack.c.b16 %v7162, %v7156
        %v7763 = vpack.c.b16 %v7163, %v7157
        %v7764 = vpack.c.b16 %v7170, %v7164
        %v7765 = vpack.c.b16 %v7171, %v7165
        %v7766 = vpack.c.b16 %v7172, %v7166
        %v7767 = vpack.c.b16 %v7173, %v7167
        %v7768 = vpack.c.b16 %v7174, %v7168
        %v7769 = vpack.c.b16 %v7175, %v7169
        %v7770 = vpack.c.b16 %v7182, %v7176
        %v7771 = vpack.c.b16 %v7183, %v7177
        %v7772 = vpack.c.b16 %v7184, %v7178
        %v7773 = vpack.c.b16 %v7185, %v7179
        %v7774 = vpack.c.b16 %v7186, %v7180
        %v7775 = vpack.c.b16 %v7187, %v7181
        %v7776 = vpack.c.b16 %v7194, %v7188
        %v7777 = vpack.c.b16 %v7195, %v7189
        %v7778 = vpack.c.b16 %v7196, %v7190
        %v7779 = vpack.c.b16 %v7197, %v7191
        %v7780 = vpack.c.b16 %v7198, %v7192
        %v7781 = vpack.c.b16 %v7199, %v7193
        %v7782 = vpack.c.b16 %v7206, %v7200
        %v7783 = vpack.c.b16 %v7207, %v7201
        %v7784 = vpack.c.b16 %v7208, %v7202
        %v7785 = vpack.c.b16 %v7209, %v7203
        %v7786 = vpack.c.b16 %v7210, %v7204
        %v7787 = vpack.c.b16 %v7211, %v7205
        %v7788 = vpack.c.b16 %v7218, %v7212
        %v7789 = vpack.c.b16 %v7219, %v7213
        %v7790 = vpack.c.b16 %v7220, %v7214
        %v7791 = vpack.c.b16 %v7221, %v7215
        %v7792 = vpack.c.b16 %v7222, %v7216
        %v7793 = vpack.c.b16 %v7223, %v7217
        %v7794 = vpack.c.b16 %v7230, %v7224
        %v7795 = vpack.c.b16 %v7231, %v7225
        %v7796 = vpack.c.b16 %v7232, %v7226
        %v7797 = vpack.c.b16 %v7233, %v7227
        %v7798 = vpack.c.b16 %v7234, %v7228
        %v7799 = vpack.c.b16 %v7235, %v7229
        %v7800 = vpack.c.b16 %v7242, %v7236
        %v7801 = vpack.c.b16 %v7243, %v7237
        %v7802 = vpack.c.b16 %v7244, %v7238
        %v7803 = vpack.c.b16 %v7245, %v7239
        %v7804 = vpack.c.b16 %v7246, %v7240
        %v7805 = vpack.c.b16 %v7247, %v7241
        %v7806 = vpack.c.b16 %v7254, %v7248
        %v7807 = vpack.c.b16 %v7255, %v7249
        %v7808 = vpack.c.b16 %v7256, %v7250
        %v7809 = vpack.c.b16 %v7257, %v7251
        %v7810 = vpack.c.b16 %v7258, %v7252
        %v7811 = vpack.c.b16 %v7259, %v7253
        %v7812 = vpack.c.b16 %v7266, %v7260
        %v7813 = vpack.c.b16 %v7267, %v7261
        %v7814 = vpack.c.b16 %v7268, %v7262
        %v7815 = vpack.c.b16 %v7269, %v7263
        %v7816 = vpack.c.b16 %v7270, %v7264
        %v7817 = vpack.c.b16 %v7271, %v7265
        %v7818 = vpack.c.b16 %v7278, %v7272
        %v7819 = vpack.c.b16 %v7279, %v7273
        %v7820 = vpack.c.b16 %v7280, %v7274
        %v7821 = vpack.c.b16 %v7281, %v7275
        %v7822 = vpack.c.b16 %v7282, %v7276
        %v7823 = vpack.c.b16 %v7283, %v7277
        %v7824 = vpack.c.b16 %v7290, %v7284
        %v7825 = vpack.c.b16 %v7291, %v7285
        %v7826 = vpack.c.b16 %v7292, %v7286
        %v7827 = vpack.c.b16 %v7293, %v7287
        %v7828 = vpack.c.b16 %v7294, %v7288
        %v7829 = vpack.c.b16 %v7295, %v7289
        %v7830 = vpack.c.b16 %v7302, %v7296
        %v7831 = vpack.c.b16 %v7303, %v7297
        %v7832 = vpack.c.b16 %v7304, %v7298
        %v7833 = vpack.c.b16 %v7305, %v7299
        %v7834 = vpack.c.b16 %v7306, %v7300
        %v7835 = vpack.c.b16 %v7307, %v7301
        %v7836 = vpack.c.b16 %v7314, %v7308
        %v7837 = vpack.c.b16 %v7315, %v7309
        %v7838 = vpack.c.b16 %v7316, %v7310
        %v7839 = vpack.c.b16 %v7317, %v7311
        %v7840 = vpack.c.b16 %v7318, %v7312
        %v7841 = vpack.c.b16 %v7319, %v7313
        %v7842 = vpack.c.b16 %v7326, %v7320
        %v7843 = vpack.c.b16 %v7327, %v7321
        %v7844 = vpack.c.b16 %v7328, %v7322
        %v7845 = vpack.c.b16 %v7329, %v7323
        %v7846 = vpack.c.b16 %v7330, %v7324
        %v7847 = vpack.c.b16 %v7331, %v7325
        %v7848 = vpack.c.b16 %v7338, %v7332
        %v7849 = vpack.c.b16 %v7339, %v7333
        %v7850 = vpack.c.b16 %v7340, %v7334
        %v7851 = vpack.c.b16 %v7341, %v7335
        %v7852 = vpack.c.b16 %v7342, %v7336
        %v7853 = vpack.c.b16 %v7343, %v7337
        %v7854 = vpack.c.b16 %v7350, %v7344
        %v7855 = vpack.c.b16 %v7351, %v7345
        %v7856 = vpack.c.b16 %v7352, %v7346
        %v7857 = vpack.c.b16 %v7353, %v7347
        %v7858 = vpack.c.b16 %v7354, %v7348
        %v7859 = vpack.c.b16 %v7355, %v7349
        %v7860 = vpack.c.b16 %v7362, %v7356
        %v7861 = vpack.c.b16 %v7363, %v7357
        %v7862 = vpack.c.b16 %v7364, %v7358
        %v7863 = vpack.c.b16 %v7365, %v7359
        %v7864 = vpack.c.b16 %v7366, %v7360
        %v7865 = vpack.c.b16 %v7367, %v7361
        %v7866 = vpack.c.b16 %v7374, %v7368
        %v7867 = vpack.c.b16 %v7375, %v7369
        %v7868 = vpack.c.b16 %v7376, %v7370
        %v7869 = vpack.c.b16 %v7377, %v7371
        %v7870 = vpack.c.b16 %v7378, %v7372
        %v7871 = vpack.c.b16 %v7379, %v7373
        %v7872 = vpack.c.b16 %v7386, %v7380
        %v7873 = vpack.c.b16 %v7387, %v7381
        %v7874 = vpack.c.b16 %v7388, %v7382
        %v7875 = vpack.c.b16 %v7389, %v7383
        %v7876 = vpack.c.b16 %v7390, %v7384
        %v7877 = vpack.c.b16 %v7391, %v7385
        %v7878 = vpack.c.b16 %v7398, %v7392
        %v7879 = vpack.c.b16 %v7399, %v7393
        %v7880 = vpack.c.b16 %v7400, %v7394
        %v7881 = vpack.c.b16 %v7401, %v7395
        %v7882 = vpack.c.b16 %v7402, %v7396
        %v7883 = vpack.c.b16 %v7403, %v7397
        %v7884 = vpack.c.b16 %v7410, %v7404
        %v7885 = vpack.c.b16 %v7411, %v7405
        %v7886 = vpack.c.b16 %v7412, %v7406
        %v7887 = vpack.c.b16 %v7413, %v7407
        %v7888 = vpack.c.b16 %v7414, %v7408
        %v7889 = vpack.c.b16 %v7415, %v7409
        %v7890 = vpack.c.b16 %v7422, %v7416
        %v7891 = vpack.c.b16 %v7423, %v7417
        %v7892 = vpack.c.b16 %v7424, %v7418
        %v7893 = vpack.c.b16 %v7425, %v7419
        %v7894 = vpack.c.b16 %v7426, %v7420
        %v7895 = vpack.c.b16 %v7427, %v7421
        %v7896 = vpack.c.b16 %v7434, %v7428
        %v7897 = vpack.c.b16 %v7435, %v7429
        %v7898 = vpack.c.b16 %v7436, %v7430
        %v7899 = vpack.c.b16 %v7437, %v7431
        %v7900 = vpack.c.b16 %v7438, %v7432
        %v7901 = vpack.c.b16 %v7439, %v7433
        %v7902 = vpack.c.b16 %v7446, %v7440
        %v7903 = vpack.c.b16 %v7447, %v7441
        %v7904 = vpack.c.b16 %v7448, %v7442
        %v7905 = vpack.c.b16 %v7449, %v7443
        %v7906 = vpack.c.b16 %v7450, %v7444
        %v7907 = vpack.c.b16 %v7451, %v7445
        %v7908 = vpack.c.b16 %v7458, %v7452
        %v7909 = vpack.c.b16 %v7459, %v7453
        %v7910 = vpack.c.b16 %v7460, %v7454
        %v7911 = vpack.c.b16 %v7461, %v7455
        %v7912 = vpack.c.b16 %v7462, %v7456
        %v7913 = vpack.c.b16 %v7463, %v7457
        %v7914 = vpack.c.b16 %v7470, %v7464
        %v7915 = vpack.c.b16 %v7471, %v7465
        %v7916 = vpack.c.b16 %v7472, %v7466
        %v7917 = vpack.c.b16 %v7473, %v7467
        %v7918 = vpack.c.b16 %v7474, %v7468
        %v7919 = vpack.c.b16 %v7475, %v7469
        %v7920 = vpack.c.b16 %v7482, %v7476
        %v7921 = vpack.c.b16 %v7483, %v7477
        %v7922 = vpack.c.b16 %v7484, %v7478
        %v7923 = vpack.c.b16 %v7485, %v7479
        %v7924 = vpack.c.b16 %v7486, %v7480
        %v7925 = vpack.c.b16 %v7487, %v7481
        %v7926 = vpack.c.b16 %v7494, %v7488
        %v7927 = vpack.c.b16 %v7495, %v7489
        %v7928 = vpack.c.b16 %v7496, %v7490
        %v7929 = vpack.c.b16 %v7497, %v7491
        %v7930 = vpack.c.b16 %v7498, %v7492
        %v7931 = vpack.c.b16 %v7499, %v7493
        %v7932 = vpack.c.b16 %v7506, %v7500
        %v7933 = vpack.c.b16 %v7507, %v7501
        %v7934 = vpack.c.b16 %v7508, %v7502
        %v7935 = vpack.c.b16 %v7509, %v7503
        %v7936 = vpack.c.b16 %v7510, %v7504
        %v7937 = vpack.c.b16 %v7511, %v7505
        %v7938 = vpack.c.b16 %v7518, %v7512
        %v7939 = vpack.c.b16 %v7519, %v7513
        %v7940 = vpack.c.b16 %v7520, %v7514
        %v7941 = vpack.c.b16 %v7521, %v7515
        %v7942 = vpack.c.b16 %v7522, %v7516
        %v7943 = vpack.c.b16 %v7523, %v7517
        %v7944 = vpack.c.b16 %v7530, %v7524
        %v7945 = vpack.c.b16 %v7531, %v7525
        %v7946 = vpack.c.b16 %v7532, %v7526
        %v7947 = vpack.c.b16 %v7533, %v7527
        %v7948 = vpack.c.b16 %v7534, %v7528
        %v7949 = vpack.c.b16 %v7535, %v7529
        %v7950 = vpack.c.b16 %v7542, %v7536
        %v7951 = vpack.c.b16 %v7543, %v7537
        %v7952 = vpack.c.b16 %v7544, %v7538
        %v7953 = vpack.c.b16 %v7545, %v7539
        %v7954 = vpack.c.b16 %v7546, %v7540
        %v7955 = vpack.c.b16 %v7547, %v7541
        %v7956 = vpack.c.b16 %v7554, %v7548
        %v7957 = vpack.c.b16 %v7555, %v7549
        %v7958 = vpack.c.b16 %v7556, %v7550
        %v7959 = vpack.c.b16 %v7557, %v7551
        %v7960 = vpack.c.b16 %v7558, %v7552
        %v7961 = vpack.c.b16 %v7559, %v7553
        %v7962 = vpack.c.b16 %v7566, %v7560
        %v7963 = vpack.c.b16 %v7567, %v7561
        %v7964 = vpack.c.b16 %v7568, %v7562
        %v7965 = vpack.c.b16 %v7569, %v7563
        %v7966 = vpack.c.b16 %v7570, %v7564
        %v7967 = vpack.c.b16 %v7571, %v7565
        %v7968 = vpack.c.b16 %v7578, %v7572
        %v7969 = vpack.c.b16 %v7579, %v7573
        %v7970 = vpack.c.b16 %v7580, %v7574
        %v7971 = vpack.c.b16 %v7581, %v7575
        %v7972 = vpack.c.b16 %v7582, %v7576
        %v7973 = vpack.c.b16 %v7583, %v7577
        %v7974 = vpack.c.b16 %v7590, %v7584
        %v7975 = vpack.c.b16 %v7591, %v7585
        %v7976 = vpack.c.b16 %v7592, %v7586
        %v7977 = vpack.c.b16 %v7593, %v7587
        %v7978 = vpack.c.b16 %v7594, %v7588
        %v7979 = vpack.c.b16 %v7595, %v7589
        %8364 = vmatpush.bf16.msra.mxu0 %v7638
        %8365 = vmatpush.bf16.msra.mxu0 %v7632
        %8366 = vmatpush.bf16.msra.mxu0 %v7626
        %8367 = vmatpush.bf16.msra.mxu0 %v7620
        %8368 = vmatpush.bf16.msra.mxu0 %v7614
        %8369 = vmatpush.bf16.msra.mxu0 %v7608
        %8370 = vmatpush.bf16.msra.mxu0 %v7602
        %8371 = vmatpush.bf16.msra.mxu0 %v7596
        %8372 = vmatmul.bf16.gmra.mxu0 %v6428
        %v8373 = vpop.f32.mrf.mxu0
        %v8374 = vadd.f32 0.0, %v8373
        %v8375 = vpop.f32.mrf.mxu0
        %8376 = vdwg.mxu0
        %8377 = vmatpush.bf16.msra.mxu0 %v7686
        %8378 = vmatpush.bf16.msra.mxu0 %v7680
        %8379 = vmatpush.bf16.msra.mxu0 %v7674
        %8380 = vmatpush.bf16.msra.mxu0 %v7668
        %8381 = vmatpush.bf16.msra.mxu0 %v7662
        %8382 = vmatpush.bf16.msra.mxu0 %v7656
        %8383 = vmatpush.bf16.msra.mxu0 %v7650
        %8384 = vmatpush.bf16.msra.mxu0 %v7644
        %8385 = vmatmul.bf16.gmra.mxu0 %v6429
        %v8386 = vpop.f32.mrf.mxu0
        %v8387 = vadd.f32 %v8374, %v8386
        %v8388 = vpop.f32.mrf.mxu0
        %8389 = vdwg.mxu0
        %8390 = vmatpush.bf16.msra.mxu0 %v7734
        %8391 = vmatpush.bf16.msra.mxu0 %v7728
        %8392 = vmatpush.bf16.msra.mxu0 %v7722
        %8393 = vmatpush.bf16.msra.mxu0 %v7716
        %8394 = vmatpush.bf16.msra.mxu0 %v7710
        %8395 = vmatpush.bf16.msra.mxu0 %v7704
        %8396 = vmatpush.bf16.msra.mxu0 %v7698
        %8397 = vmatpush.bf16.msra.mxu0 %v7692
        %8398 = vmatmul.bf16.gmra.mxu0 %v6430
        %v8399 = vpop.f32.mrf.mxu0
        %v8400 = vadd.f32 %v8387, %v8399
        %v8401 = vpop.f32.mrf.mxu0
        %8402 = vdwg.mxu0
        %8403 = vmatpush.bf16.msra.mxu0 %v7782
        %8404 = vmatpush.bf16.msra.mxu0 %v7776
        %8405 = vmatpush.bf16.msra.mxu0 %v7770
        %8406 = vmatpush.bf16.msra.mxu0 %v7764
        %8407 = vmatpush.bf16.msra.mxu0 %v7758
        %8408 = vmatpush.bf16.msra.mxu0 %v7752
        %8409 = vmatpush.bf16.msra.mxu0 %v7746
        %8410 = vmatpush.bf16.msra.mxu0 %v7740
        %8411 = vmatmul.bf16.gmra.mxu0 %v6431
        %v8412 = vpop.f32.mrf.mxu0
        %v8413 = vadd.f32 %v8400, %v8412
        %v8414 = vpop.f32.mrf.mxu0
        %8415 = vdwg.mxu0
        %8416 = vmatpush.bf16.msra.mxu0 %v7830
        %8417 = vmatpush.bf16.msra.mxu0 %v7824
        %8418 = vmatpush.bf16.msra.mxu0 %v7818
        %8419 = vmatpush.bf16.msra.mxu0 %v7812
        %8420 = vmatpush.bf16.msra.mxu0 %v7806
        %8421 = vmatpush.bf16.msra.mxu0 %v7800
        %8422 = vmatpush.bf16.msra.mxu0 %v7794
        %8423 = vmatpush.bf16.msra.mxu0 %v7788
        %8424 = vmatmul.bf16.gmra.mxu0 %v6432
        %v8425 = vpop.f32.mrf.mxu0
        %v8426 = vadd.f32 %v8413, %v8425
        %v8427 = vpop.f32.mrf.mxu0
        %8428 = vdwg.mxu0
        %8429 = vmatpush.bf16.msra.mxu0 %v7878
        %8430 = vmatpush.bf16.msra.mxu0 %v7872
        %8431 = vmatpush.bf16.msra.mxu0 %v7866
        %8432 = vmatpush.bf16.msra.mxu0 %v7860
        %8433 = vmatpush.bf16.msra.mxu0 %v7854
        %8434 = vmatpush.bf16.msra.mxu0 %v7848
        %8435 = vmatpush.bf16.msra.mxu0 %v7842
        %8436 = vmatpush.bf16.msra.mxu0 %v7836
        %8437 = vmatmul.bf16.gmra.mxu0 %v6433
        %v8438 = vpop.f32.mrf.mxu0
        %v8439 = vadd.f32 %v8426, %v8438
        %v8440 = vpop.f32.mrf.mxu0
        %8441 = vdwg.mxu0
        %8442 = vmatpush.bf16.msra.mxu0 %v7926
        %8443 = vmatpush.bf16.msra.mxu0 %v7920
        %8444 = vmatpush.bf16.msra.mxu0 %v7914
        %8445 = vmatpush.bf16.msra.mxu0 %v7908
        %8446 = vmatpush.bf16.msra.mxu0 %v7902
        %8447 = vmatpush.bf16.msra.mxu0 %v7896
        %8448 = vmatpush.bf16.msra.mxu0 %v7890
        %8449 = vmatpush.bf16.msra.mxu0 %v7884
        %8450 = vmatmul.bf16.gmra.mxu0 %v6434
        %v8451 = vpop.f32.mrf.mxu0
        %v8452 = vadd.f32 %v8439, %v8451
        %v8453 = vpop.f32.mrf.mxu0
        %8454 = vdwg.mxu0
        %8455 = vmatpush.bf16.msra.mxu0 %v7974
        %8456 = vmatpush.bf16.msra.mxu0 %v7968
        %8457 = vmatpush.bf16.msra.mxu0 %v7962
        %8458 = vmatpush.bf16.msra.mxu0 %v7956
        %8459 = vmatpush.bf16.msra.mxu0 %v7950
        %8460 = vmatpush.bf16.msra.mxu0 %v7944
        %8461 = vmatpush.bf16.msra.mxu0 %v7938
        %8462 = vmatpush.bf16.msra.mxu0 %v7932
        %8463 = vmatmul.bf16.gmra.mxu0 %v6435
        %v8464 = vpop.f32.mrf.mxu0
        %v8465 = vadd.f32 %v8452, %v8464
        %v8466 = vpop.f32.mrf.mxu0
        %8467 = vdwg.mxu0
        %8468 = vmatpush.bf16.msra.mxu0 %v7639
        %8469 = vmatpush.bf16.msra.mxu0 %v7633
        %8470 = vmatpush.bf16.msra.mxu0 %v7627
        %8471 = vmatpush.bf16.msra.mxu0 %v7621
        %8472 = vmatpush.bf16.msra.mxu0 %v7615
        %8473 = vmatpush.bf16.msra.mxu0 %v7609
        %8474 = vmatpush.bf16.msra.mxu0 %v7603
        %8475 = vmatpush.bf16.msra.mxu0 %v7597
        %8476 = vmatmul.bf16.gmra.mxu0 %v6428
        %v8477 = vpop.f32.mrf.mxu0
        %v8478 = vadd.f32 0.0, %v8477
        %v8479 = vpop.f32.mrf.mxu0
        %8480 = vdwg.mxu0
        %8481 = vmatpush.bf16.msra.mxu0 %v7687
        %8482 = vmatpush.bf16.msra.mxu0 %v7681
        %8483 = vmatpush.bf16.msra.mxu0 %v7675
        %8484 = vmatpush.bf16.msra.mxu0 %v7669
        %8485 = vmatpush.bf16.msra.mxu0 %v7663
        %8486 = vmatpush.bf16.msra.mxu0 %v7657
        %8487 = vmatpush.bf16.msra.mxu0 %v7651
        %8488 = vmatpush.bf16.msra.mxu0 %v7645
        %8489 = vmatmul.bf16.gmra.mxu0 %v6429
        %v8490 = vpop.f32.mrf.mxu0
        %v8491 = vadd.f32 %v8478, %v8490
        %v8492 = vpop.f32.mrf.mxu0
        %8493 = vdwg.mxu0
        %8494 = vmatpush.bf16.msra.mxu0 %v7735
        %8495 = vmatpush.bf16.msra.mxu0 %v7729
        %8496 = vmatpush.bf16.msra.mxu0 %v7723
        %8497 = vmatpush.bf16.msra.mxu0 %v7717
        %8498 = vmatpush.bf16.msra.mxu0 %v7711
        %8499 = vmatpush.bf16.msra.mxu0 %v7705
        %8500 = vmatpush.bf16.msra.mxu0 %v7699
        %8501 = vmatpush.bf16.msra.mxu0 %v7693
        %8502 = vmatmul.bf16.gmra.mxu0 %v6430
        %v8503 = vpop.f32.mrf.mxu0
        %v8504 = vadd.f32 %v8491, %v8503
        %v8505 = vpop.f32.mrf.mxu0
        %8506 = vdwg.mxu0
        %8507 = vmatpush.bf16.msra.mxu0 %v7783
        %8508 = vmatpush.bf16.msra.mxu0 %v7777
        %8509 = vmatpush.bf16.msra.mxu0 %v7771
        %8510 = vmatpush.bf16.msra.mxu0 %v7765
        %8511 = vmatpush.bf16.msra.mxu0 %v7759
        %8512 = vmatpush.bf16.msra.mxu0 %v7753
        %8513 = vmatpush.bf16.msra.mxu0 %v7747
        %8514 = vmatpush.bf16.msra.mxu0 %v7741
        %8515 = vmatmul.bf16.gmra.mxu0 %v6431
        %v8516 = vpop.f32.mrf.mxu0
        %v8517 = vadd.f32 %v8504, %v8516
        %v8518 = vpop.f32.mrf.mxu0
        %8519 = vdwg.mxu0
        %8520 = vmatpush.bf16.msra.mxu0 %v7831
        %8521 = vmatpush.bf16.msra.mxu0 %v7825
        %8522 = vmatpush.bf16.msra.mxu0 %v7819
        %8523 = vmatpush.bf16.msra.mxu0 %v7813
        %8524 = vmatpush.bf16.msra.mxu0 %v7807
        %8525 = vmatpush.bf16.msra.mxu0 %v7801
        %8526 = vmatpush.bf16.msra.mxu0 %v7795
        %8527 = vmatpush.bf16.msra.mxu0 %v7789
        %8528 = vmatmul.bf16.gmra.mxu0 %v6432
        %v8529 = vpop.f32.mrf.mxu0
        %v8530 = vadd.f32 %v8517, %v8529
        %v8531 = vpop.f32.mrf.mxu0
        %8532 = vdwg.mxu0
        %8533 = vmatpush.bf16.msra.mxu0 %v7879
        %8534 = vmatpush.bf16.msra.mxu0 %v7873
        %8535 = vmatpush.bf16.msra.mxu0 %v7867
        %8536 = vmatpush.bf16.msra.mxu0 %v7861
        %8537 = vmatpush.bf16.msra.mxu0 %v7855
        %8538 = vmatpush.bf16.msra.mxu0 %v7849
        %8539 = vmatpush.bf16.msra.mxu0 %v7843
        %8540 = vmatpush.bf16.msra.mxu0 %v7837
        %8541 = vmatmul.bf16.gmra.mxu0 %v6433
        %v8542 = vpop.f32.mrf.mxu0
        %v8543 = vadd.f32 %v8530, %v8542
        %v8544 = vpop.f32.mrf.mxu0
        %8545 = vdwg.mxu0
        %8546 = vmatpush.bf16.msra.mxu0 %v7927
        %8547 = vmatpush.bf16.msra.mxu0 %v7921
        %8548 = vmatpush.bf16.msra.mxu0 %v7915
        %8549 = vmatpush.bf16.msra.mxu0 %v7909
        %8550 = vmatpush.bf16.msra.mxu0 %v7903
        %8551 = vmatpush.bf16.msra.mxu0 %v7897
        %8552 = vmatpush.bf16.msra.mxu0 %v7891
        %8553 = vmatpush.bf16.msra.mxu0 %v7885
        %8554 = vmatmul.bf16.gmra.mxu0 %v6434
        %v8555 = vpop.f32.mrf.mxu0
        %v8556 = vadd.f32 %v8543, %v8555
        %v8557 = vpop.f32.mrf.mxu0
        %8558 = vdwg.mxu0
        %8559 = vmatpush.bf16.msra.mxu0 %v7975
        %8560 = vmatpush.bf16.msra.mxu0 %v7969
        %8561 = vmatpush.bf16.msra.mxu0 %v7963
        %8562 = vmatpush.bf16.msra.mxu0 %v7957
        %8563 = vmatpush.bf16.msra.mxu0 %v7951
        %8564 = vmatpush.bf16.msra.mxu0 %v7945
        %8565 = vmatpush.bf16.msra.mxu0 %v7939
        %8566 = vmatpush.bf16.msra.mxu0 %v7933
        %8567 = vmatmul.bf16.gmra.mxu0 %v6435
        %v8568 = vpop.f32.mrf.mxu0
        %v8569 = vadd.f32 %v8556, %v8568
        %v8570 = vpop.f32.mrf.mxu0
        %8571 = vdwg.mxu0
        %8572 = vmatpush.bf16.msra.mxu0 %v7640
        %8573 = vmatpush.bf16.msra.mxu0 %v7634
        %8574 = vmatpush.bf16.msra.mxu0 %v7628
        %8575 = vmatpush.bf16.msra.mxu0 %v7622
        %8576 = vmatpush.bf16.msra.mxu0 %v7616
        %8577 = vmatpush.bf16.msra.mxu0 %v7610
        %8578 = vmatpush.bf16.msra.mxu0 %v7604
        %8579 = vmatpush.bf16.msra.mxu0 %v7598
        %8580 = vmatmul.bf16.gmra.mxu0 %v6428
        %v8581 = vpop.f32.mrf.mxu0
        %v8582 = vadd.f32 0.0, %v8581
        %v8583 = vpop.f32.mrf.mxu0
        %8584 = vdwg.mxu0
        %8585 = vmatpush.bf16.msra.mxu0 %v7688
        %8586 = vmatpush.bf16.msra.mxu0 %v7682
        %8587 = vmatpush.bf16.msra.mxu0 %v7676
        %8588 = vmatpush.bf16.msra.mxu0 %v7670
        %8589 = vmatpush.bf16.msra.mxu0 %v7664
        %8590 = vmatpush.bf16.msra.mxu0 %v7658
        %8591 = vmatpush.bf16.msra.mxu0 %v7652
        %8592 = vmatpush.bf16.msra.mxu0 %v7646
        %8593 = vmatmul.bf16.gmra.mxu0 %v6429
        %v8594 = vpop.f32.mrf.mxu0
        %v8595 = vadd.f32 %v8582, %v8594
        %v8596 = vpop.f32.mrf.mxu0
        %8597 = vdwg.mxu0
        %8598 = vmatpush.bf16.msra.mxu0 %v7736
        %8599 = vmatpush.bf16.msra.mxu0 %v7730
        %8600 = vmatpush.bf16.msra.mxu0 %v7724
        %8601 = vmatpush.bf16.msra.mxu0 %v7718
        %8602 = vmatpush.bf16.msra.mxu0 %v7712
        %8603 = vmatpush.bf16.msra.mxu0 %v7706
        %8604 = vmatpush.bf16.msra.mxu0 %v7700
        %8605 = vmatpush.bf16.msra.mxu0 %v7694
        %8606 = vmatmul.bf16.gmra.mxu0 %v6430
        %v8607 = vpop.f32.mrf.mxu0
        %v8608 = vadd.f32 %v8595, %v8607
        %v8609 = vpop.f32.mrf.mxu0
        %8610 = vdwg.mxu0
        %8611 = vmatpush.bf16.msra.mxu0 %v7784
        %8612 = vmatpush.bf16.msra.mxu0 %v7778
        %8613 = vmatpush.bf16.msra.mxu0 %v7772
        %8614 = vmatpush.bf16.msra.mxu0 %v7766
        %8615 = vmatpush.bf16.msra.mxu0 %v7760
        %8616 = vmatpush.bf16.msra.mxu0 %v7754
        %8617 = vmatpush.bf16.msra.mxu0 %v7748
        %8618 = vmatpush.bf16.msra.mxu0 %v7742
        %8619 = vmatmul.bf16.gmra.mxu0 %v6431
        %v8620 = vpop.f32.mrf.mxu0
        %v8621 = vadd.f32 %v8608, %v8620
        %v8622 = vpop.f32.mrf.mxu0
        %8623 = vdwg.mxu0
        %8624 = vmatpush.bf16.msra.mxu0 %v7832
        %8625 = vmatpush.bf16.msra.mxu0 %v7826
        %8626 = vmatpush.bf16.msra.mxu0 %v7820
        %8627 = vmatpush.bf16.msra.mxu0 %v7814
        %8628 = vmatpush.bf16.msra.mxu0 %v7808
        %8629 = vmatpush.bf16.msra.mxu0 %v7802
        %8630 = vmatpush.bf16.msra.mxu0 %v7796
        %8631 = vmatpush.bf16.msra.mxu0 %v7790
        %8632 = vmatmul.bf16.gmra.mxu0 %v6432
        %v8633 = vpop.f32.mrf.mxu0
        %v8634 = vadd.f32 %v8621, %v8633
        %v8635 = vpop.f32.mrf.mxu0
        %8636 = vdwg.mxu0
        %8637 = vmatpush.bf16.msra.mxu0 %v7880
        %8638 = vmatpush.bf16.msra.mxu0 %v7874
        %8639 = vmatpush.bf16.msra.mxu0 %v7868
        %8640 = vmatpush.bf16.msra.mxu0 %v7862
        %8641 = vmatpush.bf16.msra.mxu0 %v7856
        %8642 = vmatpush.bf16.msra.mxu0 %v7850
        %8643 = vmatpush.bf16.msra.mxu0 %v7844
        %8644 = vmatpush.bf16.msra.mxu0 %v7838
        %8645 = vmatmul.bf16.gmra.mxu0 %v6433
        %v8646 = vpop.f32.mrf.mxu0
        %v8647 = vadd.f32 %v8634, %v8646
        %v8648 = vpop.f32.mrf.mxu0
        %8649 = vdwg.mxu0
        %8650 = vmatpush.bf16.msra.mxu0 %v7928
        %8651 = vmatpush.bf16.msra.mxu0 %v7922
        %8652 = vmatpush.bf16.msra.mxu0 %v7916
        %8653 = vmatpush.bf16.msra.mxu0 %v7910
        %8654 = vmatpush.bf16.msra.mxu0 %v7904
        %8655 = vmatpush.bf16.msra.mxu0 %v7898
        %8656 = vmatpush.bf16.msra.mxu0 %v7892
        %8657 = vmatpush.bf16.msra.mxu0 %v7886
        %8658 = vmatmul.bf16.gmra.mxu0 %v6434
        %v8659 = vpop.f32.mrf.mxu0
        %v8660 = vadd.f32 %v8647, %v8659
        %v8661 = vpop.f32.mrf.mxu0
        %8662 = vdwg.mxu0
        %8663 = vmatpush.bf16.msra.mxu0 %v7976
        %8664 = vmatpush.bf16.msra.mxu0 %v7970
        %8665 = vmatpush.bf16.msra.mxu0 %v7964
        %8666 = vmatpush.bf16.msra.mxu0 %v7958
        %8667 = vmatpush.bf16.msra.mxu0 %v7952
        %8668 = vmatpush.bf16.msra.mxu0 %v7946
        %8669 = vmatpush.bf16.msra.mxu0 %v7940
        %8670 = vmatpush.bf16.msra.mxu0 %v7934
        %8671 = vmatmul.bf16.gmra.mxu0 %v6435
        %v8672 = vpop.f32.mrf.mxu0
        %v8673 = vadd.f32 %v8660, %v8672
        %v8674 = vpop.f32.mrf.mxu0
        %8675 = vdwg.mxu0
        %8676 = vmatpush.bf16.msra.mxu0 %v7641
        %8677 = vmatpush.bf16.msra.mxu0 %v7635
        %8678 = vmatpush.bf16.msra.mxu0 %v7629
        %8679 = vmatpush.bf16.msra.mxu0 %v7623
        %8680 = vmatpush.bf16.msra.mxu0 %v7617
        %8681 = vmatpush.bf16.msra.mxu0 %v7611
        %8682 = vmatpush.bf16.msra.mxu0 %v7605
        %8683 = vmatpush.bf16.msra.mxu0 %v7599
        %8684 = vmatmul.bf16.gmra.mxu0 %v6428
        %v8685 = vpop.f32.mrf.mxu0
        %v8686 = vadd.f32 0.0, %v8685
        %v8687 = vpop.f32.mrf.mxu0
        %8688 = vdwg.mxu0
        %8689 = vmatpush.bf16.msra.mxu0 %v7689
        %8690 = vmatpush.bf16.msra.mxu0 %v7683
        %8691 = vmatpush.bf16.msra.mxu0 %v7677
        %8692 = vmatpush.bf16.msra.mxu0 %v7671
        %8693 = vmatpush.bf16.msra.mxu0 %v7665
        %8694 = vmatpush.bf16.msra.mxu0 %v7659
        %8695 = vmatpush.bf16.msra.mxu0 %v7653
        %8696 = vmatpush.bf16.msra.mxu0 %v7647
        %8697 = vmatmul.bf16.gmra.mxu0 %v6429
        %v8698 = vpop.f32.mrf.mxu0
        %v8699 = vadd.f32 %v8686, %v8698
        %v8700 = vpop.f32.mrf.mxu0
        %8701 = vdwg.mxu0
        %8702 = vmatpush.bf16.msra.mxu0 %v7737
        %8703 = vmatpush.bf16.msra.mxu0 %v7731
        %8704 = vmatpush.bf16.msra.mxu0 %v7725
        %8705 = vmatpush.bf16.msra.mxu0 %v7719
        %8706 = vmatpush.bf16.msra.mxu0 %v7713
        %8707 = vmatpush.bf16.msra.mxu0 %v7707
        %8708 = vmatpush.bf16.msra.mxu0 %v7701
        %8709 = vmatpush.bf16.msra.mxu0 %v7695
        %8710 = vmatmul.bf16.gmra.mxu0 %v6430
        %v8711 = vpop.f32.mrf.mxu0
        %v8712 = vadd.f32 %v8699, %v8711
        %v8713 = vpop.f32.mrf.mxu0
        %8714 = vdwg.mxu0
        %8715 = vmatpush.bf16.msra.mxu0 %v7785
        %8716 = vmatpush.bf16.msra.mxu0 %v7779
        %8717 = vmatpush.bf16.msra.mxu0 %v7773
        %8718 = vmatpush.bf16.msra.mxu0 %v7767
        %8719 = vmatpush.bf16.msra.mxu0 %v7761
        %8720 = vmatpush.bf16.msra.mxu0 %v7755
        %8721 = vmatpush.bf16.msra.mxu0 %v7749
        %8722 = vmatpush.bf16.msra.mxu0 %v7743
        %8723 = vmatmul.bf16.gmra.mxu0 %v6431
        %v8724 = vpop.f32.mrf.mxu0
        %v8725 = vadd.f32 %v8712, %v8724
        %v8726 = vpop.f32.mrf.mxu0
        %8727 = vdwg.mxu0
        %8728 = vmatpush.bf16.msra.mxu0 %v7833
        %8729 = vmatpush.bf16.msra.mxu0 %v7827
        %8730 = vmatpush.bf16.msra.mxu0 %v7821
        %8731 = vmatpush.bf16.msra.mxu0 %v7815
        %8732 = vmatpush.bf16.msra.mxu0 %v7809
        %8733 = vmatpush.bf16.msra.mxu0 %v7803
        %8734 = vmatpush.bf16.msra.mxu0 %v7797
        %8735 = vmatpush.bf16.msra.mxu0 %v7791
        %8736 = vmatmul.bf16.gmra.mxu0 %v6432
        %v8737 = vpop.f32.mrf.mxu0
        %v8738 = vadd.f32 %v8725, %v8737
        %v8739 = vpop.f32.mrf.mxu0
        %8740 = vdwg.mxu0
        %8741 = vmatpush.bf16.msra.mxu0 %v7881
        %8742 = vmatpush.bf16.msra.mxu0 %v7875
        %8743 = vmatpush.bf16.msra.mxu0 %v7869
        %8744 = vmatpush.bf16.msra.mxu0 %v7863
        %8745 = vmatpush.bf16.msra.mxu0 %v7857
        %8746 = vmatpush.bf16.msra.mxu0 %v7851
        %8747 = vmatpush.bf16.msra.mxu0 %v7845
        %8748 = vmatpush.bf16.msra.mxu0 %v7839
        %8749 = vmatmul.bf16.gmra.mxu0 %v6433
        %v8750 = vpop.f32.mrf.mxu0
        %v8751 = vadd.f32 %v8738, %v8750
        %v8752 = vpop.f32.mrf.mxu0
        %8753 = vdwg.mxu0
        %8754 = vmatpush.bf16.msra.mxu0 %v7929
        %8755 = vmatpush.bf16.msra.mxu0 %v7923
        %8756 = vmatpush.bf16.msra.mxu0 %v7917
        %8757 = vmatpush.bf16.msra.mxu0 %v7911
        %8758 = vmatpush.bf16.msra.mxu0 %v7905
        %8759 = vmatpush.bf16.msra.mxu0 %v7899
        %8760 = vmatpush.bf16.msra.mxu0 %v7893
        %8761 = vmatpush.bf16.msra.mxu0 %v7887
        %8762 = vmatmul.bf16.gmra.mxu0 %v6434
        %v8763 = vpop.f32.mrf.mxu0
        %v8764 = vadd.f32 %v8751, %v8763
        %v8765 = vpop.f32.mrf.mxu0
        %8766 = vdwg.mxu0
        %8767 = vmatpush.bf16.msra.mxu0 %v7977
        %8768 = vmatpush.bf16.msra.mxu0 %v7971
        %8769 = vmatpush.bf16.msra.mxu0 %v7965
        %8770 = vmatpush.bf16.msra.mxu0 %v7959
        %8771 = vmatpush.bf16.msra.mxu0 %v7953
        %8772 = vmatpush.bf16.msra.mxu0 %v7947
        %8773 = vmatpush.bf16.msra.mxu0 %v7941
        %8774 = vmatpush.bf16.msra.mxu0 %v7935
        %8775 = vmatmul.bf16.gmra.mxu0 %v6435
        %v8776 = vpop.f32.mrf.mxu0
        %v8777 = vadd.f32 %v8764, %v8776
        %v8778 = vpop.f32.mrf.mxu0
        %8779 = vdwg.mxu0
        %8780 = vmatpush.bf16.msra.mxu0 %v7642
        %8781 = vmatpush.bf16.msra.mxu0 %v7636
        %8782 = vmatpush.bf16.msra.mxu0 %v7630
        %8783 = vmatpush.bf16.msra.mxu0 %v7624
        %8784 = vmatpush.bf16.msra.mxu0 %v7618
        %8785 = vmatpush.bf16.msra.mxu0 %v7612
        %8786 = vmatpush.bf16.msra.mxu0 %v7606
        %8787 = vmatpush.bf16.msra.mxu0 %v7600
        %8788 = vmatmul.bf16.gmra.mxu0 %v6428
        %v8789 = vpop.f32.mrf.mxu0
        %v8790 = vadd.f32 0.0, %v8789
        %v8791 = vpop.f32.mrf.mxu0
        %8792 = vdwg.mxu0
        %8793 = vmatpush.bf16.msra.mxu0 %v7690
        %8794 = vmatpush.bf16.msra.mxu0 %v7684
        %8795 = vmatpush.bf16.msra.mxu0 %v7678
        %8796 = vmatpush.bf16.msra.mxu0 %v7672
        %8797 = vmatpush.bf16.msra.mxu0 %v7666
        %8798 = vmatpush.bf16.msra.mxu0 %v7660
        %8799 = vmatpush.bf16.msra.mxu0 %v7654
        %8800 = vmatpush.bf16.msra.mxu0 %v7648
        %8801 = vmatmul.bf16.gmra.mxu0 %v6429
        %v8802 = vpop.f32.mrf.mxu0
        %v8803 = vadd.f32 %v8790, %v8802
        %v8804 = vpop.f32.mrf.mxu0
        %8805 = vdwg.mxu0
        %8806 = vmatpush.bf16.msra.mxu0 %v7738
        %8807 = vmatpush.bf16.msra.mxu0 %v7732
        %8808 = vmatpush.bf16.msra.mxu0 %v7726
        %8809 = vmatpush.bf16.msra.mxu0 %v7720
        %8810 = vmatpush.bf16.msra.mxu0 %v7714
        %8811 = vmatpush.bf16.msra.mxu0 %v7708
        %8812 = vmatpush.bf16.msra.mxu0 %v7702
        %8813 = vmatpush.bf16.msra.mxu0 %v7696
        %8814 = vmatmul.bf16.gmra.mxu0 %v6430
        %v8815 = vpop.f32.mrf.mxu0
        %v8816 = vadd.f32 %v8803, %v8815
        %v8817 = vpop.f32.mrf.mxu0
        %8818 = vdwg.mxu0
        %8819 = vmatpush.bf16.msra.mxu0 %v7786
        %8820 = vmatpush.bf16.msra.mxu0 %v7780
        %8821 = vmatpush.bf16.msra.mxu0 %v7774
        %8822 = vmatpush.bf16.msra.mxu0 %v7768
        %8823 = vmatpush.bf16.msra.mxu0 %v7762
        %8824 = vmatpush.bf16.msra.mxu0 %v7756
        %8825 = vmatpush.bf16.msra.mxu0 %v7750
        %8826 = vmatpush.bf16.msra.mxu0 %v7744
        %8827 = vmatmul.bf16.gmra.mxu0 %v6431
        %v8828 = vpop.f32.mrf.mxu0
        %v8829 = vadd.f32 %v8816, %v8828
        %v8830 = vpop.f32.mrf.mxu0
        %8831 = vdwg.mxu0
        %8832 = vmatpush.bf16.msra.mxu0 %v7834
        %8833 = vmatpush.bf16.msra.mxu0 %v7828
        %8834 = vmatpush.bf16.msra.mxu0 %v7822
        %8835 = vmatpush.bf16.msra.mxu0 %v7816
        %8836 = vmatpush.bf16.msra.mxu0 %v7810
        %8837 = vmatpush.bf16.msra.mxu0 %v7804
        %8838 = vmatpush.bf16.msra.mxu0 %v7798
        %8839 = vmatpush.bf16.msra.mxu0 %v7792
        %8840 = vmatmul.bf16.gmra.mxu0 %v6432
        %v8841 = vpop.f32.mrf.mxu0
        %v8842 = vadd.f32 %v8829, %v8841
        %v8843 = vpop.f32.mrf.mxu0
        %8844 = vdwg.mxu0
        %8845 = vmatpush.bf16.msra.mxu0 %v7882
        %8846 = vmatpush.bf16.msra.mxu0 %v7876
        %8847 = vmatpush.bf16.msra.mxu0 %v7870
        %8848 = vmatpush.bf16.msra.mxu0 %v7864
        %8849 = vmatpush.bf16.msra.mxu0 %v7858
        %8850 = vmatpush.bf16.msra.mxu0 %v7852
        %8851 = vmatpush.bf16.msra.mxu0 %v7846
        %8852 = vmatpush.bf16.msra.mxu0 %v7840
        %8853 = vmatmul.bf16.gmra.mxu0 %v6433
        %v8854 = vpop.f32.mrf.mxu0
        %v8855 = vadd.f32 %v8842, %v8854
        %v8856 = vpop.f32.mrf.mxu0
        %8857 = vdwg.mxu0
        %8858 = vmatpush.bf16.msra.mxu0 %v7930
        %8859 = vmatpush.bf16.msra.mxu0 %v7924
        %8860 = vmatpush.bf16.msra.mxu0 %v7918
        %8861 = vmatpush.bf16.msra.mxu0 %v7912
        %8862 = vmatpush.bf16.msra.mxu0 %v7906
        %8863 = vmatpush.bf16.msra.mxu0 %v7900
        %8864 = vmatpush.bf16.msra.mxu0 %v7894
        %8865 = vmatpush.bf16.msra.mxu0 %v7888
        %8866 = vmatmul.bf16.gmra.mxu0 %v6434
        %v8867 = vpop.f32.mrf.mxu0
        %v8868 = vadd.f32 %v8855, %v8867
        %v8869 = vpop.f32.mrf.mxu0
        %8870 = vdwg.mxu0
        %8871 = vmatpush.bf16.msra.mxu0 %v7978
        %8872 = vmatpush.bf16.msra.mxu0 %v7972
        %8873 = vmatpush.bf16.msra.mxu0 %v7966
        %8874 = vmatpush.bf16.msra.mxu0 %v7960
        %8875 = vmatpush.bf16.msra.mxu0 %v7954
        %8876 = vmatpush.bf16.msra.mxu0 %v7948
        %8877 = vmatpush.bf16.msra.mxu0 %v7942
        %8878 = vmatpush.bf16.msra.mxu0 %v7936
        %8879 = vmatmul.bf16.gmra.mxu0 %v6435
        %v8880 = vpop.f32.mrf.mxu0
        %v8881 = vadd.f32 %v8868, %v8880
        %v8882 = vpop.f32.mrf.mxu0
        %8883 = vdwg.mxu0
        %8884 = vmatpush.bf16.msra.mxu0 %v7643
        %8885 = vmatpush.bf16.msra.mxu0 %v7637
        %8886 = vmatpush.bf16.msra.mxu0 %v7631
        %8887 = vmatpush.bf16.msra.mxu0 %v7625
        %8888 = vmatpush.bf16.msra.mxu0 %v7619
        %8889 = vmatpush.bf16.msra.mxu0 %v7613
        %8890 = vmatpush.bf16.msra.mxu0 %v7607
        %8891 = vmatpush.bf16.msra.mxu0 %v7601
        %8892 = vmatmul.bf16.gmra.mxu0 %v6428
        %v8893 = vpop.f32.mrf.mxu0
        %v8894 = vadd.f32 0.0, %v8893
        %v8895 = vpop.f32.mrf.mxu0
        %8896 = vdwg.mxu0
        %8897 = vmatpush.bf16.msra.mxu0 %v7691
        %8898 = vmatpush.bf16.msra.mxu0 %v7685
        %8899 = vmatpush.bf16.msra.mxu0 %v7679
        %8900 = vmatpush.bf16.msra.mxu0 %v7673
        %8901 = vmatpush.bf16.msra.mxu0 %v7667
        %8902 = vmatpush.bf16.msra.mxu0 %v7661
        %8903 = vmatpush.bf16.msra.mxu0 %v7655
        %8904 = vmatpush.bf16.msra.mxu0 %v7649
        %8905 = vmatmul.bf16.gmra.mxu0 %v6429
        %v8906 = vpop.f32.mrf.mxu0
        %v8907 = vadd.f32 %v8894, %v8906
        %v8908 = vpop.f32.mrf.mxu0
        %8909 = vdwg.mxu0
        %8910 = vmatpush.bf16.msra.mxu0 %v7739
        %8911 = vmatpush.bf16.msra.mxu0 %v7733
        %8912 = vmatpush.bf16.msra.mxu0 %v7727
        %8913 = vmatpush.bf16.msra.mxu0 %v7721
        %8914 = vmatpush.bf16.msra.mxu0 %v7715
        %8915 = vmatpush.bf16.msra.mxu0 %v7709
        %8916 = vmatpush.bf16.msra.mxu0 %v7703
        %8917 = vmatpush.bf16.msra.mxu0 %v7697
        %8918 = vmatmul.bf16.gmra.mxu0 %v6430
        %v8919 = vpop.f32.mrf.mxu0
        %v8920 = vadd.f32 %v8907, %v8919
        %v8921 = vpop.f32.mrf.mxu0
        %8922 = vdwg.mxu0
        %8923 = vmatpush.bf16.msra.mxu0 %v7787
        %8924 = vmatpush.bf16.msra.mxu0 %v7781
        %8925 = vmatpush.bf16.msra.mxu0 %v7775
        %8926 = vmatpush.bf16.msra.mxu0 %v7769
        %8927 = vmatpush.bf16.msra.mxu0 %v7763
        %8928 = vmatpush.bf16.msra.mxu0 %v7757
        %8929 = vmatpush.bf16.msra.mxu0 %v7751
        %8930 = vmatpush.bf16.msra.mxu0 %v7745
        %8931 = vmatmul.bf16.gmra.mxu0 %v6431
        %v8932 = vpop.f32.mrf.mxu0
        %v8933 = vadd.f32 %v8920, %v8932
        %v8934 = vpop.f32.mrf.mxu0
        %8935 = vdwg.mxu0
        %8936 = vmatpush.bf16.msra.mxu0 %v7835
        %8937 = vmatpush.bf16.msra.mxu0 %v7829
        %8938 = vmatpush.bf16.msra.mxu0 %v7823
        %8939 = vmatpush.bf16.msra.mxu0 %v7817
        %8940 = vmatpush.bf16.msra.mxu0 %v7811
        %8941 = vmatpush.bf16.msra.mxu0 %v7805
        %8942 = vmatpush.bf16.msra.mxu0 %v7799
        %8943 = vmatpush.bf16.msra.mxu0 %v7793
        %8944 = vmatmul.bf16.gmra.mxu0 %v6432
        %v8945 = vpop.f32.mrf.mxu0
        %v8946 = vadd.f32 %v8933, %v8945
        %v8947 = vpop.f32.mrf.mxu0
        %8948 = vdwg.mxu0
        %8949 = vmatpush.bf16.msra.mxu0 %v7883
        %8950 = vmatpush.bf16.msra.mxu0 %v7877
        %8951 = vmatpush.bf16.msra.mxu0 %v7871
        %8952 = vmatpush.bf16.msra.mxu0 %v7865
        %8953 = vmatpush.bf16.msra.mxu0 %v7859
        %8954 = vmatpush.bf16.msra.mxu0 %v7853
        %8955 = vmatpush.bf16.msra.mxu0 %v7847
        %8956 = vmatpush.bf16.msra.mxu0 %v7841
        %8957 = vmatmul.bf16.gmra.mxu0 %v6433
        %v8958 = vpop.f32.mrf.mxu0
        %v8959 = vadd.f32 %v8946, %v8958
        %v8960 = vpop.f32.mrf.mxu0
        %8961 = vdwg.mxu0
        %8962 = vmatpush.bf16.msra.mxu0 %v7931
        %8963 = vmatpush.bf16.msra.mxu0 %v7925
        %8964 = vmatpush.bf16.msra.mxu0 %v7919
        %8965 = vmatpush.bf16.msra.mxu0 %v7913
        %8966 = vmatpush.bf16.msra.mxu0 %v7907
        %8967 = vmatpush.bf16.msra.mxu0 %v7901
        %8968 = vmatpush.bf16.msra.mxu0 %v7895
        %8969 = vmatpush.bf16.msra.mxu0 %v7889
        %8970 = vmatmul.bf16.gmra.mxu0 %v6434
        %v8971 = vpop.f32.mrf.mxu0
        %v8972 = vadd.f32 %v8959, %v8971
        %v8973 = vpop.f32.mrf.mxu0
        %8974 = vdwg.mxu0
        %8975 = vmatpush.bf16.msra.mxu0 %v7979
        %8976 = vmatpush.bf16.msra.mxu0 %v7973
        %8977 = vmatpush.bf16.msra.mxu0 %v7967
        %8978 = vmatpush.bf16.msra.mxu0 %v7961
        %8979 = vmatpush.bf16.msra.mxu0 %v7955
        %8980 = vmatpush.bf16.msra.mxu0 %v7949
        %8981 = vmatpush.bf16.msra.mxu0 %v7943
        %8982 = vmatpush.bf16.msra.mxu0 %v7937
        %8983 = vmatmul.bf16.gmra.mxu0 %v6435
        %v8984 = vpop.f32.mrf.mxu0
        %v8985 = vadd.f32 %v8972, %v8984
        %v8986 = vpop.f32.mrf.mxu0
        %8987 = vdwg.mxu0
        %v8994 = vrot.slane %v8569, 4
        %v8995 = vrot.slane %v8777, 4
        %v8996 = vrot.slane %v8985, 4
        %vm8997 = vcmask 1043456
        %v8998 = vsel %vm8997, %v8465, %v8994
        %v8999 = vsel %vm8997, %v8673, %v8995
        %v9000 = vsel %vm8997, %v8881, %v8996
        %9004 = vst [vmem:[%s453] sm:$0xff] %v8998
        %9005 = vst [vmem:[%s453 + $0x8] sm:$0xff] %v8999
        %9006 = vst [vmem:[%s453 + $0x10] sm:$0xff] %v9000
        %s9007 = sand.u32 %s230, 1
        %s9008 = scalar_lea.sflag [#allocation5], %s9007
        %s9009 = sand.u32 %s230, 1
        %s9010 = smul.addr %s9009, 24
        %s9011 = scalar_lea.vmem [#allocation17], %s9010
        // Predicated region
        $region89: #{tpu_custom_call.1} parent=51 // pred_check
          %p9012 = pneg %p240
        $region90: #{tpu_custom_call.1} parent=51 // pred_check_branch
          %9014 = sbr.rel (%p9012) target = $region92
        $region91: #{tpu_custom_call.1} parent=51 // pred_region
          %s9015 = smul.u32 %s33, 4
          %s9016 = sadd.s32 %s9015, %s34
          %s9017 = smul.u32 6, %s9016
          %9019 = vsyncadd %s9008, 0
          %s9020 = smul.addr %s9017, 4
          %s9021 = scalar_lea.hbm %s8, %s9020
          %s9023 = sshll.u32 %s9011, 4
          %s9024 = int_to_ptr.vmem [resolvable:$true] %s9023
          %s9025 = sshll.u32 %s9021, 4
          %s9026 = int_to_ptr.hbm [resolvable:$true] %s9025
          %9028 = dma.vmem_to_hbm [thread:$0]  %s9024, 384, %s9026, %s9008
        $region92: #{tpu_custom_call.1} parent=51 // pred_fallthru
          _
      $region52: #{tpu_custom_call.1} parent=5 // pred_fallthru
        _
      %p9029 = scmp.le.s32.totalorder 2, %s24
      // Predicated region
      $region93: #{tpu_custom_call.1} parent=5 // pred_check
        %p9030 = pneg %p9029
      $region94: #{tpu_custom_call.1} parent=5 // pred_check_branch
        %9032 = sbr.rel (%p9030) target = $region96
      $region95: #{tpu_custom_call.1} parent=5 // pred_region
        %s9033 = ssub.s32 %s24, 2
        // Predicated region
        $region97: #{tpu_custom_call.1} parent=95 // pred_check
          %p9034 = pneg %p246
        $region98: #{tpu_custom_call.1} parent=95 // pred_check_branch
          %9036 = sbr.rel (%p9034) target = $region100
        $region99: #{tpu_custom_call.1} parent=95 // pred_region
          %s9037 = sand.u32 %s231, 1
          %s9038 = scalar_lea.sflag [#allocation5], %s9037
          %s9039 = sand.u32 %s231, 1
          %s9040 = smul.addr %s9039, 24
          %s9041 = scalar_lea.vmem [#allocation17], %s9040
          %9043 = dma.done %s9038, 384
        $region100: #{tpu_custom_call.1} parent=95 // pred_fallthru
          _
      $region96: #{tpu_custom_call.1} parent=5 // pred_fallthru
        _
    $region6: #{tpu_custom_call.1} parent=1 // loop_footer
      %s28 = sadd.s32 1, %s24
    $region7: #{tpu_custom_call.1} parent=1 // loop_footer_branch
      %23 = sbr.rel target = $region3
    $region8: #{tpu_custom_call.1} parent=1 // loop_exit
      _
    %9044 = vsyncpa [#allocation4], 1
    %s9045 = scalar_lea.sflag [#allocation4], 1
    %9046 = vsyncpa %s9045, 1
    %9047 = vsyncpa [#allocation7], 1
    %9048 = vsyncpa [#allocation10], 1
    %s9049 = scalar_lea.sflag [#allocation10], 1
    %9050 = vsyncpa %s9049, 1
    %9051 = vsyncpa [#allocation13], 1
    %9052 = vsyncpa [#allocation16], 1
    %9053 = vsyncpa [#allocation5], 1
    %s9054 = scalar_lea.sflag [#allocation5], 1
    %9055 = vsyncpa %s9054, 1

</llo_original>
